<compile_context>
chip_gen: v7x
topology: tpu7x:2x2x1
jax: 0.10.0
libtpu: 0.0.40
codegen_flags: <defaults>
</compile_context>

<pallas_src>
import math

import jax
import jax.numpy as jnp
from jax import lax
from jax.experimental import pallas as pl
from jax.experimental.pallas import tpu as pltpu

FEAT_PAD = 896        # 784 zero-padded up to 7 * 128 (lane-aligned K for layer 1)
MAX_BATCH_TILE = 512  # lane-aligned batch tile cap


def _round_up(n, m):
    return ((n + m - 1) // m) * m


def _pick_batch_tile(b):
    """Pick a 128-aligned batch tile, capped at MAX_BATCH_TILE.

    Prefers >= 2 grid steps when the batch allows it so the "parallel" grid
    axis can shard across both v7x TensorCores; tiny batches use the 128-lane
    minimum instead of padding all the way up.
    """
    tile = min(MAX_BATCH_TILE, _round_up(b, 128))
    if b > 128 and _round_up(b, tile) // tile < 2:
        tile = min(tile, _round_up((b + 1) // 2, 128))
    return tile


def _leaky_relu(x, slope=0.2):
    return jnp.where(x > 0, x, slope * x)


def discriminator_kernel(x_ref,
                         w1_ref, b1_ref,
                         w2_ref, b2_ref,
                         w3_ref, b3_ref,
                         w4_ref, b4_ref,
                         o_ref):
    # x_ref: (T, 896) bf16, batch-major (no host-side transpose of the input).
    # w1/w2/w3 are bf16; accumulation + bias + LeakyReLU + sigmoid stay f32.
    x = x_ref[...]

    # Layer 1: (1024, 896) . (T, 896)^T -> (1024, T); contract the trailing
    # feature dim of both operands (classic trans_b MXU matmul).
    dn = (((1,), (1,)), ((), ()))
    h1 = lax.dot_general(w1_ref[...], x, dn, preferred_element_type=jnp.float32)
    h1 = _leaky_relu(h1 + b1_ref[...])          # Dropout(0.3): identity (eval mode)

    h2 = jnp.dot(w2_ref[...], h1.astype(jnp.bfloat16),
                 preferred_element_type=jnp.float32)
    h2 = _leaky_relu(h2 + b2_ref[...])

    h3 = jnp.dot(w3_ref[...], h2.astype(jnp.bfloat16),
                 preferred_element_type=jnp.float32)
    h3 = _leaky_relu(h3 + b3_ref[...])          # (256, T) f32

    # 256 -> 1 head: VPU multiply + XLU sublane reduce instead of an N=1 MXU
    # pass; the result is already the lane-dense (1, T) output row.
    logits = jnp.sum(h3 * w4_ref[...], axis=0, keepdims=True) + b4_ref[...]
    o_ref[...] = jax.nn.sigmoid(logits).astype(o_ref.dtype)


def discriminator_forward(x, params):
    """x: (B, 1, 28, 28) or (B, 784) float. Returns (B, 1) float32."""
    b = x.shape[0]
    tile = _pick_batch_tile(b)
    b_pad = _round_up(b, tile)

    # Cast to bf16 *before* padding so the pad pass moves half the bytes; the
    # kernel contracts the trailing feature dim, so no HBM transpose is needed.
    x2d = x.reshape(b, 784).astype(jnp.bfloat16)          # == x.view(B, 784)
    x_pad = jnp.pad(x2d, ((0, b_pad - b), (0, FEAT_PAD - 784)))   # (b_pad, 896)

    (w1, b1), (w2, b2), (w3, b3), (w4, b4) = params
    # Weights are PyTorch-layout (out, in); pad layer-1 K to 896 and cast the
    # three MXU weights to bf16.  Biases and the VPU-head weight stay f32.
    w1p = jnp.pad(w1, ((0, 0), (0, FEAT_PAD - w1.shape[1]))).astype(jnp.bfloat16)
    w2c = w2.astype(jnp.bfloat16)
    w3c = w3.astype(jnp.bfloat16)
    w4c = w4.T.astype(jnp.float32)                          # (256, 1) column

    grid = (b_pad // tile,)

    def fixed(arr):
        # Whole-array, grid-invariant block: weights/biases stay resident in
        # VMEM across the batch grid (bf16 weights ~3 MiB; comfortably within
        # the 32 MiB scoped limit even with the default double buffering).
        return pl.BlockSpec(arr.shape, lambda i: (0, 0))

    out = pl.pallas_call(
        discriminator_kernel,
        out_shape=jax.ShapeDtypeStruct((1, b_pad), jnp.float32),
        grid_spec=pltpu.PrefetchScalarGridSpec(
            num_scalar_prefetch=0,
            grid=grid,
            in_specs=[
                pl.BlockSpec((tile, FEAT_PAD), lambda i: (i, 0)),
                fixed(w1p), fixed(b1),
                fixed(w2c), fixed(b2),
                fixed(w3c), fixed(b3),
                fixed(w4c), fixed(b4),
            ],
            # Lane-dense (1, tile) output rows -> unmasked 128-lane stores.
            out_specs=pl.BlockSpec((1, tile), lambda i: (0, i)),
        ),
        compiler_params=pltpu.CompilerParams(
            dimension_semantics=("parallel",),   # shards grid across v7x TCs
            vmem_limit_bytes=32 << 20,           # ~15 MiB footprint; v7x-safe
        ),
    )(x_pad, w1p, b1, w2c, b2, w3c, b3, w4c, b4)

    return out[0, :b].reshape(b, 1)


def init_params(key):
    """Deterministic PyTorch-style init. Weights (out, in) f32; biases (out, 1)."""
    dims = [(784, 1024), (1024, 512), (512, 256), (256, 1)]
    params = []
    for fan_in, fan_out in dims:
        kw, kb, key = jax.random.split(key, 3)
        bound = 1.0 / math.sqrt(fan_in)   # PyTorch Linear default init range
        w = jax.random.uniform(kw, (fan_out, fan_in), jnp.float32, -bound, bound)
        b = jax.random.uniform(kb, (fan_out, 1), jnp.float32, -bound, bound)
        params.append((w, b))
    return params


def reference_forward(x, params):
    """Plain-JAX f32 reference for a sanity check (eval-mode dropout)."""
    h = x.reshape(x.shape[0], 784).astype(jnp.float32)
    for i, (w, b) in enumerate(params):
        h = h @ w.T + b.T
        if i < 3:
            h = jnp.where(h > 0, h, 0.2 * h)
    return jax.nn.sigmoid(h)


if __name__ == "__main__":
    key = jax.random.PRNGKey(0)
    kx, kp = jax.random.split(key)

    # Small, module-consistent input: batch=2 MNIST-shaped images (NCHW).
    x = jax.random.normal(kx, (2, 1, 28, 28), jnp.float32)
    params = init_params(kp)

    out = discriminator_forward(x, params)
    out = jax.block_until_ready(out)

    ref = reference_forward(x, params)
    assert out.shape == (2, 1), out.shape
    # bf16 matmuls (f32 accumulate): loosened tolerance on sigmoid outputs.
    assert jnp.allclose(out, ref, atol=2e-2, rtol=2e-2), (out, ref)

    print("KERNEL_OK")
</pallas_src>

<mosaic_0001>
module attributes {stable_mosaic.version = 11 : i64} {
  func.func @discriminator_kernel(%arg0: i32, %arg1: memref<128x896xbf16, #tpu.memory_space<vmem>>, %arg2: memref<1024x896xbf16, #tpu.memory_space<vmem>>, %arg3: memref<1024x1xf32, #tpu.memory_space<vmem>>, %arg4: memref<512x1024xbf16, #tpu.memory_space<vmem>>, %arg5: memref<512x1xf32, #tpu.memory_space<vmem>>, %arg6: memref<256x512xbf16, #tpu.memory_space<vmem>>, %arg7: memref<256x1xf32, #tpu.memory_space<vmem>>, %arg8: memref<256x1xf32, #tpu.memory_space<vmem>>, %arg9: memref<1x1xf32, #tpu.memory_space<vmem>>, %arg10: memref<1x128xf32, #tpu.memory_space<vmem>>) attributes {dimension_semantics = [#tpu.dimension_semantics<parallel>], iteration_bounds = array<i64: 1>, scalar_prefetch = 0 : i64, scratch_operands = 0 : i64, tpu.core_type = #tpu.core_type<tc>, window_params = [{transform_indices = @transform_0, window_bounds = array<i64: 128, 896>}, {pipeline_mode = #tpu.pipeline_mode<synchronous>, transform_indices = @transform_1, window_bounds = array<i64: 1024, 896>}, {pipeline_mode = #tpu.pipeline_mode<synchronous>, transform_indices = @transform_2, window_bounds = array<i64: 1024, 1>}, {pipeline_mode = #tpu.pipeline_mode<synchronous>, transform_indices = @transform_3, window_bounds = array<i64: 512, 1024>}, {pipeline_mode = #tpu.pipeline_mode<synchronous>, transform_indices = @transform_4, window_bounds = array<i64: 512, 1>}, {pipeline_mode = #tpu.pipeline_mode<synchronous>, transform_indices = @transform_5, window_bounds = array<i64: 256, 512>}, {pipeline_mode = #tpu.pipeline_mode<synchronous>, transform_indices = @transform_6, window_bounds = array<i64: 256, 1>}, {pipeline_mode = #tpu.pipeline_mode<synchronous>, transform_indices = @transform_7, window_bounds = array<i64: 256, 1>}, {pipeline_mode = #tpu.pipeline_mode<synchronous>, transform_indices = @transform_8, window_bounds = array<i64: 1, 1>}, {transform_indices = @transform_9, window_bounds = array<i64: 1, 128>}]} {
    %c0 = arith.constant 0 : index
    %c0_0 = arith.constant 0 : index
    %0 = vector.load %arg1[%c0, %c0_0] : memref<128x896xbf16, #tpu.memory_space<vmem>>, vector<128x896xbf16>
    %c0_1 = arith.constant 0 : index
    %c0_2 = arith.constant 0 : index
    %1 = vector.load %arg2[%c0_1, %c0_2] : memref<1024x896xbf16, #tpu.memory_space<vmem>>, vector<1024x896xbf16>
    %cst = arith.constant dense<0.000000e+00> : vector<1024x128xf32>
    %2 = tpu.matmul %1, %0, %cst {dimension_numbers = #tpu.dot_dimension_numbers<[1], [1], [0], [0], [0, 0, 1, 0], [], []>} : vector<1024x896xbf16>, vector<128x896xbf16>, vector<1024x128xf32> -> vector<1024x128xf32>
    %c0_3 = arith.constant 0 : index
    %c0_4 = arith.constant 0 : index
    %3 = vector.load %arg3[%c0_3, %c0_4] : memref<1024x1xf32, #tpu.memory_space<vmem>>, vector<1024x1xf32>
    %4 = vector.broadcast %3 : vector<1024x1xf32> to vector<1024x128xf32>
    %5 = arith.addf %2, %4 : vector<1024x128xf32>
    %cst_5 = arith.constant 0.000000e+00 : f32
    %6 = vector.broadcast %cst_5 : f32 to vector<1024x128xf32>
    %7 = arith.cmpf ogt, %5, %6 : vector<1024x128xf32>
    %cst_6 = arith.constant 2.000000e-01 : f32
    %8 = vector.broadcast %cst_6 : f32 to vector<1024x128xf32>
    %9 = arith.mulf %8, %5 : vector<1024x128xf32>
    %10 = arith.select %7, %5, %9 : vector<1024x128xi1>, vector<1024x128xf32>
    %c0_7 = arith.constant 0 : index
    %c0_8 = arith.constant 0 : index
    %11 = vector.load %arg4[%c0_7, %c0_8] : memref<512x1024xbf16, #tpu.memory_space<vmem>>, vector<512x1024xbf16>
    %12 = arith.truncf %10 : vector<1024x128xf32> to vector<1024x128xbf16>
    %cst_9 = arith.constant dense<0.000000e+00> : vector<512x128xf32>
    %13 = tpu.matmul %11, %12, %cst_9 {dimension_numbers = #tpu.dot_dimension_numbers<[1], [0], [0], [1], [0, 0, 1, 1], [], []>} : vector<512x1024xbf16>, vector<1024x128xbf16>, vector<512x128xf32> -> vector<512x128xf32>
    %c0_10 = arith.constant 0 : index
    %c0_11 = arith.constant 0 : index
    %14 = vector.load %arg5[%c0_10, %c0_11] : memref<512x1xf32, #tpu.memory_space<vmem>>, vector<512x1xf32>
    %15 = vector.broadcast %14 : vector<512x1xf32> to vector<512x128xf32>
    %16 = arith.addf %13, %15 : vector<512x128xf32>
    %cst_12 = arith.constant 0.000000e+00 : f32
    %17 = vector.broadcast %cst_12 : f32 to vector<512x128xf32>
    %18 = arith.cmpf ogt, %16, %17 : vector<512x128xf32>
    %cst_13 = arith.constant 2.000000e-01 : f32
    %19 = vector.broadcast %cst_13 : f32 to vector<512x128xf32>
    %20 = arith.mulf %19, %16 : vector<512x128xf32>
    %21 = arith.select %18, %16, %20 : vector<512x128xi1>, vector<512x128xf32>
    %c0_14 = arith.constant 0 : index
    %c0_15 = arith.constant 0 : index
    %22 = vector.load %arg6[%c0_14, %c0_15] : memref<256x512xbf16, #tpu.memory_space<vmem>>, vector<256x512xbf16>
    %23 = arith.truncf %21 : vector<512x128xf32> to vector<512x128xbf16>
    %cst_16 = arith.constant dense<0.000000e+00> : vector<256x128xf32>
    %24 = tpu.matmul %22, %23, %cst_16 {dimension_numbers = #tpu.dot_dimension_numbers<[1], [0], [0], [1], [0, 0, 1, 1], [], []>} : vector<256x512xbf16>, vector<512x128xbf16>, vector<256x128xf32> -> vector<256x128xf32>
    %c0_17 = arith.constant 0 : index
    %c0_18 = arith.constant 0 : index
    %25 = vector.load %arg7[%c0_17, %c0_18] : memref<256x1xf32, #tpu.memory_space<vmem>>, vector<256x1xf32>
    %26 = vector.broadcast %25 : vector<256x1xf32> to vector<256x128xf32>
    %27 = arith.addf %24, %26 : vector<256x128xf32>
    %cst_19 = arith.constant 0.000000e+00 : f32
    %28 = vector.broadcast %cst_19 : f32 to vector<256x128xf32>
    %29 = arith.cmpf ogt, %27, %28 : vector<256x128xf32>
    %cst_20 = arith.constant 2.000000e-01 : f32
    %30 = vector.broadcast %cst_20 : f32 to vector<256x128xf32>
    %31 = arith.mulf %30, %27 : vector<256x128xf32>
    %32 = arith.select %29, %27, %31 : vector<256x128xi1>, vector<256x128xf32>
    %c0_21 = arith.constant 0 : index
    %c0_22 = arith.constant 0 : index
    %33 = vector.load %arg8[%c0_21, %c0_22] : memref<256x1xf32, #tpu.memory_space<vmem>>, vector<256x1xf32>
    %34 = vector.broadcast %33 : vector<256x1xf32> to vector<256x128xf32>
    %35 = arith.mulf %32, %34 : vector<256x128xf32>
    %cst_23 = arith.constant dense<0.000000e+00> : vector<128xf32>
    %36 = vector.multi_reduction <add>, %35, %cst_23 [0] : vector<256x128xf32> to vector<128xf32>
    %37 = vector.shape_cast %36 : vector<128xf32> to vector<1x128xf32>
    %c0_24 = arith.constant 0 : index
    %c0_25 = arith.constant 0 : index
    %38 = vector.load %arg9[%c0_24, %c0_25] : memref<1x1xf32, #tpu.memory_space<vmem>>, vector<1x1xf32>
    %39 = vector.broadcast %38 : vector<1x1xf32> to vector<1x128xf32>
    %40 = arith.addf %37, %39 : vector<1x128xf32>
    %41 = arith.negf %40 : vector<1x128xf32>
    %42 = math.exp %41 : vector<1x128xf32>
    %cst_26 = arith.constant 1.000000e+00 : f32
    %43 = vector.broadcast %cst_26 : f32 to vector<1x128xf32>
    %44 = arith.addf %43, %42 : vector<1x128xf32>
    %45 = arith.divf %43, %44 : vector<1x128xf32>
    %c0_27 = arith.constant 0 : index
    %c0_28 = arith.constant 0 : index
    %46 = vector.load %arg10[%c0_27, %c0_28] : memref<1x128xf32, #tpu.memory_space<vmem>>, vector<1x128xf32>
    tpu.vector_store %arg10[%c0_27, %c0_28], %45 {strides = array<i32>} : memref<1x128xf32, #tpu.memory_space<vmem>>, vector<1x128xf32>,
    return
  }
  func.func @transform_0(%arg0: i32) -> (i32, i32) {
    %c0_i32 = arith.constant 0 : i32
    %c0_i32_0 = arith.constant 0 : i32
    return %arg0, %c0_i32 : i32, i32
  }
  func.func @transform_1(%arg0: i32) -> (i32, i32) {
    %c0_i32 = arith.constant 0 : i32
    %c0_i32_0 = arith.constant 0 : i32
    %c0_i32_1 = arith.constant 0 : i32
    return %c0_i32, %c0_i32_0 : i32, i32
  }
  func.func @transform_2(%arg0: i32) -> (i32, i32) {
    %c0_i32 = arith.constant 0 : i32
    %c0_i32_0 = arith.constant 0 : i32
    %c0_i32_1 = arith.constant 0 : i32
    return %c0_i32, %c0_i32_0 : i32, i32
  }
  func.func @transform_3(%arg0: i32) -> (i32, i32) {
    %c0_i32 = arith.constant 0 : i32
    %c0_i32_0 = arith.constant 0 : i32
    %c0_i32_1 = arith.constant 0 : i32
    return %c0_i32, %c0_i32_0 : i32, i32
  }
  func.func @transform_4(%arg0: i32) -> (i32, i32) {
    %c0_i32 = arith.constant 0 : i32
    %c0_i32_0 = arith.constant 0 : i32
    %c0_i32_1 = arith.constant 0 : i32
    return %c0_i32, %c0_i32_0 : i32, i32
  }
  func.func @transform_5(%arg0: i32) -> (i32, i32) {
    %c0_i32 = arith.constant 0 : i32
    %c0_i32_0 = arith.constant 0 : i32
    %c0_i32_1 = arith.constant 0 : i32
    return %c0_i32, %c0_i32_0 : i32, i32
  }
  func.func @transform_6(%arg0: i32) -> (i32, i32) {
    %c0_i32 = arith.constant 0 : i32
    %c0_i32_0 = arith.constant 0 : i32
    %c0_i32_1 = arith.constant 0 : i32
    return %c0_i32, %c0_i32_0 : i32, i32
  }
  func.func @transform_7(%arg0: i32) -> (i32, i32) {
    %c0_i32 = arith.constant 0 : i32
    %c0_i32_0 = arith.constant 0 : i32
    %c0_i32_1 = arith.constant 0 : i32
    return %c0_i32, %c0_i32_0 : i32, i32
  }
  func.func @transform_8(%arg0: i32) -> (i32, i32) {
    %c0_i32 = arith.constant 0 : i32
    %c0_i32_0 = arith.constant 0 : i32
    %c0_i32_1 = arith.constant 0 : i32
    return %c0_i32, %c0_i32_0 : i32, i32
  }
  func.func @transform_9(%arg0: i32) -> (i32, i32) {
    %c0_i32 = arith.constant 0 : i32
    %c0_i32_0 = arith.constant 0 : i32
    return %c0_i32, %arg0 : i32, i32
  }
}

</mosaic_0001>

<llo_original>
// kernel: tpu_custom_call.1
$region0: #{tpu_custom_call.1}
  #allocation0 [shape = 'u32[]', space=smem, size = 0x4, offset = 0x4, fixed_abs, tag = 'smem constant byte address 0x4 - core index']
  #allocation1 [shape = 'u32[144,128]{1,0:T(1,128)}', space=vmem, size = 0x12000, scoped, tag = 'internal scratch']
  #allocation2 [shape = 'f32[1,1]{1,0:T(1,128)S(1)}', space=vmem, size = 0x200, scoped, tag = 'scoped memory for tpu_custom_call.1']
  %s0 = inlined_call_operand.hbm [shape: bf16[128,896], index: 0, kind: input, shape index: {}]
  %s1 = inlined_call_operand.hbm [shape: bf16[1024,896], index: 1, kind: input, shape index: {}]
  %s2 = inlined_call_operand.vmem [shape: f32[1024,1], index: 2, kind: input, shape index: {}]
  %s3 = inlined_call_operand.hbm [shape: bf16[512,1024], index: 3, kind: input, shape index: {}]
  %s4 = inlined_call_operand.vmem [shape: f32[512,1], index: 4, kind: input, shape index: {}]
  %s5 = inlined_call_operand.hbm [shape: bf16[256,512], index: 5, kind: input, shape index: {}]
  %s6 = inlined_call_operand.vmem [shape: f32[256,1], index: 6, kind: input, shape index: {}]
  %s7 = inlined_call_operand.vmem [shape: f32[256,1], index: 7, kind: input, shape index: {}]
  %s8 = inlined_call_operand.<no memory space> [shape: f32[1,1], index: 8, kind: input, shape index: {}]
  %s9 = inlined_call_operand.hbm [shape: f32[1,128], index: 9, kind: output, shape index: {}]
  %s10 = sld [smem:[#allocation0]]
  $region62: #{tpu_custom_call.1} parent=0
    _
  %s12 = ssub.s32 1, %s10
  %s13 = scalar_select 0, %s12, %s10
  %v14 = vstv %s8
  %15 = vst [vmem:[#allocation2] sm:$0x1] %v14
  $region1: #{tpu_custom_call.1} parent=0
    #allocation3 [shape = 'u8[229376]{0}', space=vmem, size = 0x38000, scoped, tag = 'input window, operand 0, single buffered']
    #allocation4 [shape = 's32[1]{0}', space=sflag, size = 0x4, scoped, tag = 'scoped memory for tpu_custom_call.1']
    #allocation5 [shape = 's32[1]{0}', space=sflag, size = 0x4, scoped, tag = 'scoped memory for tpu_custom_call.1']
    #allocation6 [shape = 'u8[1835008]{0}', space=vmem, size = 0x1c0000, scoped, tag = 'input window, operand 1, single buffered']
    #allocation7 [shape = 's32[1]{0}', space=sflag, size = 0x4, scoped, tag = 'scoped memory for tpu_custom_call.1']
    #allocation8 [shape = 'u8[1048576]{0}', space=vmem, size = 0x100000, scoped, tag = 'input window, operand 3, single buffered']
    #allocation9 [shape = 'u8[262144]{0}', space=vmem, size = 0x40000, scoped, tag = 'input window, operand 5, single buffered']
    #allocation10 [shape = 's32[1]{0}', space=sflag, size = 0x4, scoped, tag = 'scoped memory for tpu_custom_call.1']
    #allocation11 [shape = 'u8[512]{0}', space=vmem, size = 0x400, scoped, tag = 'output window, operand 0, single buffered']
    %16 = vsyncpa [#allocation4], 0
    %17 = vsyncpa [#allocation7], 0
    %18 = vsyncpa [#allocation10], 0
    %19 = vsyncpa [#allocation5], 0
    // Predicated region
    $region2: #{tpu_custom_call.1} parent=1 // pred_check
      _
    $region3: #{tpu_custom_call.1} parent=1 // pred_check_branch
      %21 = sbr.rel (0) target = $region5
    $region4: #{tpu_custom_call.1} parent=1 // pred_region
      %s23 = ssub.s32 7168, 7168
      %24 = vsyncadd [#allocation4], %s23
      %s25 = sshll.u32 [#allocation3], 4
      %s26 = int_to_ptr.vmem [resolvable:$true] %s25
      %31 = dma.hbm_to_vmem [thread:$0]  %s0, 7168, %s26, [#allocation4], 448, 448, 28
    $region5: #{tpu_custom_call.1} parent=1 // pred_fallthru
      _
    // Predicated region
    $region6: #{tpu_custom_call.1} parent=1 // pred_check
      _
    $region7: #{tpu_custom_call.1} parent=1 // pred_check_branch
      %33 = sbr.rel (0) target = $region9
    $region8: #{tpu_custom_call.1} parent=1 // pred_region
      %s35 = ssub.s32 57344, 57344
      %36 = vsyncadd [#allocation7], %s35
      %s37 = sshll.u32 [#allocation6], 4
      %s38 = int_to_ptr.vmem [resolvable:$true] %s37
      %43 = dma.hbm_to_vmem [thread:$0]  %s1, 57344, %s38, [#allocation7], 448, 448, 28
    $region9: #{tpu_custom_call.1} parent=1 // pred_fallthru
      _
    // Predicated region
    $region10: #{tpu_custom_call.1} parent=1 // pred_check
      _
    $region11: #{tpu_custom_call.1} parent=1 // pred_check_branch
      %45 = sbr.rel (0) target = $region13
    $region12: #{tpu_custom_call.1} parent=1 // pred_region
      _
    $region13: #{tpu_custom_call.1} parent=1 // pred_fallthru
      _
    // Predicated region
    $region14: #{tpu_custom_call.1} parent=1 // pred_check
      _
    $region15: #{tpu_custom_call.1} parent=1 // pred_check_branch
      %47 = sbr.rel (0) target = $region17
    $region16: #{tpu_custom_call.1} parent=1 // pred_region
      %s49 = ssub.s32 32768, 32768
      %50 = vsyncadd [#allocation7], %s49
      %s51 = sshll.u32 [#allocation8], 4
      %s52 = int_to_ptr.vmem [resolvable:$true] %s51
      %57 = dma.hbm_to_vmem [thread:$0]  %s3, 32768, %s52, [#allocation7], 512, 512, 32
    $region17: #{tpu_custom_call.1} parent=1 // pred_fallthru
      _
    // Predicated region
    $region18: #{tpu_custom_call.1} parent=1 // pred_check
      _
    $region19: #{tpu_custom_call.1} parent=1 // pred_check_branch
      %59 = sbr.rel (0) target = $region21
    $region20: #{tpu_custom_call.1} parent=1 // pred_region
      _
    $region21: #{tpu_custom_call.1} parent=1 // pred_fallthru
      _
    // Predicated region
    $region22: #{tpu_custom_call.1} parent=1 // pred_check
      _
    $region23: #{tpu_custom_call.1} parent=1 // pred_check_branch
      %61 = sbr.rel (0) target = $region25
    $region24: #{tpu_custom_call.1} parent=1 // pred_region
      %s63 = ssub.s32 8192, 8192
      %64 = vsyncadd [#allocation10], %s63
      %s65 = sshll.u32 [#allocation9], 4
      %s66 = int_to_ptr.vmem [resolvable:$true] %s65
      %71 = dma.hbm_to_vmem [thread:$0]  %s5, 8192, %s66, [#allocation10], 256, 256, 16
    $region25: #{tpu_custom_call.1} parent=1 // pred_fallthru
      _
    // Predicated region
    $region26: #{tpu_custom_call.1} parent=1 // pred_check
      _
    $region27: #{tpu_custom_call.1} parent=1 // pred_check_branch
      %73 = sbr.rel (0) target = $region29
    $region28: #{tpu_custom_call.1} parent=1 // pred_region
      _
    $region29: #{tpu_custom_call.1} parent=1 // pred_fallthru
      _
    // Predicated region
    $region30: #{tpu_custom_call.1} parent=1 // pred_check
      _
    $region31: #{tpu_custom_call.1} parent=1 // pred_check_branch
      %75 = sbr.rel (0) target = $region33
    $region32: #{tpu_custom_call.1} parent=1 // pred_region
      _
    $region33: #{tpu_custom_call.1} parent=1 // pred_fallthru
      _
    // Predicated region
    $region34: #{tpu_custom_call.1} parent=1 // pred_check
      _
    $region35: #{tpu_custom_call.1} parent=1 // pred_check_branch
      %77 = sbr.rel (0) target = $region37
    $region36: #{tpu_custom_call.1} parent=1 // pred_region
      _
    $region37: #{tpu_custom_call.1} parent=1 // pred_fallthru
      _
    // Predicated region
    $region38: #{tpu_custom_call.1} parent=1 // pred_check
      _
    $region39: #{tpu_custom_call.1} parent=1 // pred_check_branch
      %79 = sbr.rel (0) target = $region41
    $region40: #{tpu_custom_call.1} parent=1 // pred_region
      %80 = dma.done [#allocation4], 7168
    $region41: #{tpu_custom_call.1} parent=1 // pred_fallthru
      _
    // Predicated region
    $region42: #{tpu_custom_call.1} parent=1 // pred_check
      _
    $region43: #{tpu_custom_call.1} parent=1 // pred_check_branch
      %82 = sbr.rel (0) target = $region45
    $region44: #{tpu_custom_call.1} parent=1 // pred_region
      %83 = dma.done [#allocation7], 57344
    $region45: #{tpu_custom_call.1} parent=1 // pred_fallthru
      _
    // Predicated region
    $region46: #{tpu_custom_call.1} parent=1 // pred_check
      _
    $region47: #{tpu_custom_call.1} parent=1 // pred_check_branch
      %85 = sbr.rel (0) target = $region49
    $region48: #{tpu_custom_call.1} parent=1 // pred_region
      %86 = dma.done [#allocation7], 32768
    $region49: #{tpu_custom_call.1} parent=1 // pred_fallthru
      _
    // Predicated region
    $region50: #{tpu_custom_call.1} parent=1 // pred_check
      _
    $region51: #{tpu_custom_call.1} parent=1 // pred_check_branch
      %88 = sbr.rel (0) target = $region53
    $region52: #{tpu_custom_call.1} parent=1 // pred_region
      %89 = dma.done [#allocation10], 8192
    $region53: #{tpu_custom_call.1} parent=1 // pred_fallthru
      _
    %v91 = vld [vmem:[#allocation3] sm:$0xff]
    %v92 = vld [vmem:[#allocation3 + $0x8] sm:$0xff]
    %v93 = vld [vmem:[#allocation3 + $0x10] sm:$0xff]
    %v94 = vld [vmem:[#allocation3 + $0x18] sm:$0xf]
    %v95 = vld [vmem:[#allocation3 + $0x1c] sm:$0xff]
    %v96 = vld [vmem:[#allocation3 + $0x24] sm:$0xff]
    %v97 = vld [vmem:[#allocation3 + $0x2c] sm:$0xff]
    %v98 = vld [vmem:[#allocation3 + $0x34] sm:$0xf]
    %v99 = vld [vmem:[#allocation3 + $0x38] sm:$0xff]
    %v100 = vld [vmem:[#allocation3 + $0x40] sm:$0xff]
    %v101 = vld [vmem:[#allocation3 + $0x48] sm:$0xff]
    %v102 = vld [vmem:[#allocation3 + $0x50] sm:$0xf]
    %v103 = vld [vmem:[#allocation3 + $0x54] sm:$0xff]
    %v104 = vld [vmem:[#allocation3 + $0x5c] sm:$0xff]
    %v105 = vld [vmem:[#allocation3 + $0x64] sm:$0xff]
    %v106 = vld [vmem:[#allocation3 + $0x6c] sm:$0xf]
    %v107 = vld [vmem:[#allocation3 + $0x70] sm:$0xff]
    %v108 = vld [vmem:[#allocation3 + $0x78] sm:$0xff]
    %v109 = vld [vmem:[#allocation3 + $0x80] sm:$0xff]
    %v110 = vld [vmem:[#allocation3 + $0x88] sm:$0xf]
    %v111 = vld [vmem:[#allocation3 + $0x8c] sm:$0xff]
    %v112 = vld [vmem:[#allocation3 + $0x94] sm:$0xff]
    %v113 = vld [vmem:[#allocation3 + $0x9c] sm:$0xff]
    %v114 = vld [vmem:[#allocation3 + $0xa4] sm:$0xf]
    %v115 = vld [vmem:[#allocation3 + $0xa8] sm:$0xff]
    %v116 = vld [vmem:[#allocation3 + $0xb0] sm:$0xff]
    %v117 = vld [vmem:[#allocation3 + $0xb8] sm:$0xff]
    %v118 = vld [vmem:[#allocation3 + $0xc0] sm:$0xf]
    %v119 = vld [vmem:[#allocation3 + $0xc4] sm:$0xff]
    %v120 = vld [vmem:[#allocation3 + $0xcc] sm:$0xff]
    %v121 = vld [vmem:[#allocation3 + $0xd4] sm:$0xff]
    %v122 = vld [vmem:[#allocation3 + $0xdc] sm:$0xf]
    %v123 = vld [vmem:[#allocation3 + $0xe0] sm:$0xff]
    %v124 = vld [vmem:[#allocation3 + $0xe8] sm:$0xff]
    %v125 = vld [vmem:[#allocation3 + $0xf0] sm:$0xff]
    %v126 = vld [vmem:[#allocation3 + $0xf8] sm:$0xf]
    %v127 = vld [vmem:[#allocation3 + $0xfc] sm:$0xff]
    %v128 = vld [vmem:[#allocation3 + $0x104] sm:$0xff]
    %v129 = vld [vmem:[#allocation3 + $0x10c] sm:$0xff]
    %v130 = vld [vmem:[#allocation3 + $0x114] sm:$0xf]
    %v131 = vld [vmem:[#allocation3 + $0x118] sm:$0xff]
    %v132 = vld [vmem:[#allocation3 + $0x120] sm:$0xff]
    %v133 = vld [vmem:[#allocation3 + $0x128] sm:$0xff]
    %v134 = vld [vmem:[#allocation3 + $0x130] sm:$0xf]
    %v135 = vld [vmem:[#allocation3 + $0x134] sm:$0xff]
    %v136 = vld [vmem:[#allocation3 + $0x13c] sm:$0xff]
    %v137 = vld [vmem:[#allocation3 + $0x144] sm:$0xff]
    %v138 = vld [vmem:[#allocation3 + $0x14c] sm:$0xf]
    %v139 = vld [vmem:[#allocation3 + $0x150] sm:$0xff]
    %v140 = vld [vmem:[#allocation3 + $0x158] sm:$0xff]
    %v141 = vld [vmem:[#allocation3 + $0x160] sm:$0xff]
    %v142 = vld [vmem:[#allocation3 + $0x168] sm:$0xf]
    %v143 = vld [vmem:[#allocation3 + $0x16c] sm:$0xff]
    %v144 = vld [vmem:[#allocation3 + $0x174] sm:$0xff]
    %v145 = vld [vmem:[#allocation3 + $0x17c] sm:$0xff]
    %v146 = vld [vmem:[#allocation3 + $0x184] sm:$0xf]
    %v147 = vld [vmem:[#allocation3 + $0x188] sm:$0xff]
    %v148 = vld [vmem:[#allocation3 + $0x190] sm:$0xff]
    %v149 = vld [vmem:[#allocation3 + $0x198] sm:$0xff]
    %v150 = vld [vmem:[#allocation3 + $0x1a0] sm:$0xf]
    %v151 = vld [vmem:[#allocation3 + $0x1a4] sm:$0xff]
    %v152 = vld [vmem:[#allocation3 + $0x1ac] sm:$0xff]
    %v153 = vld [vmem:[#allocation3 + $0x1b4] sm:$0xff]
    %v154 = vld [vmem:[#allocation3 + $0x1bc] sm:$0xf]
    %v155 = vld [vmem:[#allocation6] sm:$0xff]
    %v156 = vld [vmem:[#allocation6 + $0x8] sm:$0xff]
    %v157 = vld [vmem:[#allocation6 + $0x10] sm:$0xff]
    %v158 = vld [vmem:[#allocation6 + $0x18] sm:$0xf]
    %v159 = vld [vmem:[#allocation6 + $0x1c] sm:$0xff]
    %v160 = vld [vmem:[#allocation6 + $0x24] sm:$0xff]
    %v161 = vld [vmem:[#allocation6 + $0x2c] sm:$0xff]
    %v162 = vld [vmem:[#allocation6 + $0x34] sm:$0xf]
    %v163 = vld [vmem:[#allocation6 + $0x38] sm:$0xff]
    %v164 = vld [vmem:[#allocation6 + $0x40] sm:$0xff]
    %v165 = vld [vmem:[#allocation6 + $0x48] sm:$0xff]
    %v166 = vld [vmem:[#allocation6 + $0x50] sm:$0xf]
    %v167 = vld [vmem:[#allocation6 + $0x54] sm:$0xff]
    %v168 = vld [vmem:[#allocation6 + $0x5c] sm:$0xff]
    %v169 = vld [vmem:[#allocation6 + $0x64] sm:$0xff]
    %v170 = vld [vmem:[#allocation6 + $0x6c] sm:$0xf]
    %v171 = vld [vmem:[#allocation6 + $0x70] sm:$0xff]
    %v172 = vld [vmem:[#allocation6 + $0x78] sm:$0xff]
    %v173 = vld [vmem:[#allocation6 + $0x80] sm:$0xff]
    %v174 = vld [vmem:[#allocation6 + $0x88] sm:$0xf]
    %v175 = vld [vmem:[#allocation6 + $0x8c] sm:$0xff]
    %v176 = vld [vmem:[#allocation6 + $0x94] sm:$0xff]
    %v177 = vld [vmem:[#allocation6 + $0x9c] sm:$0xff]
    %v178 = vld [vmem:[#allocation6 + $0xa4] sm:$0xf]
    %v179 = vld [vmem:[#allocation6 + $0xa8] sm:$0xff]
    %v180 = vld [vmem:[#allocation6 + $0xb0] sm:$0xff]
    %v181 = vld [vmem:[#allocation6 + $0xb8] sm:$0xff]
    %v182 = vld [vmem:[#allocation6 + $0xc0] sm:$0xf]
    %v183 = vld [vmem:[#allocation6 + $0xc4] sm:$0xff]
    %v184 = vld [vmem:[#allocation6 + $0xcc] sm:$0xff]
    %v185 = vld [vmem:[#allocation6 + $0xd4] sm:$0xff]
    %v186 = vld [vmem:[#allocation6 + $0xdc] sm:$0xf]
    %v187 = vld [vmem:[#allocation6 + $0xe0] sm:$0xff]
    %v188 = vld [vmem:[#allocation6 + $0xe8] sm:$0xff]
    %v189 = vld [vmem:[#allocation6 + $0xf0] sm:$0xff]
    %v190 = vld [vmem:[#allocation6 + $0xf8] sm:$0xf]
    %v191 = vld [vmem:[#allocation6 + $0xfc] sm:$0xff]
    %v192 = vld [vmem:[#allocation6 + $0x104] sm:$0xff]
    %v193 = vld [vmem:[#allocation6 + $0x10c] sm:$0xff]
    %v194 = vld [vmem:[#allocation6 + $0x114] sm:$0xf]
    %v195 = vld [vmem:[#allocation6 + $0x118] sm:$0xff]
    %v196 = vld [vmem:[#allocation6 + $0x120] sm:$0xff]
    %v197 = vld [vmem:[#allocation6 + $0x128] sm:$0xff]
    %v198 = vld [vmem:[#allocation6 + $0x130] sm:$0xf]
    %v199 = vld [vmem:[#allocation6 + $0x134] sm:$0xff]
    %v200 = vld [vmem:[#allocation6 + $0x13c] sm:$0xff]
    %v201 = vld [vmem:[#allocation6 + $0x144] sm:$0xff]
    %v202 = vld [vmem:[#allocation6 + $0x14c] sm:$0xf]
    %v203 = vld [vmem:[#allocation6 + $0x150] sm:$0xff]
    %v204 = vld [vmem:[#allocation6 + $0x158] sm:$0xff]
    %v205 = vld [vmem:[#allocation6 + $0x160] sm:$0xff]
    %v206 = vld [vmem:[#allocation6 + $0x168] sm:$0xf]
    %v207 = vld [vmem:[#allocation6 + $0x16c] sm:$0xff]
    %v208 = vld [vmem:[#allocation6 + $0x174] sm:$0xff]
    %v209 = vld [vmem:[#allocation6 + $0x17c] sm:$0xff]
    %v210 = vld [vmem:[#allocation6 + $0x184] sm:$0xf]
    %v211 = vld [vmem:[#allocation6 + $0x188] sm:$0xff]
    %v212 = vld [vmem:[#allocation6 + $0x190] sm:$0xff]
    %v213 = vld [vmem:[#allocation6 + $0x198] sm:$0xff]
    %v214 = vld [vmem:[#allocation6 + $0x1a0] sm:$0xf]
    %v215 = vld [vmem:[#allocation6 + $0x1a4] sm:$0xff]
    %v216 = vld [vmem:[#allocation6 + $0x1ac] sm:$0xff]
    %v217 = vld [vmem:[#allocation6 + $0x1b4] sm:$0xff]
    %v218 = vld [vmem:[#allocation6 + $0x1bc] sm:$0xf]
    %v219 = vld [vmem:[#allocation6 + $0x1c0] sm:$0xff]
    %v220 = vld [vmem:[#allocation6 + $0x1c8] sm:$0xff]
    %v221 = vld [vmem:[#allocation6 + $0x1d0] sm:$0xff]
    %v222 = vld [vmem:[#allocation6 + $0x1d8] sm:$0xf]
    %v223 = vld [vmem:[#allocation6 + $0x1dc] sm:$0xff]
    %v224 = vld [vmem:[#allocation6 + $0x1e4] sm:$0xff]
    %v225 = vld [vmem:[#allocation6 + $0x1ec] sm:$0xff]
    %v226 = vld [vmem:[#allocation6 + $0x1f4] sm:$0xf]
    %v227 = vld [vmem:[#allocation6 + $0x1f8] sm:$0xff]
    %v228 = vld [vmem:[#allocation6 + $0x200] sm:$0xff]
    %v229 = vld [vmem:[#allocation6 + $0x208] sm:$0xff]
    %v230 = vld [vmem:[#allocation6 + $0x210] sm:$0xf]
    %v231 = vld [vmem:[#allocation6 + $0x214] sm:$0xff]
    %v232 = vld [vmem:[#allocation6 + $0x21c] sm:$0xff]
    %v233 = vld [vmem:[#allocation6 + $0x224] sm:$0xff]
    %v234 = vld [vmem:[#allocation6 + $0x22c] sm:$0xf]
    %v235 = vld [vmem:[#allocation6 + $0x230] sm:$0xff]
    %v236 = vld [vmem:[#allocation6 + $0x238] sm:$0xff]
    %v237 = vld [vmem:[#allocation6 + $0x240] sm:$0xff]
    %v238 = vld [vmem:[#allocation6 + $0x248] sm:$0xf]
    %v239 = vld [vmem:[#allocation6 + $0x24c] sm:$0xff]
    %v240 = vld [vmem:[#allocation6 + $0x254] sm:$0xff]
    %v241 = vld [vmem:[#allocation6 + $0x25c] sm:$0xff]
    %v242 = vld [vmem:[#allocation6 + $0x264] sm:$0xf]
    %v243 = vld [vmem:[#allocation6 + $0x268] sm:$0xff]
    %v244 = vld [vmem:[#allocation6 + $0x270] sm:$0xff]
    %v245 = vld [vmem:[#allocation6 + $0x278] sm:$0xff]
    %v246 = vld [vmem:[#allocation6 + $0x280] sm:$0xf]
    %v247 = vld [vmem:[#allocation6 + $0x284] sm:$0xff]
    %v248 = vld [vmem:[#allocation6 + $0x28c] sm:$0xff]
    %v249 = vld [vmem:[#allocation6 + $0x294] sm:$0xff]
    %v250 = vld [vmem:[#allocation6 + $0x29c] sm:$0xf]
    %v251 = vld [vmem:[#allocation6 + $0x2a0] sm:$0xff]
    %v252 = vld [vmem:[#allocation6 + $0x2a8] sm:$0xff]
    %v253 = vld [vmem:[#allocation6 + $0x2b0] sm:$0xff]
    %v254 = vld [vmem:[#allocation6 + $0x2b8] sm:$0xf]
    %v255 = vld [vmem:[#allocation6 + $0x2bc] sm:$0xff]
    %v256 = vld [vmem:[#allocation6 + $0x2c4] sm:$0xff]
    %v257 = vld [vmem:[#allocation6 + $0x2cc] sm:$0xff]
    %v258 = vld [vmem:[#allocation6 + $0x2d4] sm:$0xf]
    %v259 = vld [vmem:[#allocation6 + $0x2d8] sm:$0xff]
    %v260 = vld [vmem:[#allocation6 + $0x2e0] sm:$0xff]
    %v261 = vld [vmem:[#allocation6 + $0x2e8] sm:$0xff]
    %v262 = vld [vmem:[#allocation6 + $0x2f0] sm:$0xf]
    %v263 = vld [vmem:[#allocation6 + $0x2f4] sm:$0xff]
    %v264 = vld [vmem:[#allocation6 + $0x2fc] sm:$0xff]
    %v265 = vld [vmem:[#allocation6 + $0x304] sm:$0xff]
    %v266 = vld [vmem:[#allocation6 + $0x30c] sm:$0xf]
    %v267 = vld [vmem:[#allocation6 + $0x310] sm:$0xff]
    %v268 = vld [vmem:[#allocation6 + $0x318] sm:$0xff]
    %v269 = vld [vmem:[#allocation6 + $0x320] sm:$0xff]
    %v270 = vld [vmem:[#allocation6 + $0x328] sm:$0xf]
    %v271 = vld [vmem:[#allocation6 + $0x32c] sm:$0xff]
    %v272 = vld [vmem:[#allocation6 + $0x334] sm:$0xff]
    %v273 = vld [vmem:[#allocation6 + $0x33c] sm:$0xff]
    %v274 = vld [vmem:[#allocation6 + $0x344] sm:$0xf]
    %v275 = vld [vmem:[#allocation6 + $0x348] sm:$0xff]
    %v276 = vld [vmem:[#allocation6 + $0x350] sm:$0xff]
    %v277 = vld [vmem:[#allocation6 + $0x358] sm:$0xff]
    %v278 = vld [vmem:[#allocation6 + $0x360] sm:$0xf]
    %v279 = vld [vmem:[#allocation6 + $0x364] sm:$0xff]
    %v280 = vld [vmem:[#allocation6 + $0x36c] sm:$0xff]
    %v281 = vld [vmem:[#allocation6 + $0x374] sm:$0xff]
    %v282 = vld [vmem:[#allocation6 + $0x37c] sm:$0xf]
    %v283 = vld [vmem:[#allocation6 + $0x380] sm:$0xff]
    %v284 = vld [vmem:[#allocation6 + $0x388] sm:$0xff]
    %v285 = vld [vmem:[#allocation6 + $0x390] sm:$0xff]
    %v286 = vld [vmem:[#allocation6 + $0x398] sm:$0xf]
    %v287 = vld [vmem:[#allocation6 + $0x39c] sm:$0xff]
    %v288 = vld [vmem:[#allocation6 + $0x3a4] sm:$0xff]
    %v289 = vld [vmem:[#allocation6 + $0x3ac] sm:$0xff]
    %v290 = vld [vmem:[#allocation6 + $0x3b4] sm:$0xf]
    %v291 = vld [vmem:[#allocation6 + $0x3b8] sm:$0xff]
    %v292 = vld [vmem:[#allocation6 + $0x3c0] sm:$0xff]
    %v293 = vld [vmem:[#allocation6 + $0x3c8] sm:$0xff]
    %v294 = vld [vmem:[#allocation6 + $0x3d0] sm:$0xf]
    %v295 = vld [vmem:[#allocation6 + $0x3d4] sm:$0xff]
    %v296 = vld [vmem:[#allocation6 + $0x3dc] sm:$0xff]
    %v297 = vld [vmem:[#allocation6 + $0x3e4] sm:$0xff]
    %v298 = vld [vmem:[#allocation6 + $0x3ec] sm:$0xf]
    %v299 = vld [vmem:[#allocation6 + $0x3f0] sm:$0xff]
    %v300 = vld [vmem:[#allocation6 + $0x3f8] sm:$0xff]
    %v301 = vld [vmem:[#allocation6 + $0x400] sm:$0xff]
    %v302 = vld [vmem:[#allocation6 + $0x408] sm:$0xf]
    %v303 = vld [vmem:[#allocation6 + $0x40c] sm:$0xff]
    %v304 = vld [vmem:[#allocation6 + $0x414] sm:$0xff]
    %v305 = vld [vmem:[#allocation6 + $0x41c] sm:$0xff]
    %v306 = vld [vmem:[#allocation6 + $0x424] sm:$0xf]
    %v307 = vld [vmem:[#allocation6 + $0x428] sm:$0xff]
    %v308 = vld [vmem:[#allocation6 + $0x430] sm:$0xff]
    %v309 = vld [vmem:[#allocation6 + $0x438] sm:$0xff]
    %v310 = vld [vmem:[#allocation6 + $0x440] sm:$0xf]
    %v311 = vld [vmem:[#allocation6 + $0x444] sm:$0xff]
    %v312 = vld [vmem:[#allocation6 + $0x44c] sm:$0xff]
    %v313 = vld [vmem:[#allocation6 + $0x454] sm:$0xff]
    %v314 = vld [vmem:[#allocation6 + $0x45c] sm:$0xf]
    %v315 = vld [vmem:[#allocation6 + $0x460] sm:$0xff]
    %v316 = vld [vmem:[#allocation6 + $0x468] sm:$0xff]
    %v317 = vld [vmem:[#allocation6 + $0x470] sm:$0xff]
    %v318 = vld [vmem:[#allocation6 + $0x478] sm:$0xf]
    %v319 = vld [vmem:[#allocation6 + $0x47c] sm:$0xff]
    %v320 = vld [vmem:[#allocation6 + $0x484] sm:$0xff]
    %v321 = vld [vmem:[#allocation6 + $0x48c] sm:$0xff]
    %v322 = vld [vmem:[#allocation6 + $0x494] sm:$0xf]
    %v323 = vld [vmem:[#allocation6 + $0x498] sm:$0xff]
    %v324 = vld [vmem:[#allocation6 + $0x4a0] sm:$0xff]
    %v325 = vld [vmem:[#allocation6 + $0x4a8] sm:$0xff]
    %v326 = vld [vmem:[#allocation6 + $0x4b0] sm:$0xf]
    %v327 = vld [vmem:[#allocation6 + $0x4b4] sm:$0xff]
    %v328 = vld [vmem:[#allocation6 + $0x4bc] sm:$0xff]
    %v329 = vld [vmem:[#allocation6 + $0x4c4] sm:$0xff]
    %v330 = vld [vmem:[#allocation6 + $0x4cc] sm:$0xf]
    %v331 = vld [vmem:[#allocation6 + $0x4d0] sm:$0xff]
    %v332 = vld [vmem:[#allocation6 + $0x4d8] sm:$0xff]
    %v333 = vld [vmem:[#allocation6 + $0x4e0] sm:$0xff]
    %v334 = vld [vmem:[#allocation6 + $0x4e8] sm:$0xf]
    %v335 = vld [vmem:[#allocation6 + $0x4ec] sm:$0xff]
    %v336 = vld [vmem:[#allocation6 + $0x4f4] sm:$0xff]
    %v337 = vld [vmem:[#allocation6 + $0x4fc] sm:$0xff]
    %v338 = vld [vmem:[#allocation6 + $0x504] sm:$0xf]
    %v339 = vld [vmem:[#allocation6 + $0x508] sm:$0xff]
    %v340 = vld [vmem:[#allocation6 + $0x510] sm:$0xff]
    %v341 = vld [vmem:[#allocation6 + $0x518] sm:$0xff]
    %v342 = vld [vmem:[#allocation6 + $0x520] sm:$0xf]
    %v343 = vld [vmem:[#allocation6 + $0x524] sm:$0xff]
    %v344 = vld [vmem:[#allocation6 + $0x52c] sm:$0xff]
    %v345 = vld [vmem:[#allocation6 + $0x534] sm:$0xff]
    %v346 = vld [vmem:[#allocation6 + $0x53c] sm:$0xf]
    %v347 = vld [vmem:[#allocation6 + $0x540] sm:$0xff]
    %v348 = vld [vmem:[#allocation6 + $0x548] sm:$0xff]
    %v349 = vld [vmem:[#allocation6 + $0x550] sm:$0xff]
    %v350 = vld [vmem:[#allocation6 + $0x558] sm:$0xf]
    %v351 = vld [vmem:[#allocation6 + $0x55c] sm:$0xff]
    %v352 = vld [vmem:[#allocation6 + $0x564] sm:$0xff]
    %v353 = vld [vmem:[#allocation6 + $0x56c] sm:$0xff]
    %v354 = vld [vmem:[#allocation6 + $0x574] sm:$0xf]
    %v355 = vld [vmem:[#allocation6 + $0x578] sm:$0xff]
    %v356 = vld [vmem:[#allocation6 + $0x580] sm:$0xff]
    %v357 = vld [vmem:[#allocation6 + $0x588] sm:$0xff]
    %v358 = vld [vmem:[#allocation6 + $0x590] sm:$0xf]
    %v359 = vld [vmem:[#allocation6 + $0x594] sm:$0xff]
    %v360 = vld [vmem:[#allocation6 + $0x59c] sm:$0xff]
    %v361 = vld [vmem:[#allocation6 + $0x5a4] sm:$0xff]
    %v362 = vld [vmem:[#allocation6 + $0x5ac] sm:$0xf]
    %v363 = vld [vmem:[#allocation6 + $0x5b0] sm:$0xff]
    %v364 = vld [vmem:[#allocation6 + $0x5b8] sm:$0xff]
    %v365 = vld [vmem:[#allocation6 + $0x5c0] sm:$0xff]
    %v366 = vld [vmem:[#allocation6 + $0x5c8] sm:$0xf]
    %v367 = vld [vmem:[#allocation6 + $0x5cc] sm:$0xff]
    %v368 = vld [vmem:[#allocation6 + $0x5d4] sm:$0xff]
    %v369 = vld [vmem:[#allocation6 + $0x5dc] sm:$0xff]
    %v370 = vld [vmem:[#allocation6 + $0x5e4] sm:$0xf]
    %v371 = vld [vmem:[#allocation6 + $0x5e8] sm:$0xff]
    %v372 = vld [vmem:[#allocation6 + $0x5f0] sm:$0xff]
    %v373 = vld [vmem:[#allocation6 + $0x5f8] sm:$0xff]
    %v374 = vld [vmem:[#allocation6 + $0x600] sm:$0xf]
    %v375 = vld [vmem:[#allocation6 + $0x604] sm:$0xff]
    %v376 = vld [vmem:[#allocation6 + $0x60c] sm:$0xff]
    %v377 = vld [vmem:[#allocation6 + $0x614] sm:$0xff]
    %v378 = vld [vmem:[#allocation6 + $0x61c] sm:$0xf]
    %v379 = vld [vmem:[#allocation6 + $0x620] sm:$0xff]
    %v380 = vld [vmem:[#allocation6 + $0x628] sm:$0xff]
    %v381 = vld [vmem:[#allocation6 + $0x630] sm:$0xff]
    %v382 = vld [vmem:[#allocation6 + $0x638] sm:$0xf]
    %v383 = vld [vmem:[#allocation6 + $0x63c] sm:$0xff]
    %v384 = vld [vmem:[#allocation6 + $0x644] sm:$0xff]
    %v385 = vld [vmem:[#allocation6 + $0x64c] sm:$0xff]
    %v386 = vld [vmem:[#allocation6 + $0x654] sm:$0xf]
    %v387 = vld [vmem:[#allocation6 + $0x658] sm:$0xff]
    %v388 = vld [vmem:[#allocation6 + $0x660] sm:$0xff]
    %v389 = vld [vmem:[#allocation6 + $0x668] sm:$0xff]
    %v390 = vld [vmem:[#allocation6 + $0x670] sm:$0xf]
    %v391 = vld [vmem:[#allocation6 + $0x674] sm:$0xff]
    %v392 = vld [vmem:[#allocation6 + $0x67c] sm:$0xff]
    %v393 = vld [vmem:[#allocation6 + $0x684] sm:$0xff]
    %v394 = vld [vmem:[#allocation6 + $0x68c] sm:$0xf]
    %v395 = vld [vmem:[#allocation6 + $0x690] sm:$0xff]
    %v396 = vld [vmem:[#allocation6 + $0x698] sm:$0xff]
    %v397 = vld [vmem:[#allocation6 + $0x6a0] sm:$0xff]
    %v398 = vld [vmem:[#allocation6 + $0x6a8] sm:$0xf]
    %v399 = vld [vmem:[#allocation6 + $0x6ac] sm:$0xff]
    %v400 = vld [vmem:[#allocation6 + $0x6b4] sm:$0xff]
    %v401 = vld [vmem:[#allocation6 + $0x6bc] sm:$0xff]
    %v402 = vld [vmem:[#allocation6 + $0x6c4] sm:$0xf]
    %v403 = vld [vmem:[#allocation6 + $0x6c8] sm:$0xff]
    %v404 = vld [vmem:[#allocation6 + $0x6d0] sm:$0xff]
    %v405 = vld [vmem:[#allocation6 + $0x6d8] sm:$0xff]
    %v406 = vld [vmem:[#allocation6 + $0x6e0] sm:$0xf]
    %v407 = vld [vmem:[#allocation6 + $0x6e4] sm:$0xff]
    %v408 = vld [vmem:[#allocation6 + $0x6ec] sm:$0xff]
    %v409 = vld [vmem:[#allocation6 + $0x6f4] sm:$0xff]
    %v410 = vld [vmem:[#allocation6 + $0x6fc] sm:$0xf]
    %v411 = vld [vmem:[#allocation6 + $0x700] sm:$0xff]
    %v412 = vld [vmem:[#allocation6 + $0x708] sm:$0xff]
    %v413 = vld [vmem:[#allocation6 + $0x710] sm:$0xff]
    %v414 = vld [vmem:[#allocation6 + $0x718] sm:$0xf]
    %v415 = vld [vmem:[#allocation6 + $0x71c] sm:$0xff]
    %v416 = vld [vmem:[#allocation6 + $0x724] sm:$0xff]
    %v417 = vld [vmem:[#allocation6 + $0x72c] sm:$0xff]
    %v418 = vld [vmem:[#allocation6 + $0x734] sm:$0xf]
    %v419 = vld [vmem:[#allocation6 + $0x738] sm:$0xff]
    %v420 = vld [vmem:[#allocation6 + $0x740] sm:$0xff]
    %v421 = vld [vmem:[#allocation6 + $0x748] sm:$0xff]
    %v422 = vld [vmem:[#allocation6 + $0x750] sm:$0xf]
    %v423 = vld [vmem:[#allocation6 + $0x754] sm:$0xff]
    %v424 = vld [vmem:[#allocation6 + $0x75c] sm:$0xff]
    %v425 = vld [vmem:[#allocation6 + $0x764] sm:$0xff]
    %v426 = vld [vmem:[#allocation6 + $0x76c] sm:$0xf]
    %v427 = vld [vmem:[#allocation6 + $0x770] sm:$0xff]
    %v428 = vld [vmem:[#allocation6 + $0x778] sm:$0xff]
    %v429 = vld [vmem:[#allocation6 + $0x780] sm:$0xff]
    %v430 = vld [vmem:[#allocation6 + $0x788] sm:$0xf]
    %v431 = vld [vmem:[#allocation6 + $0x78c] sm:$0xff]
    %v432 = vld [vmem:[#allocation6 + $0x794] sm:$0xff]
    %v433 = vld [vmem:[#allocation6 + $0x79c] sm:$0xff]
    %v434 = vld [vmem:[#allocation6 + $0x7a4] sm:$0xf]
    %v435 = vld [vmem:[#allocation6 + $0x7a8] sm:$0xff]
    %v436 = vld [vmem:[#allocation6 + $0x7b0] sm:$0xff]
    %v437 = vld [vmem:[#allocation6 + $0x7b8] sm:$0xff]
    %v438 = vld [vmem:[#allocation6 + $0x7c0] sm:$0xf]
    %v439 = vld [vmem:[#allocation6 + $0x7c4] sm:$0xff]
    %v440 = vld [vmem:[#allocation6 + $0x7cc] sm:$0xff]
    %v441 = vld [vmem:[#allocation6 + $0x7d4] sm:$0xff]
    %v442 = vld [vmem:[#allocation6 + $0x7dc] sm:$0xf]
    %v443 = vld [vmem:[#allocation6 + $0x7e0] sm:$0xff]
    %v444 = vld [vmem:[#allocation6 + $0x7e8] sm:$0xff]
    %v445 = vld [vmem:[#allocation6 + $0x7f0] sm:$0xff]
    %v446 = vld [vmem:[#allocation6 + $0x7f8] sm:$0xf]
    %v447 = vld [vmem:[#allocation6 + $0x7fc] sm:$0xff]
    %v448 = vld [vmem:[#allocation6 + $0x804] sm:$0xff]
    %v449 = vld [vmem:[#allocation6 + $0x80c] sm:$0xff]
    %v450 = vld [vmem:[#allocation6 + $0x814] sm:$0xf]
    %v451 = vld [vmem:[#allocation6 + $0x818] sm:$0xff]
    %v452 = vld [vmem:[#allocation6 + $0x820] sm:$0xff]
    %v453 = vld [vmem:[#allocation6 + $0x828] sm:$0xff]
    %v454 = vld [vmem:[#allocation6 + $0x830] sm:$0xf]
    %v455 = vld [vmem:[#allocation6 + $0x834] sm:$0xff]
    %v456 = vld [vmem:[#allocation6 + $0x83c] sm:$0xff]
    %v457 = vld [vmem:[#allocation6 + $0x844] sm:$0xff]
    %v458 = vld [vmem:[#allocation6 + $0x84c] sm:$0xf]
    %v459 = vld [vmem:[#allocation6 + $0x850] sm:$0xff]
    %v460 = vld [vmem:[#allocation6 + $0x858] sm:$0xff]
    %v461 = vld [vmem:[#allocation6 + $0x860] sm:$0xff]
    %v462 = vld [vmem:[#allocation6 + $0x868] sm:$0xf]
    %v463 = vld [vmem:[#allocation6 + $0x86c] sm:$0xff]
    %v464 = vld [vmem:[#allocation6 + $0x874] sm:$0xff]
    %v465 = vld [vmem:[#allocation6 + $0x87c] sm:$0xff]
    %v466 = vld [vmem:[#allocation6 + $0x884] sm:$0xf]
    %v467 = vld [vmem:[#allocation6 + $0x888] sm:$0xff]
    %v468 = vld [vmem:[#allocation6 + $0x890] sm:$0xff]
    %v469 = vld [vmem:[#allocation6 + $0x898] sm:$0xff]
    %v470 = vld [vmem:[#allocation6 + $0x8a0] sm:$0xf]
    %v471 = vld [vmem:[#allocation6 + $0x8a4] sm:$0xff]
    %v472 = vld [vmem:[#allocation6 + $0x8ac] sm:$0xff]
    %v473 = vld [vmem:[#allocation6 + $0x8b4] sm:$0xff]
    %v474 = vld [vmem:[#allocation6 + $0x8bc] sm:$0xf]
    %v475 = vld [vmem:[#allocation6 + $0x8c0] sm:$0xff]
    %v476 = vld [vmem:[#allocation6 + $0x8c8] sm:$0xff]
    %v477 = vld [vmem:[#allocation6 + $0x8d0] sm:$0xff]
    %v478 = vld [vmem:[#allocation6 + $0x8d8] sm:$0xf]
    %v479 = vld [vmem:[#allocation6 + $0x8dc] sm:$0xff]
    %v480 = vld [vmem:[#allocation6 + $0x8e4] sm:$0xff]
    %v481 = vld [vmem:[#allocation6 + $0x8ec] sm:$0xff]
    %v482 = vld [vmem:[#allocation6 + $0x8f4] sm:$0xf]
    %v483 = vld [vmem:[#allocation6 + $0x8f8] sm:$0xff]
    %v484 = vld [vmem:[#allocation6 + $0x900] sm:$0xff]
    %v485 = vld [vmem:[#allocation6 + $0x908] sm:$0xff]
    %v486 = vld [vmem:[#allocation6 + $0x910] sm:$0xf]
    %v487 = vld [vmem:[#allocation6 + $0x914] sm:$0xff]
    %v488 = vld [vmem:[#allocation6 + $0x91c] sm:$0xff]
    %v489 = vld [vmem:[#allocation6 + $0x924] sm:$0xff]
    %v490 = vld [vmem:[#allocation6 + $0x92c] sm:$0xf]
    %v491 = vld [vmem:[#allocation6 + $0x930] sm:$0xff]
    %v492 = vld [vmem:[#allocation6 + $0x938] sm:$0xff]
    %v493 = vld [vmem:[#allocation6 + $0x940] sm:$0xff]
    %v494 = vld [vmem:[#allocation6 + $0x948] sm:$0xf]
    %v495 = vld [vmem:[#allocation6 + $0x94c] sm:$0xff]
    %v496 = vld [vmem:[#allocation6 + $0x954] sm:$0xff]
    %v497 = vld [vmem:[#allocation6 + $0x95c] sm:$0xff]
    %v498 = vld [vmem:[#allocation6 + $0x964] sm:$0xf]
    %v499 = vld [vmem:[#allocation6 + $0x968] sm:$0xff]
    %v500 = vld [vmem:[#allocation6 + $0x970] sm:$0xff]
    %v501 = vld [vmem:[#allocation6 + $0x978] sm:$0xff]
    %v502 = vld [vmem:[#allocation6 + $0x980] sm:$0xf]
    %v503 = vld [vmem:[#allocation6 + $0x984] sm:$0xff]
    %v504 = vld [vmem:[#allocation6 + $0x98c] sm:$0xff]
    %v505 = vld [vmem:[#allocation6 + $0x994] sm:$0xff]
    %v506 = vld [vmem:[#allocation6 + $0x99c] sm:$0xf]
    %v507 = vld [vmem:[#allocation6 + $0x9a0] sm:$0xff]
    %v508 = vld [vmem:[#allocation6 + $0x9a8] sm:$0xff]
    %v509 = vld [vmem:[#allocation6 + $0x9b0] sm:$0xff]
    %v510 = vld [vmem:[#allocation6 + $0x9b8] sm:$0xf]
    %v511 = vld [vmem:[#allocation6 + $0x9bc] sm:$0xff]
    %v512 = vld [vmem:[#allocation6 + $0x9c4] sm:$0xff]
    %v513 = vld [vmem:[#allocation6 + $0x9cc] sm:$0xff]
    %v514 = vld [vmem:[#allocation6 + $0x9d4] sm:$0xf]
    %v515 = vld [vmem:[#allocation6 + $0x9d8] sm:$0xff]
    %v516 = vld [vmem:[#allocation6 + $0x9e0] sm:$0xff]
    %v517 = vld [vmem:[#allocation6 + $0x9e8] sm:$0xff]
    %v518 = vld [vmem:[#allocation6 + $0x9f0] sm:$0xf]
    %v519 = vld [vmem:[#allocation6 + $0x9f4] sm:$0xff]
    %v520 = vld [vmem:[#allocation6 + $0x9fc] sm:$0xff]
    %v521 = vld [vmem:[#allocation6 + $0xa04] sm:$0xff]
    %v522 = vld [vmem:[#allocation6 + $0xa0c] sm:$0xf]
    %v523 = vld [vmem:[#allocation6 + $0xa10] sm:$0xff]
    %v524 = vld [vmem:[#allocation6 + $0xa18] sm:$0xff]
    %v525 = vld [vmem:[#allocation6 + $0xa20] sm:$0xff]
    %v526 = vld [vmem:[#allocation6 + $0xa28] sm:$0xf]
    %v527 = vld [vmem:[#allocation6 + $0xa2c] sm:$0xff]
    %v528 = vld [vmem:[#allocation6 + $0xa34] sm:$0xff]
    %v529 = vld [vmem:[#allocation6 + $0xa3c] sm:$0xff]
    %v530 = vld [vmem:[#allocation6 + $0xa44] sm:$0xf]
    %v531 = vld [vmem:[#allocation6 + $0xa48] sm:$0xff]
    %v532 = vld [vmem:[#allocation6 + $0xa50] sm:$0xff]
    %v533 = vld [vmem:[#allocation6 + $0xa58] sm:$0xff]
    %v534 = vld [vmem:[#allocation6 + $0xa60] sm:$0xf]
    %v535 = vld [vmem:[#allocation6 + $0xa64] sm:$0xff]
    %v536 = vld [vmem:[#allocation6 + $0xa6c] sm:$0xff]
    %v537 = vld [vmem:[#allocation6 + $0xa74] sm:$0xff]
    %v538 = vld [vmem:[#allocation6 + $0xa7c] sm:$0xf]
    %v539 = vld [vmem:[#allocation6 + $0xa80] sm:$0xff]
    %v540 = vld [vmem:[#allocation6 + $0xa88] sm:$0xff]
    %v541 = vld [vmem:[#allocation6 + $0xa90] sm:$0xff]
    %v542 = vld [vmem:[#allocation6 + $0xa98] sm:$0xf]
    %v543 = vld [vmem:[#allocation6 + $0xa9c] sm:$0xff]
    %v544 = vld [vmem:[#allocation6 + $0xaa4] sm:$0xff]
    %v545 = vld [vmem:[#allocation6 + $0xaac] sm:$0xff]
    %v546 = vld [vmem:[#allocation6 + $0xab4] sm:$0xf]
    %v547 = vld [vmem:[#allocation6 + $0xab8] sm:$0xff]
    %v548 = vld [vmem:[#allocation6 + $0xac0] sm:$0xff]
    %v549 = vld [vmem:[#allocation6 + $0xac8] sm:$0xff]
    %v550 = vld [vmem:[#allocation6 + $0xad0] sm:$0xf]
    %v551 = vld [vmem:[#allocation6 + $0xad4] sm:$0xff]
    %v552 = vld [vmem:[#allocation6 + $0xadc] sm:$0xff]
    %v553 = vld [vmem:[#allocation6 + $0xae4] sm:$0xff]
    %v554 = vld [vmem:[#allocation6 + $0xaec] sm:$0xf]
    %v555 = vld [vmem:[#allocation6 + $0xaf0] sm:$0xff]
    %v556 = vld [vmem:[#allocation6 + $0xaf8] sm:$0xff]
    %v557 = vld [vmem:[#allocation6 + $0xb00] sm:$0xff]
    %v558 = vld [vmem:[#allocation6 + $0xb08] sm:$0xf]
    %v559 = vld [vmem:[#allocation6 + $0xb0c] sm:$0xff]
    %v560 = vld [vmem:[#allocation6 + $0xb14] sm:$0xff]
    %v561 = vld [vmem:[#allocation6 + $0xb1c] sm:$0xff]
    %v562 = vld [vmem:[#allocation6 + $0xb24] sm:$0xf]
    %v563 = vld [vmem:[#allocation6 + $0xb28] sm:$0xff]
    %v564 = vld [vmem:[#allocation6 + $0xb30] sm:$0xff]
    %v565 = vld [vmem:[#allocation6 + $0xb38] sm:$0xff]
    %v566 = vld [vmem:[#allocation6 + $0xb40] sm:$0xf]
    %v567 = vld [vmem:[#allocation6 + $0xb44] sm:$0xff]
    %v568 = vld [vmem:[#allocation6 + $0xb4c] sm:$0xff]
    %v569 = vld [vmem:[#allocation6 + $0xb54] sm:$0xff]
    %v570 = vld [vmem:[#allocation6 + $0xb5c] sm:$0xf]
    %v571 = vld [vmem:[#allocation6 + $0xb60] sm:$0xff]
    %v572 = vld [vmem:[#allocation6 + $0xb68] sm:$0xff]
    %v573 = vld [vmem:[#allocation6 + $0xb70] sm:$0xff]
    %v574 = vld [vmem:[#allocation6 + $0xb78] sm:$0xf]
    %v575 = vld [vmem:[#allocation6 + $0xb7c] sm:$0xff]
    %v576 = vld [vmem:[#allocation6 + $0xb84] sm:$0xff]
    %v577 = vld [vmem:[#allocation6 + $0xb8c] sm:$0xff]
    %v578 = vld [vmem:[#allocation6 + $0xb94] sm:$0xf]
    %v579 = vld [vmem:[#allocation6 + $0xb98] sm:$0xff]
    %v580 = vld [vmem:[#allocation6 + $0xba0] sm:$0xff]
    %v581 = vld [vmem:[#allocation6 + $0xba8] sm:$0xff]
    %v582 = vld [vmem:[#allocation6 + $0xbb0] sm:$0xf]
    %v583 = vld [vmem:[#allocation6 + $0xbb4] sm:$0xff]
    %v584 = vld [vmem:[#allocation6 + $0xbbc] sm:$0xff]
    %v585 = vld [vmem:[#allocation6 + $0xbc4] sm:$0xff]
    %v586 = vld [vmem:[#allocation6 + $0xbcc] sm:$0xf]
    %v587 = vld [vmem:[#allocation6 + $0xbd0] sm:$0xff]
    %v588 = vld [vmem:[#allocation6 + $0xbd8] sm:$0xff]
    %v589 = vld [vmem:[#allocation6 + $0xbe0] sm:$0xff]
    %v590 = vld [vmem:[#allocation6 + $0xbe8] sm:$0xf]
    %v591 = vld [vmem:[#allocation6 + $0xbec] sm:$0xff]
    %v592 = vld [vmem:[#allocation6 + $0xbf4] sm:$0xff]
    %v593 = vld [vmem:[#allocation6 + $0xbfc] sm:$0xff]
    %v594 = vld [vmem:[#allocation6 + $0xc04] sm:$0xf]
    %v595 = vld [vmem:[#allocation6 + $0xc08] sm:$0xff]
    %v596 = vld [vmem:[#allocation6 + $0xc10] sm:$0xff]
    %v597 = vld [vmem:[#allocation6 + $0xc18] sm:$0xff]
    %v598 = vld [vmem:[#allocation6 + $0xc20] sm:$0xf]
    %v599 = vld [vmem:[#allocation6 + $0xc24] sm:$0xff]
    %v600 = vld [vmem:[#allocation6 + $0xc2c] sm:$0xff]
    %v601 = vld [vmem:[#allocation6 + $0xc34] sm:$0xff]
    %v602 = vld [vmem:[#allocation6 + $0xc3c] sm:$0xf]
    %v603 = vld [vmem:[#allocation6 + $0xc40] sm:$0xff]
    %v604 = vld [vmem:[#allocation6 + $0xc48] sm:$0xff]
    %v605 = vld [vmem:[#allocation6 + $0xc50] sm:$0xff]
    %v606 = vld [vmem:[#allocation6 + $0xc58] sm:$0xf]
    %v607 = vld [vmem:[#allocation6 + $0xc5c] sm:$0xff]
    %v608 = vld [vmem:[#allocation6 + $0xc64] sm:$0xff]
    %v609 = vld [vmem:[#allocation6 + $0xc6c] sm:$0xff]
    %v610 = vld [vmem:[#allocation6 + $0xc74] sm:$0xf]
    %v611 = vld [vmem:[#allocation6 + $0xc78] sm:$0xff]
    %v612 = vld [vmem:[#allocation6 + $0xc80] sm:$0xff]
    %v613 = vld [vmem:[#allocation6 + $0xc88] sm:$0xff]
    %v614 = vld [vmem:[#allocation6 + $0xc90] sm:$0xf]
    %v615 = vld [vmem:[#allocation6 + $0xc94] sm:$0xff]
    %v616 = vld [vmem:[#allocation6 + $0xc9c] sm:$0xff]
    %v617 = vld [vmem:[#allocation6 + $0xca4] sm:$0xff]
    %v618 = vld [vmem:[#allocation6 + $0xcac] sm:$0xf]
    %v619 = vld [vmem:[#allocation6 + $0xcb0] sm:$0xff]
    %v620 = vld [vmem:[#allocation6 + $0xcb8] sm:$0xff]
    %v621 = vld [vmem:[#allocation6 + $0xcc0] sm:$0xff]
    %v622 = vld [vmem:[#allocation6 + $0xcc8] sm:$0xf]
    %v623 = vld [vmem:[#allocation6 + $0xccc] sm:$0xff]
    %v624 = vld [vmem:[#allocation6 + $0xcd4] sm:$0xff]
    %v625 = vld [vmem:[#allocation6 + $0xcdc] sm:$0xff]
    %v626 = vld [vmem:[#allocation6 + $0xce4] sm:$0xf]
    %v627 = vld [vmem:[#allocation6 + $0xce8] sm:$0xff]
    %v628 = vld [vmem:[#allocation6 + $0xcf0] sm:$0xff]
    %v629 = vld [vmem:[#allocation6 + $0xcf8] sm:$0xff]
    %v630 = vld [vmem:[#allocation6 + $0xd00] sm:$0xf]
    %v631 = vld [vmem:[#allocation6 + $0xd04] sm:$0xff]
    %v632 = vld [vmem:[#allocation6 + $0xd0c] sm:$0xff]
    %v633 = vld [vmem:[#allocation6 + $0xd14] sm:$0xff]
    %v634 = vld [vmem:[#allocation6 + $0xd1c] sm:$0xf]
    %v635 = vld [vmem:[#allocation6 + $0xd20] sm:$0xff]
    %v636 = vld [vmem:[#allocation6 + $0xd28] sm:$0xff]
    %v637 = vld [vmem:[#allocation6 + $0xd30] sm:$0xff]
    %v638 = vld [vmem:[#allocation6 + $0xd38] sm:$0xf]
    %v639 = vld [vmem:[#allocation6 + $0xd3c] sm:$0xff]
    %v640 = vld [vmem:[#allocation6 + $0xd44] sm:$0xff]
    %v641 = vld [vmem:[#allocation6 + $0xd4c] sm:$0xff]
    %v642 = vld [vmem:[#allocation6 + $0xd54] sm:$0xf]
    %v643 = vld [vmem:[#allocation6 + $0xd58] sm:$0xff]
    %v644 = vld [vmem:[#allocation6 + $0xd60] sm:$0xff]
    %v645 = vld [vmem:[#allocation6 + $0xd68] sm:$0xff]
    %v646 = vld [vmem:[#allocation6 + $0xd70] sm:$0xf]
    %v647 = vld [vmem:[#allocation6 + $0xd74] sm:$0xff]
    %v648 = vld [vmem:[#allocation6 + $0xd7c] sm:$0xff]
    %v649 = vld [vmem:[#allocation6 + $0xd84] sm:$0xff]
    %v650 = vld [vmem:[#allocation6 + $0xd8c] sm:$0xf]
    %v651 = vld [vmem:[#allocation6 + $0xd90] sm:$0xff]
    %v652 = vld [vmem:[#allocation6 + $0xd98] sm:$0xff]
    %v653 = vld [vmem:[#allocation6 + $0xda0] sm:$0xff]
    %v654 = vld [vmem:[#allocation6 + $0xda8] sm:$0xf]
    %v655 = vld [vmem:[#allocation6 + $0xdac] sm:$0xff]
    %v656 = vld [vmem:[#allocation6 + $0xdb4] sm:$0xff]
    %v657 = vld [vmem:[#allocation6 + $0xdbc] sm:$0xff]
    %v658 = vld [vmem:[#allocation6 + $0xdc4] sm:$0xf]
    %v659 = vld [vmem:[#allocation6 + $0xdc8] sm:$0xff]
    %v660 = vld [vmem:[#allocation6 + $0xdd0] sm:$0xff]
    %v661 = vld [vmem:[#allocation6 + $0xdd8] sm:$0xff]
    %v662 = vld [vmem:[#allocation6 + $0xde0] sm:$0xf]
    %v663 = vld [vmem:[#allocation6 + $0xde4] sm:$0xff]
    %v664 = vld [vmem:[#allocation6 + $0xdec] sm:$0xff]
    %v665 = vld [vmem:[#allocation6 + $0xdf4] sm:$0xff]
    %v666 = vld [vmem:[#allocation6 + $0xdfc] sm:$0xf]
    %v667 = vld [vmem:[%s2] sm:$0xff]
    %v668 = vld [vmem:[%s2 + $0x8] sm:$0xff]
    %v669 = vld [vmem:[%s2 + $0x10] sm:$0xff]
    %v670 = vld [vmem:[%s2 + $0x18] sm:$0xff]
    %v671 = vld [vmem:[%s2 + $0x20] sm:$0xff]
    %v672 = vld [vmem:[%s2 + $0x28] sm:$0xff]
    %v673 = vld [vmem:[%s2 + $0x30] sm:$0xff]
    %v674 = vld [vmem:[%s2 + $0x38] sm:$0xff]
    %v675 = vld [vmem:[%s2 + $0x40] sm:$0xff]
    %v676 = vld [vmem:[%s2 + $0x48] sm:$0xff]
    %v677 = vld [vmem:[%s2 + $0x50] sm:$0xff]
    %v678 = vld [vmem:[%s2 + $0x58] sm:$0xff]
    %v679 = vld [vmem:[%s2 + $0x60] sm:$0xff]
    %v680 = vld [vmem:[%s2 + $0x68] sm:$0xff]
    %v681 = vld [vmem:[%s2 + $0x70] sm:$0xff]
    %v682 = vld [vmem:[%s2 + $0x78] sm:$0xff]
    %v683 = vld [vmem:[%s2 + $0x80] sm:$0xff]
    %v684 = vld [vmem:[%s2 + $0x88] sm:$0xff]
    %v685 = vld [vmem:[%s2 + $0x90] sm:$0xff]
    %v686 = vld [vmem:[%s2 + $0x98] sm:$0xff]
    %v687 = vld [vmem:[%s2 + $0xa0] sm:$0xff]
    %v688 = vld [vmem:[%s2 + $0xa8] sm:$0xff]
    %v689 = vld [vmem:[%s2 + $0xb0] sm:$0xff]
    %v690 = vld [vmem:[%s2 + $0xb8] sm:$0xff]
    %v691 = vld [vmem:[%s2 + $0xc0] sm:$0xff]
    %v692 = vld [vmem:[%s2 + $0xc8] sm:$0xff]
    %v693 = vld [vmem:[%s2 + $0xd0] sm:$0xff]
    %v694 = vld [vmem:[%s2 + $0xd8] sm:$0xff]
    %v695 = vld [vmem:[%s2 + $0xe0] sm:$0xff]
    %v696 = vld [vmem:[%s2 + $0xe8] sm:$0xff]
    %v697 = vld [vmem:[%s2 + $0xf0] sm:$0xff]
    %v698 = vld [vmem:[%s2 + $0xf8] sm:$0xff]
    %v699 = vld [vmem:[%s2 + $0x100] sm:$0xff]
    %v700 = vld [vmem:[%s2 + $0x108] sm:$0xff]
    %v701 = vld [vmem:[%s2 + $0x110] sm:$0xff]
    %v702 = vld [vmem:[%s2 + $0x118] sm:$0xff]
    %v703 = vld [vmem:[%s2 + $0x120] sm:$0xff]
    %v704 = vld [vmem:[%s2 + $0x128] sm:$0xff]
    %v705 = vld [vmem:[%s2 + $0x130] sm:$0xff]
    %v706 = vld [vmem:[%s2 + $0x138] sm:$0xff]
    %v707 = vld [vmem:[%s2 + $0x140] sm:$0xff]
    %v708 = vld [vmem:[%s2 + $0x148] sm:$0xff]
    %v709 = vld [vmem:[%s2 + $0x150] sm:$0xff]
    %v710 = vld [vmem:[%s2 + $0x158] sm:$0xff]
    %v711 = vld [vmem:[%s2 + $0x160] sm:$0xff]
    %v712 = vld [vmem:[%s2 + $0x168] sm:$0xff]
    %v713 = vld [vmem:[%s2 + $0x170] sm:$0xff]
    %v714 = vld [vmem:[%s2 + $0x178] sm:$0xff]
    %v715 = vld [vmem:[%s2 + $0x180] sm:$0xff]
    %v716 = vld [vmem:[%s2 + $0x188] sm:$0xff]
    %v717 = vld [vmem:[%s2 + $0x190] sm:$0xff]
    %v718 = vld [vmem:[%s2 + $0x198] sm:$0xff]
    %v719 = vld [vmem:[%s2 + $0x1a0] sm:$0xff]
    %v720 = vld [vmem:[%s2 + $0x1a8] sm:$0xff]
    %v721 = vld [vmem:[%s2 + $0x1b0] sm:$0xff]
    %v722 = vld [vmem:[%s2 + $0x1b8] sm:$0xff]
    %v723 = vld [vmem:[%s2 + $0x1c0] sm:$0xff]
    %v724 = vld [vmem:[%s2 + $0x1c8] sm:$0xff]
    %v725 = vld [vmem:[%s2 + $0x1d0] sm:$0xff]
    %v726 = vld [vmem:[%s2 + $0x1d8] sm:$0xff]
    %v727 = vld [vmem:[%s2 + $0x1e0] sm:$0xff]
    %v728 = vld [vmem:[%s2 + $0x1e8] sm:$0xff]
    %v729 = vld [vmem:[%s2 + $0x1f0] sm:$0xff]
    %v730 = vld [vmem:[%s2 + $0x1f8] sm:$0xff]
    %v731 = vld [vmem:[%s2 + $0x200] sm:$0xff]
    %v732 = vld [vmem:[%s2 + $0x208] sm:$0xff]
    %v733 = vld [vmem:[%s2 + $0x210] sm:$0xff]
    %v734 = vld [vmem:[%s2 + $0x218] sm:$0xff]
    %v735 = vld [vmem:[%s2 + $0x220] sm:$0xff]
    %v736 = vld [vmem:[%s2 + $0x228] sm:$0xff]
    %v737 = vld [vmem:[%s2 + $0x230] sm:$0xff]
    %v738 = vld [vmem:[%s2 + $0x238] sm:$0xff]
    %v739 = vld [vmem:[%s2 + $0x240] sm:$0xff]
    %v740 = vld [vmem:[%s2 + $0x248] sm:$0xff]
    %v741 = vld [vmem:[%s2 + $0x250] sm:$0xff]
    %v742 = vld [vmem:[%s2 + $0x258] sm:$0xff]
    %v743 = vld [vmem:[%s2 + $0x260] sm:$0xff]
    %v744 = vld [vmem:[%s2 + $0x268] sm:$0xff]
    %v745 = vld [vmem:[%s2 + $0x270] sm:$0xff]
    %v746 = vld [vmem:[%s2 + $0x278] sm:$0xff]
    %v747 = vld [vmem:[%s2 + $0x280] sm:$0xff]
    %v748 = vld [vmem:[%s2 + $0x288] sm:$0xff]
    %v749 = vld [vmem:[%s2 + $0x290] sm:$0xff]
    %v750 = vld [vmem:[%s2 + $0x298] sm:$0xff]
    %v751 = vld [vmem:[%s2 + $0x2a0] sm:$0xff]
    %v752 = vld [vmem:[%s2 + $0x2a8] sm:$0xff]
    %v753 = vld [vmem:[%s2 + $0x2b0] sm:$0xff]
    %v754 = vld [vmem:[%s2 + $0x2b8] sm:$0xff]
    %v755 = vld [vmem:[%s2 + $0x2c0] sm:$0xff]
    %v756 = vld [vmem:[%s2 + $0x2c8] sm:$0xff]
    %v757 = vld [vmem:[%s2 + $0x2d0] sm:$0xff]
    %v758 = vld [vmem:[%s2 + $0x2d8] sm:$0xff]
    %v759 = vld [vmem:[%s2 + $0x2e0] sm:$0xff]
    %v760 = vld [vmem:[%s2 + $0x2e8] sm:$0xff]
    %v761 = vld [vmem:[%s2 + $0x2f0] sm:$0xff]
    %v762 = vld [vmem:[%s2 + $0x2f8] sm:$0xff]
    %v763 = vld [vmem:[%s2 + $0x300] sm:$0xff]
    %v764 = vld [vmem:[%s2 + $0x308] sm:$0xff]
    %v765 = vld [vmem:[%s2 + $0x310] sm:$0xff]
    %v766 = vld [vmem:[%s2 + $0x318] sm:$0xff]
    %v767 = vld [vmem:[%s2 + $0x320] sm:$0xff]
    %v768 = vld [vmem:[%s2 + $0x328] sm:$0xff]
    %v769 = vld [vmem:[%s2 + $0x330] sm:$0xff]
    %v770 = vld [vmem:[%s2 + $0x338] sm:$0xff]
    %v771 = vld [vmem:[%s2 + $0x340] sm:$0xff]
    %v772 = vld [vmem:[%s2 + $0x348] sm:$0xff]
    %v773 = vld [vmem:[%s2 + $0x350] sm:$0xff]
    %v774 = vld [vmem:[%s2 + $0x358] sm:$0xff]
    %v775 = vld [vmem:[%s2 + $0x360] sm:$0xff]
    %v776 = vld [vmem:[%s2 + $0x368] sm:$0xff]
    %v777 = vld [vmem:[%s2 + $0x370] sm:$0xff]
    %v778 = vld [vmem:[%s2 + $0x378] sm:$0xff]
    %v779 = vld [vmem:[%s2 + $0x380] sm:$0xff]
    %v780 = vld [vmem:[%s2 + $0x388] sm:$0xff]
    %v781 = vld [vmem:[%s2 + $0x390] sm:$0xff]
    %v782 = vld [vmem:[%s2 + $0x398] sm:$0xff]
    %v783 = vld [vmem:[%s2 + $0x3a0] sm:$0xff]
    %v784 = vld [vmem:[%s2 + $0x3a8] sm:$0xff]
    %v785 = vld [vmem:[%s2 + $0x3b0] sm:$0xff]
    %v786 = vld [vmem:[%s2 + $0x3b8] sm:$0xff]
    %v787 = vld [vmem:[%s2 + $0x3c0] sm:$0xff]
    %v788 = vld [vmem:[%s2 + $0x3c8] sm:$0xff]
    %v789 = vld [vmem:[%s2 + $0x3d0] sm:$0xff]
    %v790 = vld [vmem:[%s2 + $0x3d8] sm:$0xff]
    %v791 = vld [vmem:[%s2 + $0x3e0] sm:$0xff]
    %v792 = vld [vmem:[%s2 + $0x3e8] sm:$0xff]
    %v793 = vld [vmem:[%s2 + $0x3f0] sm:$0xff]
    %v794 = vld [vmem:[%s2 + $0x3f8] sm:$0xff]
    %796 = vset.pattern.permute.xlu0 0
    %797 = vperm.xlu0 %796, %v667
    %v798 = vpop.permute.xlu0 %797
    %801 = vset.pattern.permute.xlu0 0
    %802 = vperm.xlu0 %801, %v668
    %v803 = vpop.permute.xlu0 %802
    %806 = vset.pattern.permute.xlu0 0
    %807 = vperm.xlu0 %806, %v669
    %v808 = vpop.permute.xlu0 %807
    %811 = vset.pattern.permute.xlu0 0
    %812 = vperm.xlu0 %811, %v670
    %v813 = vpop.permute.xlu0 %812
    %816 = vset.pattern.permute.xlu0 0
    %817 = vperm.xlu0 %816, %v671
    %v818 = vpop.permute.xlu0 %817
    %821 = vset.pattern.permute.xlu0 0
    %822 = vperm.xlu0 %821, %v672
    %v823 = vpop.permute.xlu0 %822
    %826 = vset.pattern.permute.xlu0 0
    %827 = vperm.xlu0 %826, %v673
    %v828 = vpop.permute.xlu0 %827
    %831 = vset.pattern.permute.xlu0 0
    %832 = vperm.xlu0 %831, %v674
    %v833 = vpop.permute.xlu0 %832
    %836 = vset.pattern.permute.xlu0 0
    %837 = vperm.xlu0 %836, %v675
    %v838 = vpop.permute.xlu0 %837
    %841 = vset.pattern.permute.xlu0 0
    %842 = vperm.xlu0 %841, %v676
    %v843 = vpop.permute.xlu0 %842
    %846 = vset.pattern.permute.xlu0 0
    %847 = vperm.xlu0 %846, %v677
    %v848 = vpop.permute.xlu0 %847
    %851 = vset.pattern.permute.xlu0 0
    %852 = vperm.xlu0 %851, %v678
    %v853 = vpop.permute.xlu0 %852
    %856 = vset.pattern.permute.xlu0 0
    %857 = vperm.xlu0 %856, %v679
    %v858 = vpop.permute.xlu0 %857
    %861 = vset.pattern.permute.xlu0 0
    %862 = vperm.xlu0 %861, %v680
    %v863 = vpop.permute.xlu0 %862
    %866 = vset.pattern.permute.xlu0 0
    %867 = vperm.xlu0 %866, %v681
    %v868 = vpop.permute.xlu0 %867
    %871 = vset.pattern.permute.xlu0 0
    %872 = vperm.xlu0 %871, %v682
    %v873 = vpop.permute.xlu0 %872
    %876 = vset.pattern.permute.xlu0 0
    %877 = vperm.xlu0 %876, %v683
    %v878 = vpop.permute.xlu0 %877
    %881 = vset.pattern.permute.xlu0 0
    %882 = vperm.xlu0 %881, %v684
    %v883 = vpop.permute.xlu0 %882
    %886 = vset.pattern.permute.xlu0 0
    %887 = vperm.xlu0 %886, %v685
    %v888 = vpop.permute.xlu0 %887
    %891 = vset.pattern.permute.xlu0 0
    %892 = vperm.xlu0 %891, %v686
    %v893 = vpop.permute.xlu0 %892
    %896 = vset.pattern.permute.xlu0 0
    %897 = vperm.xlu0 %896, %v687
    %v898 = vpop.permute.xlu0 %897
    %901 = vset.pattern.permute.xlu0 0
    %902 = vperm.xlu0 %901, %v688
    %v903 = vpop.permute.xlu0 %902
    %906 = vset.pattern.permute.xlu0 0
    %907 = vperm.xlu0 %906, %v689
    %v908 = vpop.permute.xlu0 %907
    %911 = vset.pattern.permute.xlu0 0
    %912 = vperm.xlu0 %911, %v690
    %v913 = vpop.permute.xlu0 %912
    %916 = vset.pattern.permute.xlu0 0
    %917 = vperm.xlu0 %916, %v691
    %v918 = vpop.permute.xlu0 %917
    %921 = vset.pattern.permute.xlu0 0
    %922 = vperm.xlu0 %921, %v692
    %v923 = vpop.permute.xlu0 %922
    %926 = vset.pattern.permute.xlu0 0
    %927 = vperm.xlu0 %926, %v693
    %v928 = vpop.permute.xlu0 %927
    %931 = vset.pattern.permute.xlu0 0
    %932 = vperm.xlu0 %931, %v694
    %v933 = vpop.permute.xlu0 %932
    %936 = vset.pattern.permute.xlu0 0
    %937 = vperm.xlu0 %936, %v695
    %v938 = vpop.permute.xlu0 %937
    %941 = vset.pattern.permute.xlu0 0
    %942 = vperm.xlu0 %941, %v696
    %v943 = vpop.permute.xlu0 %942
    %946 = vset.pattern.permute.xlu0 0
    %947 = vperm.xlu0 %946, %v697
    %v948 = vpop.permute.xlu0 %947
    %951 = vset.pattern.permute.xlu0 0
    %952 = vperm.xlu0 %951, %v698
    %v953 = vpop.permute.xlu0 %952
    %956 = vset.pattern.permute.xlu0 0
    %957 = vperm.xlu0 %956, %v699
    %v958 = vpop.permute.xlu0 %957
    %961 = vset.pattern.permute.xlu0 0
    %962 = vperm.xlu0 %961, %v700
    %v963 = vpop.permute.xlu0 %962
    %966 = vset.pattern.permute.xlu0 0
    %967 = vperm.xlu0 %966, %v701
    %v968 = vpop.permute.xlu0 %967
    %971 = vset.pattern.permute.xlu0 0
    %972 = vperm.xlu0 %971, %v702
    %v973 = vpop.permute.xlu0 %972
    %976 = vset.pattern.permute.xlu0 0
    %977 = vperm.xlu0 %976, %v703
    %v978 = vpop.permute.xlu0 %977
    %981 = vset.pattern.permute.xlu0 0
    %982 = vperm.xlu0 %981, %v704
    %v983 = vpop.permute.xlu0 %982
    %986 = vset.pattern.permute.xlu0 0
    %987 = vperm.xlu0 %986, %v705
    %v988 = vpop.permute.xlu0 %987
    %991 = vset.pattern.permute.xlu0 0
    %992 = vperm.xlu0 %991, %v706
    %v993 = vpop.permute.xlu0 %992
    %996 = vset.pattern.permute.xlu0 0
    %997 = vperm.xlu0 %996, %v707
    %v998 = vpop.permute.xlu0 %997
    %1001 = vset.pattern.permute.xlu0 0
    %1002 = vperm.xlu0 %1001, %v708
    %v1003 = vpop.permute.xlu0 %1002
    %1006 = vset.pattern.permute.xlu0 0
    %1007 = vperm.xlu0 %1006, %v709
    %v1008 = vpop.permute.xlu0 %1007
    %1011 = vset.pattern.permute.xlu0 0
    %1012 = vperm.xlu0 %1011, %v710
    %v1013 = vpop.permute.xlu0 %1012
    %1016 = vset.pattern.permute.xlu0 0
    %1017 = vperm.xlu0 %1016, %v711
    %v1018 = vpop.permute.xlu0 %1017
    %1021 = vset.pattern.permute.xlu0 0
    %1022 = vperm.xlu0 %1021, %v712
    %v1023 = vpop.permute.xlu0 %1022
    %1026 = vset.pattern.permute.xlu0 0
    %1027 = vperm.xlu0 %1026, %v713
    %v1028 = vpop.permute.xlu0 %1027
    %1031 = vset.pattern.permute.xlu0 0
    %1032 = vperm.xlu0 %1031, %v714
    %v1033 = vpop.permute.xlu0 %1032
    %1036 = vset.pattern.permute.xlu0 0
    %1037 = vperm.xlu0 %1036, %v715
    %v1038 = vpop.permute.xlu0 %1037
    %1041 = vset.pattern.permute.xlu0 0
    %1042 = vperm.xlu0 %1041, %v716
    %v1043 = vpop.permute.xlu0 %1042
    %1046 = vset.pattern.permute.xlu0 0
    %1047 = vperm.xlu0 %1046, %v717
    %v1048 = vpop.permute.xlu0 %1047
    %1051 = vset.pattern.permute.xlu0 0
    %1052 = vperm.xlu0 %1051, %v718
    %v1053 = vpop.permute.xlu0 %1052
    %1056 = vset.pattern.permute.xlu0 0
    %1057 = vperm.xlu0 %1056, %v719
    %v1058 = vpop.permute.xlu0 %1057
    %1061 = vset.pattern.permute.xlu0 0
    %1062 = vperm.xlu0 %1061, %v720
    %v1063 = vpop.permute.xlu0 %1062
    %1066 = vset.pattern.permute.xlu0 0
    %1067 = vperm.xlu0 %1066, %v721
    %v1068 = vpop.permute.xlu0 %1067
    %1071 = vset.pattern.permute.xlu0 0
    %1072 = vperm.xlu0 %1071, %v722
    %v1073 = vpop.permute.xlu0 %1072
    %1076 = vset.pattern.permute.xlu0 0
    %1077 = vperm.xlu0 %1076, %v723
    %v1078 = vpop.permute.xlu0 %1077
    %1081 = vset.pattern.permute.xlu0 0
    %1082 = vperm.xlu0 %1081, %v724
    %v1083 = vpop.permute.xlu0 %1082
    %1086 = vset.pattern.permute.xlu0 0
    %1087 = vperm.xlu0 %1086, %v725
    %v1088 = vpop.permute.xlu0 %1087
    %1091 = vset.pattern.permute.xlu0 0
    %1092 = vperm.xlu0 %1091, %v726
    %v1093 = vpop.permute.xlu0 %1092
    %1096 = vset.pattern.permute.xlu0 0
    %1097 = vperm.xlu0 %1096, %v727
    %v1098 = vpop.permute.xlu0 %1097
    %1101 = vset.pattern.permute.xlu0 0
    %1102 = vperm.xlu0 %1101, %v728
    %v1103 = vpop.permute.xlu0 %1102
    %1106 = vset.pattern.permute.xlu0 0
    %1107 = vperm.xlu0 %1106, %v729
    %v1108 = vpop.permute.xlu0 %1107
    %1111 = vset.pattern.permute.xlu0 0
    %1112 = vperm.xlu0 %1111, %v730
    %v1113 = vpop.permute.xlu0 %1112
    %1116 = vset.pattern.permute.xlu0 0
    %1117 = vperm.xlu0 %1116, %v731
    %v1118 = vpop.permute.xlu0 %1117
    %1121 = vset.pattern.permute.xlu0 0
    %1122 = vperm.xlu0 %1121, %v732
    %v1123 = vpop.permute.xlu0 %1122
    %1126 = vset.pattern.permute.xlu0 0
    %1127 = vperm.xlu0 %1126, %v733
    %v1128 = vpop.permute.xlu0 %1127
    %1131 = vset.pattern.permute.xlu0 0
    %1132 = vperm.xlu0 %1131, %v734
    %v1133 = vpop.permute.xlu0 %1132
    %1136 = vset.pattern.permute.xlu0 0
    %1137 = vperm.xlu0 %1136, %v735
    %v1138 = vpop.permute.xlu0 %1137
    %1141 = vset.pattern.permute.xlu0 0
    %1142 = vperm.xlu0 %1141, %v736
    %v1143 = vpop.permute.xlu0 %1142
    %1146 = vset.pattern.permute.xlu0 0
    %1147 = vperm.xlu0 %1146, %v737
    %v1148 = vpop.permute.xlu0 %1147
    %1151 = vset.pattern.permute.xlu0 0
    %1152 = vperm.xlu0 %1151, %v738
    %v1153 = vpop.permute.xlu0 %1152
    %1156 = vset.pattern.permute.xlu0 0
    %1157 = vperm.xlu0 %1156, %v739
    %v1158 = vpop.permute.xlu0 %1157
    %1161 = vset.pattern.permute.xlu0 0
    %1162 = vperm.xlu0 %1161, %v740
    %v1163 = vpop.permute.xlu0 %1162
    %1166 = vset.pattern.permute.xlu0 0
    %1167 = vperm.xlu0 %1166, %v741
    %v1168 = vpop.permute.xlu0 %1167
    %1171 = vset.pattern.permute.xlu0 0
    %1172 = vperm.xlu0 %1171, %v742
    %v1173 = vpop.permute.xlu0 %1172
    %1176 = vset.pattern.permute.xlu0 0
    %1177 = vperm.xlu0 %1176, %v743
    %v1178 = vpop.permute.xlu0 %1177
    %1181 = vset.pattern.permute.xlu0 0
    %1182 = vperm.xlu0 %1181, %v744
    %v1183 = vpop.permute.xlu0 %1182
    %1186 = vset.pattern.permute.xlu0 0
    %1187 = vperm.xlu0 %1186, %v745
    %v1188 = vpop.permute.xlu0 %1187
    %1191 = vset.pattern.permute.xlu0 0
    %1192 = vperm.xlu0 %1191, %v746
    %v1193 = vpop.permute.xlu0 %1192
    %1196 = vset.pattern.permute.xlu0 0
    %1197 = vperm.xlu0 %1196, %v747
    %v1198 = vpop.permute.xlu0 %1197
    %1201 = vset.pattern.permute.xlu0 0
    %1202 = vperm.xlu0 %1201, %v748
    %v1203 = vpop.permute.xlu0 %1202
    %1206 = vset.pattern.permute.xlu0 0
    %1207 = vperm.xlu0 %1206, %v749
    %v1208 = vpop.permute.xlu0 %1207
    %1211 = vset.pattern.permute.xlu0 0
    %1212 = vperm.xlu0 %1211, %v750
    %v1213 = vpop.permute.xlu0 %1212
    %1216 = vset.pattern.permute.xlu0 0
    %1217 = vperm.xlu0 %1216, %v751
    %v1218 = vpop.permute.xlu0 %1217
    %1221 = vset.pattern.permute.xlu0 0
    %1222 = vperm.xlu0 %1221, %v752
    %v1223 = vpop.permute.xlu0 %1222
    %1226 = vset.pattern.permute.xlu0 0
    %1227 = vperm.xlu0 %1226, %v753
    %v1228 = vpop.permute.xlu0 %1227
    %1231 = vset.pattern.permute.xlu0 0
    %1232 = vperm.xlu0 %1231, %v754
    %v1233 = vpop.permute.xlu0 %1232
    %1236 = vset.pattern.permute.xlu0 0
    %1237 = vperm.xlu0 %1236, %v755
    %v1238 = vpop.permute.xlu0 %1237
    %1241 = vset.pattern.permute.xlu0 0
    %1242 = vperm.xlu0 %1241, %v756
    %v1243 = vpop.permute.xlu0 %1242
    %1246 = vset.pattern.permute.xlu0 0
    %1247 = vperm.xlu0 %1246, %v757
    %v1248 = vpop.permute.xlu0 %1247
    %1251 = vset.pattern.permute.xlu0 0
    %1252 = vperm.xlu0 %1251, %v758
    %v1253 = vpop.permute.xlu0 %1252
    %1256 = vset.pattern.permute.xlu0 0
    %1257 = vperm.xlu0 %1256, %v759
    %v1258 = vpop.permute.xlu0 %1257
    %1261 = vset.pattern.permute.xlu0 0
    %1262 = vperm.xlu0 %1261, %v760
    %v1263 = vpop.permute.xlu0 %1262
    %1266 = vset.pattern.permute.xlu0 0
    %1267 = vperm.xlu0 %1266, %v761
    %v1268 = vpop.permute.xlu0 %1267
    %1271 = vset.pattern.permute.xlu0 0
    %1272 = vperm.xlu0 %1271, %v762
    %v1273 = vpop.permute.xlu0 %1272
    %1276 = vset.pattern.permute.xlu0 0
    %1277 = vperm.xlu0 %1276, %v763
    %v1278 = vpop.permute.xlu0 %1277
    %1281 = vset.pattern.permute.xlu0 0
    %1282 = vperm.xlu0 %1281, %v764
    %v1283 = vpop.permute.xlu0 %1282
    %1286 = vset.pattern.permute.xlu0 0
    %1287 = vperm.xlu0 %1286, %v765
    %v1288 = vpop.permute.xlu0 %1287
    %1291 = vset.pattern.permute.xlu0 0
    %1292 = vperm.xlu0 %1291, %v766
    %v1293 = vpop.permute.xlu0 %1292
    %1296 = vset.pattern.permute.xlu0 0
    %1297 = vperm.xlu0 %1296, %v767
    %v1298 = vpop.permute.xlu0 %1297
    %1301 = vset.pattern.permute.xlu0 0
    %1302 = vperm.xlu0 %1301, %v768
    %v1303 = vpop.permute.xlu0 %1302
    %1306 = vset.pattern.permute.xlu0 0
    %1307 = vperm.xlu0 %1306, %v769
    %v1308 = vpop.permute.xlu0 %1307
    %1311 = vset.pattern.permute.xlu0 0
    %1312 = vperm.xlu0 %1311, %v770
    %v1313 = vpop.permute.xlu0 %1312
    %1316 = vset.pattern.permute.xlu0 0
    %1317 = vperm.xlu0 %1316, %v771
    %v1318 = vpop.permute.xlu0 %1317
    %1321 = vset.pattern.permute.xlu0 0
    %1322 = vperm.xlu0 %1321, %v772
    %v1323 = vpop.permute.xlu0 %1322
    %1326 = vset.pattern.permute.xlu0 0
    %1327 = vperm.xlu0 %1326, %v773
    %v1328 = vpop.permute.xlu0 %1327
    %1331 = vset.pattern.permute.xlu0 0
    %1332 = vperm.xlu0 %1331, %v774
    %v1333 = vpop.permute.xlu0 %1332
    %1336 = vset.pattern.permute.xlu0 0
    %1337 = vperm.xlu0 %1336, %v775
    %v1338 = vpop.permute.xlu0 %1337
    %1341 = vset.pattern.permute.xlu0 0
    %1342 = vperm.xlu0 %1341, %v776
    %v1343 = vpop.permute.xlu0 %1342
    %1346 = vset.pattern.permute.xlu0 0
    %1347 = vperm.xlu0 %1346, %v777
    %v1348 = vpop.permute.xlu0 %1347
    %1351 = vset.pattern.permute.xlu0 0
    %1352 = vperm.xlu0 %1351, %v778
    %v1353 = vpop.permute.xlu0 %1352
    %1356 = vset.pattern.permute.xlu0 0
    %1357 = vperm.xlu0 %1356, %v779
    %v1358 = vpop.permute.xlu0 %1357
    %1361 = vset.pattern.permute.xlu0 0
    %1362 = vperm.xlu0 %1361, %v780
    %v1363 = vpop.permute.xlu0 %1362
    %1366 = vset.pattern.permute.xlu0 0
    %1367 = vperm.xlu0 %1366, %v781
    %v1368 = vpop.permute.xlu0 %1367
    %1371 = vset.pattern.permute.xlu0 0
    %1372 = vperm.xlu0 %1371, %v782
    %v1373 = vpop.permute.xlu0 %1372
    %1376 = vset.pattern.permute.xlu0 0
    %1377 = vperm.xlu0 %1376, %v783
    %v1378 = vpop.permute.xlu0 %1377
    %1381 = vset.pattern.permute.xlu0 0
    %1382 = vperm.xlu0 %1381, %v784
    %v1383 = vpop.permute.xlu0 %1382
    %1386 = vset.pattern.permute.xlu0 0
    %1387 = vperm.xlu0 %1386, %v785
    %v1388 = vpop.permute.xlu0 %1387
    %1391 = vset.pattern.permute.xlu0 0
    %1392 = vperm.xlu0 %1391, %v786
    %v1393 = vpop.permute.xlu0 %1392
    %1396 = vset.pattern.permute.xlu0 0
    %1397 = vperm.xlu0 %1396, %v787
    %v1398 = vpop.permute.xlu0 %1397
    %1401 = vset.pattern.permute.xlu0 0
    %1402 = vperm.xlu0 %1401, %v788
    %v1403 = vpop.permute.xlu0 %1402
    %1406 = vset.pattern.permute.xlu0 0
    %1407 = vperm.xlu0 %1406, %v789
    %v1408 = vpop.permute.xlu0 %1407
    %1411 = vset.pattern.permute.xlu0 0
    %1412 = vperm.xlu0 %1411, %v790
    %v1413 = vpop.permute.xlu0 %1412
    %1416 = vset.pattern.permute.xlu0 0
    %1417 = vperm.xlu0 %1416, %v791
    %v1418 = vpop.permute.xlu0 %1417
    %1421 = vset.pattern.permute.xlu0 0
    %1422 = vperm.xlu0 %1421, %v792
    %v1423 = vpop.permute.xlu0 %1422
    %1426 = vset.pattern.permute.xlu0 0
    %1427 = vperm.xlu0 %1426, %v793
    %v1428 = vpop.permute.xlu0 %1427
    %1431 = vset.pattern.permute.xlu0 0
    %1432 = vperm.xlu0 %1431, %v794
    %v1433 = vpop.permute.xlu0 %1432
    %v1947 = vunpack.c.l.b16 %v155
    %v1948 = vunpack.c.h.b16 %v155
    %v1949 = vunpack.c.l.b16 %v156
    %v1950 = vunpack.c.h.b16 %v156
    %v1951 = vunpack.c.l.b16 %v157
    %v1952 = vunpack.c.h.b16 %v157
    %v1953 = vunpack.c.l.b16 %v158
    %v1954 = vunpack.c.l.b16 %v159
    %v1955 = vunpack.c.h.b16 %v159
    %v1956 = vunpack.c.l.b16 %v160
    %v1957 = vunpack.c.h.b16 %v160
    %v1958 = vunpack.c.l.b16 %v161
    %v1959 = vunpack.c.h.b16 %v161
    %v1960 = vunpack.c.l.b16 %v162
    %v1961 = vunpack.c.l.b16 %v163
    %v1962 = vunpack.c.h.b16 %v163
    %v1963 = vunpack.c.l.b16 %v164
    %v1964 = vunpack.c.h.b16 %v164
    %v1965 = vunpack.c.l.b16 %v165
    %v1966 = vunpack.c.h.b16 %v165
    %v1967 = vunpack.c.l.b16 %v166
    %v1968 = vunpack.c.l.b16 %v167
    %v1969 = vunpack.c.h.b16 %v167
    %v1970 = vunpack.c.l.b16 %v168
    %v1971 = vunpack.c.h.b16 %v168
    %v1972 = vunpack.c.l.b16 %v169
    %v1973 = vunpack.c.h.b16 %v169
    %v1974 = vunpack.c.l.b16 %v170
    %v1975 = vunpack.c.l.b16 %v171
    %v1976 = vunpack.c.h.b16 %v171
    %v1977 = vunpack.c.l.b16 %v172
    %v1978 = vunpack.c.h.b16 %v172
    %v1979 = vunpack.c.l.b16 %v173
    %v1980 = vunpack.c.h.b16 %v173
    %v1981 = vunpack.c.l.b16 %v174
    %v1982 = vunpack.c.l.b16 %v175
    %v1983 = vunpack.c.h.b16 %v175
    %v1984 = vunpack.c.l.b16 %v176
    %v1985 = vunpack.c.h.b16 %v176
    %v1986 = vunpack.c.l.b16 %v177
    %v1987 = vunpack.c.h.b16 %v177
    %v1988 = vunpack.c.l.b16 %v178
    %v1989 = vunpack.c.l.b16 %v179
    %v1990 = vunpack.c.h.b16 %v179
    %v1991 = vunpack.c.l.b16 %v180
    %v1992 = vunpack.c.h.b16 %v180
    %v1993 = vunpack.c.l.b16 %v181
    %v1994 = vunpack.c.h.b16 %v181
    %v1995 = vunpack.c.l.b16 %v182
    %v1996 = vunpack.c.l.b16 %v183
    %v1997 = vunpack.c.h.b16 %v183
    %v1998 = vunpack.c.l.b16 %v184
    %v1999 = vunpack.c.h.b16 %v184
    %v2000 = vunpack.c.l.b16 %v185
    %v2001 = vunpack.c.h.b16 %v185
    %v2002 = vunpack.c.l.b16 %v186
    %v2003 = vunpack.c.l.b16 %v187
    %v2004 = vunpack.c.h.b16 %v187
    %v2005 = vunpack.c.l.b16 %v188
    %v2006 = vunpack.c.h.b16 %v188
    %v2007 = vunpack.c.l.b16 %v189
    %v2008 = vunpack.c.h.b16 %v189
    %v2009 = vunpack.c.l.b16 %v190
    %v2010 = vunpack.c.l.b16 %v191
    %v2011 = vunpack.c.h.b16 %v191
    %v2012 = vunpack.c.l.b16 %v192
    %v2013 = vunpack.c.h.b16 %v192
    %v2014 = vunpack.c.l.b16 %v193
    %v2015 = vunpack.c.h.b16 %v193
    %v2016 = vunpack.c.l.b16 %v194
    %v2017 = vunpack.c.l.b16 %v195
    %v2018 = vunpack.c.h.b16 %v195
    %v2019 = vunpack.c.l.b16 %v196
    %v2020 = vunpack.c.h.b16 %v196
    %v2021 = vunpack.c.l.b16 %v197
    %v2022 = vunpack.c.h.b16 %v197
    %v2023 = vunpack.c.l.b16 %v198
    %v2024 = vunpack.c.l.b16 %v199
    %v2025 = vunpack.c.h.b16 %v199
    %v2026 = vunpack.c.l.b16 %v200
    %v2027 = vunpack.c.h.b16 %v200
    %v2028 = vunpack.c.l.b16 %v201
    %v2029 = vunpack.c.h.b16 %v201
    %v2030 = vunpack.c.l.b16 %v202
    %v2031 = vunpack.c.l.b16 %v203
    %v2032 = vunpack.c.h.b16 %v203
    %v2033 = vunpack.c.l.b16 %v204
    %v2034 = vunpack.c.h.b16 %v204
    %v2035 = vunpack.c.l.b16 %v205
    %v2036 = vunpack.c.h.b16 %v205
    %v2037 = vunpack.c.l.b16 %v206
    %v2038 = vunpack.c.l.b16 %v207
    %v2039 = vunpack.c.h.b16 %v207
    %v2040 = vunpack.c.l.b16 %v208
    %v2041 = vunpack.c.h.b16 %v208
    %v2042 = vunpack.c.l.b16 %v209
    %v2043 = vunpack.c.h.b16 %v209
    %v2044 = vunpack.c.l.b16 %v210
    %v2045 = vunpack.c.l.b16 %v211
    %v2046 = vunpack.c.h.b16 %v211
    %v2047 = vunpack.c.l.b16 %v212
    %v2048 = vunpack.c.h.b16 %v212
    %v2049 = vunpack.c.l.b16 %v213
    %v2050 = vunpack.c.h.b16 %v213
    %v2051 = vunpack.c.l.b16 %v214
    %v2052 = vunpack.c.l.b16 %v215
    %v2053 = vunpack.c.h.b16 %v215
    %v2054 = vunpack.c.l.b16 %v216
    %v2055 = vunpack.c.h.b16 %v216
    %v2056 = vunpack.c.l.b16 %v217
    %v2057 = vunpack.c.h.b16 %v217
    %v2058 = vunpack.c.l.b16 %v218
    %v2059 = vunpack.c.l.b16 %v219
    %v2060 = vunpack.c.h.b16 %v219
    %v2061 = vunpack.c.l.b16 %v220
    %v2062 = vunpack.c.h.b16 %v220
    %v2063 = vunpack.c.l.b16 %v221
    %v2064 = vunpack.c.h.b16 %v221
    %v2065 = vunpack.c.l.b16 %v222
    %v2066 = vunpack.c.l.b16 %v223
    %v2067 = vunpack.c.h.b16 %v223
    %v2068 = vunpack.c.l.b16 %v224
    %v2069 = vunpack.c.h.b16 %v224
    %v2070 = vunpack.c.l.b16 %v225
    %v2071 = vunpack.c.h.b16 %v225
    %v2072 = vunpack.c.l.b16 %v226
    %v2073 = vunpack.c.l.b16 %v227
    %v2074 = vunpack.c.h.b16 %v227
    %v2075 = vunpack.c.l.b16 %v228
    %v2076 = vunpack.c.h.b16 %v228
    %v2077 = vunpack.c.l.b16 %v229
    %v2078 = vunpack.c.h.b16 %v229
    %v2079 = vunpack.c.l.b16 %v230
    %v2080 = vunpack.c.l.b16 %v231
    %v2081 = vunpack.c.h.b16 %v231
    %v2082 = vunpack.c.l.b16 %v232
    %v2083 = vunpack.c.h.b16 %v232
    %v2084 = vunpack.c.l.b16 %v233
    %v2085 = vunpack.c.h.b16 %v233
    %v2086 = vunpack.c.l.b16 %v234
    %v2087 = vunpack.c.l.b16 %v235
    %v2088 = vunpack.c.h.b16 %v235
    %v2089 = vunpack.c.l.b16 %v236
    %v2090 = vunpack.c.h.b16 %v236
    %v2091 = vunpack.c.l.b16 %v237
    %v2092 = vunpack.c.h.b16 %v237
    %v2093 = vunpack.c.l.b16 %v238
    %v2094 = vunpack.c.l.b16 %v239
    %v2095 = vunpack.c.h.b16 %v239
    %v2096 = vunpack.c.l.b16 %v240
    %v2097 = vunpack.c.h.b16 %v240
    %v2098 = vunpack.c.l.b16 %v241
    %v2099 = vunpack.c.h.b16 %v241
    %v2100 = vunpack.c.l.b16 %v242
    %v2101 = vunpack.c.l.b16 %v243
    %v2102 = vunpack.c.h.b16 %v243
    %v2103 = vunpack.c.l.b16 %v244
    %v2104 = vunpack.c.h.b16 %v244
    %v2105 = vunpack.c.l.b16 %v245
    %v2106 = vunpack.c.h.b16 %v245
    %v2107 = vunpack.c.l.b16 %v246
    %v2108 = vunpack.c.l.b16 %v247
    %v2109 = vunpack.c.h.b16 %v247
    %v2110 = vunpack.c.l.b16 %v248
    %v2111 = vunpack.c.h.b16 %v248
    %v2112 = vunpack.c.l.b16 %v249
    %v2113 = vunpack.c.h.b16 %v249
    %v2114 = vunpack.c.l.b16 %v250
    %v2115 = vunpack.c.l.b16 %v251
    %v2116 = vunpack.c.h.b16 %v251
    %v2117 = vunpack.c.l.b16 %v252
    %v2118 = vunpack.c.h.b16 %v252
    %v2119 = vunpack.c.l.b16 %v253
    %v2120 = vunpack.c.h.b16 %v253
    %v2121 = vunpack.c.l.b16 %v254
    %v2122 = vunpack.c.l.b16 %v255
    %v2123 = vunpack.c.h.b16 %v255
    %v2124 = vunpack.c.l.b16 %v256
    %v2125 = vunpack.c.h.b16 %v256
    %v2126 = vunpack.c.l.b16 %v257
    %v2127 = vunpack.c.h.b16 %v257
    %v2128 = vunpack.c.l.b16 %v258
    %v2129 = vunpack.c.l.b16 %v259
    %v2130 = vunpack.c.h.b16 %v259
    %v2131 = vunpack.c.l.b16 %v260
    %v2132 = vunpack.c.h.b16 %v260
    %v2133 = vunpack.c.l.b16 %v261
    %v2134 = vunpack.c.h.b16 %v261
    %v2135 = vunpack.c.l.b16 %v262
    %v2136 = vunpack.c.l.b16 %v263
    %v2137 = vunpack.c.h.b16 %v263
    %v2138 = vunpack.c.l.b16 %v264
    %v2139 = vunpack.c.h.b16 %v264
    %v2140 = vunpack.c.l.b16 %v265
    %v2141 = vunpack.c.h.b16 %v265
    %v2142 = vunpack.c.l.b16 %v266
    %v2143 = vunpack.c.l.b16 %v267
    %v2144 = vunpack.c.h.b16 %v267
    %v2145 = vunpack.c.l.b16 %v268
    %v2146 = vunpack.c.h.b16 %v268
    %v2147 = vunpack.c.l.b16 %v269
    %v2148 = vunpack.c.h.b16 %v269
    %v2149 = vunpack.c.l.b16 %v270
    %v2150 = vunpack.c.l.b16 %v271
    %v2151 = vunpack.c.h.b16 %v271
    %v2152 = vunpack.c.l.b16 %v272
    %v2153 = vunpack.c.h.b16 %v272
    %v2154 = vunpack.c.l.b16 %v273
    %v2155 = vunpack.c.h.b16 %v273
    %v2156 = vunpack.c.l.b16 %v274
    %v2157 = vunpack.c.l.b16 %v275
    %v2158 = vunpack.c.h.b16 %v275
    %v2159 = vunpack.c.l.b16 %v276
    %v2160 = vunpack.c.h.b16 %v276
    %v2161 = vunpack.c.l.b16 %v277
    %v2162 = vunpack.c.h.b16 %v277
    %v2163 = vunpack.c.l.b16 %v278
    %v2164 = vunpack.c.l.b16 %v279
    %v2165 = vunpack.c.h.b16 %v279
    %v2166 = vunpack.c.l.b16 %v280
    %v2167 = vunpack.c.h.b16 %v280
    %v2168 = vunpack.c.l.b16 %v281
    %v2169 = vunpack.c.h.b16 %v281
    %v2170 = vunpack.c.l.b16 %v282
    %v2171 = vunpack.c.l.b16 %v283
    %v2172 = vunpack.c.h.b16 %v283
    %v2173 = vunpack.c.l.b16 %v284
    %v2174 = vunpack.c.h.b16 %v284
    %v2175 = vunpack.c.l.b16 %v285
    %v2176 = vunpack.c.h.b16 %v285
    %v2177 = vunpack.c.l.b16 %v286
    %v2178 = vunpack.c.l.b16 %v287
    %v2179 = vunpack.c.h.b16 %v287
    %v2180 = vunpack.c.l.b16 %v288
    %v2181 = vunpack.c.h.b16 %v288
    %v2182 = vunpack.c.l.b16 %v289
    %v2183 = vunpack.c.h.b16 %v289
    %v2184 = vunpack.c.l.b16 %v290
    %v2185 = vunpack.c.l.b16 %v291
    %v2186 = vunpack.c.h.b16 %v291
    %v2187 = vunpack.c.l.b16 %v292
    %v2188 = vunpack.c.h.b16 %v292
    %v2189 = vunpack.c.l.b16 %v293
    %v2190 = vunpack.c.h.b16 %v293
    %v2191 = vunpack.c.l.b16 %v294
    %v2192 = vunpack.c.l.b16 %v295
    %v2193 = vunpack.c.h.b16 %v295
    %v2194 = vunpack.c.l.b16 %v296
    %v2195 = vunpack.c.h.b16 %v296
    %v2196 = vunpack.c.l.b16 %v297
    %v2197 = vunpack.c.h.b16 %v297
    %v2198 = vunpack.c.l.b16 %v298
    %v2199 = vunpack.c.l.b16 %v299
    %v2200 = vunpack.c.h.b16 %v299
    %v2201 = vunpack.c.l.b16 %v300
    %v2202 = vunpack.c.h.b16 %v300
    %v2203 = vunpack.c.l.b16 %v301
    %v2204 = vunpack.c.h.b16 %v301
    %v2205 = vunpack.c.l.b16 %v302
    %v2206 = vunpack.c.l.b16 %v303
    %v2207 = vunpack.c.h.b16 %v303
    %v2208 = vunpack.c.l.b16 %v304
    %v2209 = vunpack.c.h.b16 %v304
    %v2210 = vunpack.c.l.b16 %v305
    %v2211 = vunpack.c.h.b16 %v305
    %v2212 = vunpack.c.l.b16 %v306
    %v2213 = vunpack.c.l.b16 %v307
    %v2214 = vunpack.c.h.b16 %v307
    %v2215 = vunpack.c.l.b16 %v308
    %v2216 = vunpack.c.h.b16 %v308
    %v2217 = vunpack.c.l.b16 %v309
    %v2218 = vunpack.c.h.b16 %v309
    %v2219 = vunpack.c.l.b16 %v310
    %v2220 = vunpack.c.l.b16 %v311
    %v2221 = vunpack.c.h.b16 %v311
    %v2222 = vunpack.c.l.b16 %v312
    %v2223 = vunpack.c.h.b16 %v312
    %v2224 = vunpack.c.l.b16 %v313
    %v2225 = vunpack.c.h.b16 %v313
    %v2226 = vunpack.c.l.b16 %v314
    %v2227 = vunpack.c.l.b16 %v315
    %v2228 = vunpack.c.h.b16 %v315
    %v2229 = vunpack.c.l.b16 %v316
    %v2230 = vunpack.c.h.b16 %v316
    %v2231 = vunpack.c.l.b16 %v317
    %v2232 = vunpack.c.h.b16 %v317
    %v2233 = vunpack.c.l.b16 %v318
    %v2234 = vunpack.c.l.b16 %v319
    %v2235 = vunpack.c.h.b16 %v319
    %v2236 = vunpack.c.l.b16 %v320
    %v2237 = vunpack.c.h.b16 %v320
    %v2238 = vunpack.c.l.b16 %v321
    %v2239 = vunpack.c.h.b16 %v321
    %v2240 = vunpack.c.l.b16 %v322
    %v2241 = vunpack.c.l.b16 %v323
    %v2242 = vunpack.c.h.b16 %v323
    %v2243 = vunpack.c.l.b16 %v324
    %v2244 = vunpack.c.h.b16 %v324
    %v2245 = vunpack.c.l.b16 %v325
    %v2246 = vunpack.c.h.b16 %v325
    %v2247 = vunpack.c.l.b16 %v326
    %v2248 = vunpack.c.l.b16 %v327
    %v2249 = vunpack.c.h.b16 %v327
    %v2250 = vunpack.c.l.b16 %v328
    %v2251 = vunpack.c.h.b16 %v328
    %v2252 = vunpack.c.l.b16 %v329
    %v2253 = vunpack.c.h.b16 %v329
    %v2254 = vunpack.c.l.b16 %v330
    %v2255 = vunpack.c.l.b16 %v331
    %v2256 = vunpack.c.h.b16 %v331
    %v2257 = vunpack.c.l.b16 %v332
    %v2258 = vunpack.c.h.b16 %v332
    %v2259 = vunpack.c.l.b16 %v333
    %v2260 = vunpack.c.h.b16 %v333
    %v2261 = vunpack.c.l.b16 %v334
    %v2262 = vunpack.c.l.b16 %v335
    %v2263 = vunpack.c.h.b16 %v335
    %v2264 = vunpack.c.l.b16 %v336
    %v2265 = vunpack.c.h.b16 %v336
    %v2266 = vunpack.c.l.b16 %v337
    %v2267 = vunpack.c.h.b16 %v337
    %v2268 = vunpack.c.l.b16 %v338
    %v2269 = vunpack.c.l.b16 %v339
    %v2270 = vunpack.c.h.b16 %v339
    %v2271 = vunpack.c.l.b16 %v340
    %v2272 = vunpack.c.h.b16 %v340
    %v2273 = vunpack.c.l.b16 %v341
    %v2274 = vunpack.c.h.b16 %v341
    %v2275 = vunpack.c.l.b16 %v342
    %v2276 = vunpack.c.l.b16 %v343
    %v2277 = vunpack.c.h.b16 %v343
    %v2278 = vunpack.c.l.b16 %v344
    %v2279 = vunpack.c.h.b16 %v344
    %v2280 = vunpack.c.l.b16 %v345
    %v2281 = vunpack.c.h.b16 %v345
    %v2282 = vunpack.c.l.b16 %v346
    %v2283 = vunpack.c.l.b16 %v347
    %v2284 = vunpack.c.h.b16 %v347
    %v2285 = vunpack.c.l.b16 %v348
    %v2286 = vunpack.c.h.b16 %v348
    %v2287 = vunpack.c.l.b16 %v349
    %v2288 = vunpack.c.h.b16 %v349
    %v2289 = vunpack.c.l.b16 %v350
    %v2290 = vunpack.c.l.b16 %v351
    %v2291 = vunpack.c.h.b16 %v351
    %v2292 = vunpack.c.l.b16 %v352
    %v2293 = vunpack.c.h.b16 %v352
    %v2294 = vunpack.c.l.b16 %v353
    %v2295 = vunpack.c.h.b16 %v353
    %v2296 = vunpack.c.l.b16 %v354
    %v2297 = vunpack.c.l.b16 %v355
    %v2298 = vunpack.c.h.b16 %v355
    %v2299 = vunpack.c.l.b16 %v356
    %v2300 = vunpack.c.h.b16 %v356
    %v2301 = vunpack.c.l.b16 %v357
    %v2302 = vunpack.c.h.b16 %v357
    %v2303 = vunpack.c.l.b16 %v358
    %v2304 = vunpack.c.l.b16 %v359
    %v2305 = vunpack.c.h.b16 %v359
    %v2306 = vunpack.c.l.b16 %v360
    %v2307 = vunpack.c.h.b16 %v360
    %v2308 = vunpack.c.l.b16 %v361
    %v2309 = vunpack.c.h.b16 %v361
    %v2310 = vunpack.c.l.b16 %v362
    %v2311 = vunpack.c.l.b16 %v363
    %v2312 = vunpack.c.h.b16 %v363
    %v2313 = vunpack.c.l.b16 %v364
    %v2314 = vunpack.c.h.b16 %v364
    %v2315 = vunpack.c.l.b16 %v365
    %v2316 = vunpack.c.h.b16 %v365
    %v2317 = vunpack.c.l.b16 %v366
    %v2318 = vunpack.c.l.b16 %v367
    %v2319 = vunpack.c.h.b16 %v367
    %v2320 = vunpack.c.l.b16 %v368
    %v2321 = vunpack.c.h.b16 %v368
    %v2322 = vunpack.c.l.b16 %v369
    %v2323 = vunpack.c.h.b16 %v369
    %v2324 = vunpack.c.l.b16 %v370
    %v2325 = vunpack.c.l.b16 %v371
    %v2326 = vunpack.c.h.b16 %v371
    %v2327 = vunpack.c.l.b16 %v372
    %v2328 = vunpack.c.h.b16 %v372
    %v2329 = vunpack.c.l.b16 %v373
    %v2330 = vunpack.c.h.b16 %v373
    %v2331 = vunpack.c.l.b16 %v374
    %v2332 = vunpack.c.l.b16 %v375
    %v2333 = vunpack.c.h.b16 %v375
    %v2334 = vunpack.c.l.b16 %v376
    %v2335 = vunpack.c.h.b16 %v376
    %v2336 = vunpack.c.l.b16 %v377
    %v2337 = vunpack.c.h.b16 %v377
    %v2338 = vunpack.c.l.b16 %v378
    %v2339 = vunpack.c.l.b16 %v379
    %v2340 = vunpack.c.h.b16 %v379
    %v2341 = vunpack.c.l.b16 %v380
    %v2342 = vunpack.c.h.b16 %v380
    %v2343 = vunpack.c.l.b16 %v381
    %v2344 = vunpack.c.h.b16 %v381
    %v2345 = vunpack.c.l.b16 %v382
    %v2346 = vunpack.c.l.b16 %v383
    %v2347 = vunpack.c.h.b16 %v383
    %v2348 = vunpack.c.l.b16 %v384
    %v2349 = vunpack.c.h.b16 %v384
    %v2350 = vunpack.c.l.b16 %v385
    %v2351 = vunpack.c.h.b16 %v385
    %v2352 = vunpack.c.l.b16 %v386
    %v2353 = vunpack.c.l.b16 %v387
    %v2354 = vunpack.c.h.b16 %v387
    %v2355 = vunpack.c.l.b16 %v388
    %v2356 = vunpack.c.h.b16 %v388
    %v2357 = vunpack.c.l.b16 %v389
    %v2358 = vunpack.c.h.b16 %v389
    %v2359 = vunpack.c.l.b16 %v390
    %v2360 = vunpack.c.l.b16 %v391
    %v2361 = vunpack.c.h.b16 %v391
    %v2362 = vunpack.c.l.b16 %v392
    %v2363 = vunpack.c.h.b16 %v392
    %v2364 = vunpack.c.l.b16 %v393
    %v2365 = vunpack.c.h.b16 %v393
    %v2366 = vunpack.c.l.b16 %v394
    %v2367 = vunpack.c.l.b16 %v395
    %v2368 = vunpack.c.h.b16 %v395
    %v2369 = vunpack.c.l.b16 %v396
    %v2370 = vunpack.c.h.b16 %v396
    %v2371 = vunpack.c.l.b16 %v397
    %v2372 = vunpack.c.h.b16 %v397
    %v2373 = vunpack.c.l.b16 %v398
    %v2374 = vunpack.c.l.b16 %v399
    %v2375 = vunpack.c.h.b16 %v399
    %v2376 = vunpack.c.l.b16 %v400
    %v2377 = vunpack.c.h.b16 %v400
    %v2378 = vunpack.c.l.b16 %v401
    %v2379 = vunpack.c.h.b16 %v401
    %v2380 = vunpack.c.l.b16 %v402
    %v2381 = vunpack.c.l.b16 %v403
    %v2382 = vunpack.c.h.b16 %v403
    %v2383 = vunpack.c.l.b16 %v404
    %v2384 = vunpack.c.h.b16 %v404
    %v2385 = vunpack.c.l.b16 %v405
    %v2386 = vunpack.c.h.b16 %v405
    %v2387 = vunpack.c.l.b16 %v406
    %v2388 = vunpack.c.l.b16 %v407
    %v2389 = vunpack.c.h.b16 %v407
    %v2390 = vunpack.c.l.b16 %v408
    %v2391 = vunpack.c.h.b16 %v408
    %v2392 = vunpack.c.l.b16 %v409
    %v2393 = vunpack.c.h.b16 %v409
    %v2394 = vunpack.c.l.b16 %v410
    %v2395 = vunpack.c.l.b16 %v411
    %v2396 = vunpack.c.h.b16 %v411
    %v2397 = vunpack.c.l.b16 %v412
    %v2398 = vunpack.c.h.b16 %v412
    %v2399 = vunpack.c.l.b16 %v413
    %v2400 = vunpack.c.h.b16 %v413
    %v2401 = vunpack.c.l.b16 %v414
    %v2402 = vunpack.c.l.b16 %v415
    %v2403 = vunpack.c.h.b16 %v415
    %v2404 = vunpack.c.l.b16 %v416
    %v2405 = vunpack.c.h.b16 %v416
    %v2406 = vunpack.c.l.b16 %v417
    %v2407 = vunpack.c.h.b16 %v417
    %v2408 = vunpack.c.l.b16 %v418
    %v2409 = vunpack.c.l.b16 %v419
    %v2410 = vunpack.c.h.b16 %v419
    %v2411 = vunpack.c.l.b16 %v420
    %v2412 = vunpack.c.h.b16 %v420
    %v2413 = vunpack.c.l.b16 %v421
    %v2414 = vunpack.c.h.b16 %v421
    %v2415 = vunpack.c.l.b16 %v422
    %v2416 = vunpack.c.l.b16 %v423
    %v2417 = vunpack.c.h.b16 %v423
    %v2418 = vunpack.c.l.b16 %v424
    %v2419 = vunpack.c.h.b16 %v424
    %v2420 = vunpack.c.l.b16 %v425
    %v2421 = vunpack.c.h.b16 %v425
    %v2422 = vunpack.c.l.b16 %v426
    %v2423 = vunpack.c.l.b16 %v427
    %v2424 = vunpack.c.h.b16 %v427
    %v2425 = vunpack.c.l.b16 %v428
    %v2426 = vunpack.c.h.b16 %v428
    %v2427 = vunpack.c.l.b16 %v429
    %v2428 = vunpack.c.h.b16 %v429
    %v2429 = vunpack.c.l.b16 %v430
    %v2430 = vunpack.c.l.b16 %v431
    %v2431 = vunpack.c.h.b16 %v431
    %v2432 = vunpack.c.l.b16 %v432
    %v2433 = vunpack.c.h.b16 %v432
    %v2434 = vunpack.c.l.b16 %v433
    %v2435 = vunpack.c.h.b16 %v433
    %v2436 = vunpack.c.l.b16 %v434
    %v2437 = vunpack.c.l.b16 %v435
    %v2438 = vunpack.c.h.b16 %v435
    %v2439 = vunpack.c.l.b16 %v436
    %v2440 = vunpack.c.h.b16 %v436
    %v2441 = vunpack.c.l.b16 %v437
    %v2442 = vunpack.c.h.b16 %v437
    %v2443 = vunpack.c.l.b16 %v438
    %v2444 = vunpack.c.l.b16 %v439
    %v2445 = vunpack.c.h.b16 %v439
    %v2446 = vunpack.c.l.b16 %v440
    %v2447 = vunpack.c.h.b16 %v440
    %v2448 = vunpack.c.l.b16 %v441
    %v2449 = vunpack.c.h.b16 %v441
    %v2450 = vunpack.c.l.b16 %v442
    %v2451 = vunpack.c.l.b16 %v443
    %v2452 = vunpack.c.h.b16 %v443
    %v2453 = vunpack.c.l.b16 %v444
    %v2454 = vunpack.c.h.b16 %v444
    %v2455 = vunpack.c.l.b16 %v445
    %v2456 = vunpack.c.h.b16 %v445
    %v2457 = vunpack.c.l.b16 %v446
    %v2458 = vunpack.c.l.b16 %v447
    %v2459 = vunpack.c.h.b16 %v447
    %v2460 = vunpack.c.l.b16 %v448
    %v2461 = vunpack.c.h.b16 %v448
    %v2462 = vunpack.c.l.b16 %v449
    %v2463 = vunpack.c.h.b16 %v449
    %v2464 = vunpack.c.l.b16 %v450
    %v2465 = vunpack.c.l.b16 %v451
    %v2466 = vunpack.c.h.b16 %v451
    %v2467 = vunpack.c.l.b16 %v452
    %v2468 = vunpack.c.h.b16 %v452
    %v2469 = vunpack.c.l.b16 %v453
    %v2470 = vunpack.c.h.b16 %v453
    %v2471 = vunpack.c.l.b16 %v454
    %v2472 = vunpack.c.l.b16 %v455
    %v2473 = vunpack.c.h.b16 %v455
    %v2474 = vunpack.c.l.b16 %v456
    %v2475 = vunpack.c.h.b16 %v456
    %v2476 = vunpack.c.l.b16 %v457
    %v2477 = vunpack.c.h.b16 %v457
    %v2478 = vunpack.c.l.b16 %v458
    %v2479 = vunpack.c.l.b16 %v459
    %v2480 = vunpack.c.h.b16 %v459
    %v2481 = vunpack.c.l.b16 %v460
    %v2482 = vunpack.c.h.b16 %v460
    %v2483 = vunpack.c.l.b16 %v461
    %v2484 = vunpack.c.h.b16 %v461
    %v2485 = vunpack.c.l.b16 %v462
    %v2486 = vunpack.c.l.b16 %v463
    %v2487 = vunpack.c.h.b16 %v463
    %v2488 = vunpack.c.l.b16 %v464
    %v2489 = vunpack.c.h.b16 %v464
    %v2490 = vunpack.c.l.b16 %v465
    %v2491 = vunpack.c.h.b16 %v465
    %v2492 = vunpack.c.l.b16 %v466
    %v2493 = vunpack.c.l.b16 %v467
    %v2494 = vunpack.c.h.b16 %v467
    %v2495 = vunpack.c.l.b16 %v468
    %v2496 = vunpack.c.h.b16 %v468
    %v2497 = vunpack.c.l.b16 %v469
    %v2498 = vunpack.c.h.b16 %v469
    %v2499 = vunpack.c.l.b16 %v470
    %v2500 = vunpack.c.l.b16 %v471
    %v2501 = vunpack.c.h.b16 %v471
    %v2502 = vunpack.c.l.b16 %v472
    %v2503 = vunpack.c.h.b16 %v472
    %v2504 = vunpack.c.l.b16 %v473
    %v2505 = vunpack.c.h.b16 %v473
    %v2506 = vunpack.c.l.b16 %v474
    %v2507 = vunpack.c.l.b16 %v475
    %v2508 = vunpack.c.h.b16 %v475
    %v2509 = vunpack.c.l.b16 %v476
    %v2510 = vunpack.c.h.b16 %v476
    %v2511 = vunpack.c.l.b16 %v477
    %v2512 = vunpack.c.h.b16 %v477
    %v2513 = vunpack.c.l.b16 %v478
    %v2514 = vunpack.c.l.b16 %v479
    %v2515 = vunpack.c.h.b16 %v479
    %v2516 = vunpack.c.l.b16 %v480
    %v2517 = vunpack.c.h.b16 %v480
    %v2518 = vunpack.c.l.b16 %v481
    %v2519 = vunpack.c.h.b16 %v481
    %v2520 = vunpack.c.l.b16 %v482
    %v2521 = vunpack.c.l.b16 %v483
    %v2522 = vunpack.c.h.b16 %v483
    %v2523 = vunpack.c.l.b16 %v484
    %v2524 = vunpack.c.h.b16 %v484
    %v2525 = vunpack.c.l.b16 %v485
    %v2526 = vunpack.c.h.b16 %v485
    %v2527 = vunpack.c.l.b16 %v486
    %v2528 = vunpack.c.l.b16 %v487
    %v2529 = vunpack.c.h.b16 %v487
    %v2530 = vunpack.c.l.b16 %v488
    %v2531 = vunpack.c.h.b16 %v488
    %v2532 = vunpack.c.l.b16 %v489
    %v2533 = vunpack.c.h.b16 %v489
    %v2534 = vunpack.c.l.b16 %v490
    %v2535 = vunpack.c.l.b16 %v491
    %v2536 = vunpack.c.h.b16 %v491
    %v2537 = vunpack.c.l.b16 %v492
    %v2538 = vunpack.c.h.b16 %v492
    %v2539 = vunpack.c.l.b16 %v493
    %v2540 = vunpack.c.h.b16 %v493
    %v2541 = vunpack.c.l.b16 %v494
    %v2542 = vunpack.c.l.b16 %v495
    %v2543 = vunpack.c.h.b16 %v495
    %v2544 = vunpack.c.l.b16 %v496
    %v2545 = vunpack.c.h.b16 %v496
    %v2546 = vunpack.c.l.b16 %v497
    %v2547 = vunpack.c.h.b16 %v497
    %v2548 = vunpack.c.l.b16 %v498
    %v2549 = vunpack.c.l.b16 %v499
    %v2550 = vunpack.c.h.b16 %v499
    %v2551 = vunpack.c.l.b16 %v500
    %v2552 = vunpack.c.h.b16 %v500
    %v2553 = vunpack.c.l.b16 %v501
    %v2554 = vunpack.c.h.b16 %v501
    %v2555 = vunpack.c.l.b16 %v502
    %v2556 = vunpack.c.l.b16 %v503
    %v2557 = vunpack.c.h.b16 %v503
    %v2558 = vunpack.c.l.b16 %v504
    %v2559 = vunpack.c.h.b16 %v504
    %v2560 = vunpack.c.l.b16 %v505
    %v2561 = vunpack.c.h.b16 %v505
    %v2562 = vunpack.c.l.b16 %v506
    %v2563 = vunpack.c.l.b16 %v507
    %v2564 = vunpack.c.h.b16 %v507
    %v2565 = vunpack.c.l.b16 %v508
    %v2566 = vunpack.c.h.b16 %v508
    %v2567 = vunpack.c.l.b16 %v509
    %v2568 = vunpack.c.h.b16 %v509
    %v2569 = vunpack.c.l.b16 %v510
    %v2570 = vunpack.c.l.b16 %v511
    %v2571 = vunpack.c.h.b16 %v511
    %v2572 = vunpack.c.l.b16 %v512
    %v2573 = vunpack.c.h.b16 %v512
    %v2574 = vunpack.c.l.b16 %v513
    %v2575 = vunpack.c.h.b16 %v513
    %v2576 = vunpack.c.l.b16 %v514
    %v2577 = vunpack.c.l.b16 %v515
    %v2578 = vunpack.c.h.b16 %v515
    %v2579 = vunpack.c.l.b16 %v516
    %v2580 = vunpack.c.h.b16 %v516
    %v2581 = vunpack.c.l.b16 %v517
    %v2582 = vunpack.c.h.b16 %v517
    %v2583 = vunpack.c.l.b16 %v518
    %v2584 = vunpack.c.l.b16 %v519
    %v2585 = vunpack.c.h.b16 %v519
    %v2586 = vunpack.c.l.b16 %v520
    %v2587 = vunpack.c.h.b16 %v520
    %v2588 = vunpack.c.l.b16 %v521
    %v2589 = vunpack.c.h.b16 %v521
    %v2590 = vunpack.c.l.b16 %v522
    %v2591 = vunpack.c.l.b16 %v523
    %v2592 = vunpack.c.h.b16 %v523
    %v2593 = vunpack.c.l.b16 %v524
    %v2594 = vunpack.c.h.b16 %v524
    %v2595 = vunpack.c.l.b16 %v525
    %v2596 = vunpack.c.h.b16 %v525
    %v2597 = vunpack.c.l.b16 %v526
    %v2598 = vunpack.c.l.b16 %v527
    %v2599 = vunpack.c.h.b16 %v527
    %v2600 = vunpack.c.l.b16 %v528
    %v2601 = vunpack.c.h.b16 %v528
    %v2602 = vunpack.c.l.b16 %v529
    %v2603 = vunpack.c.h.b16 %v529
    %v2604 = vunpack.c.l.b16 %v530
    %v2605 = vunpack.c.l.b16 %v531
    %v2606 = vunpack.c.h.b16 %v531
    %v2607 = vunpack.c.l.b16 %v532
    %v2608 = vunpack.c.h.b16 %v532
    %v2609 = vunpack.c.l.b16 %v533
    %v2610 = vunpack.c.h.b16 %v533
    %v2611 = vunpack.c.l.b16 %v534
    %v2612 = vunpack.c.l.b16 %v535
    %v2613 = vunpack.c.h.b16 %v535
    %v2614 = vunpack.c.l.b16 %v536
    %v2615 = vunpack.c.h.b16 %v536
    %v2616 = vunpack.c.l.b16 %v537
    %v2617 = vunpack.c.h.b16 %v537
    %v2618 = vunpack.c.l.b16 %v538
    %v2619 = vunpack.c.l.b16 %v539
    %v2620 = vunpack.c.h.b16 %v539
    %v2621 = vunpack.c.l.b16 %v540
    %v2622 = vunpack.c.h.b16 %v540
    %v2623 = vunpack.c.l.b16 %v541
    %v2624 = vunpack.c.h.b16 %v541
    %v2625 = vunpack.c.l.b16 %v542
    %v2626 = vunpack.c.l.b16 %v543
    %v2627 = vunpack.c.h.b16 %v543
    %v2628 = vunpack.c.l.b16 %v544
    %v2629 = vunpack.c.h.b16 %v544
    %v2630 = vunpack.c.l.b16 %v545
    %v2631 = vunpack.c.h.b16 %v545
    %v2632 = vunpack.c.l.b16 %v546
    %v2633 = vunpack.c.l.b16 %v547
    %v2634 = vunpack.c.h.b16 %v547
    %v2635 = vunpack.c.l.b16 %v548
    %v2636 = vunpack.c.h.b16 %v548
    %v2637 = vunpack.c.l.b16 %v549
    %v2638 = vunpack.c.h.b16 %v549
    %v2639 = vunpack.c.l.b16 %v550
    %v2640 = vunpack.c.l.b16 %v551
    %v2641 = vunpack.c.h.b16 %v551
    %v2642 = vunpack.c.l.b16 %v552
    %v2643 = vunpack.c.h.b16 %v552
    %v2644 = vunpack.c.l.b16 %v553
    %v2645 = vunpack.c.h.b16 %v553
    %v2646 = vunpack.c.l.b16 %v554
    %v2647 = vunpack.c.l.b16 %v555
    %v2648 = vunpack.c.h.b16 %v555
    %v2649 = vunpack.c.l.b16 %v556
    %v2650 = vunpack.c.h.b16 %v556
    %v2651 = vunpack.c.l.b16 %v557
    %v2652 = vunpack.c.h.b16 %v557
    %v2653 = vunpack.c.l.b16 %v558
    %v2654 = vunpack.c.l.b16 %v559
    %v2655 = vunpack.c.h.b16 %v559
    %v2656 = vunpack.c.l.b16 %v560
    %v2657 = vunpack.c.h.b16 %v560
    %v2658 = vunpack.c.l.b16 %v561
    %v2659 = vunpack.c.h.b16 %v561
    %v2660 = vunpack.c.l.b16 %v562
    %v2661 = vunpack.c.l.b16 %v563
    %v2662 = vunpack.c.h.b16 %v563
    %v2663 = vunpack.c.l.b16 %v564
    %v2664 = vunpack.c.h.b16 %v564
    %v2665 = vunpack.c.l.b16 %v565
    %v2666 = vunpack.c.h.b16 %v565
    %v2667 = vunpack.c.l.b16 %v566
    %v2668 = vunpack.c.l.b16 %v567
    %v2669 = vunpack.c.h.b16 %v567
    %v2670 = vunpack.c.l.b16 %v568
    %v2671 = vunpack.c.h.b16 %v568
    %v2672 = vunpack.c.l.b16 %v569
    %v2673 = vunpack.c.h.b16 %v569
    %v2674 = vunpack.c.l.b16 %v570
    %v2675 = vunpack.c.l.b16 %v571
    %v2676 = vunpack.c.h.b16 %v571
    %v2677 = vunpack.c.l.b16 %v572
    %v2678 = vunpack.c.h.b16 %v572
    %v2679 = vunpack.c.l.b16 %v573
    %v2680 = vunpack.c.h.b16 %v573
    %v2681 = vunpack.c.l.b16 %v574
    %v2682 = vunpack.c.l.b16 %v575
    %v2683 = vunpack.c.h.b16 %v575
    %v2684 = vunpack.c.l.b16 %v576
    %v2685 = vunpack.c.h.b16 %v576
    %v2686 = vunpack.c.l.b16 %v577
    %v2687 = vunpack.c.h.b16 %v577
    %v2688 = vunpack.c.l.b16 %v578
    %v2689 = vunpack.c.l.b16 %v579
    %v2690 = vunpack.c.h.b16 %v579
    %v2691 = vunpack.c.l.b16 %v580
    %v2692 = vunpack.c.h.b16 %v580
    %v2693 = vunpack.c.l.b16 %v581
    %v2694 = vunpack.c.h.b16 %v581
    %v2695 = vunpack.c.l.b16 %v582
    %v2696 = vunpack.c.l.b16 %v583
    %v2697 = vunpack.c.h.b16 %v583
    %v2698 = vunpack.c.l.b16 %v584
    %v2699 = vunpack.c.h.b16 %v584
    %v2700 = vunpack.c.l.b16 %v585
    %v2701 = vunpack.c.h.b16 %v585
    %v2702 = vunpack.c.l.b16 %v586
    %v2703 = vunpack.c.l.b16 %v587
    %v2704 = vunpack.c.h.b16 %v587
    %v2705 = vunpack.c.l.b16 %v588
    %v2706 = vunpack.c.h.b16 %v588
    %v2707 = vunpack.c.l.b16 %v589
    %v2708 = vunpack.c.h.b16 %v589
    %v2709 = vunpack.c.l.b16 %v590
    %v2710 = vunpack.c.l.b16 %v591
    %v2711 = vunpack.c.h.b16 %v591
    %v2712 = vunpack.c.l.b16 %v592
    %v2713 = vunpack.c.h.b16 %v592
    %v2714 = vunpack.c.l.b16 %v593
    %v2715 = vunpack.c.h.b16 %v593
    %v2716 = vunpack.c.l.b16 %v594
    %v2717 = vunpack.c.l.b16 %v595
    %v2718 = vunpack.c.h.b16 %v595
    %v2719 = vunpack.c.l.b16 %v596
    %v2720 = vunpack.c.h.b16 %v596
    %v2721 = vunpack.c.l.b16 %v597
    %v2722 = vunpack.c.h.b16 %v597
    %v2723 = vunpack.c.l.b16 %v598
    %v2724 = vunpack.c.l.b16 %v599
    %v2725 = vunpack.c.h.b16 %v599
    %v2726 = vunpack.c.l.b16 %v600
    %v2727 = vunpack.c.h.b16 %v600
    %v2728 = vunpack.c.l.b16 %v601
    %v2729 = vunpack.c.h.b16 %v601
    %v2730 = vunpack.c.l.b16 %v602
    %v2731 = vunpack.c.l.b16 %v603
    %v2732 = vunpack.c.h.b16 %v603
    %v2733 = vunpack.c.l.b16 %v604
    %v2734 = vunpack.c.h.b16 %v604
    %v2735 = vunpack.c.l.b16 %v605
    %v2736 = vunpack.c.h.b16 %v605
    %v2737 = vunpack.c.l.b16 %v606
    %v2738 = vunpack.c.l.b16 %v607
    %v2739 = vunpack.c.h.b16 %v607
    %v2740 = vunpack.c.l.b16 %v608
    %v2741 = vunpack.c.h.b16 %v608
    %v2742 = vunpack.c.l.b16 %v609
    %v2743 = vunpack.c.h.b16 %v609
    %v2744 = vunpack.c.l.b16 %v610
    %v2745 = vunpack.c.l.b16 %v611
    %v2746 = vunpack.c.h.b16 %v611
    %v2747 = vunpack.c.l.b16 %v612
    %v2748 = vunpack.c.h.b16 %v612
    %v2749 = vunpack.c.l.b16 %v613
    %v2750 = vunpack.c.h.b16 %v613
    %v2751 = vunpack.c.l.b16 %v614
    %v2752 = vunpack.c.l.b16 %v615
    %v2753 = vunpack.c.h.b16 %v615
    %v2754 = vunpack.c.l.b16 %v616
    %v2755 = vunpack.c.h.b16 %v616
    %v2756 = vunpack.c.l.b16 %v617
    %v2757 = vunpack.c.h.b16 %v617
    %v2758 = vunpack.c.l.b16 %v618
    %v2759 = vunpack.c.l.b16 %v619
    %v2760 = vunpack.c.h.b16 %v619
    %v2761 = vunpack.c.l.b16 %v620
    %v2762 = vunpack.c.h.b16 %v620
    %v2763 = vunpack.c.l.b16 %v621
    %v2764 = vunpack.c.h.b16 %v621
    %v2765 = vunpack.c.l.b16 %v622
    %v2766 = vunpack.c.l.b16 %v623
    %v2767 = vunpack.c.h.b16 %v623
    %v2768 = vunpack.c.l.b16 %v624
    %v2769 = vunpack.c.h.b16 %v624
    %v2770 = vunpack.c.l.b16 %v625
    %v2771 = vunpack.c.h.b16 %v625
    %v2772 = vunpack.c.l.b16 %v626
    %v2773 = vunpack.c.l.b16 %v627
    %v2774 = vunpack.c.h.b16 %v627
    %v2775 = vunpack.c.l.b16 %v628
    %v2776 = vunpack.c.h.b16 %v628
    %v2777 = vunpack.c.l.b16 %v629
    %v2778 = vunpack.c.h.b16 %v629
    %v2779 = vunpack.c.l.b16 %v630
    %v2780 = vunpack.c.l.b16 %v631
    %v2781 = vunpack.c.h.b16 %v631
    %v2782 = vunpack.c.l.b16 %v632
    %v2783 = vunpack.c.h.b16 %v632
    %v2784 = vunpack.c.l.b16 %v633
    %v2785 = vunpack.c.h.b16 %v633
    %v2786 = vunpack.c.l.b16 %v634
    %v2787 = vunpack.c.l.b16 %v635
    %v2788 = vunpack.c.h.b16 %v635
    %v2789 = vunpack.c.l.b16 %v636
    %v2790 = vunpack.c.h.b16 %v636
    %v2791 = vunpack.c.l.b16 %v637
    %v2792 = vunpack.c.h.b16 %v637
    %v2793 = vunpack.c.l.b16 %v638
    %v2794 = vunpack.c.l.b16 %v639
    %v2795 = vunpack.c.h.b16 %v639
    %v2796 = vunpack.c.l.b16 %v640
    %v2797 = vunpack.c.h.b16 %v640
    %v2798 = vunpack.c.l.b16 %v641
    %v2799 = vunpack.c.h.b16 %v641
    %v2800 = vunpack.c.l.b16 %v642
    %v2801 = vunpack.c.l.b16 %v643
    %v2802 = vunpack.c.h.b16 %v643
    %v2803 = vunpack.c.l.b16 %v644
    %v2804 = vunpack.c.h.b16 %v644
    %v2805 = vunpack.c.l.b16 %v645
    %v2806 = vunpack.c.h.b16 %v645
    %v2807 = vunpack.c.l.b16 %v646
    %v2808 = vunpack.c.l.b16 %v647
    %v2809 = vunpack.c.h.b16 %v647
    %v2810 = vunpack.c.l.b16 %v648
    %v2811 = vunpack.c.h.b16 %v648
    %v2812 = vunpack.c.l.b16 %v649
    %v2813 = vunpack.c.h.b16 %v649
    %v2814 = vunpack.c.l.b16 %v650
    %v2815 = vunpack.c.l.b16 %v651
    %v2816 = vunpack.c.h.b16 %v651
    %v2817 = vunpack.c.l.b16 %v652
    %v2818 = vunpack.c.h.b16 %v652
    %v2819 = vunpack.c.l.b16 %v653
    %v2820 = vunpack.c.h.b16 %v653
    %v2821 = vunpack.c.l.b16 %v654
    %v2822 = vunpack.c.l.b16 %v655
    %v2823 = vunpack.c.h.b16 %v655
    %v2824 = vunpack.c.l.b16 %v656
    %v2825 = vunpack.c.h.b16 %v656
    %v2826 = vunpack.c.l.b16 %v657
    %v2827 = vunpack.c.h.b16 %v657
    %v2828 = vunpack.c.l.b16 %v658
    %v2829 = vunpack.c.l.b16 %v659
    %v2830 = vunpack.c.h.b16 %v659
    %v2831 = vunpack.c.l.b16 %v660
    %v2832 = vunpack.c.h.b16 %v660
    %v2833 = vunpack.c.l.b16 %v661
    %v2834 = vunpack.c.h.b16 %v661
    %v2835 = vunpack.c.l.b16 %v662
    %v2836 = vunpack.c.l.b16 %v663
    %v2837 = vunpack.c.h.b16 %v663
    %v2838 = vunpack.c.l.b16 %v664
    %v2839 = vunpack.c.h.b16 %v664
    %v2840 = vunpack.c.l.b16 %v665
    %v2841 = vunpack.c.h.b16 %v665
    %v2842 = vunpack.c.l.b16 %v666
    %v2843 = vpack.c.b16 %v1954, %v1947
    %v2844 = vpack.c.b16 %v1955, %v1948
    %v2845 = vpack.c.b16 %v1956, %v1949
    %v2846 = vpack.c.b16 %v1957, %v1950
    %v2847 = vpack.c.b16 %v1958, %v1951
    %v2848 = vpack.c.b16 %v1959, %v1952
    %v2849 = vpack.c.b16 %v1960, %v1953
    %v2850 = vpack.c.b16 %v1968, %v1961
    %v2851 = vpack.c.b16 %v1969, %v1962
    %v2852 = vpack.c.b16 %v1970, %v1963
    %v2853 = vpack.c.b16 %v1971, %v1964
    %v2854 = vpack.c.b16 %v1972, %v1965
    %v2855 = vpack.c.b16 %v1973, %v1966
    %v2856 = vpack.c.b16 %v1974, %v1967
    %v2857 = vpack.c.b16 %v1982, %v1975
    %v2858 = vpack.c.b16 %v1983, %v1976
    %v2859 = vpack.c.b16 %v1984, %v1977
    %v2860 = vpack.c.b16 %v1985, %v1978
    %v2861 = vpack.c.b16 %v1986, %v1979
    %v2862 = vpack.c.b16 %v1987, %v1980
    %v2863 = vpack.c.b16 %v1988, %v1981
    %v2864 = vpack.c.b16 %v1996, %v1989
    %v2865 = vpack.c.b16 %v1997, %v1990
    %v2866 = vpack.c.b16 %v1998, %v1991
    %v2867 = vpack.c.b16 %v1999, %v1992
    %v2868 = vpack.c.b16 %v2000, %v1993
    %v2869 = vpack.c.b16 %v2001, %v1994
    %v2870 = vpack.c.b16 %v2002, %v1995
    %v2871 = vpack.c.b16 %v2010, %v2003
    %v2872 = vpack.c.b16 %v2011, %v2004
    %v2873 = vpack.c.b16 %v2012, %v2005
    %v2874 = vpack.c.b16 %v2013, %v2006
    %v2875 = vpack.c.b16 %v2014, %v2007
    %v2876 = vpack.c.b16 %v2015, %v2008
    %v2877 = vpack.c.b16 %v2016, %v2009
    %v2878 = vpack.c.b16 %v2024, %v2017
    %v2879 = vpack.c.b16 %v2025, %v2018
    %v2880 = vpack.c.b16 %v2026, %v2019
    %v2881 = vpack.c.b16 %v2027, %v2020
    %v2882 = vpack.c.b16 %v2028, %v2021
    %v2883 = vpack.c.b16 %v2029, %v2022
    %v2884 = vpack.c.b16 %v2030, %v2023
    %v2885 = vpack.c.b16 %v2038, %v2031
    %v2886 = vpack.c.b16 %v2039, %v2032
    %v2887 = vpack.c.b16 %v2040, %v2033
    %v2888 = vpack.c.b16 %v2041, %v2034
    %v2889 = vpack.c.b16 %v2042, %v2035
    %v2890 = vpack.c.b16 %v2043, %v2036
    %v2891 = vpack.c.b16 %v2044, %v2037
    %v2892 = vpack.c.b16 %v2052, %v2045
    %v2893 = vpack.c.b16 %v2053, %v2046
    %v2894 = vpack.c.b16 %v2054, %v2047
    %v2895 = vpack.c.b16 %v2055, %v2048
    %v2896 = vpack.c.b16 %v2056, %v2049
    %v2897 = vpack.c.b16 %v2057, %v2050
    %v2898 = vpack.c.b16 %v2058, %v2051
    %v2899 = vpack.c.b16 %v2066, %v2059
    %v2900 = vpack.c.b16 %v2067, %v2060
    %v2901 = vpack.c.b16 %v2068, %v2061
    %v2902 = vpack.c.b16 %v2069, %v2062
    %v2903 = vpack.c.b16 %v2070, %v2063
    %v2904 = vpack.c.b16 %v2071, %v2064
    %v2905 = vpack.c.b16 %v2072, %v2065
    %v2906 = vpack.c.b16 %v2080, %v2073
    %v2907 = vpack.c.b16 %v2081, %v2074
    %v2908 = vpack.c.b16 %v2082, %v2075
    %v2909 = vpack.c.b16 %v2083, %v2076
    %v2910 = vpack.c.b16 %v2084, %v2077
    %v2911 = vpack.c.b16 %v2085, %v2078
    %v2912 = vpack.c.b16 %v2086, %v2079
    %v2913 = vpack.c.b16 %v2094, %v2087
    %v2914 = vpack.c.b16 %v2095, %v2088
    %v2915 = vpack.c.b16 %v2096, %v2089
    %v2916 = vpack.c.b16 %v2097, %v2090
    %v2917 = vpack.c.b16 %v2098, %v2091
    %v2918 = vpack.c.b16 %v2099, %v2092
    %v2919 = vpack.c.b16 %v2100, %v2093
    %v2920 = vpack.c.b16 %v2108, %v2101
    %v2921 = vpack.c.b16 %v2109, %v2102
    %v2922 = vpack.c.b16 %v2110, %v2103
    %v2923 = vpack.c.b16 %v2111, %v2104
    %v2924 = vpack.c.b16 %v2112, %v2105
    %v2925 = vpack.c.b16 %v2113, %v2106
    %v2926 = vpack.c.b16 %v2114, %v2107
    %v2927 = vpack.c.b16 %v2122, %v2115
    %v2928 = vpack.c.b16 %v2123, %v2116
    %v2929 = vpack.c.b16 %v2124, %v2117
    %v2930 = vpack.c.b16 %v2125, %v2118
    %v2931 = vpack.c.b16 %v2126, %v2119
    %v2932 = vpack.c.b16 %v2127, %v2120
    %v2933 = vpack.c.b16 %v2128, %v2121
    %v2934 = vpack.c.b16 %v2136, %v2129
    %v2935 = vpack.c.b16 %v2137, %v2130
    %v2936 = vpack.c.b16 %v2138, %v2131
    %v2937 = vpack.c.b16 %v2139, %v2132
    %v2938 = vpack.c.b16 %v2140, %v2133
    %v2939 = vpack.c.b16 %v2141, %v2134
    %v2940 = vpack.c.b16 %v2142, %v2135
    %v2941 = vpack.c.b16 %v2150, %v2143
    %v2942 = vpack.c.b16 %v2151, %v2144
    %v2943 = vpack.c.b16 %v2152, %v2145
    %v2944 = vpack.c.b16 %v2153, %v2146
    %v2945 = vpack.c.b16 %v2154, %v2147
    %v2946 = vpack.c.b16 %v2155, %v2148
    %v2947 = vpack.c.b16 %v2156, %v2149
    %v2948 = vpack.c.b16 %v2164, %v2157
    %v2949 = vpack.c.b16 %v2165, %v2158
    %v2950 = vpack.c.b16 %v2166, %v2159
    %v2951 = vpack.c.b16 %v2167, %v2160
    %v2952 = vpack.c.b16 %v2168, %v2161
    %v2953 = vpack.c.b16 %v2169, %v2162
    %v2954 = vpack.c.b16 %v2170, %v2163
    %v2955 = vpack.c.b16 %v2178, %v2171
    %v2956 = vpack.c.b16 %v2179, %v2172
    %v2957 = vpack.c.b16 %v2180, %v2173
    %v2958 = vpack.c.b16 %v2181, %v2174
    %v2959 = vpack.c.b16 %v2182, %v2175
    %v2960 = vpack.c.b16 %v2183, %v2176
    %v2961 = vpack.c.b16 %v2184, %v2177
    %v2962 = vpack.c.b16 %v2192, %v2185
    %v2963 = vpack.c.b16 %v2193, %v2186
    %v2964 = vpack.c.b16 %v2194, %v2187
    %v2965 = vpack.c.b16 %v2195, %v2188
    %v2966 = vpack.c.b16 %v2196, %v2189
    %v2967 = vpack.c.b16 %v2197, %v2190
    %v2968 = vpack.c.b16 %v2198, %v2191
    %v2969 = vpack.c.b16 %v2206, %v2199
    %v2970 = vpack.c.b16 %v2207, %v2200
    %v2971 = vpack.c.b16 %v2208, %v2201
    %v2972 = vpack.c.b16 %v2209, %v2202
    %v2973 = vpack.c.b16 %v2210, %v2203
    %v2974 = vpack.c.b16 %v2211, %v2204
    %v2975 = vpack.c.b16 %v2212, %v2205
    %v2976 = vpack.c.b16 %v2220, %v2213
    %v2977 = vpack.c.b16 %v2221, %v2214
    %v2978 = vpack.c.b16 %v2222, %v2215
    %v2979 = vpack.c.b16 %v2223, %v2216
    %v2980 = vpack.c.b16 %v2224, %v2217
    %v2981 = vpack.c.b16 %v2225, %v2218
    %v2982 = vpack.c.b16 %v2226, %v2219
    %v2983 = vpack.c.b16 %v2234, %v2227
    %v2984 = vpack.c.b16 %v2235, %v2228
    %v2985 = vpack.c.b16 %v2236, %v2229
    %v2986 = vpack.c.b16 %v2237, %v2230
    %v2987 = vpack.c.b16 %v2238, %v2231
    %v2988 = vpack.c.b16 %v2239, %v2232
    %v2989 = vpack.c.b16 %v2240, %v2233
    %v2990 = vpack.c.b16 %v2248, %v2241
    %v2991 = vpack.c.b16 %v2249, %v2242
    %v2992 = vpack.c.b16 %v2250, %v2243
    %v2993 = vpack.c.b16 %v2251, %v2244
    %v2994 = vpack.c.b16 %v2252, %v2245
    %v2995 = vpack.c.b16 %v2253, %v2246
    %v2996 = vpack.c.b16 %v2254, %v2247
    %v2997 = vpack.c.b16 %v2262, %v2255
    %v2998 = vpack.c.b16 %v2263, %v2256
    %v2999 = vpack.c.b16 %v2264, %v2257
    %v3000 = vpack.c.b16 %v2265, %v2258
    %v3001 = vpack.c.b16 %v2266, %v2259
    %v3002 = vpack.c.b16 %v2267, %v2260
    %v3003 = vpack.c.b16 %v2268, %v2261
    %v3004 = vpack.c.b16 %v2276, %v2269
    %v3005 = vpack.c.b16 %v2277, %v2270
    %v3006 = vpack.c.b16 %v2278, %v2271
    %v3007 = vpack.c.b16 %v2279, %v2272
    %v3008 = vpack.c.b16 %v2280, %v2273
    %v3009 = vpack.c.b16 %v2281, %v2274
    %v3010 = vpack.c.b16 %v2282, %v2275
    %v3011 = vpack.c.b16 %v2290, %v2283
    %v3012 = vpack.c.b16 %v2291, %v2284
    %v3013 = vpack.c.b16 %v2292, %v2285
    %v3014 = vpack.c.b16 %v2293, %v2286
    %v3015 = vpack.c.b16 %v2294, %v2287
    %v3016 = vpack.c.b16 %v2295, %v2288
    %v3017 = vpack.c.b16 %v2296, %v2289
    %v3018 = vpack.c.b16 %v2304, %v2297
    %v3019 = vpack.c.b16 %v2305, %v2298
    %v3020 = vpack.c.b16 %v2306, %v2299
    %v3021 = vpack.c.b16 %v2307, %v2300
    %v3022 = vpack.c.b16 %v2308, %v2301
    %v3023 = vpack.c.b16 %v2309, %v2302
    %v3024 = vpack.c.b16 %v2310, %v2303
    %v3025 = vpack.c.b16 %v2318, %v2311
    %v3026 = vpack.c.b16 %v2319, %v2312
    %v3027 = vpack.c.b16 %v2320, %v2313
    %v3028 = vpack.c.b16 %v2321, %v2314
    %v3029 = vpack.c.b16 %v2322, %v2315
    %v3030 = vpack.c.b16 %v2323, %v2316
    %v3031 = vpack.c.b16 %v2324, %v2317
    %v3032 = vpack.c.b16 %v2332, %v2325
    %v3033 = vpack.c.b16 %v2333, %v2326
    %v3034 = vpack.c.b16 %v2334, %v2327
    %v3035 = vpack.c.b16 %v2335, %v2328
    %v3036 = vpack.c.b16 %v2336, %v2329
    %v3037 = vpack.c.b16 %v2337, %v2330
    %v3038 = vpack.c.b16 %v2338, %v2331
    %v3039 = vpack.c.b16 %v2346, %v2339
    %v3040 = vpack.c.b16 %v2347, %v2340
    %v3041 = vpack.c.b16 %v2348, %v2341
    %v3042 = vpack.c.b16 %v2349, %v2342
    %v3043 = vpack.c.b16 %v2350, %v2343
    %v3044 = vpack.c.b16 %v2351, %v2344
    %v3045 = vpack.c.b16 %v2352, %v2345
    %v3046 = vpack.c.b16 %v2360, %v2353
    %v3047 = vpack.c.b16 %v2361, %v2354
    %v3048 = vpack.c.b16 %v2362, %v2355
    %v3049 = vpack.c.b16 %v2363, %v2356
    %v3050 = vpack.c.b16 %v2364, %v2357
    %v3051 = vpack.c.b16 %v2365, %v2358
    %v3052 = vpack.c.b16 %v2366, %v2359
    %v3053 = vpack.c.b16 %v2374, %v2367
    %v3054 = vpack.c.b16 %v2375, %v2368
    %v3055 = vpack.c.b16 %v2376, %v2369
    %v3056 = vpack.c.b16 %v2377, %v2370
    %v3057 = vpack.c.b16 %v2378, %v2371
    %v3058 = vpack.c.b16 %v2379, %v2372
    %v3059 = vpack.c.b16 %v2380, %v2373
    %v3060 = vpack.c.b16 %v2388, %v2381
    %v3061 = vpack.c.b16 %v2389, %v2382
    %v3062 = vpack.c.b16 %v2390, %v2383
    %v3063 = vpack.c.b16 %v2391, %v2384
    %v3064 = vpack.c.b16 %v2392, %v2385
    %v3065 = vpack.c.b16 %v2393, %v2386
    %v3066 = vpack.c.b16 %v2394, %v2387
    %v3067 = vpack.c.b16 %v2402, %v2395
    %v3068 = vpack.c.b16 %v2403, %v2396
    %v3069 = vpack.c.b16 %v2404, %v2397
    %v3070 = vpack.c.b16 %v2405, %v2398
    %v3071 = vpack.c.b16 %v2406, %v2399
    %v3072 = vpack.c.b16 %v2407, %v2400
    %v3073 = vpack.c.b16 %v2408, %v2401
    %v3074 = vpack.c.b16 %v2416, %v2409
    %v3075 = vpack.c.b16 %v2417, %v2410
    %v3076 = vpack.c.b16 %v2418, %v2411
    %v3077 = vpack.c.b16 %v2419, %v2412
    %v3078 = vpack.c.b16 %v2420, %v2413
    %v3079 = vpack.c.b16 %v2421, %v2414
    %v3080 = vpack.c.b16 %v2422, %v2415
    %v3081 = vpack.c.b16 %v2430, %v2423
    %v3082 = vpack.c.b16 %v2431, %v2424
    %v3083 = vpack.c.b16 %v2432, %v2425
    %v3084 = vpack.c.b16 %v2433, %v2426
    %v3085 = vpack.c.b16 %v2434, %v2427
    %v3086 = vpack.c.b16 %v2435, %v2428
    %v3087 = vpack.c.b16 %v2436, %v2429
    %v3088 = vpack.c.b16 %v2444, %v2437
    %v3089 = vpack.c.b16 %v2445, %v2438
    %v3090 = vpack.c.b16 %v2446, %v2439
    %v3091 = vpack.c.b16 %v2447, %v2440
    %v3092 = vpack.c.b16 %v2448, %v2441
    %v3093 = vpack.c.b16 %v2449, %v2442
    %v3094 = vpack.c.b16 %v2450, %v2443
    %v3095 = vpack.c.b16 %v2458, %v2451
    %v3096 = vpack.c.b16 %v2459, %v2452
    %v3097 = vpack.c.b16 %v2460, %v2453
    %v3098 = vpack.c.b16 %v2461, %v2454
    %v3099 = vpack.c.b16 %v2462, %v2455
    %v3100 = vpack.c.b16 %v2463, %v2456
    %v3101 = vpack.c.b16 %v2464, %v2457
    %v3102 = vpack.c.b16 %v2472, %v2465
    %v3103 = vpack.c.b16 %v2473, %v2466
    %v3104 = vpack.c.b16 %v2474, %v2467
    %v3105 = vpack.c.b16 %v2475, %v2468
    %v3106 = vpack.c.b16 %v2476, %v2469
    %v3107 = vpack.c.b16 %v2477, %v2470
    %v3108 = vpack.c.b16 %v2478, %v2471
    %v3109 = vpack.c.b16 %v2486, %v2479
    %v3110 = vpack.c.b16 %v2487, %v2480
    %v3111 = vpack.c.b16 %v2488, %v2481
    %v3112 = vpack.c.b16 %v2489, %v2482
    %v3113 = vpack.c.b16 %v2490, %v2483
    %v3114 = vpack.c.b16 %v2491, %v2484
    %v3115 = vpack.c.b16 %v2492, %v2485
    %v3116 = vpack.c.b16 %v2500, %v2493
    %v3117 = vpack.c.b16 %v2501, %v2494
    %v3118 = vpack.c.b16 %v2502, %v2495
    %v3119 = vpack.c.b16 %v2503, %v2496
    %v3120 = vpack.c.b16 %v2504, %v2497
    %v3121 = vpack.c.b16 %v2505, %v2498
    %v3122 = vpack.c.b16 %v2506, %v2499
    %v3123 = vpack.c.b16 %v2514, %v2507
    %v3124 = vpack.c.b16 %v2515, %v2508
    %v3125 = vpack.c.b16 %v2516, %v2509
    %v3126 = vpack.c.b16 %v2517, %v2510
    %v3127 = vpack.c.b16 %v2518, %v2511
    %v3128 = vpack.c.b16 %v2519, %v2512
    %v3129 = vpack.c.b16 %v2520, %v2513
    %v3130 = vpack.c.b16 %v2528, %v2521
    %v3131 = vpack.c.b16 %v2529, %v2522
    %v3132 = vpack.c.b16 %v2530, %v2523
    %v3133 = vpack.c.b16 %v2531, %v2524
    %v3134 = vpack.c.b16 %v2532, %v2525
    %v3135 = vpack.c.b16 %v2533, %v2526
    %v3136 = vpack.c.b16 %v2534, %v2527
    %v3137 = vpack.c.b16 %v2542, %v2535
    %v3138 = vpack.c.b16 %v2543, %v2536
    %v3139 = vpack.c.b16 %v2544, %v2537
    %v3140 = vpack.c.b16 %v2545, %v2538
    %v3141 = vpack.c.b16 %v2546, %v2539
    %v3142 = vpack.c.b16 %v2547, %v2540
    %v3143 = vpack.c.b16 %v2548, %v2541
    %v3144 = vpack.c.b16 %v2556, %v2549
    %v3145 = vpack.c.b16 %v2557, %v2550
    %v3146 = vpack.c.b16 %v2558, %v2551
    %v3147 = vpack.c.b16 %v2559, %v2552
    %v3148 = vpack.c.b16 %v2560, %v2553
    %v3149 = vpack.c.b16 %v2561, %v2554
    %v3150 = vpack.c.b16 %v2562, %v2555
    %v3151 = vpack.c.b16 %v2570, %v2563
    %v3152 = vpack.c.b16 %v2571, %v2564
    %v3153 = vpack.c.b16 %v2572, %v2565
    %v3154 = vpack.c.b16 %v2573, %v2566
    %v3155 = vpack.c.b16 %v2574, %v2567
    %v3156 = vpack.c.b16 %v2575, %v2568
    %v3157 = vpack.c.b16 %v2576, %v2569
    %v3158 = vpack.c.b16 %v2584, %v2577
    %v3159 = vpack.c.b16 %v2585, %v2578
    %v3160 = vpack.c.b16 %v2586, %v2579
    %v3161 = vpack.c.b16 %v2587, %v2580
    %v3162 = vpack.c.b16 %v2588, %v2581
    %v3163 = vpack.c.b16 %v2589, %v2582
    %v3164 = vpack.c.b16 %v2590, %v2583
    %v3165 = vpack.c.b16 %v2598, %v2591
    %v3166 = vpack.c.b16 %v2599, %v2592
    %v3167 = vpack.c.b16 %v2600, %v2593
    %v3168 = vpack.c.b16 %v2601, %v2594
    %v3169 = vpack.c.b16 %v2602, %v2595
    %v3170 = vpack.c.b16 %v2603, %v2596
    %v3171 = vpack.c.b16 %v2604, %v2597
    %v3172 = vpack.c.b16 %v2612, %v2605
    %v3173 = vpack.c.b16 %v2613, %v2606
    %v3174 = vpack.c.b16 %v2614, %v2607
    %v3175 = vpack.c.b16 %v2615, %v2608
    %v3176 = vpack.c.b16 %v2616, %v2609
    %v3177 = vpack.c.b16 %v2617, %v2610
    %v3178 = vpack.c.b16 %v2618, %v2611
    %v3179 = vpack.c.b16 %v2626, %v2619
    %v3180 = vpack.c.b16 %v2627, %v2620
    %v3181 = vpack.c.b16 %v2628, %v2621
    %v3182 = vpack.c.b16 %v2629, %v2622
    %v3183 = vpack.c.b16 %v2630, %v2623
    %v3184 = vpack.c.b16 %v2631, %v2624
    %v3185 = vpack.c.b16 %v2632, %v2625
    %v3186 = vpack.c.b16 %v2640, %v2633
    %v3187 = vpack.c.b16 %v2641, %v2634
    %v3188 = vpack.c.b16 %v2642, %v2635
    %v3189 = vpack.c.b16 %v2643, %v2636
    %v3190 = vpack.c.b16 %v2644, %v2637
    %v3191 = vpack.c.b16 %v2645, %v2638
    %v3192 = vpack.c.b16 %v2646, %v2639
    %v3193 = vpack.c.b16 %v2654, %v2647
    %v3194 = vpack.c.b16 %v2655, %v2648
    %v3195 = vpack.c.b16 %v2656, %v2649
    %v3196 = vpack.c.b16 %v2657, %v2650
    %v3197 = vpack.c.b16 %v2658, %v2651
    %v3198 = vpack.c.b16 %v2659, %v2652
    %v3199 = vpack.c.b16 %v2660, %v2653
    %v3200 = vpack.c.b16 %v2668, %v2661
    %v3201 = vpack.c.b16 %v2669, %v2662
    %v3202 = vpack.c.b16 %v2670, %v2663
    %v3203 = vpack.c.b16 %v2671, %v2664
    %v3204 = vpack.c.b16 %v2672, %v2665
    %v3205 = vpack.c.b16 %v2673, %v2666
    %v3206 = vpack.c.b16 %v2674, %v2667
    %v3207 = vpack.c.b16 %v2682, %v2675
    %v3208 = vpack.c.b16 %v2683, %v2676
    %v3209 = vpack.c.b16 %v2684, %v2677
    %v3210 = vpack.c.b16 %v2685, %v2678
    %v3211 = vpack.c.b16 %v2686, %v2679
    %v3212 = vpack.c.b16 %v2687, %v2680
    %v3213 = vpack.c.b16 %v2688, %v2681
    %v3214 = vpack.c.b16 %v2696, %v2689
    %v3215 = vpack.c.b16 %v2697, %v2690
    %v3216 = vpack.c.b16 %v2698, %v2691
    %v3217 = vpack.c.b16 %v2699, %v2692
    %v3218 = vpack.c.b16 %v2700, %v2693
    %v3219 = vpack.c.b16 %v2701, %v2694
    %v3220 = vpack.c.b16 %v2702, %v2695
    %v3221 = vpack.c.b16 %v2710, %v2703
    %v3222 = vpack.c.b16 %v2711, %v2704
    %v3223 = vpack.c.b16 %v2712, %v2705
    %v3224 = vpack.c.b16 %v2713, %v2706
    %v3225 = vpack.c.b16 %v2714, %v2707
    %v3226 = vpack.c.b16 %v2715, %v2708
    %v3227 = vpack.c.b16 %v2716, %v2709
    %v3228 = vpack.c.b16 %v2724, %v2717
    %v3229 = vpack.c.b16 %v2725, %v2718
    %v3230 = vpack.c.b16 %v2726, %v2719
    %v3231 = vpack.c.b16 %v2727, %v2720
    %v3232 = vpack.c.b16 %v2728, %v2721
    %v3233 = vpack.c.b16 %v2729, %v2722
    %v3234 = vpack.c.b16 %v2730, %v2723
    %v3235 = vpack.c.b16 %v2738, %v2731
    %v3236 = vpack.c.b16 %v2739, %v2732
    %v3237 = vpack.c.b16 %v2740, %v2733
    %v3238 = vpack.c.b16 %v2741, %v2734
    %v3239 = vpack.c.b16 %v2742, %v2735
    %v3240 = vpack.c.b16 %v2743, %v2736
    %v3241 = vpack.c.b16 %v2744, %v2737
    %v3242 = vpack.c.b16 %v2752, %v2745
    %v3243 = vpack.c.b16 %v2753, %v2746
    %v3244 = vpack.c.b16 %v2754, %v2747
    %v3245 = vpack.c.b16 %v2755, %v2748
    %v3246 = vpack.c.b16 %v2756, %v2749
    %v3247 = vpack.c.b16 %v2757, %v2750
    %v3248 = vpack.c.b16 %v2758, %v2751
    %v3249 = vpack.c.b16 %v2766, %v2759
    %v3250 = vpack.c.b16 %v2767, %v2760
    %v3251 = vpack.c.b16 %v2768, %v2761
    %v3252 = vpack.c.b16 %v2769, %v2762
    %v3253 = vpack.c.b16 %v2770, %v2763
    %v3254 = vpack.c.b16 %v2771, %v2764
    %v3255 = vpack.c.b16 %v2772, %v2765
    %v3256 = vpack.c.b16 %v2780, %v2773
    %v3257 = vpack.c.b16 %v2781, %v2774
    %v3258 = vpack.c.b16 %v2782, %v2775
    %v3259 = vpack.c.b16 %v2783, %v2776
    %v3260 = vpack.c.b16 %v2784, %v2777
    %v3261 = vpack.c.b16 %v2785, %v2778
    %v3262 = vpack.c.b16 %v2786, %v2779
    %v3263 = vpack.c.b16 %v2794, %v2787
    %v3264 = vpack.c.b16 %v2795, %v2788
    %v3265 = vpack.c.b16 %v2796, %v2789
    %v3266 = vpack.c.b16 %v2797, %v2790
    %v3267 = vpack.c.b16 %v2798, %v2791
    %v3268 = vpack.c.b16 %v2799, %v2792
    %v3269 = vpack.c.b16 %v2800, %v2793
    %v3270 = vpack.c.b16 %v2808, %v2801
    %v3271 = vpack.c.b16 %v2809, %v2802
    %v3272 = vpack.c.b16 %v2810, %v2803
    %v3273 = vpack.c.b16 %v2811, %v2804
    %v3274 = vpack.c.b16 %v2812, %v2805
    %v3275 = vpack.c.b16 %v2813, %v2806
    %v3276 = vpack.c.b16 %v2814, %v2807
    %v3277 = vpack.c.b16 %v2822, %v2815
    %v3278 = vpack.c.b16 %v2823, %v2816
    %v3279 = vpack.c.b16 %v2824, %v2817
    %v3280 = vpack.c.b16 %v2825, %v2818
    %v3281 = vpack.c.b16 %v2826, %v2819
    %v3282 = vpack.c.b16 %v2827, %v2820
    %v3283 = vpack.c.b16 %v2828, %v2821
    %v3284 = vpack.c.b16 %v2836, %v2829
    %v3285 = vpack.c.b16 %v2837, %v2830
    %v3286 = vpack.c.b16 %v2838, %v2831
    %v3287 = vpack.c.b16 %v2839, %v2832
    %v3288 = vpack.c.b16 %v2840, %v2833
    %v3289 = vpack.c.b16 %v2841, %v2834
    %v3290 = vpack.c.b16 %v2842, %v2835
    %v3803 = vunpack.c.l.b16 %v91
    %v3804 = vunpack.c.h.b16 %v91
    %v3805 = vunpack.c.l.b16 %v92
    %v3806 = vunpack.c.h.b16 %v92
    %v3807 = vunpack.c.l.b16 %v93
    %v3808 = vunpack.c.h.b16 %v93
    %v3809 = vunpack.c.l.b16 %v94
    %v3810 = vunpack.c.l.b16 %v95
    %v3811 = vunpack.c.h.b16 %v95
    %v3812 = vunpack.c.l.b16 %v96
    %v3813 = vunpack.c.h.b16 %v96
    %v3814 = vunpack.c.l.b16 %v97
    %v3815 = vunpack.c.h.b16 %v97
    %v3816 = vunpack.c.l.b16 %v98
    %v3817 = vunpack.c.l.b16 %v99
    %v3818 = vunpack.c.h.b16 %v99
    %v3819 = vunpack.c.l.b16 %v100
    %v3820 = vunpack.c.h.b16 %v100
    %v3821 = vunpack.c.l.b16 %v101
    %v3822 = vunpack.c.h.b16 %v101
    %v3823 = vunpack.c.l.b16 %v102
    %v3824 = vunpack.c.l.b16 %v103
    %v3825 = vunpack.c.h.b16 %v103
    %v3826 = vunpack.c.l.b16 %v104
    %v3827 = vunpack.c.h.b16 %v104
    %v3828 = vunpack.c.l.b16 %v105
    %v3829 = vunpack.c.h.b16 %v105
    %v3830 = vunpack.c.l.b16 %v106
    %v3831 = vunpack.c.l.b16 %v107
    %v3832 = vunpack.c.h.b16 %v107
    %v3833 = vunpack.c.l.b16 %v108
    %v3834 = vunpack.c.h.b16 %v108
    %v3835 = vunpack.c.l.b16 %v109
    %v3836 = vunpack.c.h.b16 %v109
    %v3837 = vunpack.c.l.b16 %v110
    %v3838 = vunpack.c.l.b16 %v111
    %v3839 = vunpack.c.h.b16 %v111
    %v3840 = vunpack.c.l.b16 %v112
    %v3841 = vunpack.c.h.b16 %v112
    %v3842 = vunpack.c.l.b16 %v113
    %v3843 = vunpack.c.h.b16 %v113
    %v3844 = vunpack.c.l.b16 %v114
    %v3845 = vunpack.c.l.b16 %v115
    %v3846 = vunpack.c.h.b16 %v115
    %v3847 = vunpack.c.l.b16 %v116
    %v3848 = vunpack.c.h.b16 %v116
    %v3849 = vunpack.c.l.b16 %v117
    %v3850 = vunpack.c.h.b16 %v117
    %v3851 = vunpack.c.l.b16 %v118
    %v3852 = vunpack.c.l.b16 %v119
    %v3853 = vunpack.c.h.b16 %v119
    %v3854 = vunpack.c.l.b16 %v120
    %v3855 = vunpack.c.h.b16 %v120
    %v3856 = vunpack.c.l.b16 %v121
    %v3857 = vunpack.c.h.b16 %v121
    %v3858 = vunpack.c.l.b16 %v122
    %v3859 = vunpack.c.l.b16 %v123
    %v3860 = vunpack.c.h.b16 %v123
    %v3861 = vunpack.c.l.b16 %v124
    %v3862 = vunpack.c.h.b16 %v124
    %v3863 = vunpack.c.l.b16 %v125
    %v3864 = vunpack.c.h.b16 %v125
    %v3865 = vunpack.c.l.b16 %v126
    %v3866 = vunpack.c.l.b16 %v127
    %v3867 = vunpack.c.h.b16 %v127
    %v3868 = vunpack.c.l.b16 %v128
    %v3869 = vunpack.c.h.b16 %v128
    %v3870 = vunpack.c.l.b16 %v129
    %v3871 = vunpack.c.h.b16 %v129
    %v3872 = vunpack.c.l.b16 %v130
    %v3873 = vunpack.c.l.b16 %v131
    %v3874 = vunpack.c.h.b16 %v131
    %v3875 = vunpack.c.l.b16 %v132
    %v3876 = vunpack.c.h.b16 %v132
    %v3877 = vunpack.c.l.b16 %v133
    %v3878 = vunpack.c.h.b16 %v133
    %v3879 = vunpack.c.l.b16 %v134
    %v3880 = vunpack.c.l.b16 %v135
    %v3881 = vunpack.c.h.b16 %v135
    %v3882 = vunpack.c.l.b16 %v136
    %v3883 = vunpack.c.h.b16 %v136
    %v3884 = vunpack.c.l.b16 %v137
    %v3885 = vunpack.c.h.b16 %v137
    %v3886 = vunpack.c.l.b16 %v138
    %v3887 = vunpack.c.l.b16 %v139
    %v3888 = vunpack.c.h.b16 %v139
    %v3889 = vunpack.c.l.b16 %v140
    %v3890 = vunpack.c.h.b16 %v140
    %v3891 = vunpack.c.l.b16 %v141
    %v3892 = vunpack.c.h.b16 %v141
    %v3893 = vunpack.c.l.b16 %v142
    %v3894 = vunpack.c.l.b16 %v143
    %v3895 = vunpack.c.h.b16 %v143
    %v3896 = vunpack.c.l.b16 %v144
    %v3897 = vunpack.c.h.b16 %v144
    %v3898 = vunpack.c.l.b16 %v145
    %v3899 = vunpack.c.h.b16 %v145
    %v3900 = vunpack.c.l.b16 %v146
    %v3901 = vunpack.c.l.b16 %v147
    %v3902 = vunpack.c.h.b16 %v147
    %v3903 = vunpack.c.l.b16 %v148
    %v3904 = vunpack.c.h.b16 %v148
    %v3905 = vunpack.c.l.b16 %v149
    %v3906 = vunpack.c.h.b16 %v149
    %v3907 = vunpack.c.l.b16 %v150
    %v3908 = vunpack.c.l.b16 %v151
    %v3909 = vunpack.c.h.b16 %v151
    %v3910 = vunpack.c.l.b16 %v152
    %v3911 = vunpack.c.h.b16 %v152
    %v3912 = vunpack.c.l.b16 %v153
    %v3913 = vunpack.c.h.b16 %v153
    %v3914 = vunpack.c.l.b16 %v154
    %v3915 = vpack.c.b16 %v3810, %v3803
    %v3916 = vpack.c.b16 %v3811, %v3804
    %v3917 = vpack.c.b16 %v3812, %v3805
    %v3918 = vpack.c.b16 %v3813, %v3806
    %v3919 = vpack.c.b16 %v3814, %v3807
    %v3920 = vpack.c.b16 %v3815, %v3808
    %v3921 = vpack.c.b16 %v3816, %v3809
    %v3922 = vpack.c.b16 %v3824, %v3817
    %v3923 = vpack.c.b16 %v3825, %v3818
    %v3924 = vpack.c.b16 %v3826, %v3819
    %v3925 = vpack.c.b16 %v3827, %v3820
    %v3926 = vpack.c.b16 %v3828, %v3821
    %v3927 = vpack.c.b16 %v3829, %v3822
    %v3928 = vpack.c.b16 %v3830, %v3823
    %v3929 = vpack.c.b16 %v3838, %v3831
    %v3930 = vpack.c.b16 %v3839, %v3832
    %v3931 = vpack.c.b16 %v3840, %v3833
    %v3932 = vpack.c.b16 %v3841, %v3834
    %v3933 = vpack.c.b16 %v3842, %v3835
    %v3934 = vpack.c.b16 %v3843, %v3836
    %v3935 = vpack.c.b16 %v3844, %v3837
    %v3936 = vpack.c.b16 %v3852, %v3845
    %v3937 = vpack.c.b16 %v3853, %v3846
    %v3938 = vpack.c.b16 %v3854, %v3847
    %v3939 = vpack.c.b16 %v3855, %v3848
    %v3940 = vpack.c.b16 %v3856, %v3849
    %v3941 = vpack.c.b16 %v3857, %v3850
    %v3942 = vpack.c.b16 %v3858, %v3851
    %v3943 = vpack.c.b16 %v3866, %v3859
    %v3944 = vpack.c.b16 %v3867, %v3860
    %v3945 = vpack.c.b16 %v3868, %v3861
    %v3946 = vpack.c.b16 %v3869, %v3862
    %v3947 = vpack.c.b16 %v3870, %v3863
    %v3948 = vpack.c.b16 %v3871, %v3864
    %v3949 = vpack.c.b16 %v3872, %v3865
    %v3950 = vpack.c.b16 %v3880, %v3873
    %v3951 = vpack.c.b16 %v3881, %v3874
    %v3952 = vpack.c.b16 %v3882, %v3875
    %v3953 = vpack.c.b16 %v3883, %v3876
    %v3954 = vpack.c.b16 %v3884, %v3877
    %v3955 = vpack.c.b16 %v3885, %v3878
    %v3956 = vpack.c.b16 %v3886, %v3879
    %v3957 = vpack.c.b16 %v3894, %v3887
    %v3958 = vpack.c.b16 %v3895, %v3888
    %v3959 = vpack.c.b16 %v3896, %v3889
    %v3960 = vpack.c.b16 %v3897, %v3890
    %v3961 = vpack.c.b16 %v3898, %v3891
    %v3962 = vpack.c.b16 %v3899, %v3892
    %v3963 = vpack.c.b16 %v3900, %v3893
    %v3964 = vpack.c.b16 %v3908, %v3901
    %v3965 = vpack.c.b16 %v3909, %v3902
    %v3966 = vpack.c.b16 %v3910, %v3903
    %v3967 = vpack.c.b16 %v3911, %v3904
    %v3968 = vpack.c.b16 %v3912, %v3905
    %v3969 = vpack.c.b16 %v3913, %v3906
    %v3970 = vpack.c.b16 %v3914, %v3907
    %4027 = vmatprep.subr.bf16.mxu0 %v3916
    %4028 = vmatpush1.bf16.xpose.msra.mxu0 %v3915
    %4029 = vmatprep.subr.bf16.mxu0 %v3923
    %4030 = vmatpush1.bf16.xpose.msra.mxu0 %v3922
    %4031 = vmatprep.subr.bf16.mxu0 %v3930
    %4032 = vmatpush1.bf16.xpose.msra.mxu0 %v3929
    %4033 = vmatprep.subr.bf16.mxu0 %v3937
    %4034 = vmatpush1.bf16.xpose.msra.mxu0 %v3936
    %4035 = vmatprep.subr.bf16.mxu0 %v3944
    %4036 = vmatpush1.bf16.xpose.msra.mxu0 %v3943
    %4037 = vmatprep.subr.bf16.mxu0 %v3951
    %4038 = vmatpush1.bf16.xpose.msra.mxu0 %v3950
    %4039 = vmatprep.subr.bf16.mxu0 %v3958
    %4040 = vmatpush1.bf16.xpose.msra.mxu0 %v3957
    %4041 = vmatprep.subr.bf16.mxu0 %v3965
    %4042 = vmatpush1.bf16.xpose.msra.mxu0 %v3964
    %4043 = vmatprep.subr.bf16.mxu0 0
    %4044 = vmatpush1.bf16.xpose.msra.mxu0 0
    %4045 = vmatprep.subr.bf16.mxu0 0
    %4046 = vmatpush1.bf16.xpose.msra.mxu0 0
    %4047 = vmatprep.subr.bf16.mxu0 0
    %4048 = vmatpush1.bf16.xpose.msra.mxu0 0
    %4049 = vmatprep.subr.bf16.mxu0 0
    %4050 = vmatpush1.bf16.xpose.msra.mxu0 0
    %4051 = vmatprep.subr.bf16.mxu0 0
    %4052 = vmatpush1.bf16.xpose.msra.mxu0 0
    %4053 = vmatprep.subr.bf16.mxu0 0
    %4054 = vmatpush1.bf16.xpose.msra.mxu0 0
    %4055 = vmatprep.subr.bf16.mxu0 0
    %4056 = vmatpush1.bf16.xpose.msra.mxu0 0
    %4057 = vmatprep.subr.bf16.mxu0 0
    %4058 = vmatpush1.bf16.xpose.msra.mxu0 0
    %4059 = vmatprep.mubr.bf16.mxu0 %v2844
    %4060 = vmatmul.mubr.bf16.gmra.mrb[0].mxu0 %v2843
    %v4061 = vpop.f32.mrb[0].mxu0
    %v4062 = vadd.f32 %v798, %v4061
    %v4063 = vpop.f32.mrb[0].mxu0
    %v4064 = vpop.f32.mrb[0].mxu0
    %v4065 = vadd.f32 %v803, %v4064
    %v4066 = vpop.f32.mrb[0].mxu0
    %4067 = vmatprep.mubr.bf16.mxu0 %v2851
    %4068 = vmatmul.mubr.bf16.gmra.mrb[0].mxu0 %v2850
    %v4069 = vpop.f32.mrb[0].mxu0
    %v4070 = vadd.f32 %v808, %v4069
    %v4071 = vpop.f32.mrb[0].mxu0
    %v4072 = vpop.f32.mrb[0].mxu0
    %v4073 = vadd.f32 %v813, %v4072
    %v4074 = vpop.f32.mrb[0].mxu0
    %4075 = vmatprep.mubr.bf16.mxu0 %v2858
    %4076 = vmatmul.mubr.bf16.gmra.mrb[0].mxu0 %v2857
    %v4077 = vpop.f32.mrb[0].mxu0
    %v4078 = vadd.f32 %v818, %v4077
    %v4079 = vpop.f32.mrb[0].mxu0
    %v4080 = vpop.f32.mrb[0].mxu0
    %v4081 = vadd.f32 %v823, %v4080
    %v4082 = vpop.f32.mrb[0].mxu0
    %4083 = vmatprep.mubr.bf16.mxu0 %v2865
    %4084 = vmatmul.mubr.bf16.gmra.mrb[0].mxu0 %v2864
    %v4085 = vpop.f32.mrb[0].mxu0
    %v4086 = vadd.f32 %v828, %v4085
    %v4087 = vpop.f32.mrb[0].mxu0
    %v4088 = vpop.f32.mrb[0].mxu0
    %v4089 = vadd.f32 %v833, %v4088
    %v4090 = vpop.f32.mrb[0].mxu0
    %4091 = vmatprep.mubr.bf16.mxu0 %v2872
    %4092 = vmatmul.mubr.bf16.gmra.mrb[0].mxu0 %v2871
    %v4093 = vpop.f32.mrb[0].mxu0
    %v4094 = vadd.f32 %v838, %v4093
    %v4095 = vpop.f32.mrb[0].mxu0
    %v4096 = vpop.f32.mrb[0].mxu0
    %v4097 = vadd.f32 %v843, %v4096
    %v4098 = vpop.f32.mrb[0].mxu0
    %4099 = vmatprep.mubr.bf16.mxu0 %v2879
    %4100 = vmatmul.mubr.bf16.gmra.mrb[0].mxu0 %v2878
    %v4101 = vpop.f32.mrb[0].mxu0
    %v4102 = vadd.f32 %v848, %v4101
    %v4103 = vpop.f32.mrb[0].mxu0
    %v4104 = vpop.f32.mrb[0].mxu0
    %v4105 = vadd.f32 %v853, %v4104
    %v4106 = vpop.f32.mrb[0].mxu0
    %4107 = vmatprep.mubr.bf16.mxu0 %v2886
    %4108 = vmatmul.mubr.bf16.gmra.mrb[0].mxu0 %v2885
    %v4109 = vpop.f32.mrb[0].mxu0
    %v4110 = vadd.f32 %v858, %v4109
    %v4111 = vpop.f32.mrb[0].mxu0
    %v4112 = vpop.f32.mrb[0].mxu0
    %v4113 = vadd.f32 %v863, %v4112
    %v4114 = vpop.f32.mrb[0].mxu0
    %4115 = vmatprep.mubr.bf16.mxu0 %v2893
    %4116 = vmatmul.mubr.bf16.gmra.mrb[0].mxu0 %v2892
    %v4117 = vpop.f32.mrb[0].mxu0
    %v4118 = vadd.f32 %v868, %v4117
    %v4119 = vpop.f32.mrb[0].mxu0
    %v4120 = vpop.f32.mrb[0].mxu0
    %v4121 = vadd.f32 %v873, %v4120
    %v4122 = vpop.f32.mrb[0].mxu0
    %4123 = vmatprep.mubr.bf16.mxu0 %v2900
    %4124 = vmatmul.mubr.bf16.gmra.mrb[0].mxu0 %v2899
    %v4125 = vpop.f32.mrb[0].mxu0
    %v4126 = vadd.f32 %v878, %v4125
    %v4127 = vpop.f32.mrb[0].mxu0
    %v4128 = vpop.f32.mrb[0].mxu0
    %v4129 = vadd.f32 %v883, %v4128
    %v4130 = vpop.f32.mrb[0].mxu0
    %4131 = vmatprep.mubr.bf16.mxu0 %v2907
    %4132 = vmatmul.mubr.bf16.gmra.mrb[0].mxu0 %v2906
    %v4133 = vpop.f32.mrb[0].mxu0
    %v4134 = vadd.f32 %v888, %v4133
    %v4135 = vpop.f32.mrb[0].mxu0
    %v4136 = vpop.f32.mrb[0].mxu0
    %v4137 = vadd.f32 %v893, %v4136
    %v4138 = vpop.f32.mrb[0].mxu0
    %4139 = vmatprep.mubr.bf16.mxu0 %v2914
    %4140 = vmatmul.mubr.bf16.gmra.mrb[0].mxu0 %v2913
    %v4141 = vpop.f32.mrb[0].mxu0
    %v4142 = vadd.f32 %v898, %v4141
    %v4143 = vpop.f32.mrb[0].mxu0
    %v4144 = vpop.f32.mrb[0].mxu0
    %v4145 = vadd.f32 %v903, %v4144
    %v4146 = vpop.f32.mrb[0].mxu0
    %4147 = vmatprep.mubr.bf16.mxu0 %v2921
    %4148 = vmatmul.mubr.bf16.gmra.mrb[0].mxu0 %v2920
    %v4149 = vpop.f32.mrb[0].mxu0
    %v4150 = vadd.f32 %v908, %v4149
    %v4151 = vpop.f32.mrb[0].mxu0
    %v4152 = vpop.f32.mrb[0].mxu0
    %v4153 = vadd.f32 %v913, %v4152
    %v4154 = vpop.f32.mrb[0].mxu0
    %4155 = vmatprep.mubr.bf16.mxu0 %v2928
    %4156 = vmatmul.mubr.bf16.gmra.mrb[0].mxu0 %v2927
    %v4157 = vpop.f32.mrb[0].mxu0
    %v4158 = vadd.f32 %v918, %v4157
    %v4159 = vpop.f32.mrb[0].mxu0
    %v4160 = vpop.f32.mrb[0].mxu0
    %v4161 = vadd.f32 %v923, %v4160
    %v4162 = vpop.f32.mrb[0].mxu0
    %4163 = vmatprep.mubr.bf16.mxu0 %v2935
    %4164 = vmatmul.mubr.bf16.gmra.mrb[0].mxu0 %v2934
    %v4165 = vpop.f32.mrb[0].mxu0
    %v4166 = vadd.f32 %v928, %v4165
    %v4167 = vpop.f32.mrb[0].mxu0
    %v4168 = vpop.f32.mrb[0].mxu0
    %v4169 = vadd.f32 %v933, %v4168
    %v4170 = vpop.f32.mrb[0].mxu0
    %4171 = vmatprep.mubr.bf16.mxu0 %v2942
    %4172 = vmatmul.mubr.bf16.gmra.mrb[0].mxu0 %v2941
    %v4173 = vpop.f32.mrb[0].mxu0
    %v4174 = vadd.f32 %v938, %v4173
    %v4175 = vpop.f32.mrb[0].mxu0
    %v4176 = vpop.f32.mrb[0].mxu0
    %v4177 = vadd.f32 %v943, %v4176
    %v4178 = vpop.f32.mrb[0].mxu0
    %4179 = vmatprep.mubr.bf16.mxu0 %v2949
    %4180 = vmatmul.mubr.bf16.gmra.mrb[0].mxu0 %v2948
    %v4181 = vpop.f32.mrb[0].mxu0
    %v4182 = vadd.f32 %v948, %v4181
    %v4183 = vpop.f32.mrb[0].mxu0
    %v4184 = vpop.f32.mrb[0].mxu0
    %v4185 = vadd.f32 %v953, %v4184
    %v4186 = vpop.f32.mrb[0].mxu0
    %4187 = vmatprep.mubr.bf16.mxu0 %v2956
    %4188 = vmatmul.mubr.bf16.gmra.mrb[0].mxu0 %v2955
    %v4189 = vpop.f32.mrb[0].mxu0
    %v4190 = vadd.f32 %v958, %v4189
    %v4191 = vpop.f32.mrb[0].mxu0
    %v4192 = vpop.f32.mrb[0].mxu0
    %v4193 = vadd.f32 %v963, %v4192
    %v4194 = vpop.f32.mrb[0].mxu0
    %4195 = vmatprep.mubr.bf16.mxu0 %v2963
    %4196 = vmatmul.mubr.bf16.gmra.mrb[0].mxu0 %v2962
    %v4197 = vpop.f32.mrb[0].mxu0
    %v4198 = vadd.f32 %v968, %v4197
    %v4199 = vpop.f32.mrb[0].mxu0
    %v4200 = vpop.f32.mrb[0].mxu0
    %v4201 = vadd.f32 %v973, %v4200
    %v4202 = vpop.f32.mrb[0].mxu0
    %4203 = vmatprep.mubr.bf16.mxu0 %v2970
    %4204 = vmatmul.mubr.bf16.gmra.mrb[0].mxu0 %v2969
    %v4205 = vpop.f32.mrb[0].mxu0
    %v4206 = vadd.f32 %v978, %v4205
    %v4207 = vpop.f32.mrb[0].mxu0
    %v4208 = vpop.f32.mrb[0].mxu0
    %v4209 = vadd.f32 %v983, %v4208
    %v4210 = vpop.f32.mrb[0].mxu0
    %4211 = vmatprep.mubr.bf16.mxu0 %v2977
    %4212 = vmatmul.mubr.bf16.gmra.mrb[0].mxu0 %v2976
    %v4213 = vpop.f32.mrb[0].mxu0
    %v4214 = vadd.f32 %v988, %v4213
    %v4215 = vpop.f32.mrb[0].mxu0
    %v4216 = vpop.f32.mrb[0].mxu0
    %v4217 = vadd.f32 %v993, %v4216
    %v4218 = vpop.f32.mrb[0].mxu0
    %4219 = vmatprep.mubr.bf16.mxu0 %v2984
    %4220 = vmatmul.mubr.bf16.gmra.mrb[0].mxu0 %v2983
    %v4221 = vpop.f32.mrb[0].mxu0
    %v4222 = vadd.f32 %v998, %v4221
    %v4223 = vpop.f32.mrb[0].mxu0
    %v4224 = vpop.f32.mrb[0].mxu0
    %v4225 = vadd.f32 %v1003, %v4224
    %v4226 = vpop.f32.mrb[0].mxu0
    %4227 = vmatprep.mubr.bf16.mxu0 %v2991
    %4228 = vmatmul.mubr.bf16.gmra.mrb[0].mxu0 %v2990
    %v4229 = vpop.f32.mrb[0].mxu0
    %v4230 = vadd.f32 %v1008, %v4229
    %v4231 = vpop.f32.mrb[0].mxu0
    %v4232 = vpop.f32.mrb[0].mxu0
    %v4233 = vadd.f32 %v1013, %v4232
    %v4234 = vpop.f32.mrb[0].mxu0
    %4235 = vmatprep.mubr.bf16.mxu0 %v2998
    %4236 = vmatmul.mubr.bf16.gmra.mrb[0].mxu0 %v2997
    %v4237 = vpop.f32.mrb[0].mxu0
    %v4238 = vadd.f32 %v1018, %v4237
    %v4239 = vpop.f32.mrb[0].mxu0
    %v4240 = vpop.f32.mrb[0].mxu0
    %v4241 = vadd.f32 %v1023, %v4240
    %v4242 = vpop.f32.mrb[0].mxu0
    %4243 = vmatprep.mubr.bf16.mxu0 %v3005
    %4244 = vmatmul.mubr.bf16.gmra.mrb[0].mxu0 %v3004
    %v4245 = vpop.f32.mrb[0].mxu0
    %v4246 = vadd.f32 %v1028, %v4245
    %v4247 = vpop.f32.mrb[0].mxu0
    %v4248 = vpop.f32.mrb[0].mxu0
    %v4249 = vadd.f32 %v1033, %v4248
    %v4250 = vpop.f32.mrb[0].mxu0
    %4251 = vmatprep.mubr.bf16.mxu0 %v3012
    %4252 = vmatmul.mubr.bf16.gmra.mrb[0].mxu0 %v3011
    %v4253 = vpop.f32.mrb[0].mxu0
    %v4254 = vadd.f32 %v1038, %v4253
    %v4255 = vpop.f32.mrb[0].mxu0
    %v4256 = vpop.f32.mrb[0].mxu0
    %v4257 = vadd.f32 %v1043, %v4256
    %v4258 = vpop.f32.mrb[0].mxu0
    %4259 = vmatprep.mubr.bf16.mxu0 %v3019
    %4260 = vmatmul.mubr.bf16.gmra.mrb[0].mxu0 %v3018
    %v4261 = vpop.f32.mrb[0].mxu0
    %v4262 = vadd.f32 %v1048, %v4261
    %v4263 = vpop.f32.mrb[0].mxu0
    %v4264 = vpop.f32.mrb[0].mxu0
    %v4265 = vadd.f32 %v1053, %v4264
    %v4266 = vpop.f32.mrb[0].mxu0
    %4267 = vmatprep.mubr.bf16.mxu0 %v3026
    %4268 = vmatmul.mubr.bf16.gmra.mrb[0].mxu0 %v3025
    %v4269 = vpop.f32.mrb[0].mxu0
    %v4270 = vadd.f32 %v1058, %v4269
    %v4271 = vpop.f32.mrb[0].mxu0
    %v4272 = vpop.f32.mrb[0].mxu0
    %v4273 = vadd.f32 %v1063, %v4272
    %v4274 = vpop.f32.mrb[0].mxu0
    %4275 = vmatprep.mubr.bf16.mxu0 %v3033
    %4276 = vmatmul.mubr.bf16.gmra.mrb[0].mxu0 %v3032
    %v4277 = vpop.f32.mrb[0].mxu0
    %v4278 = vadd.f32 %v1068, %v4277
    %v4279 = vpop.f32.mrb[0].mxu0
    %v4280 = vpop.f32.mrb[0].mxu0
    %v4281 = vadd.f32 %v1073, %v4280
    %v4282 = vpop.f32.mrb[0].mxu0
    %4283 = vmatprep.mubr.bf16.mxu0 %v3040
    %4284 = vmatmul.mubr.bf16.gmra.mrb[0].mxu0 %v3039
    %v4285 = vpop.f32.mrb[0].mxu0
    %v4286 = vadd.f32 %v1078, %v4285
    %v4287 = vpop.f32.mrb[0].mxu0
    %v4288 = vpop.f32.mrb[0].mxu0
    %v4289 = vadd.f32 %v1083, %v4288
    %v4290 = vpop.f32.mrb[0].mxu0
    %4291 = vmatprep.mubr.bf16.mxu0 %v3047
    %4292 = vmatmul.mubr.bf16.gmra.mrb[0].mxu0 %v3046
    %v4293 = vpop.f32.mrb[0].mxu0
    %v4294 = vadd.f32 %v1088, %v4293
    %v4295 = vpop.f32.mrb[0].mxu0
    %v4296 = vpop.f32.mrb[0].mxu0
    %v4297 = vadd.f32 %v1093, %v4296
    %v4298 = vpop.f32.mrb[0].mxu0
    %4299 = vmatprep.mubr.bf16.mxu0 %v3054
    %4300 = vmatmul.mubr.bf16.gmra.mrb[0].mxu0 %v3053
    %v4301 = vpop.f32.mrb[0].mxu0
    %v4302 = vadd.f32 %v1098, %v4301
    %v4303 = vpop.f32.mrb[0].mxu0
    %v4304 = vpop.f32.mrb[0].mxu0
    %v4305 = vadd.f32 %v1103, %v4304
    %v4306 = vpop.f32.mrb[0].mxu0
    %4307 = vmatprep.mubr.bf16.mxu0 %v3061
    %4308 = vmatmul.mubr.bf16.gmra.mrb[0].mxu0 %v3060
    %v4309 = vpop.f32.mrb[0].mxu0
    %v4310 = vadd.f32 %v1108, %v4309
    %v4311 = vpop.f32.mrb[0].mxu0
    %v4312 = vpop.f32.mrb[0].mxu0
    %v4313 = vadd.f32 %v1113, %v4312
    %v4314 = vpop.f32.mrb[0].mxu0
    %4315 = vmatprep.mubr.bf16.mxu0 %v3068
    %4316 = vmatmul.mubr.bf16.gmra.mrb[0].mxu0 %v3067
    %v4317 = vpop.f32.mrb[0].mxu0
    %v4318 = vadd.f32 %v1118, %v4317
    %v4319 = vpop.f32.mrb[0].mxu0
    %v4320 = vpop.f32.mrb[0].mxu0
    %v4321 = vadd.f32 %v1123, %v4320
    %v4322 = vpop.f32.mrb[0].mxu0
    %4323 = vmatprep.mubr.bf16.mxu0 %v3075
    %4324 = vmatmul.mubr.bf16.gmra.mrb[0].mxu0 %v3074
    %v4325 = vpop.f32.mrb[0].mxu0
    %v4326 = vadd.f32 %v1128, %v4325
    %v4327 = vpop.f32.mrb[0].mxu0
    %v4328 = vpop.f32.mrb[0].mxu0
    %v4329 = vadd.f32 %v1133, %v4328
    %v4330 = vpop.f32.mrb[0].mxu0
    %4331 = vmatprep.mubr.bf16.mxu0 %v3082
    %4332 = vmatmul.mubr.bf16.gmra.mrb[0].mxu0 %v3081
    %v4333 = vpop.f32.mrb[0].mxu0
    %v4334 = vadd.f32 %v1138, %v4333
    %v4335 = vpop.f32.mrb[0].mxu0
    %v4336 = vpop.f32.mrb[0].mxu0
    %v4337 = vadd.f32 %v1143, %v4336
    %v4338 = vpop.f32.mrb[0].mxu0
    %4339 = vmatprep.mubr.bf16.mxu0 %v3089
    %4340 = vmatmul.mubr.bf16.gmra.mrb[0].mxu0 %v3088
    %v4341 = vpop.f32.mrb[0].mxu0
    %v4342 = vadd.f32 %v1148, %v4341
    %v4343 = vpop.f32.mrb[0].mxu0
    %v4344 = vpop.f32.mrb[0].mxu0
    %v4345 = vadd.f32 %v1153, %v4344
    %v4346 = vpop.f32.mrb[0].mxu0
    %4347 = vmatprep.mubr.bf16.mxu0 %v3096
    %4348 = vmatmul.mubr.bf16.gmra.mrb[0].mxu0 %v3095
    %v4349 = vpop.f32.mrb[0].mxu0
    %v4350 = vadd.f32 %v1158, %v4349
    %v4351 = vpop.f32.mrb[0].mxu0
    %v4352 = vpop.f32.mrb[0].mxu0
    %v4353 = vadd.f32 %v1163, %v4352
    %v4354 = vpop.f32.mrb[0].mxu0
    %4355 = vmatprep.mubr.bf16.mxu0 %v3103
    %4356 = vmatmul.mubr.bf16.gmra.mrb[0].mxu0 %v3102
    %v4357 = vpop.f32.mrb[0].mxu0
    %v4358 = vadd.f32 %v1168, %v4357
    %v4359 = vpop.f32.mrb[0].mxu0
    %v4360 = vpop.f32.mrb[0].mxu0
    %v4361 = vadd.f32 %v1173, %v4360
    %v4362 = vpop.f32.mrb[0].mxu0
    %4363 = vmatprep.mubr.bf16.mxu0 %v3110
    %4364 = vmatmul.mubr.bf16.gmra.mrb[0].mxu0 %v3109
    %v4365 = vpop.f32.mrb[0].mxu0
    %v4366 = vadd.f32 %v1178, %v4365
    %v4367 = vpop.f32.mrb[0].mxu0
    %v4368 = vpop.f32.mrb[0].mxu0
    %v4369 = vadd.f32 %v1183, %v4368
    %v4370 = vpop.f32.mrb[0].mxu0
    %4371 = vmatprep.mubr.bf16.mxu0 %v3117
    %4372 = vmatmul.mubr.bf16.gmra.mrb[0].mxu0 %v3116
    %v4373 = vpop.f32.mrb[0].mxu0
    %v4374 = vadd.f32 %v1188, %v4373
    %v4375 = vpop.f32.mrb[0].mxu0
    %v4376 = vpop.f32.mrb[0].mxu0
    %v4377 = vadd.f32 %v1193, %v4376
    %v4378 = vpop.f32.mrb[0].mxu0
    %4379 = vmatprep.mubr.bf16.mxu0 %v3124
    %4380 = vmatmul.mubr.bf16.gmra.mrb[0].mxu0 %v3123
    %v4381 = vpop.f32.mrb[0].mxu0
    %v4382 = vadd.f32 %v1198, %v4381
    %v4383 = vpop.f32.mrb[0].mxu0
    %v4384 = vpop.f32.mrb[0].mxu0
    %v4385 = vadd.f32 %v1203, %v4384
    %v4386 = vpop.f32.mrb[0].mxu0
    %4387 = vmatprep.mubr.bf16.mxu0 %v3131
    %4388 = vmatmul.mubr.bf16.gmra.mrb[0].mxu0 %v3130
    %v4389 = vpop.f32.mrb[0].mxu0
    %v4390 = vadd.f32 %v1208, %v4389
    %v4391 = vpop.f32.mrb[0].mxu0
    %v4392 = vpop.f32.mrb[0].mxu0
    %v4393 = vadd.f32 %v1213, %v4392
    %v4394 = vpop.f32.mrb[0].mxu0
    %4395 = vmatprep.mubr.bf16.mxu0 %v3138
    %4396 = vmatmul.mubr.bf16.gmra.mrb[0].mxu0 %v3137
    %v4397 = vpop.f32.mrb[0].mxu0
    %v4398 = vadd.f32 %v1218, %v4397
    %v4399 = vpop.f32.mrb[0].mxu0
    %v4400 = vpop.f32.mrb[0].mxu0
    %v4401 = vadd.f32 %v1223, %v4400
    %v4402 = vpop.f32.mrb[0].mxu0
    %4403 = vmatprep.mubr.bf16.mxu0 %v3145
    %4404 = vmatmul.mubr.bf16.gmra.mrb[0].mxu0 %v3144
    %v4405 = vpop.f32.mrb[0].mxu0
    %v4406 = vadd.f32 %v1228, %v4405
    %v4407 = vpop.f32.mrb[0].mxu0
    %v4408 = vpop.f32.mrb[0].mxu0
    %v4409 = vadd.f32 %v1233, %v4408
    %v4410 = vpop.f32.mrb[0].mxu0
    %4411 = vmatprep.mubr.bf16.mxu0 %v3152
    %4412 = vmatmul.mubr.bf16.gmra.mrb[0].mxu0 %v3151
    %v4413 = vpop.f32.mrb[0].mxu0
    %v4414 = vadd.f32 %v1238, %v4413
    %v4415 = vpop.f32.mrb[0].mxu0
    %v4416 = vpop.f32.mrb[0].mxu0
    %v4417 = vadd.f32 %v1243, %v4416
    %v4418 = vpop.f32.mrb[0].mxu0
    %4419 = vmatprep.mubr.bf16.mxu0 %v3159
    %4420 = vmatmul.mubr.bf16.gmra.mrb[0].mxu0 %v3158
    %v4421 = vpop.f32.mrb[0].mxu0
    %v4422 = vadd.f32 %v1248, %v4421
    %v4423 = vpop.f32.mrb[0].mxu0
    %v4424 = vpop.f32.mrb[0].mxu0
    %v4425 = vadd.f32 %v1253, %v4424
    %v4426 = vpop.f32.mrb[0].mxu0
    %4427 = vmatprep.mubr.bf16.mxu0 %v3166
    %4428 = vmatmul.mubr.bf16.gmra.mrb[0].mxu0 %v3165
    %v4429 = vpop.f32.mrb[0].mxu0
    %v4430 = vadd.f32 %v1258, %v4429
    %v4431 = vpop.f32.mrb[0].mxu0
    %v4432 = vpop.f32.mrb[0].mxu0
    %v4433 = vadd.f32 %v1263, %v4432
    %v4434 = vpop.f32.mrb[0].mxu0
    %4435 = vmatprep.mubr.bf16.mxu0 %v3173
    %4436 = vmatmul.mubr.bf16.gmra.mrb[0].mxu0 %v3172
    %v4437 = vpop.f32.mrb[0].mxu0
    %v4438 = vadd.f32 %v1268, %v4437
    %v4439 = vpop.f32.mrb[0].mxu0
    %v4440 = vpop.f32.mrb[0].mxu0
    %v4441 = vadd.f32 %v1273, %v4440
    %v4442 = vpop.f32.mrb[0].mxu0
    %4443 = vmatprep.mubr.bf16.mxu0 %v3180
    %4444 = vmatmul.mubr.bf16.gmra.mrb[0].mxu0 %v3179
    %v4445 = vpop.f32.mrb[0].mxu0
    %v4446 = vadd.f32 %v1278, %v4445
    %v4447 = vpop.f32.mrb[0].mxu0
    %v4448 = vpop.f32.mrb[0].mxu0
    %v4449 = vadd.f32 %v1283, %v4448
    %v4450 = vpop.f32.mrb[0].mxu0
    %4451 = vmatprep.mubr.bf16.mxu0 %v3187
    %4452 = vmatmul.mubr.bf16.gmra.mrb[0].mxu0 %v3186
    %v4453 = vpop.f32.mrb[0].mxu0
    %v4454 = vadd.f32 %v1288, %v4453
    %v4455 = vpop.f32.mrb[0].mxu0
    %v4456 = vpop.f32.mrb[0].mxu0
    %v4457 = vadd.f32 %v1293, %v4456
    %v4458 = vpop.f32.mrb[0].mxu0
    %4459 = vmatprep.mubr.bf16.mxu0 %v3194
    %4460 = vmatmul.mubr.bf16.gmra.mrb[0].mxu0 %v3193
    %v4461 = vpop.f32.mrb[0].mxu0
    %v4462 = vadd.f32 %v1298, %v4461
    %v4463 = vpop.f32.mrb[0].mxu0
    %v4464 = vpop.f32.mrb[0].mxu0
    %v4465 = vadd.f32 %v1303, %v4464
    %v4466 = vpop.f32.mrb[0].mxu0
    %4467 = vmatprep.mubr.bf16.mxu0 %v3201
    %4468 = vmatmul.mubr.bf16.gmra.mrb[0].mxu0 %v3200
    %v4469 = vpop.f32.mrb[0].mxu0
    %v4470 = vadd.f32 %v1308, %v4469
    %v4471 = vpop.f32.mrb[0].mxu0
    %v4472 = vpop.f32.mrb[0].mxu0
    %v4473 = vadd.f32 %v1313, %v4472
    %v4474 = vpop.f32.mrb[0].mxu0
    %4475 = vmatprep.mubr.bf16.mxu0 %v3208
    %4476 = vmatmul.mubr.bf16.gmra.mrb[0].mxu0 %v3207
    %v4477 = vpop.f32.mrb[0].mxu0
    %v4478 = vadd.f32 %v1318, %v4477
    %v4479 = vpop.f32.mrb[0].mxu0
    %v4480 = vpop.f32.mrb[0].mxu0
    %v4481 = vadd.f32 %v1323, %v4480
    %v4482 = vpop.f32.mrb[0].mxu0
    %4483 = vmatprep.mubr.bf16.mxu0 %v3215
    %4484 = vmatmul.mubr.bf16.gmra.mrb[0].mxu0 %v3214
    %v4485 = vpop.f32.mrb[0].mxu0
    %v4486 = vadd.f32 %v1328, %v4485
    %v4487 = vpop.f32.mrb[0].mxu0
    %v4488 = vpop.f32.mrb[0].mxu0
    %v4489 = vadd.f32 %v1333, %v4488
    %v4490 = vpop.f32.mrb[0].mxu0
    %4491 = vmatprep.mubr.bf16.mxu0 %v3222
    %4492 = vmatmul.mubr.bf16.gmra.mrb[0].mxu0 %v3221
    %v4493 = vpop.f32.mrb[0].mxu0
    %v4494 = vadd.f32 %v1338, %v4493
    %v4495 = vpop.f32.mrb[0].mxu0
    %v4496 = vpop.f32.mrb[0].mxu0
    %v4497 = vadd.f32 %v1343, %v4496
    %v4498 = vpop.f32.mrb[0].mxu0
    %4499 = vmatprep.mubr.bf16.mxu0 %v3229
    %4500 = vmatmul.mubr.bf16.gmra.mrb[0].mxu0 %v3228
    %v4501 = vpop.f32.mrb[0].mxu0
    %v4502 = vadd.f32 %v1348, %v4501
    %v4503 = vpop.f32.mrb[0].mxu0
    %v4504 = vpop.f32.mrb[0].mxu0
    %v4505 = vadd.f32 %v1353, %v4504
    %v4506 = vpop.f32.mrb[0].mxu0
    %4507 = vmatprep.mubr.bf16.mxu0 %v3236
    %4508 = vmatmul.mubr.bf16.gmra.mrb[0].mxu0 %v3235
    %v4509 = vpop.f32.mrb[0].mxu0
    %v4510 = vadd.f32 %v1358, %v4509
    %v4511 = vpop.f32.mrb[0].mxu0
    %v4512 = vpop.f32.mrb[0].mxu0
    %v4513 = vadd.f32 %v1363, %v4512
    %v4514 = vpop.f32.mrb[0].mxu0
    %4515 = vmatprep.mubr.bf16.mxu0 %v3243
    %4516 = vmatmul.mubr.bf16.gmra.mrb[0].mxu0 %v3242
    %v4517 = vpop.f32.mrb[0].mxu0
    %v4518 = vadd.f32 %v1368, %v4517
    %v4519 = vpop.f32.mrb[0].mxu0
    %v4520 = vpop.f32.mrb[0].mxu0
    %v4521 = vadd.f32 %v1373, %v4520
    %v4522 = vpop.f32.mrb[0].mxu0
    %4523 = vmatprep.mubr.bf16.mxu0 %v3250
    %4524 = vmatmul.mubr.bf16.gmra.mrb[0].mxu0 %v3249
    %v4525 = vpop.f32.mrb[0].mxu0
    %v4526 = vadd.f32 %v1378, %v4525
    %v4527 = vpop.f32.mrb[0].mxu0
    %v4528 = vpop.f32.mrb[0].mxu0
    %v4529 = vadd.f32 %v1383, %v4528
    %v4530 = vpop.f32.mrb[0].mxu0
    %4531 = vmatprep.mubr.bf16.mxu0 %v3257
    %4532 = vmatmul.mubr.bf16.gmra.mrb[0].mxu0 %v3256
    %v4533 = vpop.f32.mrb[0].mxu0
    %v4534 = vadd.f32 %v1388, %v4533
    %v4535 = vpop.f32.mrb[0].mxu0
    %v4536 = vpop.f32.mrb[0].mxu0
    %v4537 = vadd.f32 %v1393, %v4536
    %v4538 = vpop.f32.mrb[0].mxu0
    %4539 = vmatprep.mubr.bf16.mxu0 %v3264
    %4540 = vmatmul.mubr.bf16.gmra.mrb[0].mxu0 %v3263
    %v4541 = vpop.f32.mrb[0].mxu0
    %v4542 = vadd.f32 %v1398, %v4541
    %v4543 = vpop.f32.mrb[0].mxu0
    %v4544 = vpop.f32.mrb[0].mxu0
    %v4545 = vadd.f32 %v1403, %v4544
    %v4546 = vpop.f32.mrb[0].mxu0
    %4547 = vmatprep.mubr.bf16.mxu0 %v3271
    %4548 = vmatmul.mubr.bf16.gmra.mrb[0].mxu0 %v3270
    %v4549 = vpop.f32.mrb[0].mxu0
    %v4550 = vadd.f32 %v1408, %v4549
    %v4551 = vpop.f32.mrb[0].mxu0
    %v4552 = vpop.f32.mrb[0].mxu0
    %v4553 = vadd.f32 %v1413, %v4552
    %v4554 = vpop.f32.mrb[0].mxu0
    %4555 = vmatprep.mubr.bf16.mxu0 %v3278
    %4556 = vmatmul.mubr.bf16.gmra.mrb[0].mxu0 %v3277
    %v4557 = vpop.f32.mrb[0].mxu0
    %v4558 = vadd.f32 %v1418, %v4557
    %v4559 = vpop.f32.mrb[0].mxu0
    %v4560 = vpop.f32.mrb[0].mxu0
    %v4561 = vadd.f32 %v1423, %v4560
    %v4562 = vpop.f32.mrb[0].mxu0
    %4563 = vmatprep.mubr.bf16.mxu0 %v3285
    %4564 = vmatmul.mubr.bf16.gmra.mrb[0].mxu0 %v3284
    %v4565 = vpop.f32.mrb[0].mxu0
    %v4566 = vadd.f32 %v1428, %v4565
    %v4567 = vpop.f32.mrb[0].mxu0
    %v4568 = vpop.f32.mrb[0].mxu0
    %v4569 = vadd.f32 %v1433, %v4568
    %v4570 = vpop.f32.mrb[0].mxu0
    %4571 = vdwg.mxu0
    %4572 = vmatprep.subr.bf16.mxu0 %v3918
    %4573 = vmatpush1.bf16.xpose.msra.mxu0 %v3917
    %4574 = vmatprep.subr.bf16.mxu0 %v3925
    %4575 = vmatpush1.bf16.xpose.msra.mxu0 %v3924
    %4576 = vmatprep.subr.bf16.mxu0 %v3932
    %4577 = vmatpush1.bf16.xpose.msra.mxu0 %v3931
    %4578 = vmatprep.subr.bf16.mxu0 %v3939
    %4579 = vmatpush1.bf16.xpose.msra.mxu0 %v3938
    %4580 = vmatprep.subr.bf16.mxu0 %v3946
    %4581 = vmatpush1.bf16.xpose.msra.mxu0 %v3945
    %4582 = vmatprep.subr.bf16.mxu0 %v3953
    %4583 = vmatpush1.bf16.xpose.msra.mxu0 %v3952
    %4584 = vmatprep.subr.bf16.mxu0 %v3960
    %4585 = vmatpush1.bf16.xpose.msra.mxu0 %v3959
    %4586 = vmatprep.subr.bf16.mxu0 %v3967
    %4587 = vmatpush1.bf16.xpose.msra.mxu0 %v3966
    %4588 = vmatprep.subr.bf16.mxu0 0
    %4589 = vmatpush1.bf16.xpose.msra.mxu0 0
    %4590 = vmatprep.subr.bf16.mxu0 0
    %4591 = vmatpush1.bf16.xpose.msra.mxu0 0
    %4592 = vmatprep.subr.bf16.mxu0 0
    %4593 = vmatpush1.bf16.xpose.msra.mxu0 0
    %4594 = vmatprep.subr.bf16.mxu0 0
    %4595 = vmatpush1.bf16.xpose.msra.mxu0 0
    %4596 = vmatprep.subr.bf16.mxu0 0
    %4597 = vmatpush1.bf16.xpose.msra.mxu0 0
    %4598 = vmatprep.subr.bf16.mxu0 0
    %4599 = vmatpush1.bf16.xpose.msra.mxu0 0
    %4600 = vmatprep.subr.bf16.mxu0 0
    %4601 = vmatpush1.bf16.xpose.msra.mxu0 0
    %4602 = vmatprep.subr.bf16.mxu0 0
    %4603 = vmatpush1.bf16.xpose.msra.mxu0 0
    %4604 = vmatprep.mubr.bf16.mxu0 %v2846
    %4605 = vmatmul.mubr.bf16.gmra.mrb[0].mxu0 %v2845
    %v4606 = vpop.f32.mrb[0].mxu0
    %v4607 = vadd.f32 %v4062, %v4606
    %v4608 = vpop.f32.mrb[0].mxu0
    %v4609 = vpop.f32.mrb[0].mxu0
    %v4610 = vadd.f32 %v4065, %v4609
    %v4611 = vpop.f32.mrb[0].mxu0
    %4612 = vmatprep.mubr.bf16.mxu0 %v2853
    %4613 = vmatmul.mubr.bf16.gmra.mrb[0].mxu0 %v2852
    %v4614 = vpop.f32.mrb[0].mxu0
    %v4615 = vadd.f32 %v4070, %v4614
    %v4616 = vpop.f32.mrb[0].mxu0
    %v4617 = vpop.f32.mrb[0].mxu0
    %v4618 = vadd.f32 %v4073, %v4617
    %v4619 = vpop.f32.mrb[0].mxu0
    %4620 = vmatprep.mubr.bf16.mxu0 %v2860
    %4621 = vmatmul.mubr.bf16.gmra.mrb[0].mxu0 %v2859
    %v4622 = vpop.f32.mrb[0].mxu0
    %v4623 = vadd.f32 %v4078, %v4622
    %v4624 = vpop.f32.mrb[0].mxu0
    %v4625 = vpop.f32.mrb[0].mxu0
    %v4626 = vadd.f32 %v4081, %v4625
    %v4627 = vpop.f32.mrb[0].mxu0
    %4628 = vmatprep.mubr.bf16.mxu0 %v2867
    %4629 = vmatmul.mubr.bf16.gmra.mrb[0].mxu0 %v2866
    %v4630 = vpop.f32.mrb[0].mxu0
    %v4631 = vadd.f32 %v4086, %v4630
    %v4632 = vpop.f32.mrb[0].mxu0
    %v4633 = vpop.f32.mrb[0].mxu0
    %v4634 = vadd.f32 %v4089, %v4633
    %v4635 = vpop.f32.mrb[0].mxu0
    %4636 = vmatprep.mubr.bf16.mxu0 %v2874
    %4637 = vmatmul.mubr.bf16.gmra.mrb[0].mxu0 %v2873
    %v4638 = vpop.f32.mrb[0].mxu0
    %v4639 = vadd.f32 %v4094, %v4638
    %v4640 = vpop.f32.mrb[0].mxu0
    %v4641 = vpop.f32.mrb[0].mxu0
    %v4642 = vadd.f32 %v4097, %v4641
    %v4643 = vpop.f32.mrb[0].mxu0
    %4644 = vmatprep.mubr.bf16.mxu0 %v2881
    %4645 = vmatmul.mubr.bf16.gmra.mrb[0].mxu0 %v2880
    %v4646 = vpop.f32.mrb[0].mxu0
    %v4647 = vadd.f32 %v4102, %v4646
    %v4648 = vpop.f32.mrb[0].mxu0
    %v4649 = vpop.f32.mrb[0].mxu0
    %v4650 = vadd.f32 %v4105, %v4649
    %v4651 = vpop.f32.mrb[0].mxu0
    %4652 = vmatprep.mubr.bf16.mxu0 %v2888
    %4653 = vmatmul.mubr.bf16.gmra.mrb[0].mxu0 %v2887
    %v4654 = vpop.f32.mrb[0].mxu0
    %v4655 = vadd.f32 %v4110, %v4654
    %v4656 = vpop.f32.mrb[0].mxu0
    %v4657 = vpop.f32.mrb[0].mxu0
    %v4658 = vadd.f32 %v4113, %v4657
    %v4659 = vpop.f32.mrb[0].mxu0
    %4660 = vmatprep.mubr.bf16.mxu0 %v2895
    %4661 = vmatmul.mubr.bf16.gmra.mrb[0].mxu0 %v2894
    %v4662 = vpop.f32.mrb[0].mxu0
    %v4663 = vadd.f32 %v4118, %v4662
    %v4664 = vpop.f32.mrb[0].mxu0
    %v4665 = vpop.f32.mrb[0].mxu0
    %v4666 = vadd.f32 %v4121, %v4665
    %v4667 = vpop.f32.mrb[0].mxu0
    %4668 = vmatprep.mubr.bf16.mxu0 %v2902
    %4669 = vmatmul.mubr.bf16.gmra.mrb[0].mxu0 %v2901
    %v4670 = vpop.f32.mrb[0].mxu0
    %v4671 = vadd.f32 %v4126, %v4670
    %v4672 = vpop.f32.mrb[0].mxu0
    %v4673 = vpop.f32.mrb[0].mxu0
    %v4674 = vadd.f32 %v4129, %v4673
    %v4675 = vpop.f32.mrb[0].mxu0
    %4676 = vmatprep.mubr.bf16.mxu0 %v2909
    %4677 = vmatmul.mubr.bf16.gmra.mrb[0].mxu0 %v2908
    %v4678 = vpop.f32.mrb[0].mxu0
    %v4679 = vadd.f32 %v4134, %v4678
    %v4680 = vpop.f32.mrb[0].mxu0
    %v4681 = vpop.f32.mrb[0].mxu0
    %v4682 = vadd.f32 %v4137, %v4681
    %v4683 = vpop.f32.mrb[0].mxu0
    %4684 = vmatprep.mubr.bf16.mxu0 %v2916
    %4685 = vmatmul.mubr.bf16.gmra.mrb[0].mxu0 %v2915
    %v4686 = vpop.f32.mrb[0].mxu0
    %v4687 = vadd.f32 %v4142, %v4686
    %v4688 = vpop.f32.mrb[0].mxu0
    %v4689 = vpop.f32.mrb[0].mxu0
    %v4690 = vadd.f32 %v4145, %v4689
    %v4691 = vpop.f32.mrb[0].mxu0
    %4692 = vmatprep.mubr.bf16.mxu0 %v2923
    %4693 = vmatmul.mubr.bf16.gmra.mrb[0].mxu0 %v2922
    %v4694 = vpop.f32.mrb[0].mxu0
    %v4695 = vadd.f32 %v4150, %v4694
    %v4696 = vpop.f32.mrb[0].mxu0
    %v4697 = vpop.f32.mrb[0].mxu0
    %v4698 = vadd.f32 %v4153, %v4697
    %v4699 = vpop.f32.mrb[0].mxu0
    %4700 = vmatprep.mubr.bf16.mxu0 %v2930
    %4701 = vmatmul.mubr.bf16.gmra.mrb[0].mxu0 %v2929
    %v4702 = vpop.f32.mrb[0].mxu0
    %v4703 = vadd.f32 %v4158, %v4702
    %v4704 = vpop.f32.mrb[0].mxu0
    %v4705 = vpop.f32.mrb[0].mxu0
    %v4706 = vadd.f32 %v4161, %v4705
    %v4707 = vpop.f32.mrb[0].mxu0
    %4708 = vmatprep.mubr.bf16.mxu0 %v2937
    %4709 = vmatmul.mubr.bf16.gmra.mrb[0].mxu0 %v2936
    %v4710 = vpop.f32.mrb[0].mxu0
    %v4711 = vadd.f32 %v4166, %v4710
    %v4712 = vpop.f32.mrb[0].mxu0
    %v4713 = vpop.f32.mrb[0].mxu0
    %v4714 = vadd.f32 %v4169, %v4713
    %v4715 = vpop.f32.mrb[0].mxu0
    %4716 = vmatprep.mubr.bf16.mxu0 %v2944
    %4717 = vmatmul.mubr.bf16.gmra.mrb[0].mxu0 %v2943
    %v4718 = vpop.f32.mrb[0].mxu0
    %v4719 = vadd.f32 %v4174, %v4718
    %v4720 = vpop.f32.mrb[0].mxu0
    %v4721 = vpop.f32.mrb[0].mxu0
    %v4722 = vadd.f32 %v4177, %v4721
    %v4723 = vpop.f32.mrb[0].mxu0
    %4724 = vmatprep.mubr.bf16.mxu0 %v2951
    %4725 = vmatmul.mubr.bf16.gmra.mrb[0].mxu0 %v2950
    %v4726 = vpop.f32.mrb[0].mxu0
    %v4727 = vadd.f32 %v4182, %v4726
    %v4728 = vpop.f32.mrb[0].mxu0
    %v4729 = vpop.f32.mrb[0].mxu0
    %v4730 = vadd.f32 %v4185, %v4729
    %v4731 = vpop.f32.mrb[0].mxu0
    %4732 = vmatprep.mubr.bf16.mxu0 %v2958
    %4733 = vmatmul.mubr.bf16.gmra.mrb[0].mxu0 %v2957
    %v4734 = vpop.f32.mrb[0].mxu0
    %v4735 = vadd.f32 %v4190, %v4734
    %v4736 = vpop.f32.mrb[0].mxu0
    %v4737 = vpop.f32.mrb[0].mxu0
    %v4738 = vadd.f32 %v4193, %v4737
    %v4739 = vpop.f32.mrb[0].mxu0
    %4740 = vmatprep.mubr.bf16.mxu0 %v2965
    %4741 = vmatmul.mubr.bf16.gmra.mrb[0].mxu0 %v2964
    %v4742 = vpop.f32.mrb[0].mxu0
    %v4743 = vadd.f32 %v4198, %v4742
    %v4744 = vpop.f32.mrb[0].mxu0
    %v4745 = vpop.f32.mrb[0].mxu0
    %v4746 = vadd.f32 %v4201, %v4745
    %v4747 = vpop.f32.mrb[0].mxu0
    %4748 = vmatprep.mubr.bf16.mxu0 %v2972
    %4749 = vmatmul.mubr.bf16.gmra.mrb[0].mxu0 %v2971
    %v4750 = vpop.f32.mrb[0].mxu0
    %v4751 = vadd.f32 %v4206, %v4750
    %v4752 = vpop.f32.mrb[0].mxu0
    %v4753 = vpop.f32.mrb[0].mxu0
    %v4754 = vadd.f32 %v4209, %v4753
    %v4755 = vpop.f32.mrb[0].mxu0
    %4756 = vmatprep.mubr.bf16.mxu0 %v2979
    %4757 = vmatmul.mubr.bf16.gmra.mrb[0].mxu0 %v2978
    %v4758 = vpop.f32.mrb[0].mxu0
    %v4759 = vadd.f32 %v4214, %v4758
    %v4760 = vpop.f32.mrb[0].mxu0
    %v4761 = vpop.f32.mrb[0].mxu0
    %v4762 = vadd.f32 %v4217, %v4761
    %v4763 = vpop.f32.mrb[0].mxu0
    %4764 = vmatprep.mubr.bf16.mxu0 %v2986
    %4765 = vmatmul.mubr.bf16.gmra.mrb[0].mxu0 %v2985
    %v4766 = vpop.f32.mrb[0].mxu0
    %v4767 = vadd.f32 %v4222, %v4766
    %v4768 = vpop.f32.mrb[0].mxu0
    %v4769 = vpop.f32.mrb[0].mxu0
    %v4770 = vadd.f32 %v4225, %v4769
    %v4771 = vpop.f32.mrb[0].mxu0
    %4772 = vmatprep.mubr.bf16.mxu0 %v2993
    %4773 = vmatmul.mubr.bf16.gmra.mrb[0].mxu0 %v2992
    %v4774 = vpop.f32.mrb[0].mxu0
    %v4775 = vadd.f32 %v4230, %v4774
    %v4776 = vpop.f32.mrb[0].mxu0
    %v4777 = vpop.f32.mrb[0].mxu0
    %v4778 = vadd.f32 %v4233, %v4777
    %v4779 = vpop.f32.mrb[0].mxu0
    %4780 = vmatprep.mubr.bf16.mxu0 %v3000
    %4781 = vmatmul.mubr.bf16.gmra.mrb[0].mxu0 %v2999
    %v4782 = vpop.f32.mrb[0].mxu0
    %v4783 = vadd.f32 %v4238, %v4782
    %v4784 = vpop.f32.mrb[0].mxu0
    %v4785 = vpop.f32.mrb[0].mxu0
    %v4786 = vadd.f32 %v4241, %v4785
    %v4787 = vpop.f32.mrb[0].mxu0
    %4788 = vmatprep.mubr.bf16.mxu0 %v3007
    %4789 = vmatmul.mubr.bf16.gmra.mrb[0].mxu0 %v3006
    %v4790 = vpop.f32.mrb[0].mxu0
    %v4791 = vadd.f32 %v4246, %v4790
    %v4792 = vpop.f32.mrb[0].mxu0
    %v4793 = vpop.f32.mrb[0].mxu0
    %v4794 = vadd.f32 %v4249, %v4793
    %v4795 = vpop.f32.mrb[0].mxu0
    %4796 = vmatprep.mubr.bf16.mxu0 %v3014
    %4797 = vmatmul.mubr.bf16.gmra.mrb[0].mxu0 %v3013
    %v4798 = vpop.f32.mrb[0].mxu0
    %v4799 = vadd.f32 %v4254, %v4798
    %v4800 = vpop.f32.mrb[0].mxu0
    %v4801 = vpop.f32.mrb[0].mxu0
    %v4802 = vadd.f32 %v4257, %v4801
    %v4803 = vpop.f32.mrb[0].mxu0
    %4804 = vmatprep.mubr.bf16.mxu0 %v3021
    %4805 = vmatmul.mubr.bf16.gmra.mrb[0].mxu0 %v3020
    %v4806 = vpop.f32.mrb[0].mxu0
    %v4807 = vadd.f32 %v4262, %v4806
    %v4808 = vpop.f32.mrb[0].mxu0
    %v4809 = vpop.f32.mrb[0].mxu0
    %v4810 = vadd.f32 %v4265, %v4809
    %v4811 = vpop.f32.mrb[0].mxu0
    %4812 = vmatprep.mubr.bf16.mxu0 %v3028
    %4813 = vmatmul.mubr.bf16.gmra.mrb[0].mxu0 %v3027
    %v4814 = vpop.f32.mrb[0].mxu0
    %v4815 = vadd.f32 %v4270, %v4814
    %v4816 = vpop.f32.mrb[0].mxu0
    %v4817 = vpop.f32.mrb[0].mxu0
    %v4818 = vadd.f32 %v4273, %v4817
    %v4819 = vpop.f32.mrb[0].mxu0
    %4820 = vmatprep.mubr.bf16.mxu0 %v3035
    %4821 = vmatmul.mubr.bf16.gmra.mrb[0].mxu0 %v3034
    %v4822 = vpop.f32.mrb[0].mxu0
    %v4823 = vadd.f32 %v4278, %v4822
    %v4824 = vpop.f32.mrb[0].mxu0
    %v4825 = vpop.f32.mrb[0].mxu0
    %v4826 = vadd.f32 %v4281, %v4825
    %v4827 = vpop.f32.mrb[0].mxu0
    %4828 = vmatprep.mubr.bf16.mxu0 %v3042
    %4829 = vmatmul.mubr.bf16.gmra.mrb[0].mxu0 %v3041
    %v4830 = vpop.f32.mrb[0].mxu0
    %v4831 = vadd.f32 %v4286, %v4830
    %v4832 = vpop.f32.mrb[0].mxu0
    %v4833 = vpop.f32.mrb[0].mxu0
    %v4834 = vadd.f32 %v4289, %v4833
    %v4835 = vpop.f32.mrb[0].mxu0
    %4836 = vmatprep.mubr.bf16.mxu0 %v3049
    %4837 = vmatmul.mubr.bf16.gmra.mrb[0].mxu0 %v3048
    %v4838 = vpop.f32.mrb[0].mxu0
    %v4839 = vadd.f32 %v4294, %v4838
    %v4840 = vpop.f32.mrb[0].mxu0
    %v4841 = vpop.f32.mrb[0].mxu0
    %v4842 = vadd.f32 %v4297, %v4841
    %v4843 = vpop.f32.mrb[0].mxu0
    %4844 = vmatprep.mubr.bf16.mxu0 %v3056
    %4845 = vmatmul.mubr.bf16.gmra.mrb[0].mxu0 %v3055
    %v4846 = vpop.f32.mrb[0].mxu0
    %v4847 = vadd.f32 %v4302, %v4846
    %v4848 = vpop.f32.mrb[0].mxu0
    %v4849 = vpop.f32.mrb[0].mxu0
    %v4850 = vadd.f32 %v4305, %v4849
    %v4851 = vpop.f32.mrb[0].mxu0
    %4852 = vmatprep.mubr.bf16.mxu0 %v3063
    %4853 = vmatmul.mubr.bf16.gmra.mrb[0].mxu0 %v3062
    %v4854 = vpop.f32.mrb[0].mxu0
    %v4855 = vadd.f32 %v4310, %v4854
    %v4856 = vpop.f32.mrb[0].mxu0
    %v4857 = vpop.f32.mrb[0].mxu0
    %v4858 = vadd.f32 %v4313, %v4857
    %v4859 = vpop.f32.mrb[0].mxu0
    %4860 = vmatprep.mubr.bf16.mxu0 %v3070
    %4861 = vmatmul.mubr.bf16.gmra.mrb[0].mxu0 %v3069
    %v4862 = vpop.f32.mrb[0].mxu0
    %v4863 = vadd.f32 %v4318, %v4862
    %v4864 = vpop.f32.mrb[0].mxu0
    %v4865 = vpop.f32.mrb[0].mxu0
    %v4866 = vadd.f32 %v4321, %v4865
    %v4867 = vpop.f32.mrb[0].mxu0
    %4868 = vmatprep.mubr.bf16.mxu0 %v3077
    %4869 = vmatmul.mubr.bf16.gmra.mrb[0].mxu0 %v3076
    %v4870 = vpop.f32.mrb[0].mxu0
    %v4871 = vadd.f32 %v4326, %v4870
    %v4872 = vpop.f32.mrb[0].mxu0
    %v4873 = vpop.f32.mrb[0].mxu0
    %v4874 = vadd.f32 %v4329, %v4873
    %v4875 = vpop.f32.mrb[0].mxu0
    %4876 = vmatprep.mubr.bf16.mxu0 %v3084
    %4877 = vmatmul.mubr.bf16.gmra.mrb[0].mxu0 %v3083
    %v4878 = vpop.f32.mrb[0].mxu0
    %v4879 = vadd.f32 %v4334, %v4878
    %v4880 = vpop.f32.mrb[0].mxu0
    %v4881 = vpop.f32.mrb[0].mxu0
    %v4882 = vadd.f32 %v4337, %v4881
    %v4883 = vpop.f32.mrb[0].mxu0
    %4884 = vmatprep.mubr.bf16.mxu0 %v3091
    %4885 = vmatmul.mubr.bf16.gmra.mrb[0].mxu0 %v3090
    %v4886 = vpop.f32.mrb[0].mxu0
    %v4887 = vadd.f32 %v4342, %v4886
    %v4888 = vpop.f32.mrb[0].mxu0
    %v4889 = vpop.f32.mrb[0].mxu0
    %v4890 = vadd.f32 %v4345, %v4889
    %v4891 = vpop.f32.mrb[0].mxu0
    %4892 = vmatprep.mubr.bf16.mxu0 %v3098
    %4893 = vmatmul.mubr.bf16.gmra.mrb[0].mxu0 %v3097
    %v4894 = vpop.f32.mrb[0].mxu0
    %v4895 = vadd.f32 %v4350, %v4894
    %v4896 = vpop.f32.mrb[0].mxu0
    %v4897 = vpop.f32.mrb[0].mxu0
    %v4898 = vadd.f32 %v4353, %v4897
    %v4899 = vpop.f32.mrb[0].mxu0
    %4900 = vmatprep.mubr.bf16.mxu0 %v3105
    %4901 = vmatmul.mubr.bf16.gmra.mrb[0].mxu0 %v3104
    %v4902 = vpop.f32.mrb[0].mxu0
    %v4903 = vadd.f32 %v4358, %v4902
    %v4904 = vpop.f32.mrb[0].mxu0
    %v4905 = vpop.f32.mrb[0].mxu0
    %v4906 = vadd.f32 %v4361, %v4905
    %v4907 = vpop.f32.mrb[0].mxu0
    %4908 = vmatprep.mubr.bf16.mxu0 %v3112
    %4909 = vmatmul.mubr.bf16.gmra.mrb[0].mxu0 %v3111
    %v4910 = vpop.f32.mrb[0].mxu0
    %v4911 = vadd.f32 %v4366, %v4910
    %v4912 = vpop.f32.mrb[0].mxu0
    %v4913 = vpop.f32.mrb[0].mxu0
    %v4914 = vadd.f32 %v4369, %v4913
    %v4915 = vpop.f32.mrb[0].mxu0
    %4916 = vmatprep.mubr.bf16.mxu0 %v3119
    %4917 = vmatmul.mubr.bf16.gmra.mrb[0].mxu0 %v3118
    %v4918 = vpop.f32.mrb[0].mxu0
    %v4919 = vadd.f32 %v4374, %v4918
    %v4920 = vpop.f32.mrb[0].mxu0
    %v4921 = vpop.f32.mrb[0].mxu0
    %v4922 = vadd.f32 %v4377, %v4921
    %v4923 = vpop.f32.mrb[0].mxu0
    %4924 = vmatprep.mubr.bf16.mxu0 %v3126
    %4925 = vmatmul.mubr.bf16.gmra.mrb[0].mxu0 %v3125
    %v4926 = vpop.f32.mrb[0].mxu0
    %v4927 = vadd.f32 %v4382, %v4926
    %v4928 = vpop.f32.mrb[0].mxu0
    %v4929 = vpop.f32.mrb[0].mxu0
    %v4930 = vadd.f32 %v4385, %v4929
    %v4931 = vpop.f32.mrb[0].mxu0
    %4932 = vmatprep.mubr.bf16.mxu0 %v3133
    %4933 = vmatmul.mubr.bf16.gmra.mrb[0].mxu0 %v3132
    %v4934 = vpop.f32.mrb[0].mxu0
    %v4935 = vadd.f32 %v4390, %v4934
    %v4936 = vpop.f32.mrb[0].mxu0
    %v4937 = vpop.f32.mrb[0].mxu0
    %v4938 = vadd.f32 %v4393, %v4937
    %v4939 = vpop.f32.mrb[0].mxu0
    %4940 = vmatprep.mubr.bf16.mxu0 %v3140
    %4941 = vmatmul.mubr.bf16.gmra.mrb[0].mxu0 %v3139
    %v4942 = vpop.f32.mrb[0].mxu0
    %v4943 = vadd.f32 %v4398, %v4942
    %v4944 = vpop.f32.mrb[0].mxu0
    %v4945 = vpop.f32.mrb[0].mxu0
    %v4946 = vadd.f32 %v4401, %v4945
    %v4947 = vpop.f32.mrb[0].mxu0
    %4948 = vmatprep.mubr.bf16.mxu0 %v3147
    %4949 = vmatmul.mubr.bf16.gmra.mrb[0].mxu0 %v3146
    %v4950 = vpop.f32.mrb[0].mxu0
    %v4951 = vadd.f32 %v4406, %v4950
    %v4952 = vpop.f32.mrb[0].mxu0
    %v4953 = vpop.f32.mrb[0].mxu0
    %v4954 = vadd.f32 %v4409, %v4953
    %v4955 = vpop.f32.mrb[0].mxu0
    %4956 = vmatprep.mubr.bf16.mxu0 %v3154
    %4957 = vmatmul.mubr.bf16.gmra.mrb[0].mxu0 %v3153
    %v4958 = vpop.f32.mrb[0].mxu0
    %v4959 = vadd.f32 %v4414, %v4958
    %v4960 = vpop.f32.mrb[0].mxu0
    %v4961 = vpop.f32.mrb[0].mxu0
    %v4962 = vadd.f32 %v4417, %v4961
    %v4963 = vpop.f32.mrb[0].mxu0
    %4964 = vmatprep.mubr.bf16.mxu0 %v3161
    %4965 = vmatmul.mubr.bf16.gmra.mrb[0].mxu0 %v3160
    %v4966 = vpop.f32.mrb[0].mxu0
    %v4967 = vadd.f32 %v4422, %v4966
    %v4968 = vpop.f32.mrb[0].mxu0
    %v4969 = vpop.f32.mrb[0].mxu0
    %v4970 = vadd.f32 %v4425, %v4969
    %v4971 = vpop.f32.mrb[0].mxu0
    %4972 = vmatprep.mubr.bf16.mxu0 %v3168
    %4973 = vmatmul.mubr.bf16.gmra.mrb[0].mxu0 %v3167
    %v4974 = vpop.f32.mrb[0].mxu0
    %v4975 = vadd.f32 %v4430, %v4974
    %v4976 = vpop.f32.mrb[0].mxu0
    %v4977 = vpop.f32.mrb[0].mxu0
    %v4978 = vadd.f32 %v4433, %v4977
    %v4979 = vpop.f32.mrb[0].mxu0
    %4980 = vmatprep.mubr.bf16.mxu0 %v3175
    %4981 = vmatmul.mubr.bf16.gmra.mrb[0].mxu0 %v3174
    %v4982 = vpop.f32.mrb[0].mxu0
    %v4983 = vadd.f32 %v4438, %v4982
    %v4984 = vpop.f32.mrb[0].mxu0
    %v4985 = vpop.f32.mrb[0].mxu0
    %v4986 = vadd.f32 %v4441, %v4985
    %v4987 = vpop.f32.mrb[0].mxu0
    %4988 = vmatprep.mubr.bf16.mxu0 %v3182
    %4989 = vmatmul.mubr.bf16.gmra.mrb[0].mxu0 %v3181
    %v4990 = vpop.f32.mrb[0].mxu0
    %v4991 = vadd.f32 %v4446, %v4990
    %v4992 = vpop.f32.mrb[0].mxu0
    %v4993 = vpop.f32.mrb[0].mxu0
    %v4994 = vadd.f32 %v4449, %v4993
    %v4995 = vpop.f32.mrb[0].mxu0
    %4996 = vmatprep.mubr.bf16.mxu0 %v3189
    %4997 = vmatmul.mubr.bf16.gmra.mrb[0].mxu0 %v3188
    %v4998 = vpop.f32.mrb[0].mxu0
    %v4999 = vadd.f32 %v4454, %v4998
    %v5000 = vpop.f32.mrb[0].mxu0
    %v5001 = vpop.f32.mrb[0].mxu0
    %v5002 = vadd.f32 %v4457, %v5001
    %v5003 = vpop.f32.mrb[0].mxu0
    %5004 = vmatprep.mubr.bf16.mxu0 %v3196
    %5005 = vmatmul.mubr.bf16.gmra.mrb[0].mxu0 %v3195
    %v5006 = vpop.f32.mrb[0].mxu0
    %v5007 = vadd.f32 %v4462, %v5006
    %v5008 = vpop.f32.mrb[0].mxu0
    %v5009 = vpop.f32.mrb[0].mxu0
    %v5010 = vadd.f32 %v4465, %v5009
    %v5011 = vpop.f32.mrb[0].mxu0
    %5012 = vmatprep.mubr.bf16.mxu0 %v3203
    %5013 = vmatmul.mubr.bf16.gmra.mrb[0].mxu0 %v3202
    %v5014 = vpop.f32.mrb[0].mxu0
    %v5015 = vadd.f32 %v4470, %v5014
    %v5016 = vpop.f32.mrb[0].mxu0
    %v5017 = vpop.f32.mrb[0].mxu0
    %v5018 = vadd.f32 %v4473, %v5017
    %v5019 = vpop.f32.mrb[0].mxu0
    %5020 = vmatprep.mubr.bf16.mxu0 %v3210
    %5021 = vmatmul.mubr.bf16.gmra.mrb[0].mxu0 %v3209
    %v5022 = vpop.f32.mrb[0].mxu0
    %v5023 = vadd.f32 %v4478, %v5022
    %v5024 = vpop.f32.mrb[0].mxu0
    %v5025 = vpop.f32.mrb[0].mxu0
    %v5026 = vadd.f32 %v4481, %v5025
    %v5027 = vpop.f32.mrb[0].mxu0
    %5028 = vmatprep.mubr.bf16.mxu0 %v3217
    %5029 = vmatmul.mubr.bf16.gmra.mrb[0].mxu0 %v3216
    %v5030 = vpop.f32.mrb[0].mxu0
    %v5031 = vadd.f32 %v4486, %v5030
    %v5032 = vpop.f32.mrb[0].mxu0
    %v5033 = vpop.f32.mrb[0].mxu0
    %v5034 = vadd.f32 %v4489, %v5033
    %v5035 = vpop.f32.mrb[0].mxu0
    %5036 = vmatprep.mubr.bf16.mxu0 %v3224
    %5037 = vmatmul.mubr.bf16.gmra.mrb[0].mxu0 %v3223
    %v5038 = vpop.f32.mrb[0].mxu0
    %v5039 = vadd.f32 %v4494, %v5038
    %v5040 = vpop.f32.mrb[0].mxu0
    %v5041 = vpop.f32.mrb[0].mxu0
    %v5042 = vadd.f32 %v4497, %v5041
    %v5043 = vpop.f32.mrb[0].mxu0
    %5044 = vmatprep.mubr.bf16.mxu0 %v3231
    %5045 = vmatmul.mubr.bf16.gmra.mrb[0].mxu0 %v3230
    %v5046 = vpop.f32.mrb[0].mxu0
    %v5047 = vadd.f32 %v4502, %v5046
    %v5048 = vpop.f32.mrb[0].mxu0
    %v5049 = vpop.f32.mrb[0].mxu0
    %v5050 = vadd.f32 %v4505, %v5049
    %v5051 = vpop.f32.mrb[0].mxu0
    %5052 = vmatprep.mubr.bf16.mxu0 %v3238
    %5053 = vmatmul.mubr.bf16.gmra.mrb[0].mxu0 %v3237
    %v5054 = vpop.f32.mrb[0].mxu0
    %v5055 = vadd.f32 %v4510, %v5054
    %v5056 = vpop.f32.mrb[0].mxu0
    %v5057 = vpop.f32.mrb[0].mxu0
    %v5058 = vadd.f32 %v4513, %v5057
    %v5059 = vpop.f32.mrb[0].mxu0
    %5060 = vmatprep.mubr.bf16.mxu0 %v3245
    %5061 = vmatmul.mubr.bf16.gmra.mrb[0].mxu0 %v3244
    %v5062 = vpop.f32.mrb[0].mxu0
    %v5063 = vadd.f32 %v4518, %v5062
    %v5064 = vpop.f32.mrb[0].mxu0
    %v5065 = vpop.f32.mrb[0].mxu0
    %v5066 = vadd.f32 %v4521, %v5065
    %v5067 = vpop.f32.mrb[0].mxu0
    %5068 = vmatprep.mubr.bf16.mxu0 %v3252
    %5069 = vmatmul.mubr.bf16.gmra.mrb[0].mxu0 %v3251
    %v5070 = vpop.f32.mrb[0].mxu0
    %v5071 = vadd.f32 %v4526, %v5070
    %v5072 = vpop.f32.mrb[0].mxu0
    %v5073 = vpop.f32.mrb[0].mxu0
    %v5074 = vadd.f32 %v4529, %v5073
    %v5075 = vpop.f32.mrb[0].mxu0
    %5076 = vmatprep.mubr.bf16.mxu0 %v3259
    %5077 = vmatmul.mubr.bf16.gmra.mrb[0].mxu0 %v3258
    %v5078 = vpop.f32.mrb[0].mxu0
    %v5079 = vadd.f32 %v4534, %v5078
    %v5080 = vpop.f32.mrb[0].mxu0
    %v5081 = vpop.f32.mrb[0].mxu0
    %v5082 = vadd.f32 %v4537, %v5081
    %v5083 = vpop.f32.mrb[0].mxu0
    %5084 = vmatprep.mubr.bf16.mxu0 %v3266
    %5085 = vmatmul.mubr.bf16.gmra.mrb[0].mxu0 %v3265
    %v5086 = vpop.f32.mrb[0].mxu0
    %v5087 = vadd.f32 %v4542, %v5086
    %v5088 = vpop.f32.mrb[0].mxu0
    %v5089 = vpop.f32.mrb[0].mxu0
    %v5090 = vadd.f32 %v4545, %v5089
    %v5091 = vpop.f32.mrb[0].mxu0
    %5092 = vmatprep.mubr.bf16.mxu0 %v3273
    %5093 = vmatmul.mubr.bf16.gmra.mrb[0].mxu0 %v3272
    %v5094 = vpop.f32.mrb[0].mxu0
    %v5095 = vadd.f32 %v4550, %v5094
    %v5096 = vpop.f32.mrb[0].mxu0
    %v5097 = vpop.f32.mrb[0].mxu0
    %v5098 = vadd.f32 %v4553, %v5097
    %v5099 = vpop.f32.mrb[0].mxu0
    %5100 = vmatprep.mubr.bf16.mxu0 %v3280
    %5101 = vmatmul.mubr.bf16.gmra.mrb[0].mxu0 %v3279
    %v5102 = vpop.f32.mrb[0].mxu0
    %v5103 = vadd.f32 %v4558, %v5102
    %v5104 = vpop.f32.mrb[0].mxu0
    %v5105 = vpop.f32.mrb[0].mxu0
    %v5106 = vadd.f32 %v4561, %v5105
    %v5107 = vpop.f32.mrb[0].mxu0
    %5108 = vmatprep.mubr.bf16.mxu0 %v3287
    %5109 = vmatmul.mubr.bf16.gmra.mrb[0].mxu0 %v3286
    %v5110 = vpop.f32.mrb[0].mxu0
    %v5111 = vadd.f32 %v4566, %v5110
    %v5112 = vpop.f32.mrb[0].mxu0
    %v5113 = vpop.f32.mrb[0].mxu0
    %v5114 = vadd.f32 %v4569, %v5113
    %v5115 = vpop.f32.mrb[0].mxu0
    %5116 = vdwg.mxu0
    %5117 = vmatprep.subr.bf16.mxu0 %v3920
    %5118 = vmatpush1.bf16.xpose.msra.mxu0 %v3919
    %5119 = vmatprep.subr.bf16.mxu0 %v3927
    %5120 = vmatpush1.bf16.xpose.msra.mxu0 %v3926
    %5121 = vmatprep.subr.bf16.mxu0 %v3934
    %5122 = vmatpush1.bf16.xpose.msra.mxu0 %v3933
    %5123 = vmatprep.subr.bf16.mxu0 %v3941
    %5124 = vmatpush1.bf16.xpose.msra.mxu0 %v3940
    %5125 = vmatprep.subr.bf16.mxu0 %v3948
    %5126 = vmatpush1.bf16.xpose.msra.mxu0 %v3947
    %5127 = vmatprep.subr.bf16.mxu0 %v3955
    %5128 = vmatpush1.bf16.xpose.msra.mxu0 %v3954
    %5129 = vmatprep.subr.bf16.mxu0 %v3962
    %5130 = vmatpush1.bf16.xpose.msra.mxu0 %v3961
    %5131 = vmatprep.subr.bf16.mxu0 %v3969
    %5132 = vmatpush1.bf16.xpose.msra.mxu0 %v3968
    %5133 = vmatprep.subr.bf16.mxu0 0
    %5134 = vmatpush1.bf16.xpose.msra.mxu0 0
    %5135 = vmatprep.subr.bf16.mxu0 0
    %5136 = vmatpush1.bf16.xpose.msra.mxu0 0
    %5137 = vmatprep.subr.bf16.mxu0 0
    %5138 = vmatpush1.bf16.xpose.msra.mxu0 0
    %5139 = vmatprep.subr.bf16.mxu0 0
    %5140 = vmatpush1.bf16.xpose.msra.mxu0 0
    %5141 = vmatprep.subr.bf16.mxu0 0
    %5142 = vmatpush1.bf16.xpose.msra.mxu0 0
    %5143 = vmatprep.subr.bf16.mxu0 0
    %5144 = vmatpush1.bf16.xpose.msra.mxu0 0
    %5145 = vmatprep.subr.bf16.mxu0 0
    %5146 = vmatpush1.bf16.xpose.msra.mxu0 0
    %5147 = vmatprep.subr.bf16.mxu0 0
    %5148 = vmatpush1.bf16.xpose.msra.mxu0 0
    %5149 = vmatprep.mubr.bf16.mxu0 %v2848
    %5150 = vmatmul.mubr.bf16.gmra.mrb[0].mxu0 %v2847
    %v5151 = vpop.f32.mrb[0].mxu0
    %v5152 = vadd.f32 %v4607, %v5151
    %v5153 = vpop.f32.mrb[0].mxu0
    %v5154 = vpop.f32.mrb[0].mxu0
    %v5155 = vadd.f32 %v4610, %v5154
    %v5156 = vpop.f32.mrb[0].mxu0
    %5157 = vmatprep.mubr.bf16.mxu0 %v2855
    %5158 = vmatmul.mubr.bf16.gmra.mrb[0].mxu0 %v2854
    %v5159 = vpop.f32.mrb[0].mxu0
    %v5160 = vadd.f32 %v4615, %v5159
    %v5161 = vpop.f32.mrb[0].mxu0
    %v5162 = vpop.f32.mrb[0].mxu0
    %v5163 = vadd.f32 %v4618, %v5162
    %v5164 = vpop.f32.mrb[0].mxu0
    %5165 = vmatprep.mubr.bf16.mxu0 %v2862
    %5166 = vmatmul.mubr.bf16.gmra.mrb[0].mxu0 %v2861
    %v5167 = vpop.f32.mrb[0].mxu0
    %v5168 = vadd.f32 %v4623, %v5167
    %v5169 = vpop.f32.mrb[0].mxu0
    %v5170 = vpop.f32.mrb[0].mxu0
    %v5171 = vadd.f32 %v4626, %v5170
    %v5172 = vpop.f32.mrb[0].mxu0
    %5173 = vmatprep.mubr.bf16.mxu0 %v2869
    %5174 = vmatmul.mubr.bf16.gmra.mrb[0].mxu0 %v2868
    %v5175 = vpop.f32.mrb[0].mxu0
    %v5176 = vadd.f32 %v4631, %v5175
    %v5177 = vpop.f32.mrb[0].mxu0
    %v5178 = vpop.f32.mrb[0].mxu0
    %v5179 = vadd.f32 %v4634, %v5178
    %v5180 = vpop.f32.mrb[0].mxu0
    %5181 = vmatprep.mubr.bf16.mxu0 %v2876
    %5182 = vmatmul.mubr.bf16.gmra.mrb[0].mxu0 %v2875
    %v5183 = vpop.f32.mrb[0].mxu0
    %v5184 = vadd.f32 %v4639, %v5183
    %v5185 = vpop.f32.mrb[0].mxu0
    %v5186 = vpop.f32.mrb[0].mxu0
    %v5187 = vadd.f32 %v4642, %v5186
    %v5188 = vpop.f32.mrb[0].mxu0
    %5189 = vmatprep.mubr.bf16.mxu0 %v2883
    %5190 = vmatmul.mubr.bf16.gmra.mrb[0].mxu0 %v2882
    %v5191 = vpop.f32.mrb[0].mxu0
    %v5192 = vadd.f32 %v4647, %v5191
    %v5193 = vpop.f32.mrb[0].mxu0
    %v5194 = vpop.f32.mrb[0].mxu0
    %v5195 = vadd.f32 %v4650, %v5194
    %v5196 = vpop.f32.mrb[0].mxu0
    %5197 = vmatprep.mubr.bf16.mxu0 %v2890
    %5198 = vmatmul.mubr.bf16.gmra.mrb[0].mxu0 %v2889
    %v5199 = vpop.f32.mrb[0].mxu0
    %v5200 = vadd.f32 %v4655, %v5199
    %v5201 = vpop.f32.mrb[0].mxu0
    %v5202 = vpop.f32.mrb[0].mxu0
    %v5203 = vadd.f32 %v4658, %v5202
    %v5204 = vpop.f32.mrb[0].mxu0
    %5205 = vmatprep.mubr.bf16.mxu0 %v2897
    %5206 = vmatmul.mubr.bf16.gmra.mrb[0].mxu0 %v2896
    %v5207 = vpop.f32.mrb[0].mxu0
    %v5208 = vadd.f32 %v4663, %v5207
    %v5209 = vpop.f32.mrb[0].mxu0
    %v5210 = vpop.f32.mrb[0].mxu0
    %v5211 = vadd.f32 %v4666, %v5210
    %v5212 = vpop.f32.mrb[0].mxu0
    %5213 = vmatprep.mubr.bf16.mxu0 %v2904
    %5214 = vmatmul.mubr.bf16.gmra.mrb[0].mxu0 %v2903
    %v5215 = vpop.f32.mrb[0].mxu0
    %v5216 = vadd.f32 %v4671, %v5215
    %v5217 = vpop.f32.mrb[0].mxu0
    %v5218 = vpop.f32.mrb[0].mxu0
    %v5219 = vadd.f32 %v4674, %v5218
    %v5220 = vpop.f32.mrb[0].mxu0
    %5221 = vmatprep.mubr.bf16.mxu0 %v2911
    %5222 = vmatmul.mubr.bf16.gmra.mrb[0].mxu0 %v2910
    %v5223 = vpop.f32.mrb[0].mxu0
    %v5224 = vadd.f32 %v4679, %v5223
    %v5225 = vpop.f32.mrb[0].mxu0
    %v5226 = vpop.f32.mrb[0].mxu0
    %v5227 = vadd.f32 %v4682, %v5226
    %v5228 = vpop.f32.mrb[0].mxu0
    %5229 = vmatprep.mubr.bf16.mxu0 %v2918
    %5230 = vmatmul.mubr.bf16.gmra.mrb[0].mxu0 %v2917
    %v5231 = vpop.f32.mrb[0].mxu0
    %v5232 = vadd.f32 %v4687, %v5231
    %v5233 = vpop.f32.mrb[0].mxu0
    %v5234 = vpop.f32.mrb[0].mxu0
    %v5235 = vadd.f32 %v4690, %v5234
    %v5236 = vpop.f32.mrb[0].mxu0
    %5237 = vmatprep.mubr.bf16.mxu0 %v2925
    %5238 = vmatmul.mubr.bf16.gmra.mrb[0].mxu0 %v2924
    %v5239 = vpop.f32.mrb[0].mxu0
    %v5240 = vadd.f32 %v4695, %v5239
    %v5241 = vpop.f32.mrb[0].mxu0
    %v5242 = vpop.f32.mrb[0].mxu0
    %v5243 = vadd.f32 %v4698, %v5242
    %v5244 = vpop.f32.mrb[0].mxu0
    %5245 = vmatprep.mubr.bf16.mxu0 %v2932
    %5246 = vmatmul.mubr.bf16.gmra.mrb[0].mxu0 %v2931
    %v5247 = vpop.f32.mrb[0].mxu0
    %v5248 = vadd.f32 %v4703, %v5247
    %v5249 = vpop.f32.mrb[0].mxu0
    %v5250 = vpop.f32.mrb[0].mxu0
    %v5251 = vadd.f32 %v4706, %v5250
    %v5252 = vpop.f32.mrb[0].mxu0
    %5253 = vmatprep.mubr.bf16.mxu0 %v2939
    %5254 = vmatmul.mubr.bf16.gmra.mrb[0].mxu0 %v2938
    %v5255 = vpop.f32.mrb[0].mxu0
    %v5256 = vadd.f32 %v4711, %v5255
    %v5257 = vpop.f32.mrb[0].mxu0
    %v5258 = vpop.f32.mrb[0].mxu0
    %v5259 = vadd.f32 %v4714, %v5258
    %v5260 = vpop.f32.mrb[0].mxu0
    %5261 = vmatprep.mubr.bf16.mxu0 %v2946
    %5262 = vmatmul.mubr.bf16.gmra.mrb[0].mxu0 %v2945
    %v5263 = vpop.f32.mrb[0].mxu0
    %v5264 = vadd.f32 %v4719, %v5263
    %v5265 = vpop.f32.mrb[0].mxu0
    %v5266 = vpop.f32.mrb[0].mxu0
    %v5267 = vadd.f32 %v4722, %v5266
    %v5268 = vpop.f32.mrb[0].mxu0
    %5269 = vmatprep.mubr.bf16.mxu0 %v2953
    %5270 = vmatmul.mubr.bf16.gmra.mrb[0].mxu0 %v2952
    %v5271 = vpop.f32.mrb[0].mxu0
    %v5272 = vadd.f32 %v4727, %v5271
    %v5273 = vpop.f32.mrb[0].mxu0
    %v5274 = vpop.f32.mrb[0].mxu0
    %v5275 = vadd.f32 %v4730, %v5274
    %v5276 = vpop.f32.mrb[0].mxu0
    %5277 = vmatprep.mubr.bf16.mxu0 %v2960
    %5278 = vmatmul.mubr.bf16.gmra.mrb[0].mxu0 %v2959
    %v5279 = vpop.f32.mrb[0].mxu0
    %v5280 = vadd.f32 %v4735, %v5279
    %v5281 = vpop.f32.mrb[0].mxu0
    %v5282 = vpop.f32.mrb[0].mxu0
    %v5283 = vadd.f32 %v4738, %v5282
    %v5284 = vpop.f32.mrb[0].mxu0
    %5285 = vmatprep.mubr.bf16.mxu0 %v2967
    %5286 = vmatmul.mubr.bf16.gmra.mrb[0].mxu0 %v2966
    %v5287 = vpop.f32.mrb[0].mxu0
    %v5288 = vadd.f32 %v4743, %v5287
    %v5289 = vpop.f32.mrb[0].mxu0
    %v5290 = vpop.f32.mrb[0].mxu0
    %v5291 = vadd.f32 %v4746, %v5290
    %v5292 = vpop.f32.mrb[0].mxu0
    %5293 = vmatprep.mubr.bf16.mxu0 %v2974
    %5294 = vmatmul.mubr.bf16.gmra.mrb[0].mxu0 %v2973
    %v5295 = vpop.f32.mrb[0].mxu0
    %v5296 = vadd.f32 %v4751, %v5295
    %v5297 = vpop.f32.mrb[0].mxu0
    %v5298 = vpop.f32.mrb[0].mxu0
    %v5299 = vadd.f32 %v4754, %v5298
    %v5300 = vpop.f32.mrb[0].mxu0
    %5301 = vmatprep.mubr.bf16.mxu0 %v2981
    %5302 = vmatmul.mubr.bf16.gmra.mrb[0].mxu0 %v2980
    %v5303 = vpop.f32.mrb[0].mxu0
    %v5304 = vadd.f32 %v4759, %v5303
    %v5305 = vpop.f32.mrb[0].mxu0
    %v5306 = vpop.f32.mrb[0].mxu0
    %v5307 = vadd.f32 %v4762, %v5306
    %v5308 = vpop.f32.mrb[0].mxu0
    %5309 = vmatprep.mubr.bf16.mxu0 %v2988
    %5310 = vmatmul.mubr.bf16.gmra.mrb[0].mxu0 %v2987
    %v5311 = vpop.f32.mrb[0].mxu0
    %v5312 = vadd.f32 %v4767, %v5311
    %v5313 = vpop.f32.mrb[0].mxu0
    %v5314 = vpop.f32.mrb[0].mxu0
    %v5315 = vadd.f32 %v4770, %v5314
    %v5316 = vpop.f32.mrb[0].mxu0
    %5317 = vmatprep.mubr.bf16.mxu0 %v2995
    %5318 = vmatmul.mubr.bf16.gmra.mrb[0].mxu0 %v2994
    %v5319 = vpop.f32.mrb[0].mxu0
    %v5320 = vadd.f32 %v4775, %v5319
    %v5321 = vpop.f32.mrb[0].mxu0
    %v5322 = vpop.f32.mrb[0].mxu0
    %v5323 = vadd.f32 %v4778, %v5322
    %v5324 = vpop.f32.mrb[0].mxu0
    %5325 = vmatprep.mubr.bf16.mxu0 %v3002
    %5326 = vmatmul.mubr.bf16.gmra.mrb[0].mxu0 %v3001
    %v5327 = vpop.f32.mrb[0].mxu0
    %v5328 = vadd.f32 %v4783, %v5327
    %v5329 = vpop.f32.mrb[0].mxu0
    %v5330 = vpop.f32.mrb[0].mxu0
    %v5331 = vadd.f32 %v4786, %v5330
    %v5332 = vpop.f32.mrb[0].mxu0
    %5333 = vmatprep.mubr.bf16.mxu0 %v3009
    %5334 = vmatmul.mubr.bf16.gmra.mrb[0].mxu0 %v3008
    %v5335 = vpop.f32.mrb[0].mxu0
    %v5336 = vadd.f32 %v4791, %v5335
    %v5337 = vpop.f32.mrb[0].mxu0
    %v5338 = vpop.f32.mrb[0].mxu0
    %v5339 = vadd.f32 %v4794, %v5338
    %v5340 = vpop.f32.mrb[0].mxu0
    %5341 = vmatprep.mubr.bf16.mxu0 %v3016
    %5342 = vmatmul.mubr.bf16.gmra.mrb[0].mxu0 %v3015
    %v5343 = vpop.f32.mrb[0].mxu0
    %v5344 = vadd.f32 %v4799, %v5343
    %v5345 = vpop.f32.mrb[0].mxu0
    %v5346 = vpop.f32.mrb[0].mxu0
    %v5347 = vadd.f32 %v4802, %v5346
    %v5348 = vpop.f32.mrb[0].mxu0
    %5349 = vmatprep.mubr.bf16.mxu0 %v3023
    %5350 = vmatmul.mubr.bf16.gmra.mrb[0].mxu0 %v3022
    %v5351 = vpop.f32.mrb[0].mxu0
    %v5352 = vadd.f32 %v4807, %v5351
    %v5353 = vpop.f32.mrb[0].mxu0
    %v5354 = vpop.f32.mrb[0].mxu0
    %v5355 = vadd.f32 %v4810, %v5354
    %v5356 = vpop.f32.mrb[0].mxu0
    %5357 = vmatprep.mubr.bf16.mxu0 %v3030
    %5358 = vmatmul.mubr.bf16.gmra.mrb[0].mxu0 %v3029
    %v5359 = vpop.f32.mrb[0].mxu0
    %v5360 = vadd.f32 %v4815, %v5359
    %v5361 = vpop.f32.mrb[0].mxu0
    %v5362 = vpop.f32.mrb[0].mxu0
    %v5363 = vadd.f32 %v4818, %v5362
    %v5364 = vpop.f32.mrb[0].mxu0
    %5365 = vmatprep.mubr.bf16.mxu0 %v3037
    %5366 = vmatmul.mubr.bf16.gmra.mrb[0].mxu0 %v3036
    %v5367 = vpop.f32.mrb[0].mxu0
    %v5368 = vadd.f32 %v4823, %v5367
    %v5369 = vpop.f32.mrb[0].mxu0
    %v5370 = vpop.f32.mrb[0].mxu0
    %v5371 = vadd.f32 %v4826, %v5370
    %v5372 = vpop.f32.mrb[0].mxu0
    %5373 = vmatprep.mubr.bf16.mxu0 %v3044
    %5374 = vmatmul.mubr.bf16.gmra.mrb[0].mxu0 %v3043
    %v5375 = vpop.f32.mrb[0].mxu0
    %v5376 = vadd.f32 %v4831, %v5375
    %v5377 = vpop.f32.mrb[0].mxu0
    %v5378 = vpop.f32.mrb[0].mxu0
    %v5379 = vadd.f32 %v4834, %v5378
    %v5380 = vpop.f32.mrb[0].mxu0
    %5381 = vmatprep.mubr.bf16.mxu0 %v3051
    %5382 = vmatmul.mubr.bf16.gmra.mrb[0].mxu0 %v3050
    %v5383 = vpop.f32.mrb[0].mxu0
    %v5384 = vadd.f32 %v4839, %v5383
    %v5385 = vpop.f32.mrb[0].mxu0
    %v5386 = vpop.f32.mrb[0].mxu0
    %v5387 = vadd.f32 %v4842, %v5386
    %v5388 = vpop.f32.mrb[0].mxu0
    %5389 = vmatprep.mubr.bf16.mxu0 %v3058
    %5390 = vmatmul.mubr.bf16.gmra.mrb[0].mxu0 %v3057
    %v5391 = vpop.f32.mrb[0].mxu0
    %v5392 = vadd.f32 %v4847, %v5391
    %v5393 = vpop.f32.mrb[0].mxu0
    %v5394 = vpop.f32.mrb[0].mxu0
    %v5395 = vadd.f32 %v4850, %v5394
    %v5396 = vpop.f32.mrb[0].mxu0
    %5397 = vmatprep.mubr.bf16.mxu0 %v3065
    %5398 = vmatmul.mubr.bf16.gmra.mrb[0].mxu0 %v3064
    %v5399 = vpop.f32.mrb[0].mxu0
    %v5400 = vadd.f32 %v4855, %v5399
    %v5401 = vpop.f32.mrb[0].mxu0
    %v5402 = vpop.f32.mrb[0].mxu0
    %v5403 = vadd.f32 %v4858, %v5402
    %v5404 = vpop.f32.mrb[0].mxu0
    %5405 = vmatprep.mubr.bf16.mxu0 %v3072
    %5406 = vmatmul.mubr.bf16.gmra.mrb[0].mxu0 %v3071
    %v5407 = vpop.f32.mrb[0].mxu0
    %v5408 = vadd.f32 %v4863, %v5407
    %v5409 = vpop.f32.mrb[0].mxu0
    %v5410 = vpop.f32.mrb[0].mxu0
    %v5411 = vadd.f32 %v4866, %v5410
    %v5412 = vpop.f32.mrb[0].mxu0
    %5413 = vmatprep.mubr.bf16.mxu0 %v3079
    %5414 = vmatmul.mubr.bf16.gmra.mrb[0].mxu0 %v3078
    %v5415 = vpop.f32.mrb[0].mxu0
    %v5416 = vadd.f32 %v4871, %v5415
    %v5417 = vpop.f32.mrb[0].mxu0
    %v5418 = vpop.f32.mrb[0].mxu0
    %v5419 = vadd.f32 %v4874, %v5418
    %v5420 = vpop.f32.mrb[0].mxu0
    %5421 = vmatprep.mubr.bf16.mxu0 %v3086
    %5422 = vmatmul.mubr.bf16.gmra.mrb[0].mxu0 %v3085
    %v5423 = vpop.f32.mrb[0].mxu0
    %v5424 = vadd.f32 %v4879, %v5423
    %v5425 = vpop.f32.mrb[0].mxu0
    %v5426 = vpop.f32.mrb[0].mxu0
    %v5427 = vadd.f32 %v4882, %v5426
    %v5428 = vpop.f32.mrb[0].mxu0
    %5429 = vmatprep.mubr.bf16.mxu0 %v3093
    %5430 = vmatmul.mubr.bf16.gmra.mrb[0].mxu0 %v3092
    %v5431 = vpop.f32.mrb[0].mxu0
    %v5432 = vadd.f32 %v4887, %v5431
    %v5433 = vpop.f32.mrb[0].mxu0
    %v5434 = vpop.f32.mrb[0].mxu0
    %v5435 = vadd.f32 %v4890, %v5434
    %v5436 = vpop.f32.mrb[0].mxu0
    %5437 = vmatprep.mubr.bf16.mxu0 %v3100
    %5438 = vmatmul.mubr.bf16.gmra.mrb[0].mxu0 %v3099
    %v5439 = vpop.f32.mrb[0].mxu0
    %v5440 = vadd.f32 %v4895, %v5439
    %v5441 = vpop.f32.mrb[0].mxu0
    %v5442 = vpop.f32.mrb[0].mxu0
    %v5443 = vadd.f32 %v4898, %v5442
    %v5444 = vpop.f32.mrb[0].mxu0
    %5445 = vmatprep.mubr.bf16.mxu0 %v3107
    %5446 = vmatmul.mubr.bf16.gmra.mrb[0].mxu0 %v3106
    %v5447 = vpop.f32.mrb[0].mxu0
    %v5448 = vadd.f32 %v4903, %v5447
    %v5449 = vpop.f32.mrb[0].mxu0
    %v5450 = vpop.f32.mrb[0].mxu0
    %v5451 = vadd.f32 %v4906, %v5450
    %v5452 = vpop.f32.mrb[0].mxu0
    %5453 = vmatprep.mubr.bf16.mxu0 %v3114
    %5454 = vmatmul.mubr.bf16.gmra.mrb[0].mxu0 %v3113
    %v5455 = vpop.f32.mrb[0].mxu0
    %v5456 = vadd.f32 %v4911, %v5455
    %v5457 = vpop.f32.mrb[0].mxu0
    %v5458 = vpop.f32.mrb[0].mxu0
    %v5459 = vadd.f32 %v4914, %v5458
    %v5460 = vpop.f32.mrb[0].mxu0
    %5461 = vmatprep.mubr.bf16.mxu0 %v3121
    %5462 = vmatmul.mubr.bf16.gmra.mrb[0].mxu0 %v3120
    %v5463 = vpop.f32.mrb[0].mxu0
    %v5464 = vadd.f32 %v4919, %v5463
    %v5465 = vpop.f32.mrb[0].mxu0
    %v5466 = vpop.f32.mrb[0].mxu0
    %v5467 = vadd.f32 %v4922, %v5466
    %v5468 = vpop.f32.mrb[0].mxu0
    %5469 = vmatprep.mubr.bf16.mxu0 %v3128
    %5470 = vmatmul.mubr.bf16.gmra.mrb[0].mxu0 %v3127
    %v5471 = vpop.f32.mrb[0].mxu0
    %v5472 = vadd.f32 %v4927, %v5471
    %v5473 = vpop.f32.mrb[0].mxu0
    %v5474 = vpop.f32.mrb[0].mxu0
    %v5475 = vadd.f32 %v4930, %v5474
    %v5476 = vpop.f32.mrb[0].mxu0
    %5477 = vmatprep.mubr.bf16.mxu0 %v3135
    %5478 = vmatmul.mubr.bf16.gmra.mrb[0].mxu0 %v3134
    %v5479 = vpop.f32.mrb[0].mxu0
    %v5480 = vadd.f32 %v4935, %v5479
    %v5481 = vpop.f32.mrb[0].mxu0
    %v5482 = vpop.f32.mrb[0].mxu0
    %v5483 = vadd.f32 %v4938, %v5482
    %v5484 = vpop.f32.mrb[0].mxu0
    %5485 = vmatprep.mubr.bf16.mxu0 %v3142
    %5486 = vmatmul.mubr.bf16.gmra.mrb[0].mxu0 %v3141
    %v5487 = vpop.f32.mrb[0].mxu0
    %v5488 = vadd.f32 %v4943, %v5487
    %v5489 = vpop.f32.mrb[0].mxu0
    %v5490 = vpop.f32.mrb[0].mxu0
    %v5491 = vadd.f32 %v4946, %v5490
    %v5492 = vpop.f32.mrb[0].mxu0
    %5493 = vmatprep.mubr.bf16.mxu0 %v3149
    %5494 = vmatmul.mubr.bf16.gmra.mrb[0].mxu0 %v3148
    %v5495 = vpop.f32.mrb[0].mxu0
    %v5496 = vadd.f32 %v4951, %v5495
    %v5497 = vpop.f32.mrb[0].mxu0
    %v5498 = vpop.f32.mrb[0].mxu0
    %v5499 = vadd.f32 %v4954, %v5498
    %v5500 = vpop.f32.mrb[0].mxu0
    %5501 = vmatprep.mubr.bf16.mxu0 %v3156
    %5502 = vmatmul.mubr.bf16.gmra.mrb[0].mxu0 %v3155
    %v5503 = vpop.f32.mrb[0].mxu0
    %v5504 = vadd.f32 %v4959, %v5503
    %v5505 = vpop.f32.mrb[0].mxu0
    %v5506 = vpop.f32.mrb[0].mxu0
    %v5507 = vadd.f32 %v4962, %v5506
    %v5508 = vpop.f32.mrb[0].mxu0
    %5509 = vmatprep.mubr.bf16.mxu0 %v3163
    %5510 = vmatmul.mubr.bf16.gmra.mrb[0].mxu0 %v3162
    %v5511 = vpop.f32.mrb[0].mxu0
    %v5512 = vadd.f32 %v4967, %v5511
    %v5513 = vpop.f32.mrb[0].mxu0
    %v5514 = vpop.f32.mrb[0].mxu0
    %v5515 = vadd.f32 %v4970, %v5514
    %v5516 = vpop.f32.mrb[0].mxu0
    %5517 = vmatprep.mubr.bf16.mxu0 %v3170
    %5518 = vmatmul.mubr.bf16.gmra.mrb[0].mxu0 %v3169
    %v5519 = vpop.f32.mrb[0].mxu0
    %v5520 = vadd.f32 %v4975, %v5519
    %v5521 = vpop.f32.mrb[0].mxu0
    %v5522 = vpop.f32.mrb[0].mxu0
    %v5523 = vadd.f32 %v4978, %v5522
    %v5524 = vpop.f32.mrb[0].mxu0
    %5525 = vmatprep.mubr.bf16.mxu0 %v3177
    %5526 = vmatmul.mubr.bf16.gmra.mrb[0].mxu0 %v3176
    %v5527 = vpop.f32.mrb[0].mxu0
    %v5528 = vadd.f32 %v4983, %v5527
    %v5529 = vpop.f32.mrb[0].mxu0
    %v5530 = vpop.f32.mrb[0].mxu0
    %v5531 = vadd.f32 %v4986, %v5530
    %v5532 = vpop.f32.mrb[0].mxu0
    %5533 = vmatprep.mubr.bf16.mxu0 %v3184
    %5534 = vmatmul.mubr.bf16.gmra.mrb[0].mxu0 %v3183
    %v5535 = vpop.f32.mrb[0].mxu0
    %v5536 = vadd.f32 %v4991, %v5535
    %v5537 = vpop.f32.mrb[0].mxu0
    %v5538 = vpop.f32.mrb[0].mxu0
    %v5539 = vadd.f32 %v4994, %v5538
    %v5540 = vpop.f32.mrb[0].mxu0
    %5541 = vmatprep.mubr.bf16.mxu0 %v3191
    %5542 = vmatmul.mubr.bf16.gmra.mrb[0].mxu0 %v3190
    %v5543 = vpop.f32.mrb[0].mxu0
    %v5544 = vadd.f32 %v4999, %v5543
    %v5545 = vpop.f32.mrb[0].mxu0
    %v5546 = vpop.f32.mrb[0].mxu0
    %v5547 = vadd.f32 %v5002, %v5546
    %v5548 = vpop.f32.mrb[0].mxu0
    %5549 = vmatprep.mubr.bf16.mxu0 %v3198
    %5550 = vmatmul.mubr.bf16.gmra.mrb[0].mxu0 %v3197
    %v5551 = vpop.f32.mrb[0].mxu0
    %v5552 = vadd.f32 %v5007, %v5551
    %v5553 = vpop.f32.mrb[0].mxu0
    %v5554 = vpop.f32.mrb[0].mxu0
    %v5555 = vadd.f32 %v5010, %v5554
    %v5556 = vpop.f32.mrb[0].mxu0
    %5557 = vmatprep.mubr.bf16.mxu0 %v3205
    %5558 = vmatmul.mubr.bf16.gmra.mrb[0].mxu0 %v3204
    %v5559 = vpop.f32.mrb[0].mxu0
    %v5560 = vadd.f32 %v5015, %v5559
    %v5561 = vpop.f32.mrb[0].mxu0
    %v5562 = vpop.f32.mrb[0].mxu0
    %v5563 = vadd.f32 %v5018, %v5562
    %v5564 = vpop.f32.mrb[0].mxu0
    %5565 = vmatprep.mubr.bf16.mxu0 %v3212
    %5566 = vmatmul.mubr.bf16.gmra.mrb[0].mxu0 %v3211
    %v5567 = vpop.f32.mrb[0].mxu0
    %v5568 = vadd.f32 %v5023, %v5567
    %v5569 = vpop.f32.mrb[0].mxu0
    %v5570 = vpop.f32.mrb[0].mxu0
    %v5571 = vadd.f32 %v5026, %v5570
    %v5572 = vpop.f32.mrb[0].mxu0
    %5573 = vmatprep.mubr.bf16.mxu0 %v3219
    %5574 = vmatmul.mubr.bf16.gmra.mrb[0].mxu0 %v3218
    %v5575 = vpop.f32.mrb[0].mxu0
    %v5576 = vadd.f32 %v5031, %v5575
    %v5577 = vpop.f32.mrb[0].mxu0
    %v5578 = vpop.f32.mrb[0].mxu0
    %v5579 = vadd.f32 %v5034, %v5578
    %v5580 = vpop.f32.mrb[0].mxu0
    %5581 = vmatprep.mubr.bf16.mxu0 %v3226
    %5582 = vmatmul.mubr.bf16.gmra.mrb[0].mxu0 %v3225
    %v5583 = vpop.f32.mrb[0].mxu0
    %v5584 = vadd.f32 %v5039, %v5583
    %v5585 = vpop.f32.mrb[0].mxu0
    %v5586 = vpop.f32.mrb[0].mxu0
    %v5587 = vadd.f32 %v5042, %v5586
    %v5588 = vpop.f32.mrb[0].mxu0
    %5589 = vmatprep.mubr.bf16.mxu0 %v3233
    %5590 = vmatmul.mubr.bf16.gmra.mrb[0].mxu0 %v3232
    %v5591 = vpop.f32.mrb[0].mxu0
    %v5592 = vadd.f32 %v5047, %v5591
    %v5593 = vpop.f32.mrb[0].mxu0
    %v5594 = vpop.f32.mrb[0].mxu0
    %v5595 = vadd.f32 %v5050, %v5594
    %v5596 = vpop.f32.mrb[0].mxu0
    %5597 = vmatprep.mubr.bf16.mxu0 %v3240
    %5598 = vmatmul.mubr.bf16.gmra.mrb[0].mxu0 %v3239
    %v5599 = vpop.f32.mrb[0].mxu0
    %v5600 = vadd.f32 %v5055, %v5599
    %v5601 = vpop.f32.mrb[0].mxu0
    %v5602 = vpop.f32.mrb[0].mxu0
    %v5603 = vadd.f32 %v5058, %v5602
    %v5604 = vpop.f32.mrb[0].mxu0
    %5605 = vmatprep.mubr.bf16.mxu0 %v3247
    %5606 = vmatmul.mubr.bf16.gmra.mrb[0].mxu0 %v3246
    %v5607 = vpop.f32.mrb[0].mxu0
    %v5608 = vadd.f32 %v5063, %v5607
    %v5609 = vpop.f32.mrb[0].mxu0
    %v5610 = vpop.f32.mrb[0].mxu0
    %v5611 = vadd.f32 %v5066, %v5610
    %v5612 = vpop.f32.mrb[0].mxu0
    %5613 = vmatprep.mubr.bf16.mxu0 %v3254
    %5614 = vmatmul.mubr.bf16.gmra.mrb[0].mxu0 %v3253
    %v5615 = vpop.f32.mrb[0].mxu0
    %v5616 = vadd.f32 %v5071, %v5615
    %v5617 = vpop.f32.mrb[0].mxu0
    %v5618 = vpop.f32.mrb[0].mxu0
    %v5619 = vadd.f32 %v5074, %v5618
    %v5620 = vpop.f32.mrb[0].mxu0
    %5621 = vmatprep.mubr.bf16.mxu0 %v3261
    %5622 = vmatmul.mubr.bf16.gmra.mrb[0].mxu0 %v3260
    %v5623 = vpop.f32.mrb[0].mxu0
    %v5624 = vadd.f32 %v5079, %v5623
    %v5625 = vpop.f32.mrb[0].mxu0
    %v5626 = vpop.f32.mrb[0].mxu0
    %v5627 = vadd.f32 %v5082, %v5626
    %v5628 = vpop.f32.mrb[0].mxu0
    %5629 = vmatprep.mubr.bf16.mxu0 %v3268
    %5630 = vmatmul.mubr.bf16.gmra.mrb[0].mxu0 %v3267
    %v5631 = vpop.f32.mrb[0].mxu0
    %v5632 = vadd.f32 %v5087, %v5631
    %v5633 = vpop.f32.mrb[0].mxu0
    %v5634 = vpop.f32.mrb[0].mxu0
    %v5635 = vadd.f32 %v5090, %v5634
    %v5636 = vpop.f32.mrb[0].mxu0
    %5637 = vmatprep.mubr.bf16.mxu0 %v3275
    %5638 = vmatmul.mubr.bf16.gmra.mrb[0].mxu0 %v3274
    %v5639 = vpop.f32.mrb[0].mxu0
    %v5640 = vadd.f32 %v5095, %v5639
    %v5641 = vpop.f32.mrb[0].mxu0
    %v5642 = vpop.f32.mrb[0].mxu0
    %v5643 = vadd.f32 %v5098, %v5642
    %v5644 = vpop.f32.mrb[0].mxu0
    %5645 = vmatprep.mubr.bf16.mxu0 %v3282
    %5646 = vmatmul.mubr.bf16.gmra.mrb[0].mxu0 %v3281
    %v5647 = vpop.f32.mrb[0].mxu0
    %v5648 = vadd.f32 %v5103, %v5647
    %v5649 = vpop.f32.mrb[0].mxu0
    %v5650 = vpop.f32.mrb[0].mxu0
    %v5651 = vadd.f32 %v5106, %v5650
    %v5652 = vpop.f32.mrb[0].mxu0
    %5653 = vmatprep.mubr.bf16.mxu0 %v3289
    %5654 = vmatmul.mubr.bf16.gmra.mrb[0].mxu0 %v3288
    %v5655 = vpop.f32.mrb[0].mxu0
    %v5656 = vadd.f32 %v5111, %v5655
    %v5657 = vpop.f32.mrb[0].mxu0
    %v5658 = vpop.f32.mrb[0].mxu0
    %v5659 = vadd.f32 %v5114, %v5658
    %v5660 = vpop.f32.mrb[0].mxu0
    %5661 = vdwg.mxu0
    %5662 = vmatprep.subr.bf16.mxu0 0
    %5663 = vmatpush1.bf16.xpose.msra.mxu0 %v3921
    %5664 = vmatprep.subr.bf16.mxu0 0
    %5665 = vmatpush1.bf16.xpose.msra.mxu0 %v3928
    %5666 = vmatprep.subr.bf16.mxu0 0
    %5667 = vmatpush1.bf16.xpose.msra.mxu0 %v3935
    %5668 = vmatprep.subr.bf16.mxu0 0
    %5669 = vmatpush1.bf16.xpose.msra.mxu0 %v3942
    %5670 = vmatprep.subr.bf16.mxu0 0
    %5671 = vmatpush1.bf16.xpose.msra.mxu0 %v3949
    %5672 = vmatprep.subr.bf16.mxu0 0
    %5673 = vmatpush1.bf16.xpose.msra.mxu0 %v3956
    %5674 = vmatprep.subr.bf16.mxu0 0
    %5675 = vmatpush1.bf16.xpose.msra.mxu0 %v3963
    %5676 = vmatprep.subr.bf16.mxu0 0
    %5677 = vmatpush1.bf16.xpose.msra.mxu0 %v3970
    %5678 = vmatprep.subr.bf16.mxu0 0
    %5679 = vmatpush1.bf16.xpose.msra.mxu0 0
    %5680 = vmatprep.subr.bf16.mxu0 0
    %5681 = vmatpush1.bf16.xpose.msra.mxu0 0
    %5682 = vmatprep.subr.bf16.mxu0 0
    %5683 = vmatpush1.bf16.xpose.msra.mxu0 0
    %5684 = vmatprep.subr.bf16.mxu0 0
    %5685 = vmatpush1.bf16.xpose.msra.mxu0 0
    %5686 = vmatprep.subr.bf16.mxu0 0
    %5687 = vmatpush1.bf16.xpose.msra.mxu0 0
    %5688 = vmatprep.subr.bf16.mxu0 0
    %5689 = vmatpush1.bf16.xpose.msra.mxu0 0
    %5690 = vmatprep.subr.bf16.mxu0 0
    %5691 = vmatpush1.bf16.xpose.msra.mxu0 0
    %5692 = vmatprep.subr.bf16.mxu0 0
    %5693 = vmatpush1.bf16.xpose.msra.mxu0 0
    %5694 = vmatprep.mubr.bf16.mxu0 0
    %5695 = vmatmul.mubr.bf16.gmra.mrb[0].mxu0 %v2849
    %v5696 = vpop.f32.mrb[0].mxu0
    %v5697 = vadd.f32 %v5152, %v5696
    %v5698 = vpop.f32.mrb[0].mxu0
    %v5699 = vpop.f32.mrb[0].mxu0
    %v5700 = vadd.f32 %v5155, %v5699
    %v5701 = vpop.f32.mrb[0].mxu0
    %5702 = vmatprep.mubr.bf16.mxu0 0
    %5703 = vmatmul.mubr.bf16.gmra.mrb[0].mxu0 %v2856
    %v5704 = vpop.f32.mrb[0].mxu0
    %v5705 = vadd.f32 %v5160, %v5704
    %v5706 = vpop.f32.mrb[0].mxu0
    %v5707 = vpop.f32.mrb[0].mxu0
    %v5708 = vadd.f32 %v5163, %v5707
    %v5709 = vpop.f32.mrb[0].mxu0
    %5710 = vmatprep.mubr.bf16.mxu0 0
    %5711 = vmatmul.mubr.bf16.gmra.mrb[0].mxu0 %v2863
    %v5712 = vpop.f32.mrb[0].mxu0
    %v5713 = vadd.f32 %v5168, %v5712
    %v5714 = vpop.f32.mrb[0].mxu0
    %v5715 = vpop.f32.mrb[0].mxu0
    %v5716 = vadd.f32 %v5171, %v5715
    %v5717 = vpop.f32.mrb[0].mxu0
    %5718 = vmatprep.mubr.bf16.mxu0 0
    %5719 = vmatmul.mubr.bf16.gmra.mrb[0].mxu0 %v2870
    %v5720 = vpop.f32.mrb[0].mxu0
    %v5721 = vadd.f32 %v5176, %v5720
    %v5722 = vpop.f32.mrb[0].mxu0
    %v5723 = vpop.f32.mrb[0].mxu0
    %v5724 = vadd.f32 %v5179, %v5723
    %v5725 = vpop.f32.mrb[0].mxu0
    %5726 = vmatprep.mubr.bf16.mxu0 0
    %5727 = vmatmul.mubr.bf16.gmra.mrb[0].mxu0 %v2877
    %v5728 = vpop.f32.mrb[0].mxu0
    %v5729 = vadd.f32 %v5184, %v5728
    %v5730 = vpop.f32.mrb[0].mxu0
    %v5731 = vpop.f32.mrb[0].mxu0
    %v5732 = vadd.f32 %v5187, %v5731
    %v5733 = vpop.f32.mrb[0].mxu0
    %5734 = vmatprep.mubr.bf16.mxu0 0
    %5735 = vmatmul.mubr.bf16.gmra.mrb[0].mxu0 %v2884
    %v5736 = vpop.f32.mrb[0].mxu0
    %v5737 = vadd.f32 %v5192, %v5736
    %v5738 = vpop.f32.mrb[0].mxu0
    %v5739 = vpop.f32.mrb[0].mxu0
    %v5740 = vadd.f32 %v5195, %v5739
    %v5741 = vpop.f32.mrb[0].mxu0
    %5742 = vmatprep.mubr.bf16.mxu0 0
    %5743 = vmatmul.mubr.bf16.gmra.mrb[0].mxu0 %v2891
    %v5744 = vpop.f32.mrb[0].mxu0
    %v5745 = vadd.f32 %v5200, %v5744
    %v5746 = vpop.f32.mrb[0].mxu0
    %v5747 = vpop.f32.mrb[0].mxu0
    %v5748 = vadd.f32 %v5203, %v5747
    %v5749 = vpop.f32.mrb[0].mxu0
    %5750 = vmatprep.mubr.bf16.mxu0 0
    %5751 = vmatmul.mubr.bf16.gmra.mrb[0].mxu0 %v2898
    %v5752 = vpop.f32.mrb[0].mxu0
    %v5753 = vadd.f32 %v5208, %v5752
    %v5754 = vpop.f32.mrb[0].mxu0
    %v5755 = vpop.f32.mrb[0].mxu0
    %v5756 = vadd.f32 %v5211, %v5755
    %v5757 = vpop.f32.mrb[0].mxu0
    %5758 = vmatprep.mubr.bf16.mxu0 0
    %5759 = vmatmul.mubr.bf16.gmra.mrb[0].mxu0 %v2905
    %v5760 = vpop.f32.mrb[0].mxu0
    %v5761 = vadd.f32 %v5216, %v5760
    %v5762 = vpop.f32.mrb[0].mxu0
    %v5763 = vpop.f32.mrb[0].mxu0
    %v5764 = vadd.f32 %v5219, %v5763
    %v5765 = vpop.f32.mrb[0].mxu0
    %5766 = vmatprep.mubr.bf16.mxu0 0
    %5767 = vmatmul.mubr.bf16.gmra.mrb[0].mxu0 %v2912
    %v5768 = vpop.f32.mrb[0].mxu0
    %v5769 = vadd.f32 %v5224, %v5768
    %v5770 = vpop.f32.mrb[0].mxu0
    %v5771 = vpop.f32.mrb[0].mxu0
    %v5772 = vadd.f32 %v5227, %v5771
    %v5773 = vpop.f32.mrb[0].mxu0
    %5774 = vmatprep.mubr.bf16.mxu0 0
    %5775 = vmatmul.mubr.bf16.gmra.mrb[0].mxu0 %v2919
    %v5776 = vpop.f32.mrb[0].mxu0
    %v5777 = vadd.f32 %v5232, %v5776
    %v5778 = vpop.f32.mrb[0].mxu0
    %v5779 = vpop.f32.mrb[0].mxu0
    %v5780 = vadd.f32 %v5235, %v5779
    %v5781 = vpop.f32.mrb[0].mxu0
    %5782 = vmatprep.mubr.bf16.mxu0 0
    %5783 = vmatmul.mubr.bf16.gmra.mrb[0].mxu0 %v2926
    %v5784 = vpop.f32.mrb[0].mxu0
    %v5785 = vadd.f32 %v5240, %v5784
    %v5786 = vpop.f32.mrb[0].mxu0
    %v5787 = vpop.f32.mrb[0].mxu0
    %v5788 = vadd.f32 %v5243, %v5787
    %v5789 = vpop.f32.mrb[0].mxu0
    %5790 = vmatprep.mubr.bf16.mxu0 0
    %5791 = vmatmul.mubr.bf16.gmra.mrb[0].mxu0 %v2933
    %v5792 = vpop.f32.mrb[0].mxu0
    %v5793 = vadd.f32 %v5248, %v5792
    %v5794 = vpop.f32.mrb[0].mxu0
    %v5795 = vpop.f32.mrb[0].mxu0
    %v5796 = vadd.f32 %v5251, %v5795
    %v5797 = vpop.f32.mrb[0].mxu0
    %5798 = vmatprep.mubr.bf16.mxu0 0
    %5799 = vmatmul.mubr.bf16.gmra.mrb[0].mxu0 %v2940
    %v5800 = vpop.f32.mrb[0].mxu0
    %v5801 = vadd.f32 %v5256, %v5800
    %v5802 = vpop.f32.mrb[0].mxu0
    %v5803 = vpop.f32.mrb[0].mxu0
    %v5804 = vadd.f32 %v5259, %v5803
    %v5805 = vpop.f32.mrb[0].mxu0
    %5806 = vmatprep.mubr.bf16.mxu0 0
    %5807 = vmatmul.mubr.bf16.gmra.mrb[0].mxu0 %v2947
    %v5808 = vpop.f32.mrb[0].mxu0
    %v5809 = vadd.f32 %v5264, %v5808
    %v5810 = vpop.f32.mrb[0].mxu0
    %v5811 = vpop.f32.mrb[0].mxu0
    %v5812 = vadd.f32 %v5267, %v5811
    %v5813 = vpop.f32.mrb[0].mxu0
    %5814 = vmatprep.mubr.bf16.mxu0 0
    %5815 = vmatmul.mubr.bf16.gmra.mrb[0].mxu0 %v2954
    %v5816 = vpop.f32.mrb[0].mxu0
    %v5817 = vadd.f32 %v5272, %v5816
    %v5818 = vpop.f32.mrb[0].mxu0
    %v5819 = vpop.f32.mrb[0].mxu0
    %v5820 = vadd.f32 %v5275, %v5819
    %v5821 = vpop.f32.mrb[0].mxu0
    %5822 = vmatprep.mubr.bf16.mxu0 0
    %5823 = vmatmul.mubr.bf16.gmra.mrb[0].mxu0 %v2961
    %v5824 = vpop.f32.mrb[0].mxu0
    %v5825 = vadd.f32 %v5280, %v5824
    %v5826 = vpop.f32.mrb[0].mxu0
    %v5827 = vpop.f32.mrb[0].mxu0
    %v5828 = vadd.f32 %v5283, %v5827
    %v5829 = vpop.f32.mrb[0].mxu0
    %5830 = vmatprep.mubr.bf16.mxu0 0
    %5831 = vmatmul.mubr.bf16.gmra.mrb[0].mxu0 %v2968
    %v5832 = vpop.f32.mrb[0].mxu0
    %v5833 = vadd.f32 %v5288, %v5832
    %v5834 = vpop.f32.mrb[0].mxu0
    %v5835 = vpop.f32.mrb[0].mxu0
    %v5836 = vadd.f32 %v5291, %v5835
    %v5837 = vpop.f32.mrb[0].mxu0
    %5838 = vmatprep.mubr.bf16.mxu0 0
    %5839 = vmatmul.mubr.bf16.gmra.mrb[0].mxu0 %v2975
    %v5840 = vpop.f32.mrb[0].mxu0
    %v5841 = vadd.f32 %v5296, %v5840
    %v5842 = vpop.f32.mrb[0].mxu0
    %v5843 = vpop.f32.mrb[0].mxu0
    %v5844 = vadd.f32 %v5299, %v5843
    %v5845 = vpop.f32.mrb[0].mxu0
    %5846 = vmatprep.mubr.bf16.mxu0 0
    %5847 = vmatmul.mubr.bf16.gmra.mrb[0].mxu0 %v2982
    %v5848 = vpop.f32.mrb[0].mxu0
    %v5849 = vadd.f32 %v5304, %v5848
    %v5850 = vpop.f32.mrb[0].mxu0
    %v5851 = vpop.f32.mrb[0].mxu0
    %v5852 = vadd.f32 %v5307, %v5851
    %v5853 = vpop.f32.mrb[0].mxu0
    %5854 = vmatprep.mubr.bf16.mxu0 0
    %5855 = vmatmul.mubr.bf16.gmra.mrb[0].mxu0 %v2989
    %v5856 = vpop.f32.mrb[0].mxu0
    %v5857 = vadd.f32 %v5312, %v5856
    %v5858 = vpop.f32.mrb[0].mxu0
    %v5859 = vpop.f32.mrb[0].mxu0
    %v5860 = vadd.f32 %v5315, %v5859
    %v5861 = vpop.f32.mrb[0].mxu0
    %5862 = vmatprep.mubr.bf16.mxu0 0
    %5863 = vmatmul.mubr.bf16.gmra.mrb[0].mxu0 %v2996
    %v5864 = vpop.f32.mrb[0].mxu0
    %v5865 = vadd.f32 %v5320, %v5864
    %v5866 = vpop.f32.mrb[0].mxu0
    %v5867 = vpop.f32.mrb[0].mxu0
    %v5868 = vadd.f32 %v5323, %v5867
    %v5869 = vpop.f32.mrb[0].mxu0
    %5870 = vmatprep.mubr.bf16.mxu0 0
    %5871 = vmatmul.mubr.bf16.gmra.mrb[0].mxu0 %v3003
    %v5872 = vpop.f32.mrb[0].mxu0
    %v5873 = vadd.f32 %v5328, %v5872
    %v5874 = vpop.f32.mrb[0].mxu0
    %v5875 = vpop.f32.mrb[0].mxu0
    %v5876 = vadd.f32 %v5331, %v5875
    %v5877 = vpop.f32.mrb[0].mxu0
    %5878 = vmatprep.mubr.bf16.mxu0 0
    %5879 = vmatmul.mubr.bf16.gmra.mrb[0].mxu0 %v3010
    %v5880 = vpop.f32.mrb[0].mxu0
    %v5881 = vadd.f32 %v5336, %v5880
    %v5882 = vpop.f32.mrb[0].mxu0
    %v5883 = vpop.f32.mrb[0].mxu0
    %v5884 = vadd.f32 %v5339, %v5883
    %v5885 = vpop.f32.mrb[0].mxu0
    %5886 = vmatprep.mubr.bf16.mxu0 0
    %5887 = vmatmul.mubr.bf16.gmra.mrb[0].mxu0 %v3017
    %v5888 = vpop.f32.mrb[0].mxu0
    %v5889 = vadd.f32 %v5344, %v5888
    %v5890 = vpop.f32.mrb[0].mxu0
    %v5891 = vpop.f32.mrb[0].mxu0
    %v5892 = vadd.f32 %v5347, %v5891
    %v5893 = vpop.f32.mrb[0].mxu0
    %5894 = vmatprep.mubr.bf16.mxu0 0
    %5895 = vmatmul.mubr.bf16.gmra.mrb[0].mxu0 %v3024
    %v5896 = vpop.f32.mrb[0].mxu0
    %v5897 = vadd.f32 %v5352, %v5896
    %v5898 = vpop.f32.mrb[0].mxu0
    %v5899 = vpop.f32.mrb[0].mxu0
    %v5900 = vadd.f32 %v5355, %v5899
    %v5901 = vpop.f32.mrb[0].mxu0
    %5902 = vmatprep.mubr.bf16.mxu0 0
    %5903 = vmatmul.mubr.bf16.gmra.mrb[0].mxu0 %v3031
    %v5904 = vpop.f32.mrb[0].mxu0
    %v5905 = vadd.f32 %v5360, %v5904
    %v5906 = vpop.f32.mrb[0].mxu0
    %v5907 = vpop.f32.mrb[0].mxu0
    %v5908 = vadd.f32 %v5363, %v5907
    %v5909 = vpop.f32.mrb[0].mxu0
    %5910 = vmatprep.mubr.bf16.mxu0 0
    %5911 = vmatmul.mubr.bf16.gmra.mrb[0].mxu0 %v3038
    %v5912 = vpop.f32.mrb[0].mxu0
    %v5913 = vadd.f32 %v5368, %v5912
    %v5914 = vpop.f32.mrb[0].mxu0
    %v5915 = vpop.f32.mrb[0].mxu0
    %v5916 = vadd.f32 %v5371, %v5915
    %v5917 = vpop.f32.mrb[0].mxu0
    %5918 = vmatprep.mubr.bf16.mxu0 0
    %5919 = vmatmul.mubr.bf16.gmra.mrb[0].mxu0 %v3045
    %v5920 = vpop.f32.mrb[0].mxu0
    %v5921 = vadd.f32 %v5376, %v5920
    %v5922 = vpop.f32.mrb[0].mxu0
    %v5923 = vpop.f32.mrb[0].mxu0
    %v5924 = vadd.f32 %v5379, %v5923
    %v5925 = vpop.f32.mrb[0].mxu0
    %5926 = vmatprep.mubr.bf16.mxu0 0
    %5927 = vmatmul.mubr.bf16.gmra.mrb[0].mxu0 %v3052
    %v5928 = vpop.f32.mrb[0].mxu0
    %v5929 = vadd.f32 %v5384, %v5928
    %v5930 = vpop.f32.mrb[0].mxu0
    %v5931 = vpop.f32.mrb[0].mxu0
    %v5932 = vadd.f32 %v5387, %v5931
    %v5933 = vpop.f32.mrb[0].mxu0
    %5934 = vmatprep.mubr.bf16.mxu0 0
    %5935 = vmatmul.mubr.bf16.gmra.mrb[0].mxu0 %v3059
    %v5936 = vpop.f32.mrb[0].mxu0
    %v5937 = vadd.f32 %v5392, %v5936
    %v5938 = vpop.f32.mrb[0].mxu0
    %v5939 = vpop.f32.mrb[0].mxu0
    %v5940 = vadd.f32 %v5395, %v5939
    %v5941 = vpop.f32.mrb[0].mxu0
    %5942 = vmatprep.mubr.bf16.mxu0 0
    %5943 = vmatmul.mubr.bf16.gmra.mrb[0].mxu0 %v3066
    %v5944 = vpop.f32.mrb[0].mxu0
    %v5945 = vadd.f32 %v5400, %v5944
    %v5946 = vpop.f32.mrb[0].mxu0
    %v5947 = vpop.f32.mrb[0].mxu0
    %v5948 = vadd.f32 %v5403, %v5947
    %v5949 = vpop.f32.mrb[0].mxu0
    %5950 = vmatprep.mubr.bf16.mxu0 0
    %5951 = vmatmul.mubr.bf16.gmra.mrb[0].mxu0 %v3073
    %v5952 = vpop.f32.mrb[0].mxu0
    %v5953 = vadd.f32 %v5408, %v5952
    %v5954 = vpop.f32.mrb[0].mxu0
    %v5955 = vpop.f32.mrb[0].mxu0
    %v5956 = vadd.f32 %v5411, %v5955
    %v5957 = vpop.f32.mrb[0].mxu0
    %5958 = vmatprep.mubr.bf16.mxu0 0
    %5959 = vmatmul.mubr.bf16.gmra.mrb[0].mxu0 %v3080
    %v5960 = vpop.f32.mrb[0].mxu0
    %v5961 = vadd.f32 %v5416, %v5960
    %v5962 = vpop.f32.mrb[0].mxu0
    %v5963 = vpop.f32.mrb[0].mxu0
    %v5964 = vadd.f32 %v5419, %v5963
    %v5965 = vpop.f32.mrb[0].mxu0
    %5966 = vmatprep.mubr.bf16.mxu0 0
    %5967 = vmatmul.mubr.bf16.gmra.mrb[0].mxu0 %v3087
    %v5968 = vpop.f32.mrb[0].mxu0
    %v5969 = vadd.f32 %v5424, %v5968
    %v5970 = vpop.f32.mrb[0].mxu0
    %v5971 = vpop.f32.mrb[0].mxu0
    %v5972 = vadd.f32 %v5427, %v5971
    %v5973 = vpop.f32.mrb[0].mxu0
    %5974 = vmatprep.mubr.bf16.mxu0 0
    %5975 = vmatmul.mubr.bf16.gmra.mrb[0].mxu0 %v3094
    %v5976 = vpop.f32.mrb[0].mxu0
    %v5977 = vadd.f32 %v5432, %v5976
    %v5978 = vpop.f32.mrb[0].mxu0
    %v5979 = vpop.f32.mrb[0].mxu0
    %v5980 = vadd.f32 %v5435, %v5979
    %v5981 = vpop.f32.mrb[0].mxu0
    %5982 = vmatprep.mubr.bf16.mxu0 0
    %5983 = vmatmul.mubr.bf16.gmra.mrb[0].mxu0 %v3101
    %v5984 = vpop.f32.mrb[0].mxu0
    %v5985 = vadd.f32 %v5440, %v5984
    %v5986 = vpop.f32.mrb[0].mxu0
    %v5987 = vpop.f32.mrb[0].mxu0
    %v5988 = vadd.f32 %v5443, %v5987
    %v5989 = vpop.f32.mrb[0].mxu0
    %5990 = vmatprep.mubr.bf16.mxu0 0
    %5991 = vmatmul.mubr.bf16.gmra.mrb[0].mxu0 %v3108
    %v5992 = vpop.f32.mrb[0].mxu0
    %v5993 = vadd.f32 %v5448, %v5992
    %v5994 = vpop.f32.mrb[0].mxu0
    %v5995 = vpop.f32.mrb[0].mxu0
    %v5996 = vadd.f32 %v5451, %v5995
    %v5997 = vpop.f32.mrb[0].mxu0
    %5998 = vmatprep.mubr.bf16.mxu0 0
    %5999 = vmatmul.mubr.bf16.gmra.mrb[0].mxu0 %v3115
    %v6000 = vpop.f32.mrb[0].mxu0
    %v6001 = vadd.f32 %v5456, %v6000
    %v6002 = vpop.f32.mrb[0].mxu0
    %v6003 = vpop.f32.mrb[0].mxu0
    %v6004 = vadd.f32 %v5459, %v6003
    %v6005 = vpop.f32.mrb[0].mxu0
    %6006 = vmatprep.mubr.bf16.mxu0 0
    %6007 = vmatmul.mubr.bf16.gmra.mrb[0].mxu0 %v3122
    %v6008 = vpop.f32.mrb[0].mxu0
    %v6009 = vadd.f32 %v5464, %v6008
    %v6010 = vpop.f32.mrb[0].mxu0
    %v6011 = vpop.f32.mrb[0].mxu0
    %v6012 = vadd.f32 %v5467, %v6011
    %v6013 = vpop.f32.mrb[0].mxu0
    %6014 = vmatprep.mubr.bf16.mxu0 0
    %6015 = vmatmul.mubr.bf16.gmra.mrb[0].mxu0 %v3129
    %v6016 = vpop.f32.mrb[0].mxu0
    %v6017 = vadd.f32 %v5472, %v6016
    %v6018 = vpop.f32.mrb[0].mxu0
    %v6019 = vpop.f32.mrb[0].mxu0
    %v6020 = vadd.f32 %v5475, %v6019
    %v6021 = vpop.f32.mrb[0].mxu0
    %6022 = vmatprep.mubr.bf16.mxu0 0
    %6023 = vmatmul.mubr.bf16.gmra.mrb[0].mxu0 %v3136
    %v6024 = vpop.f32.mrb[0].mxu0
    %v6025 = vadd.f32 %v5480, %v6024
    %v6026 = vpop.f32.mrb[0].mxu0
    %v6027 = vpop.f32.mrb[0].mxu0
    %v6028 = vadd.f32 %v5483, %v6027
    %v6029 = vpop.f32.mrb[0].mxu0
    %6030 = vmatprep.mubr.bf16.mxu0 0
    %6031 = vmatmul.mubr.bf16.gmra.mrb[0].mxu0 %v3143
    %v6032 = vpop.f32.mrb[0].mxu0
    %v6033 = vadd.f32 %v5488, %v6032
    %v6034 = vpop.f32.mrb[0].mxu0
    %v6035 = vpop.f32.mrb[0].mxu0
    %v6036 = vadd.f32 %v5491, %v6035
    %v6037 = vpop.f32.mrb[0].mxu0
    %6038 = vmatprep.mubr.bf16.mxu0 0
    %6039 = vmatmul.mubr.bf16.gmra.mrb[0].mxu0 %v3150
    %v6040 = vpop.f32.mrb[0].mxu0
    %v6041 = vadd.f32 %v5496, %v6040
    %v6042 = vpop.f32.mrb[0].mxu0
    %v6043 = vpop.f32.mrb[0].mxu0
    %v6044 = vadd.f32 %v5499, %v6043
    %v6045 = vpop.f32.mrb[0].mxu0
    %6046 = vmatprep.mubr.bf16.mxu0 0
    %6047 = vmatmul.mubr.bf16.gmra.mrb[0].mxu0 %v3157
    %v6048 = vpop.f32.mrb[0].mxu0
    %v6049 = vadd.f32 %v5504, %v6048
    %v6050 = vpop.f32.mrb[0].mxu0
    %v6051 = vpop.f32.mrb[0].mxu0
    %v6052 = vadd.f32 %v5507, %v6051
    %v6053 = vpop.f32.mrb[0].mxu0
    %6054 = vmatprep.mubr.bf16.mxu0 0
    %6055 = vmatmul.mubr.bf16.gmra.mrb[0].mxu0 %v3164
    %v6056 = vpop.f32.mrb[0].mxu0
    %v6057 = vadd.f32 %v5512, %v6056
    %v6058 = vpop.f32.mrb[0].mxu0
    %v6059 = vpop.f32.mrb[0].mxu0
    %v6060 = vadd.f32 %v5515, %v6059
    %v6061 = vpop.f32.mrb[0].mxu0
    %6062 = vmatprep.mubr.bf16.mxu0 0
    %6063 = vmatmul.mubr.bf16.gmra.mrb[0].mxu0 %v3171
    %v6064 = vpop.f32.mrb[0].mxu0
    %v6065 = vadd.f32 %v5520, %v6064
    %v6066 = vpop.f32.mrb[0].mxu0
    %v6067 = vpop.f32.mrb[0].mxu0
    %v6068 = vadd.f32 %v5523, %v6067
    %v6069 = vpop.f32.mrb[0].mxu0
    %6070 = vmatprep.mubr.bf16.mxu0 0
    %6071 = vmatmul.mubr.bf16.gmra.mrb[0].mxu0 %v3178
    %v6072 = vpop.f32.mrb[0].mxu0
    %v6073 = vadd.f32 %v5528, %v6072
    %v6074 = vpop.f32.mrb[0].mxu0
    %v6075 = vpop.f32.mrb[0].mxu0
    %v6076 = vadd.f32 %v5531, %v6075
    %v6077 = vpop.f32.mrb[0].mxu0
    %6078 = vmatprep.mubr.bf16.mxu0 0
    %6079 = vmatmul.mubr.bf16.gmra.mrb[0].mxu0 %v3185
    %v6080 = vpop.f32.mrb[0].mxu0
    %v6081 = vadd.f32 %v5536, %v6080
    %v6082 = vpop.f32.mrb[0].mxu0
    %v6083 = vpop.f32.mrb[0].mxu0
    %v6084 = vadd.f32 %v5539, %v6083
    %v6085 = vpop.f32.mrb[0].mxu0
    %6086 = vmatprep.mubr.bf16.mxu0 0
    %6087 = vmatmul.mubr.bf16.gmra.mrb[0].mxu0 %v3192
    %v6088 = vpop.f32.mrb[0].mxu0
    %v6089 = vadd.f32 %v5544, %v6088
    %v6090 = vpop.f32.mrb[0].mxu0
    %v6091 = vpop.f32.mrb[0].mxu0
    %v6092 = vadd.f32 %v5547, %v6091
    %v6093 = vpop.f32.mrb[0].mxu0
    %6094 = vmatprep.mubr.bf16.mxu0 0
    %6095 = vmatmul.mubr.bf16.gmra.mrb[0].mxu0 %v3199
    %v6096 = vpop.f32.mrb[0].mxu0
    %v6097 = vadd.f32 %v5552, %v6096
    %v6098 = vpop.f32.mrb[0].mxu0
    %v6099 = vpop.f32.mrb[0].mxu0
    %v6100 = vadd.f32 %v5555, %v6099
    %v6101 = vpop.f32.mrb[0].mxu0
    %6102 = vmatprep.mubr.bf16.mxu0 0
    %6103 = vmatmul.mubr.bf16.gmra.mrb[0].mxu0 %v3206
    %v6104 = vpop.f32.mrb[0].mxu0
    %v6105 = vadd.f32 %v5560, %v6104
    %v6106 = vpop.f32.mrb[0].mxu0
    %v6107 = vpop.f32.mrb[0].mxu0
    %v6108 = vadd.f32 %v5563, %v6107
    %v6109 = vpop.f32.mrb[0].mxu0
    %6110 = vmatprep.mubr.bf16.mxu0 0
    %6111 = vmatmul.mubr.bf16.gmra.mrb[0].mxu0 %v3213
    %v6112 = vpop.f32.mrb[0].mxu0
    %v6113 = vadd.f32 %v5568, %v6112
    %v6114 = vpop.f32.mrb[0].mxu0
    %v6115 = vpop.f32.mrb[0].mxu0
    %v6116 = vadd.f32 %v5571, %v6115
    %v6117 = vpop.f32.mrb[0].mxu0
    %6118 = vmatprep.mubr.bf16.mxu0 0
    %6119 = vmatmul.mubr.bf16.gmra.mrb[0].mxu0 %v3220
    %v6120 = vpop.f32.mrb[0].mxu0
    %v6121 = vadd.f32 %v5576, %v6120
    %v6122 = vpop.f32.mrb[0].mxu0
    %v6123 = vpop.f32.mrb[0].mxu0
    %v6124 = vadd.f32 %v5579, %v6123
    %v6125 = vpop.f32.mrb[0].mxu0
    %6126 = vmatprep.mubr.bf16.mxu0 0
    %6127 = vmatmul.mubr.bf16.gmra.mrb[0].mxu0 %v3227
    %v6128 = vpop.f32.mrb[0].mxu0
    %v6129 = vadd.f32 %v5584, %v6128
    %v6130 = vpop.f32.mrb[0].mxu0
    %v6131 = vpop.f32.mrb[0].mxu0
    %v6132 = vadd.f32 %v5587, %v6131
    %v6133 = vpop.f32.mrb[0].mxu0
    %6134 = vmatprep.mubr.bf16.mxu0 0
    %6135 = vmatmul.mubr.bf16.gmra.mrb[0].mxu0 %v3234
    %v6136 = vpop.f32.mrb[0].mxu0
    %v6137 = vadd.f32 %v5592, %v6136
    %v6138 = vpop.f32.mrb[0].mxu0
    %v6139 = vpop.f32.mrb[0].mxu0
    %v6140 = vadd.f32 %v5595, %v6139
    %v6141 = vpop.f32.mrb[0].mxu0
    %6142 = vmatprep.mubr.bf16.mxu0 0
    %6143 = vmatmul.mubr.bf16.gmra.mrb[0].mxu0 %v3241
    %v6144 = vpop.f32.mrb[0].mxu0
    %v6145 = vadd.f32 %v5600, %v6144
    %v6146 = vpop.f32.mrb[0].mxu0
    %v6147 = vpop.f32.mrb[0].mxu0
    %v6148 = vadd.f32 %v5603, %v6147
    %v6149 = vpop.f32.mrb[0].mxu0
    %6150 = vmatprep.mubr.bf16.mxu0 0
    %6151 = vmatmul.mubr.bf16.gmra.mrb[0].mxu0 %v3248
    %v6152 = vpop.f32.mrb[0].mxu0
    %v6153 = vadd.f32 %v5608, %v6152
    %v6154 = vpop.f32.mrb[0].mxu0
    %v6155 = vpop.f32.mrb[0].mxu0
    %v6156 = vadd.f32 %v5611, %v6155
    %v6157 = vpop.f32.mrb[0].mxu0
    %6158 = vmatprep.mubr.bf16.mxu0 0
    %6159 = vmatmul.mubr.bf16.gmra.mrb[0].mxu0 %v3255
    %v6160 = vpop.f32.mrb[0].mxu0
    %v6161 = vadd.f32 %v5616, %v6160
    %v6162 = vpop.f32.mrb[0].mxu0
    %v6163 = vpop.f32.mrb[0].mxu0
    %v6164 = vadd.f32 %v5619, %v6163
    %v6165 = vpop.f32.mrb[0].mxu0
    %6166 = vmatprep.mubr.bf16.mxu0 0
    %6167 = vmatmul.mubr.bf16.gmra.mrb[0].mxu0 %v3262
    %v6168 = vpop.f32.mrb[0].mxu0
    %v6169 = vadd.f32 %v5624, %v6168
    %v6170 = vpop.f32.mrb[0].mxu0
    %v6171 = vpop.f32.mrb[0].mxu0
    %v6172 = vadd.f32 %v5627, %v6171
    %v6173 = vpop.f32.mrb[0].mxu0
    %6174 = vmatprep.mubr.bf16.mxu0 0
    %6175 = vmatmul.mubr.bf16.gmra.mrb[0].mxu0 %v3269
    %v6176 = vpop.f32.mrb[0].mxu0
    %v6177 = vadd.f32 %v5632, %v6176
    %v6178 = vpop.f32.mrb[0].mxu0
    %v6179 = vpop.f32.mrb[0].mxu0
    %v6180 = vadd.f32 %v5635, %v6179
    %v6181 = vpop.f32.mrb[0].mxu0
    %6182 = vmatprep.mubr.bf16.mxu0 0
    %6183 = vmatmul.mubr.bf16.gmra.mrb[0].mxu0 %v3276
    %v6184 = vpop.f32.mrb[0].mxu0
    %v6185 = vadd.f32 %v5640, %v6184
    %v6186 = vpop.f32.mrb[0].mxu0
    %v6187 = vpop.f32.mrb[0].mxu0
    %v6188 = vadd.f32 %v5643, %v6187
    %v6189 = vpop.f32.mrb[0].mxu0
    %6190 = vmatprep.mubr.bf16.mxu0 0
    %6191 = vmatmul.mubr.bf16.gmra.mrb[0].mxu0 %v3283
    %v6192 = vpop.f32.mrb[0].mxu0
    %v6193 = vadd.f32 %v5648, %v6192
    %v6194 = vpop.f32.mrb[0].mxu0
    %v6195 = vpop.f32.mrb[0].mxu0
    %v6196 = vadd.f32 %v5651, %v6195
    %v6197 = vpop.f32.mrb[0].mxu0
    %6198 = vmatprep.mubr.bf16.mxu0 0
    %6199 = vmatmul.mubr.bf16.gmra.mrb[0].mxu0 %v3290
    %v6200 = vpop.f32.mrb[0].mxu0
    %v6201 = vadd.f32 %v5656, %v6200
    %v6202 = vpop.f32.mrb[0].mxu0
    %v6203 = vpop.f32.mrb[0].mxu0
    %v6204 = vadd.f32 %v5659, %v6203
    %v6205 = vpop.f32.mrb[0].mxu0
    %6206 = vdwg.mxu0
    %vm6207 = vcmp.gt.f32.partialorder %v5697, 0.0
    %vm6208 = vcmp.gt.f32.partialorder %v5700, 0.0
    %vm6209 = vcmp.gt.f32.partialorder %v5705, 0.0
    %vm6210 = vcmp.gt.f32.partialorder %v5708, 0.0
    %vm6211 = vcmp.gt.f32.partialorder %v5713, 0.0
    %vm6212 = vcmp.gt.f32.partialorder %v5716, 0.0
    %vm6213 = vcmp.gt.f32.partialorder %v5721, 0.0
    %vm6214 = vcmp.gt.f32.partialorder %v5724, 0.0
    %vm6215 = vcmp.gt.f32.partialorder %v5729, 0.0
    %vm6216 = vcmp.gt.f32.partialorder %v5732, 0.0
    %vm6217 = vcmp.gt.f32.partialorder %v5737, 0.0
    %vm6218 = vcmp.gt.f32.partialorder %v5740, 0.0
    %vm6219 = vcmp.gt.f32.partialorder %v5745, 0.0
    %vm6220 = vcmp.gt.f32.partialorder %v5748, 0.0
    %vm6221 = vcmp.gt.f32.partialorder %v5753, 0.0
    %vm6222 = vcmp.gt.f32.partialorder %v5756, 0.0
    %vm6223 = vcmp.gt.f32.partialorder %v5761, 0.0
    %vm6224 = vcmp.gt.f32.partialorder %v5764, 0.0
    %vm6225 = vcmp.gt.f32.partialorder %v5769, 0.0
    %vm6226 = vcmp.gt.f32.partialorder %v5772, 0.0
    %vm6227 = vcmp.gt.f32.partialorder %v5777, 0.0
    %vm6228 = vcmp.gt.f32.partialorder %v5780, 0.0
    %vm6229 = vcmp.gt.f32.partialorder %v5785, 0.0
    %vm6230 = vcmp.gt.f32.partialorder %v5788, 0.0
    %vm6231 = vcmp.gt.f32.partialorder %v5793, 0.0
    %vm6232 = vcmp.gt.f32.partialorder %v5796, 0.0
    %vm6233 = vcmp.gt.f32.partialorder %v5801, 0.0
    %vm6234 = vcmp.gt.f32.partialorder %v5804, 0.0
    %vm6235 = vcmp.gt.f32.partialorder %v5809, 0.0
    %vm6236 = vcmp.gt.f32.partialorder %v5812, 0.0
    %vm6237 = vcmp.gt.f32.partialorder %v5817, 0.0
    %vm6238 = vcmp.gt.f32.partialorder %v5820, 0.0
    %vm6239 = vcmp.gt.f32.partialorder %v5825, 0.0
    %vm6240 = vcmp.gt.f32.partialorder %v5828, 0.0
    %vm6241 = vcmp.gt.f32.partialorder %v5833, 0.0
    %vm6242 = vcmp.gt.f32.partialorder %v5836, 0.0
    %vm6243 = vcmp.gt.f32.partialorder %v5841, 0.0
    %vm6244 = vcmp.gt.f32.partialorder %v5844, 0.0
    %vm6245 = vcmp.gt.f32.partialorder %v5849, 0.0
    %vm6246 = vcmp.gt.f32.partialorder %v5852, 0.0
    %vm6247 = vcmp.gt.f32.partialorder %v5857, 0.0
    %vm6248 = vcmp.gt.f32.partialorder %v5860, 0.0
    %vm6249 = vcmp.gt.f32.partialorder %v5865, 0.0
    %vm6250 = vcmp.gt.f32.partialorder %v5868, 0.0
    %vm6251 = vcmp.gt.f32.partialorder %v5873, 0.0
    %vm6252 = vcmp.gt.f32.partialorder %v5876, 0.0
    %vm6253 = vcmp.gt.f32.partialorder %v5881, 0.0
    %vm6254 = vcmp.gt.f32.partialorder %v5884, 0.0
    %vm6255 = vcmp.gt.f32.partialorder %v5889, 0.0
    %vm6256 = vcmp.gt.f32.partialorder %v5892, 0.0
    %vm6257 = vcmp.gt.f32.partialorder %v5897, 0.0
    %vm6258 = vcmp.gt.f32.partialorder %v5900, 0.0
    %vm6259 = vcmp.gt.f32.partialorder %v5905, 0.0
    %vm6260 = vcmp.gt.f32.partialorder %v5908, 0.0
    %vm6261 = vcmp.gt.f32.partialorder %v5913, 0.0
    %vm6262 = vcmp.gt.f32.partialorder %v5916, 0.0
    %vm6263 = vcmp.gt.f32.partialorder %v5921, 0.0
    %vm6264 = vcmp.gt.f32.partialorder %v5924, 0.0
    %vm6265 = vcmp.gt.f32.partialorder %v5929, 0.0
    %vm6266 = vcmp.gt.f32.partialorder %v5932, 0.0
    %vm6267 = vcmp.gt.f32.partialorder %v5937, 0.0
    %vm6268 = vcmp.gt.f32.partialorder %v5940, 0.0
    %vm6269 = vcmp.gt.f32.partialorder %v5945, 0.0
    %vm6270 = vcmp.gt.f32.partialorder %v5948, 0.0
    %vm6271 = vcmp.gt.f32.partialorder %v5953, 0.0
    %vm6272 = vcmp.gt.f32.partialorder %v5956, 0.0
    %vm6273 = vcmp.gt.f32.partialorder %v5961, 0.0
    %vm6274 = vcmp.gt.f32.partialorder %v5964, 0.0
    %vm6275 = vcmp.gt.f32.partialorder %v5969, 0.0
    %vm6276 = vcmp.gt.f32.partialorder %v5972, 0.0
    %vm6277 = vcmp.gt.f32.partialorder %v5977, 0.0
    %vm6278 = vcmp.gt.f32.partialorder %v5980, 0.0
    %vm6279 = vcmp.gt.f32.partialorder %v5985, 0.0
    %vm6280 = vcmp.gt.f32.partialorder %v5988, 0.0
    %vm6281 = vcmp.gt.f32.partialorder %v5993, 0.0
    %vm6282 = vcmp.gt.f32.partialorder %v5996, 0.0
    %vm6283 = vcmp.gt.f32.partialorder %v6001, 0.0
    %vm6284 = vcmp.gt.f32.partialorder %v6004, 0.0
    %vm6285 = vcmp.gt.f32.partialorder %v6009, 0.0
    %vm6286 = vcmp.gt.f32.partialorder %v6012, 0.0
    %vm6287 = vcmp.gt.f32.partialorder %v6017, 0.0
    %vm6288 = vcmp.gt.f32.partialorder %v6020, 0.0
    %vm6289 = vcmp.gt.f32.partialorder %v6025, 0.0
    %vm6290 = vcmp.gt.f32.partialorder %v6028, 0.0
    %vm6291 = vcmp.gt.f32.partialorder %v6033, 0.0
    %vm6292 = vcmp.gt.f32.partialorder %v6036, 0.0
    %vm6293 = vcmp.gt.f32.partialorder %v6041, 0.0
    %vm6294 = vcmp.gt.f32.partialorder %v6044, 0.0
    %vm6295 = vcmp.gt.f32.partialorder %v6049, 0.0
    %vm6296 = vcmp.gt.f32.partialorder %v6052, 0.0
    %vm6297 = vcmp.gt.f32.partialorder %v6057, 0.0
    %vm6298 = vcmp.gt.f32.partialorder %v6060, 0.0
    %vm6299 = vcmp.gt.f32.partialorder %v6065, 0.0
    %vm6300 = vcmp.gt.f32.partialorder %v6068, 0.0
    %vm6301 = vcmp.gt.f32.partialorder %v6073, 0.0
    %vm6302 = vcmp.gt.f32.partialorder %v6076, 0.0
    %vm6303 = vcmp.gt.f32.partialorder %v6081, 0.0
    %vm6304 = vcmp.gt.f32.partialorder %v6084, 0.0
    %vm6305 = vcmp.gt.f32.partialorder %v6089, 0.0
    %vm6306 = vcmp.gt.f32.partialorder %v6092, 0.0
    %vm6307 = vcmp.gt.f32.partialorder %v6097, 0.0
    %vm6308 = vcmp.gt.f32.partialorder %v6100, 0.0
    %vm6309 = vcmp.gt.f32.partialorder %v6105, 0.0
    %vm6310 = vcmp.gt.f32.partialorder %v6108, 0.0
    %vm6311 = vcmp.gt.f32.partialorder %v6113, 0.0
    %vm6312 = vcmp.gt.f32.partialorder %v6116, 0.0
    %vm6313 = vcmp.gt.f32.partialorder %v6121, 0.0
    %vm6314 = vcmp.gt.f32.partialorder %v6124, 0.0
    %vm6315 = vcmp.gt.f32.partialorder %v6129, 0.0
    %vm6316 = vcmp.gt.f32.partialorder %v6132, 0.0
    %vm6317 = vcmp.gt.f32.partialorder %v6137, 0.0
    %vm6318 = vcmp.gt.f32.partialorder %v6140, 0.0
    %vm6319 = vcmp.gt.f32.partialorder %v6145, 0.0
    %vm6320 = vcmp.gt.f32.partialorder %v6148, 0.0
    %vm6321 = vcmp.gt.f32.partialorder %v6153, 0.0
    %vm6322 = vcmp.gt.f32.partialorder %v6156, 0.0
    %vm6323 = vcmp.gt.f32.partialorder %v6161, 0.0
    %vm6324 = vcmp.gt.f32.partialorder %v6164, 0.0
    %vm6325 = vcmp.gt.f32.partialorder %v6169, 0.0
    %vm6326 = vcmp.gt.f32.partialorder %v6172, 0.0
    %vm6327 = vcmp.gt.f32.partialorder %v6177, 0.0
    %vm6328 = vcmp.gt.f32.partialorder %v6180, 0.0
    %vm6329 = vcmp.gt.f32.partialorder %v6185, 0.0
    %vm6330 = vcmp.gt.f32.partialorder %v6188, 0.0
    %vm6331 = vcmp.gt.f32.partialorder %v6193, 0.0
    %vm6332 = vcmp.gt.f32.partialorder %v6196, 0.0
    %vm6333 = vcmp.gt.f32.partialorder %v6201, 0.0
    %vm6334 = vcmp.gt.f32.partialorder %v6204, 0.0
    %v6335 = vmul.f32 %v5697, 0.2
    %v6336 = vmul.f32 %v5700, 0.2
    %v6337 = vmul.f32 %v5705, 0.2
    %v6338 = vmul.f32 %v5708, 0.2
    %v6339 = vmul.f32 %v5713, 0.2
    %v6340 = vmul.f32 %v5716, 0.2
    %v6341 = vmul.f32 %v5721, 0.2
    %v6342 = vmul.f32 %v5724, 0.2
    %v6343 = vmul.f32 %v5729, 0.2
    %v6344 = vmul.f32 %v5732, 0.2
    %v6345 = vmul.f32 %v5737, 0.2
    %v6346 = vmul.f32 %v5740, 0.2
    %v6347 = vmul.f32 %v5745, 0.2
    %v6348 = vmul.f32 %v5748, 0.2
    %v6349 = vmul.f32 %v5753, 0.2
    %v6350 = vmul.f32 %v5756, 0.2
    %v6351 = vmul.f32 %v5761, 0.2
    %v6352 = vmul.f32 %v5764, 0.2
    %v6353 = vmul.f32 %v5769, 0.2
    %v6354 = vmul.f32 %v5772, 0.2
    %v6355 = vmul.f32 %v5777, 0.2
    %v6356 = vmul.f32 %v5780, 0.2
    %v6357 = vmul.f32 %v5785, 0.2
    %v6358 = vmul.f32 %v5788, 0.2
    %v6359 = vmul.f32 %v5793, 0.2
    %v6360 = vmul.f32 %v5796, 0.2
    %v6361 = vmul.f32 %v5801, 0.2
    %v6362 = vmul.f32 %v5804, 0.2
    %v6363 = vmul.f32 %v5809, 0.2
    %v6364 = vmul.f32 %v5812, 0.2
    %v6365 = vmul.f32 %v5817, 0.2
    %v6366 = vmul.f32 %v5820, 0.2
    %v6367 = vmul.f32 %v5825, 0.2
    %v6368 = vmul.f32 %v5828, 0.2
    %v6369 = vmul.f32 %v5833, 0.2
    %v6370 = vmul.f32 %v5836, 0.2
    %v6371 = vmul.f32 %v5841, 0.2
    %v6372 = vmul.f32 %v5844, 0.2
    %v6373 = vmul.f32 %v5849, 0.2
    %v6374 = vmul.f32 %v5852, 0.2
    %v6375 = vmul.f32 %v5857, 0.2
    %v6376 = vmul.f32 %v5860, 0.2
    %v6377 = vmul.f32 %v5865, 0.2
    %v6378 = vmul.f32 %v5868, 0.2
    %v6379 = vmul.f32 %v5873, 0.2
    %v6380 = vmul.f32 %v5876, 0.2
    %v6381 = vmul.f32 %v5881, 0.2
    %v6382 = vmul.f32 %v5884, 0.2
    %v6383 = vmul.f32 %v5889, 0.2
    %v6384 = vmul.f32 %v5892, 0.2
    %v6385 = vmul.f32 %v5897, 0.2
    %v6386 = vmul.f32 %v5900, 0.2
    %v6387 = vmul.f32 %v5905, 0.2
    %v6388 = vmul.f32 %v5908, 0.2
    %v6389 = vmul.f32 %v5913, 0.2
    %v6390 = vmul.f32 %v5916, 0.2
    %v6391 = vmul.f32 %v5921, 0.2
    %v6392 = vmul.f32 %v5924, 0.2
    %v6393 = vmul.f32 %v5929, 0.2
    %v6394 = vmul.f32 %v5932, 0.2
    %v6395 = vmul.f32 %v5937, 0.2
    %v6396 = vmul.f32 %v5940, 0.2
    %v6397 = vmul.f32 %v5945, 0.2
    %v6398 = vmul.f32 %v5948, 0.2
    %v6399 = vmul.f32 %v5953, 0.2
    %v6400 = vmul.f32 %v5956, 0.2
    %v6401 = vmul.f32 %v5961, 0.2
    %v6402 = vmul.f32 %v5964, 0.2
    %v6403 = vmul.f32 %v5969, 0.2
    %v6404 = vmul.f32 %v5972, 0.2
    %v6405 = vmul.f32 %v5977, 0.2
    %v6406 = vmul.f32 %v5980, 0.2
    %v6407 = vmul.f32 %v5985, 0.2
    %v6408 = vmul.f32 %v5988, 0.2
    %v6409 = vmul.f32 %v5993, 0.2
    %v6410 = vmul.f32 %v5996, 0.2
    %v6411 = vmul.f32 %v6001, 0.2
    %v6412 = vmul.f32 %v6004, 0.2
    %v6413 = vmul.f32 %v6009, 0.2
    %v6414 = vmul.f32 %v6012, 0.2
    %v6415 = vmul.f32 %v6017, 0.2
    %v6416 = vmul.f32 %v6020, 0.2
    %v6417 = vmul.f32 %v6025, 0.2
    %v6418 = vmul.f32 %v6028, 0.2
    %v6419 = vmul.f32 %v6033, 0.2
    %v6420 = vmul.f32 %v6036, 0.2
    %v6421 = vmul.f32 %v6041, 0.2
    %v6422 = vmul.f32 %v6044, 0.2
    %v6423 = vmul.f32 %v6049, 0.2
    %v6424 = vmul.f32 %v6052, 0.2
    %v6425 = vmul.f32 %v6057, 0.2
    %v6426 = vmul.f32 %v6060, 0.2
    %v6427 = vmul.f32 %v6065, 0.2
    %v6428 = vmul.f32 %v6068, 0.2
    %v6429 = vmul.f32 %v6073, 0.2
    %v6430 = vmul.f32 %v6076, 0.2
    %v6431 = vmul.f32 %v6081, 0.2
    %v6432 = vmul.f32 %v6084, 0.2
    %v6433 = vmul.f32 %v6089, 0.2
    %v6434 = vmul.f32 %v6092, 0.2
    %v6435 = vmul.f32 %v6097, 0.2
    %v6436 = vmul.f32 %v6100, 0.2
    %v6437 = vmul.f32 %v6105, 0.2
    %v6438 = vmul.f32 %v6108, 0.2
    %v6439 = vmul.f32 %v6113, 0.2
    %v6440 = vmul.f32 %v6116, 0.2
    %v6441 = vmul.f32 %v6121, 0.2
    %v6442 = vmul.f32 %v6124, 0.2
    %v6443 = vmul.f32 %v6129, 0.2
    %v6444 = vmul.f32 %v6132, 0.2
    %v6445 = vmul.f32 %v6137, 0.2
    %v6446 = vmul.f32 %v6140, 0.2
    %v6447 = vmul.f32 %v6145, 0.2
    %v6448 = vmul.f32 %v6148, 0.2
    %v6449 = vmul.f32 %v6153, 0.2
    %v6450 = vmul.f32 %v6156, 0.2
    %v6451 = vmul.f32 %v6161, 0.2
    %v6452 = vmul.f32 %v6164, 0.2
    %v6453 = vmul.f32 %v6169, 0.2
    %v6454 = vmul.f32 %v6172, 0.2
    %v6455 = vmul.f32 %v6177, 0.2
    %v6456 = vmul.f32 %v6180, 0.2
    %v6457 = vmul.f32 %v6185, 0.2
    %v6458 = vmul.f32 %v6188, 0.2
    %v6459 = vmul.f32 %v6193, 0.2
    %v6460 = vmul.f32 %v6196, 0.2
    %v6461 = vmul.f32 %v6201, 0.2
    %v6462 = vmul.f32 %v6204, 0.2
    %v6463 = vsel %vm6207, %v5697, %v6335
    %v6464 = vsel %vm6208, %v5700, %v6336
    %v6465 = vsel %vm6209, %v5705, %v6337
    %v6466 = vsel %vm6210, %v5708, %v6338
    %v6467 = vsel %vm6211, %v5713, %v6339
    %v6468 = vsel %vm6212, %v5716, %v6340
    %v6469 = vsel %vm6213, %v5721, %v6341
    %v6470 = vsel %vm6214, %v5724, %v6342
    %v6471 = vsel %vm6215, %v5729, %v6343
    %v6472 = vsel %vm6216, %v5732, %v6344
    %v6473 = vsel %vm6217, %v5737, %v6345
    %v6474 = vsel %vm6218, %v5740, %v6346
    %v6475 = vsel %vm6219, %v5745, %v6347
    %v6476 = vsel %vm6220, %v5748, %v6348
    %v6477 = vsel %vm6221, %v5753, %v6349
    %v6478 = vsel %vm6222, %v5756, %v6350
    %v6479 = vsel %vm6223, %v5761, %v6351
    %v6480 = vsel %vm6224, %v5764, %v6352
    %v6481 = vsel %vm6225, %v5769, %v6353
    %v6482 = vsel %vm6226, %v5772, %v6354
    %v6483 = vsel %vm6227, %v5777, %v6355
    %v6484 = vsel %vm6228, %v5780, %v6356
    %v6485 = vsel %vm6229, %v5785, %v6357
    %v6486 = vsel %vm6230, %v5788, %v6358
    %v6487 = vsel %vm6231, %v5793, %v6359
    %v6488 = vsel %vm6232, %v5796, %v6360
    %v6489 = vsel %vm6233, %v5801, %v6361
    %v6490 = vsel %vm6234, %v5804, %v6362
    %v6491 = vsel %vm6235, %v5809, %v6363
    %v6492 = vsel %vm6236, %v5812, %v6364
    %v6493 = vsel %vm6237, %v5817, %v6365
    %v6494 = vsel %vm6238, %v5820, %v6366
    %v6495 = vsel %vm6239, %v5825, %v6367
    %v6496 = vsel %vm6240, %v5828, %v6368
    %v6497 = vsel %vm6241, %v5833, %v6369
    %v6498 = vsel %vm6242, %v5836, %v6370
    %v6499 = vsel %vm6243, %v5841, %v6371
    %v6500 = vsel %vm6244, %v5844, %v6372
    %v6501 = vsel %vm6245, %v5849, %v6373
    %v6502 = vsel %vm6246, %v5852, %v6374
    %v6503 = vsel %vm6247, %v5857, %v6375
    %v6504 = vsel %vm6248, %v5860, %v6376
    %v6505 = vsel %vm6249, %v5865, %v6377
    %v6506 = vsel %vm6250, %v5868, %v6378
    %v6507 = vsel %vm6251, %v5873, %v6379
    %v6508 = vsel %vm6252, %v5876, %v6380
    %v6509 = vsel %vm6253, %v5881, %v6381
    %v6510 = vsel %vm6254, %v5884, %v6382
    %v6511 = vsel %vm6255, %v5889, %v6383
    %v6512 = vsel %vm6256, %v5892, %v6384
    %v6513 = vsel %vm6257, %v5897, %v6385
    %v6514 = vsel %vm6258, %v5900, %v6386
    %v6515 = vsel %vm6259, %v5905, %v6387
    %v6516 = vsel %vm6260, %v5908, %v6388
    %v6517 = vsel %vm6261, %v5913, %v6389
    %v6518 = vsel %vm6262, %v5916, %v6390
    %v6519 = vsel %vm6263, %v5921, %v6391
    %v6520 = vsel %vm6264, %v5924, %v6392
    %v6521 = vsel %vm6265, %v5929, %v6393
    %v6522 = vsel %vm6266, %v5932, %v6394
    %v6523 = vsel %vm6267, %v5937, %v6395
    %v6524 = vsel %vm6268, %v5940, %v6396
    %v6525 = vsel %vm6269, %v5945, %v6397
    %v6526 = vsel %vm6270, %v5948, %v6398
    %v6527 = vsel %vm6271, %v5953, %v6399
    %v6528 = vsel %vm6272, %v5956, %v6400
    %v6529 = vsel %vm6273, %v5961, %v6401
    %v6530 = vsel %vm6274, %v5964, %v6402
    %v6531 = vsel %vm6275, %v5969, %v6403
    %v6532 = vsel %vm6276, %v5972, %v6404
    %v6533 = vsel %vm6277, %v5977, %v6405
    %v6534 = vsel %vm6278, %v5980, %v6406
    %v6535 = vsel %vm6279, %v5985, %v6407
    %v6536 = vsel %vm6280, %v5988, %v6408
    %v6537 = vsel %vm6281, %v5993, %v6409
    %v6538 = vsel %vm6282, %v5996, %v6410
    %v6539 = vsel %vm6283, %v6001, %v6411
    %v6540 = vsel %vm6284, %v6004, %v6412
    %v6541 = vsel %vm6285, %v6009, %v6413
    %v6542 = vsel %vm6286, %v6012, %v6414
    %v6543 = vsel %vm6287, %v6017, %v6415
    %v6544 = vsel %vm6288, %v6020, %v6416
    %v6545 = vsel %vm6289, %v6025, %v6417
    %v6546 = vsel %vm6290, %v6028, %v6418
    %v6547 = vsel %vm6291, %v6033, %v6419
    %v6548 = vsel %vm6292, %v6036, %v6420
    %v6549 = vsel %vm6293, %v6041, %v6421
    %v6550 = vsel %vm6294, %v6044, %v6422
    %v6551 = vsel %vm6295, %v6049, %v6423
    %v6552 = vsel %vm6296, %v6052, %v6424
    %v6553 = vsel %vm6297, %v6057, %v6425
    %v6554 = vsel %vm6298, %v6060, %v6426
    %v6555 = vsel %vm6299, %v6065, %v6427
    %v6556 = vsel %vm6300, %v6068, %v6428
    %v6557 = vsel %vm6301, %v6073, %v6429
    %v6558 = vsel %vm6302, %v6076, %v6430
    %v6559 = vsel %vm6303, %v6081, %v6431
    %v6560 = vsel %vm6304, %v6084, %v6432
    %v6561 = vsel %vm6305, %v6089, %v6433
    %v6562 = vsel %vm6306, %v6092, %v6434
    %v6563 = vsel %vm6307, %v6097, %v6435
    %v6564 = vsel %vm6308, %v6100, %v6436
    %v6565 = vsel %vm6309, %v6105, %v6437
    %v6566 = vsel %vm6310, %v6108, %v6438
    %v6567 = vsel %vm6311, %v6113, %v6439
    %v6568 = vsel %vm6312, %v6116, %v6440
    %v6569 = vsel %vm6313, %v6121, %v6441
    %v6570 = vsel %vm6314, %v6124, %v6442
    %v6571 = vsel %vm6315, %v6129, %v6443
    %v6572 = vsel %vm6316, %v6132, %v6444
    %v6573 = vsel %vm6317, %v6137, %v6445
    %v6574 = vsel %vm6318, %v6140, %v6446
    %v6575 = vsel %vm6319, %v6145, %v6447
    %v6576 = vsel %vm6320, %v6148, %v6448
    %v6577 = vsel %vm6321, %v6153, %v6449
    %v6578 = vsel %vm6322, %v6156, %v6450
    %v6579 = vsel %vm6323, %v6161, %v6451
    %v6580 = vsel %vm6324, %v6164, %v6452
    %v6581 = vsel %vm6325, %v6169, %v6453
    %v6582 = vsel %vm6326, %v6172, %v6454
    %v6583 = vsel %vm6327, %v6177, %v6455
    %v6584 = vsel %vm6328, %v6180, %v6456
    %v6585 = vsel %vm6329, %v6185, %v6457
    %v6586 = vsel %vm6330, %v6188, %v6458
    %v6587 = vsel %vm6331, %v6193, %v6459
    %v6588 = vsel %vm6332, %v6196, %v6460
    %v6589 = vsel %vm6333, %v6201, %v6461
    %v6590 = vsel %vm6334, %v6204, %v6462
    %v6591 = vld [vmem:[#allocation8] sm:$0xff]
    %v6592 = vld [vmem:[#allocation8 + $0x8] sm:$0xff]
    %v6593 = vld [vmem:[#allocation8 + $0x10] sm:$0xff]
    %v6594 = vld [vmem:[#allocation8 + $0x18] sm:$0xff]
    %v6595 = vld [vmem:[#allocation8 + $0x20] sm:$0xff]
    %v6596 = vld [vmem:[#allocation8 + $0x28] sm:$0xff]
    %v6597 = vld [vmem:[#allocation8 + $0x30] sm:$0xff]
    %v6598 = vld [vmem:[#allocation8 + $0x38] sm:$0xff]
    %v6599 = vld [vmem:[#allocation8 + $0x40] sm:$0xff]
    %v6600 = vld [vmem:[#allocation8 + $0x48] sm:$0xff]
    %v6601 = vld [vmem:[#allocation8 + $0x50] sm:$0xff]
    %v6602 = vld [vmem:[#allocation8 + $0x58] sm:$0xff]
    %v6603 = vld [vmem:[#allocation8 + $0x60] sm:$0xff]
    %v6604 = vld [vmem:[#allocation8 + $0x68] sm:$0xff]
    %v6605 = vld [vmem:[#allocation8 + $0x70] sm:$0xff]
    %v6606 = vld [vmem:[#allocation8 + $0x78] sm:$0xff]
    %v6607 = vld [vmem:[#allocation8 + $0x80] sm:$0xff]
    %v6608 = vld [vmem:[#allocation8 + $0x88] sm:$0xff]
    %v6609 = vld [vmem:[#allocation8 + $0x90] sm:$0xff]
    %v6610 = vld [vmem:[#allocation8 + $0x98] sm:$0xff]
    %v6611 = vld [vmem:[#allocation8 + $0xa0] sm:$0xff]
    %v6612 = vld [vmem:[#allocation8 + $0xa8] sm:$0xff]
    %v6613 = vld [vmem:[#allocation8 + $0xb0] sm:$0xff]
    %v6614 = vld [vmem:[#allocation8 + $0xb8] sm:$0xff]
    %v6615 = vld [vmem:[#allocation8 + $0xc0] sm:$0xff]
    %v6616 = vld [vmem:[#allocation8 + $0xc8] sm:$0xff]
    %v6617 = vld [vmem:[#allocation8 + $0xd0] sm:$0xff]
    %v6618 = vld [vmem:[#allocation8 + $0xd8] sm:$0xff]
    %v6619 = vld [vmem:[#allocation8 + $0xe0] sm:$0xff]
    %v6620 = vld [vmem:[#allocation8 + $0xe8] sm:$0xff]
    %v6621 = vld [vmem:[#allocation8 + $0xf0] sm:$0xff]
    %v6622 = vld [vmem:[#allocation8 + $0xf8] sm:$0xff]
    %v6623 = vld [vmem:[#allocation8 + $0x100] sm:$0xff]
    %v6624 = vld [vmem:[#allocation8 + $0x108] sm:$0xff]
    %v6625 = vld [vmem:[#allocation8 + $0x110] sm:$0xff]
    %v6626 = vld [vmem:[#allocation8 + $0x118] sm:$0xff]
    %v6627 = vld [vmem:[#allocation8 + $0x120] sm:$0xff]
    %v6628 = vld [vmem:[#allocation8 + $0x128] sm:$0xff]
    %v6629 = vld [vmem:[#allocation8 + $0x130] sm:$0xff]
    %v6630 = vld [vmem:[#allocation8 + $0x138] sm:$0xff]
    %v6631 = vld [vmem:[#allocation8 + $0x140] sm:$0xff]
    %v6632 = vld [vmem:[#allocation8 + $0x148] sm:$0xff]
    %v6633 = vld [vmem:[#allocation8 + $0x150] sm:$0xff]
    %v6634 = vld [vmem:[#allocation8 + $0x158] sm:$0xff]
    %v6635 = vld [vmem:[#allocation8 + $0x160] sm:$0xff]
    %v6636 = vld [vmem:[#allocation8 + $0x168] sm:$0xff]
    %v6637 = vld [vmem:[#allocation8 + $0x170] sm:$0xff]
    %v6638 = vld [vmem:[#allocation8 + $0x178] sm:$0xff]
    %v6639 = vld [vmem:[#allocation8 + $0x180] sm:$0xff]
    %v6640 = vld [vmem:[#allocation8 + $0x188] sm:$0xff]
    %v6641 = vld [vmem:[#allocation8 + $0x190] sm:$0xff]
    %v6642 = vld [vmem:[#allocation8 + $0x198] sm:$0xff]
    %v6643 = vld [vmem:[#allocation8 + $0x1a0] sm:$0xff]
    %v6644 = vld [vmem:[#allocation8 + $0x1a8] sm:$0xff]
    %v6645 = vld [vmem:[#allocation8 + $0x1b0] sm:$0xff]
    %v6646 = vld [vmem:[#allocation8 + $0x1b8] sm:$0xff]
    %v6647 = vld [vmem:[#allocation8 + $0x1c0] sm:$0xff]
    %v6648 = vld [vmem:[#allocation8 + $0x1c8] sm:$0xff]
    %v6649 = vld [vmem:[#allocation8 + $0x1d0] sm:$0xff]
    %v6650 = vld [vmem:[#allocation8 + $0x1d8] sm:$0xff]
    %v6651 = vld [vmem:[#allocation8 + $0x1e0] sm:$0xff]
    %v6652 = vld [vmem:[#allocation8 + $0x1e8] sm:$0xff]
    %v6653 = vld [vmem:[#allocation8 + $0x1f0] sm:$0xff]
    %v6654 = vld [vmem:[#allocation8 + $0x1f8] sm:$0xff]
    %v6655 = vld [vmem:[#allocation8 + $0x200] sm:$0xff]
    %v6656 = vld [vmem:[#allocation8 + $0x208] sm:$0xff]
    %v6657 = vld [vmem:[#allocation8 + $0x210] sm:$0xff]
    %v6658 = vld [vmem:[#allocation8 + $0x218] sm:$0xff]
    %v6659 = vld [vmem:[#allocation8 + $0x220] sm:$0xff]
    %v6660 = vld [vmem:[#allocation8 + $0x228] sm:$0xff]
    %v6661 = vld [vmem:[#allocation8 + $0x230] sm:$0xff]
    %v6662 = vld [vmem:[#allocation8 + $0x238] sm:$0xff]
    %v6663 = vld [vmem:[#allocation8 + $0x240] sm:$0xff]
    %v6664 = vld [vmem:[#allocation8 + $0x248] sm:$0xff]
    %v6665 = vld [vmem:[#allocation8 + $0x250] sm:$0xff]
    %v6666 = vld [vmem:[#allocation8 + $0x258] sm:$0xff]
    %v6667 = vld [vmem:[#allocation8 + $0x260] sm:$0xff]
    %v6668 = vld [vmem:[#allocation8 + $0x268] sm:$0xff]
    %v6669 = vld [vmem:[#allocation8 + $0x270] sm:$0xff]
    %v6670 = vld [vmem:[#allocation8 + $0x278] sm:$0xff]
    %v6671 = vld [vmem:[#allocation8 + $0x280] sm:$0xff]
    %v6672 = vld [vmem:[#allocation8 + $0x288] sm:$0xff]
    %v6673 = vld [vmem:[#allocation8 + $0x290] sm:$0xff]
    %v6674 = vld [vmem:[#allocation8 + $0x298] sm:$0xff]
    %v6675 = vld [vmem:[#allocation8 + $0x2a0] sm:$0xff]
    %v6676 = vld [vmem:[#allocation8 + $0x2a8] sm:$0xff]
    %v6677 = vld [vmem:[#allocation8 + $0x2b0] sm:$0xff]
    %v6678 = vld [vmem:[#allocation8 + $0x2b8] sm:$0xff]
    %v6679 = vld [vmem:[#allocation8 + $0x2c0] sm:$0xff]
    %v6680 = vld [vmem:[#allocation8 + $0x2c8] sm:$0xff]
    %v6681 = vld [vmem:[#allocation8 + $0x2d0] sm:$0xff]
    %v6682 = vld [vmem:[#allocation8 + $0x2d8] sm:$0xff]
    %v6683 = vld [vmem:[#allocation8 + $0x2e0] sm:$0xff]
    %v6684 = vld [vmem:[#allocation8 + $0x2e8] sm:$0xff]
    %v6685 = vld [vmem:[#allocation8 + $0x2f0] sm:$0xff]
    %v6686 = vld [vmem:[#allocation8 + $0x2f8] sm:$0xff]
    %v6687 = vld [vmem:[#allocation8 + $0x300] sm:$0xff]
    %v6688 = vld [vmem:[#allocation8 + $0x308] sm:$0xff]
    %v6689 = vld [vmem:[#allocation8 + $0x310] sm:$0xff]
    %v6690 = vld [vmem:[#allocation8 + $0x318] sm:$0xff]
    %v6691 = vld [vmem:[#allocation8 + $0x320] sm:$0xff]
    %v6692 = vld [vmem:[#allocation8 + $0x328] sm:$0xff]
    %v6693 = vld [vmem:[#allocation8 + $0x330] sm:$0xff]
    %v6694 = vld [vmem:[#allocation8 + $0x338] sm:$0xff]
    %v6695 = vld [vmem:[#allocation8 + $0x340] sm:$0xff]
    %v6696 = vld [vmem:[#allocation8 + $0x348] sm:$0xff]
    %v6697 = vld [vmem:[#allocation8 + $0x350] sm:$0xff]
    %v6698 = vld [vmem:[#allocation8 + $0x358] sm:$0xff]
    %v6699 = vld [vmem:[#allocation8 + $0x360] sm:$0xff]
    %v6700 = vld [vmem:[#allocation8 + $0x368] sm:$0xff]
    %v6701 = vld [vmem:[#allocation8 + $0x370] sm:$0xff]
    %v6702 = vld [vmem:[#allocation8 + $0x378] sm:$0xff]
    %v6703 = vld [vmem:[#allocation8 + $0x380] sm:$0xff]
    %v6704 = vld [vmem:[#allocation8 + $0x388] sm:$0xff]
    %v6705 = vld [vmem:[#allocation8 + $0x390] sm:$0xff]
    %v6706 = vld [vmem:[#allocation8 + $0x398] sm:$0xff]
    %v6707 = vld [vmem:[#allocation8 + $0x3a0] sm:$0xff]
    %v6708 = vld [vmem:[#allocation8 + $0x3a8] sm:$0xff]
    %v6709 = vld [vmem:[#allocation8 + $0x3b0] sm:$0xff]
    %v6710 = vld [vmem:[#allocation8 + $0x3b8] sm:$0xff]
    %v6711 = vld [vmem:[#allocation8 + $0x3c0] sm:$0xff]
    %v6712 = vld [vmem:[#allocation8 + $0x3c8] sm:$0xff]
    %v6713 = vld [vmem:[#allocation8 + $0x3d0] sm:$0xff]
    %v6714 = vld [vmem:[#allocation8 + $0x3d8] sm:$0xff]
    %v6715 = vld [vmem:[#allocation8 + $0x3e0] sm:$0xff]
    %v6716 = vld [vmem:[#allocation8 + $0x3e8] sm:$0xff]
    %v6717 = vld [vmem:[#allocation8 + $0x3f0] sm:$0xff]
    %v6718 = vld [vmem:[#allocation8 + $0x3f8] sm:$0xff]
    %v6719 = vld [vmem:[#allocation8 + $0x400] sm:$0xff]
    %v6720 = vld [vmem:[#allocation8 + $0x408] sm:$0xff]
    %v6721 = vld [vmem:[#allocation8 + $0x410] sm:$0xff]
    %v6722 = vld [vmem:[#allocation8 + $0x418] sm:$0xff]
    %v6723 = vld [vmem:[#allocation8 + $0x420] sm:$0xff]
    %v6724 = vld [vmem:[#allocation8 + $0x428] sm:$0xff]
    %v6725 = vld [vmem:[#allocation8 + $0x430] sm:$0xff]
    %v6726 = vld [vmem:[#allocation8 + $0x438] sm:$0xff]
    %v6727 = vld [vmem:[#allocation8 + $0x440] sm:$0xff]
    %v6728 = vld [vmem:[#allocation8 + $0x448] sm:$0xff]
    %v6729 = vld [vmem:[#allocation8 + $0x450] sm:$0xff]
    %v6730 = vld [vmem:[#allocation8 + $0x458] sm:$0xff]
    %v6731 = vld [vmem:[#allocation8 + $0x460] sm:$0xff]
    %v6732 = vld [vmem:[#allocation8 + $0x468] sm:$0xff]
    %v6733 = vld [vmem:[#allocation8 + $0x470] sm:$0xff]
    %v6734 = vld [vmem:[#allocation8 + $0x478] sm:$0xff]
    %v6735 = vld [vmem:[#allocation8 + $0x480] sm:$0xff]
    %v6736 = vld [vmem:[#allocation8 + $0x488] sm:$0xff]
    %v6737 = vld [vmem:[#allocation8 + $0x490] sm:$0xff]
    %v6738 = vld [vmem:[#allocation8 + $0x498] sm:$0xff]
    %v6739 = vld [vmem:[#allocation8 + $0x4a0] sm:$0xff]
    %v6740 = vld [vmem:[#allocation8 + $0x4a8] sm:$0xff]
    %v6741 = vld [vmem:[#allocation8 + $0x4b0] sm:$0xff]
    %v6742 = vld [vmem:[#allocation8 + $0x4b8] sm:$0xff]
    %v6743 = vld [vmem:[#allocation8 + $0x4c0] sm:$0xff]
    %v6744 = vld [vmem:[#allocation8 + $0x4c8] sm:$0xff]
    %v6745 = vld [vmem:[#allocation8 + $0x4d0] sm:$0xff]
    %v6746 = vld [vmem:[#allocation8 + $0x4d8] sm:$0xff]
    %v6747 = vld [vmem:[#allocation8 + $0x4e0] sm:$0xff]
    %v6748 = vld [vmem:[#allocation8 + $0x4e8] sm:$0xff]
    %v6749 = vld [vmem:[#allocation8 + $0x4f0] sm:$0xff]
    %v6750 = vld [vmem:[#allocation8 + $0x4f8] sm:$0xff]
    %v6751 = vld [vmem:[#allocation8 + $0x500] sm:$0xff]
    %v6752 = vld [vmem:[#allocation8 + $0x508] sm:$0xff]
    %v6753 = vld [vmem:[#allocation8 + $0x510] sm:$0xff]
    %v6754 = vld [vmem:[#allocation8 + $0x518] sm:$0xff]
    %v6755 = vld [vmem:[#allocation8 + $0x520] sm:$0xff]
    %v6756 = vld [vmem:[#allocation8 + $0x528] sm:$0xff]
    %v6757 = vld [vmem:[#allocation8 + $0x530] sm:$0xff]
    %v6758 = vld [vmem:[#allocation8 + $0x538] sm:$0xff]
    %v6759 = vld [vmem:[#allocation8 + $0x540] sm:$0xff]
    %v6760 = vld [vmem:[#allocation8 + $0x548] sm:$0xff]
    %v6761 = vld [vmem:[#allocation8 + $0x550] sm:$0xff]
    %v6762 = vld [vmem:[#allocation8 + $0x558] sm:$0xff]
    %v6763 = vld [vmem:[#allocation8 + $0x560] sm:$0xff]
    %v6764 = vld [vmem:[#allocation8 + $0x568] sm:$0xff]
    %v6765 = vld [vmem:[#allocation8 + $0x570] sm:$0xff]
    %v6766 = vld [vmem:[#allocation8 + $0x578] sm:$0xff]
    %v6767 = vld [vmem:[#allocation8 + $0x580] sm:$0xff]
    %v6768 = vld [vmem:[#allocation8 + $0x588] sm:$0xff]
    %v6769 = vld [vmem:[#allocation8 + $0x590] sm:$0xff]
    %v6770 = vld [vmem:[#allocation8 + $0x598] sm:$0xff]
    %v6771 = vld [vmem:[#allocation8 + $0x5a0] sm:$0xff]
    %v6772 = vld [vmem:[#allocation8 + $0x5a8] sm:$0xff]
    %v6773 = vld [vmem:[#allocation8 + $0x5b0] sm:$0xff]
    %v6774 = vld [vmem:[#allocation8 + $0x5b8] sm:$0xff]
    %v6775 = vld [vmem:[#allocation8 + $0x5c0] sm:$0xff]
    %v6776 = vld [vmem:[#allocation8 + $0x5c8] sm:$0xff]
    %v6777 = vld [vmem:[#allocation8 + $0x5d0] sm:$0xff]
    %v6778 = vld [vmem:[#allocation8 + $0x5d8] sm:$0xff]
    %v6779 = vld [vmem:[#allocation8 + $0x5e0] sm:$0xff]
    %v6780 = vld [vmem:[#allocation8 + $0x5e8] sm:$0xff]
    %v6781 = vld [vmem:[#allocation8 + $0x5f0] sm:$0xff]
    %v6782 = vld [vmem:[#allocation8 + $0x5f8] sm:$0xff]
    %v6783 = vld [vmem:[#allocation8 + $0x600] sm:$0xff]
    %v6784 = vld [vmem:[#allocation8 + $0x608] sm:$0xff]
    %v6785 = vld [vmem:[#allocation8 + $0x610] sm:$0xff]
    %v6786 = vld [vmem:[#allocation8 + $0x618] sm:$0xff]
    %v6787 = vld [vmem:[#allocation8 + $0x620] sm:$0xff]
    %v6788 = vld [vmem:[#allocation8 + $0x628] sm:$0xff]
    %v6789 = vld [vmem:[#allocation8 + $0x630] sm:$0xff]
    %v6790 = vld [vmem:[#allocation8 + $0x638] sm:$0xff]
    %v6791 = vld [vmem:[#allocation8 + $0x640] sm:$0xff]
    %v6792 = vld [vmem:[#allocation8 + $0x648] sm:$0xff]
    %v6793 = vld [vmem:[#allocation8 + $0x650] sm:$0xff]
    %v6794 = vld [vmem:[#allocation8 + $0x658] sm:$0xff]
    %v6795 = vld [vmem:[#allocation8 + $0x660] sm:$0xff]
    %v6796 = vld [vmem:[#allocation8 + $0x668] sm:$0xff]
    %v6797 = vld [vmem:[#allocation8 + $0x670] sm:$0xff]
    %v6798 = vld [vmem:[#allocation8 + $0x678] sm:$0xff]
    %v6799 = vld [vmem:[#allocation8 + $0x680] sm:$0xff]
    %v6800 = vld [vmem:[#allocation8 + $0x688] sm:$0xff]
    %v6801 = vld [vmem:[#allocation8 + $0x690] sm:$0xff]
    %v6802 = vld [vmem:[#allocation8 + $0x698] sm:$0xff]
    %v6803 = vld [vmem:[#allocation8 + $0x6a0] sm:$0xff]
    %v6804 = vld [vmem:[#allocation8 + $0x6a8] sm:$0xff]
    %v6805 = vld [vmem:[#allocation8 + $0x6b0] sm:$0xff]
    %v6806 = vld [vmem:[#allocation8 + $0x6b8] sm:$0xff]
    %v6807 = vld [vmem:[#allocation8 + $0x6c0] sm:$0xff]
    %v6808 = vld [vmem:[#allocation8 + $0x6c8] sm:$0xff]
    %v6809 = vld [vmem:[#allocation8 + $0x6d0] sm:$0xff]
    %v6810 = vld [vmem:[#allocation8 + $0x6d8] sm:$0xff]
    %v6811 = vld [vmem:[#allocation8 + $0x6e0] sm:$0xff]
    %v6812 = vld [vmem:[#allocation8 + $0x6e8] sm:$0xff]
    %v6813 = vld [vmem:[#allocation8 + $0x6f0] sm:$0xff]
    %v6814 = vld [vmem:[#allocation8 + $0x6f8] sm:$0xff]
    %v6815 = vld [vmem:[#allocation8 + $0x700] sm:$0xff]
    %v6816 = vld [vmem:[#allocation8 + $0x708] sm:$0xff]
    %v6817 = vld [vmem:[#allocation8 + $0x710] sm:$0xff]
    %v6818 = vld [vmem:[#allocation8 + $0x718] sm:$0xff]
    %v6819 = vld [vmem:[#allocation8 + $0x720] sm:$0xff]
    %v6820 = vld [vmem:[#allocation8 + $0x728] sm:$0xff]
    %v6821 = vld [vmem:[#allocation8 + $0x730] sm:$0xff]
    %v6822 = vld [vmem:[#allocation8 + $0x738] sm:$0xff]
    %v6823 = vld [vmem:[#allocation8 + $0x740] sm:$0xff]
    %v6824 = vld [vmem:[#allocation8 + $0x748] sm:$0xff]
    %v6825 = vld [vmem:[#allocation8 + $0x750] sm:$0xff]
    %v6826 = vld [vmem:[#allocation8 + $0x758] sm:$0xff]
    %v6827 = vld [vmem:[#allocation8 + $0x760] sm:$0xff]
    %v6828 = vld [vmem:[#allocation8 + $0x768] sm:$0xff]
    %v6829 = vld [vmem:[#allocation8 + $0x770] sm:$0xff]
    %v6830 = vld [vmem:[#allocation8 + $0x778] sm:$0xff]
    %v6831 = vld [vmem:[#allocation8 + $0x780] sm:$0xff]
    %v6832 = vld [vmem:[#allocation8 + $0x788] sm:$0xff]
    %v6833 = vld [vmem:[#allocation8 + $0x790] sm:$0xff]
    %v6834 = vld [vmem:[#allocation8 + $0x798] sm:$0xff]
    %v6835 = vld [vmem:[#allocation8 + $0x7a0] sm:$0xff]
    %v6836 = vld [vmem:[#allocation8 + $0x7a8] sm:$0xff]
    %v6837 = vld [vmem:[#allocation8 + $0x7b0] sm:$0xff]
    %v6838 = vld [vmem:[#allocation8 + $0x7b8] sm:$0xff]
    %v6839 = vld [vmem:[#allocation8 + $0x7c0] sm:$0xff]
    %v6840 = vld [vmem:[#allocation8 + $0x7c8] sm:$0xff]
    %v6841 = vld [vmem:[#allocation8 + $0x7d0] sm:$0xff]
    %v6842 = vld [vmem:[#allocation8 + $0x7d8] sm:$0xff]
    %v6843 = vld [vmem:[#allocation8 + $0x7e0] sm:$0xff]
    %v6844 = vld [vmem:[#allocation8 + $0x7e8] sm:$0xff]
    %v6845 = vld [vmem:[#allocation8 + $0x7f0] sm:$0xff]
    %v6846 = vld [vmem:[#allocation8 + $0x7f8] sm:$0xff]
    %v6847 = vpack.c.bf16 %v6464, %v6463
    %v6848 = vpack.c.bf16 %v6466, %v6465
    %v6849 = vpack.c.bf16 %v6468, %v6467
    %v6850 = vpack.c.bf16 %v6470, %v6469
    %v6851 = vpack.c.bf16 %v6472, %v6471
    %v6852 = vpack.c.bf16 %v6474, %v6473
    %v6853 = vpack.c.bf16 %v6476, %v6475
    %v6854 = vpack.c.bf16 %v6478, %v6477
    %v6855 = vpack.c.bf16 %v6480, %v6479
    %v6856 = vpack.c.bf16 %v6482, %v6481
    %v6857 = vpack.c.bf16 %v6484, %v6483
    %v6858 = vpack.c.bf16 %v6486, %v6485
    %v6859 = vpack.c.bf16 %v6488, %v6487
    %v6860 = vpack.c.bf16 %v6490, %v6489
    %v6861 = vpack.c.bf16 %v6492, %v6491
    %v6862 = vpack.c.bf16 %v6494, %v6493
    %v6863 = vpack.c.bf16 %v6496, %v6495
    %v6864 = vpack.c.bf16 %v6498, %v6497
    %v6865 = vpack.c.bf16 %v6500, %v6499
    %v6866 = vpack.c.bf16 %v6502, %v6501
    %v6867 = vpack.c.bf16 %v6504, %v6503
    %v6868 = vpack.c.bf16 %v6506, %v6505
    %v6869 = vpack.c.bf16 %v6508, %v6507
    %v6870 = vpack.c.bf16 %v6510, %v6509
    %v6871 = vpack.c.bf16 %v6512, %v6511
    %v6872 = vpack.c.bf16 %v6514, %v6513
    %v6873 = vpack.c.bf16 %v6516, %v6515
    %v6874 = vpack.c.bf16 %v6518, %v6517
    %v6875 = vpack.c.bf16 %v6520, %v6519
    %v6876 = vpack.c.bf16 %v6522, %v6521
    %v6877 = vpack.c.bf16 %v6524, %v6523
    %v6878 = vpack.c.bf16 %v6526, %v6525
    %v6879 = vpack.c.bf16 %v6528, %v6527
    %v6880 = vpack.c.bf16 %v6530, %v6529
    %v6881 = vpack.c.bf16 %v6532, %v6531
    %v6882 = vpack.c.bf16 %v6534, %v6533
    %v6883 = vpack.c.bf16 %v6536, %v6535
    %v6884 = vpack.c.bf16 %v6538, %v6537
    %v6885 = vpack.c.bf16 %v6540, %v6539
    %v6886 = vpack.c.bf16 %v6542, %v6541
    %v6887 = vpack.c.bf16 %v6544, %v6543
    %v6888 = vpack.c.bf16 %v6546, %v6545
    %v6889 = vpack.c.bf16 %v6548, %v6547
    %v6890 = vpack.c.bf16 %v6550, %v6549
    %v6891 = vpack.c.bf16 %v6552, %v6551
    %v6892 = vpack.c.bf16 %v6554, %v6553
    %v6893 = vpack.c.bf16 %v6556, %v6555
    %v6894 = vpack.c.bf16 %v6558, %v6557
    %v6895 = vpack.c.bf16 %v6560, %v6559
    %v6896 = vpack.c.bf16 %v6562, %v6561
    %v6897 = vpack.c.bf16 %v6564, %v6563
    %v6898 = vpack.c.bf16 %v6566, %v6565
    %v6899 = vpack.c.bf16 %v6568, %v6567
    %v6900 = vpack.c.bf16 %v6570, %v6569
    %v6901 = vpack.c.bf16 %v6572, %v6571
    %v6902 = vpack.c.bf16 %v6574, %v6573
    %v6903 = vpack.c.bf16 %v6576, %v6575
    %v6904 = vpack.c.bf16 %v6578, %v6577
    %v6905 = vpack.c.bf16 %v6580, %v6579
    %v6906 = vpack.c.bf16 %v6582, %v6581
    %v6907 = vpack.c.bf16 %v6584, %v6583
    %v6908 = vpack.c.bf16 %v6586, %v6585
    %v6909 = vpack.c.bf16 %v6588, %v6587
    %v6910 = vpack.c.bf16 %v6590, %v6589
    %v6911 = vld [vmem:[%s4] sm:$0xff]
    %v6912 = vld [vmem:[%s4 + $0x8] sm:$0xff]
    %v6913 = vld [vmem:[%s4 + $0x10] sm:$0xff]
    %v6914 = vld [vmem:[%s4 + $0x18] sm:$0xff]
    %v6915 = vld [vmem:[%s4 + $0x20] sm:$0xff]
    %v6916 = vld [vmem:[%s4 + $0x28] sm:$0xff]
    %v6917 = vld [vmem:[%s4 + $0x30] sm:$0xff]
    %v6918 = vld [vmem:[%s4 + $0x38] sm:$0xff]
    %v6919 = vld [vmem:[%s4 + $0x40] sm:$0xff]
    %v6920 = vld [vmem:[%s4 + $0x48] sm:$0xff]
    %v6921 = vld [vmem:[%s4 + $0x50] sm:$0xff]
    %v6922 = vld [vmem:[%s4 + $0x58] sm:$0xff]
    %v6923 = vld [vmem:[%s4 + $0x60] sm:$0xff]
    %v6924 = vld [vmem:[%s4 + $0x68] sm:$0xff]
    %v6925 = vld [vmem:[%s4 + $0x70] sm:$0xff]
    %v6926 = vld [vmem:[%s4 + $0x78] sm:$0xff]
    %v6927 = vld [vmem:[%s4 + $0x80] sm:$0xff]
    %v6928 = vld [vmem:[%s4 + $0x88] sm:$0xff]
    %v6929 = vld [vmem:[%s4 + $0x90] sm:$0xff]
    %v6930 = vld [vmem:[%s4 + $0x98] sm:$0xff]
    %v6931 = vld [vmem:[%s4 + $0xa0] sm:$0xff]
    %v6932 = vld [vmem:[%s4 + $0xa8] sm:$0xff]
    %v6933 = vld [vmem:[%s4 + $0xb0] sm:$0xff]
    %v6934 = vld [vmem:[%s4 + $0xb8] sm:$0xff]
    %v6935 = vld [vmem:[%s4 + $0xc0] sm:$0xff]
    %v6936 = vld [vmem:[%s4 + $0xc8] sm:$0xff]
    %v6937 = vld [vmem:[%s4 + $0xd0] sm:$0xff]
    %v6938 = vld [vmem:[%s4 + $0xd8] sm:$0xff]
    %v6939 = vld [vmem:[%s4 + $0xe0] sm:$0xff]
    %v6940 = vld [vmem:[%s4 + $0xe8] sm:$0xff]
    %v6941 = vld [vmem:[%s4 + $0xf0] sm:$0xff]
    %v6942 = vld [vmem:[%s4 + $0xf8] sm:$0xff]
    %v6943 = vld [vmem:[%s4 + $0x100] sm:$0xff]
    %v6944 = vld [vmem:[%s4 + $0x108] sm:$0xff]
    %v6945 = vld [vmem:[%s4 + $0x110] sm:$0xff]
    %v6946 = vld [vmem:[%s4 + $0x118] sm:$0xff]
    %v6947 = vld [vmem:[%s4 + $0x120] sm:$0xff]
    %v6948 = vld [vmem:[%s4 + $0x128] sm:$0xff]
    %v6949 = vld [vmem:[%s4 + $0x130] sm:$0xff]
    %v6950 = vld [vmem:[%s4 + $0x138] sm:$0xff]
    %v6951 = vld [vmem:[%s4 + $0x140] sm:$0xff]
    %v6952 = vld [vmem:[%s4 + $0x148] sm:$0xff]
    %v6953 = vld [vmem:[%s4 + $0x150] sm:$0xff]
    %v6954 = vld [vmem:[%s4 + $0x158] sm:$0xff]
    %v6955 = vld [vmem:[%s4 + $0x160] sm:$0xff]
    %v6956 = vld [vmem:[%s4 + $0x168] sm:$0xff]
    %v6957 = vld [vmem:[%s4 + $0x170] sm:$0xff]
    %v6958 = vld [vmem:[%s4 + $0x178] sm:$0xff]
    %v6959 = vld [vmem:[%s4 + $0x180] sm:$0xff]
    %v6960 = vld [vmem:[%s4 + $0x188] sm:$0xff]
    %v6961 = vld [vmem:[%s4 + $0x190] sm:$0xff]
    %v6962 = vld [vmem:[%s4 + $0x198] sm:$0xff]
    %v6963 = vld [vmem:[%s4 + $0x1a0] sm:$0xff]
    %v6964 = vld [vmem:[%s4 + $0x1a8] sm:$0xff]
    %v6965 = vld [vmem:[%s4 + $0x1b0] sm:$0xff]
    %v6966 = vld [vmem:[%s4 + $0x1b8] sm:$0xff]
    %v6967 = vld [vmem:[%s4 + $0x1c0] sm:$0xff]
    %v6968 = vld [vmem:[%s4 + $0x1c8] sm:$0xff]
    %v6969 = vld [vmem:[%s4 + $0x1d0] sm:$0xff]
    %v6970 = vld [vmem:[%s4 + $0x1d8] sm:$0xff]
    %v6971 = vld [vmem:[%s4 + $0x1e0] sm:$0xff]
    %v6972 = vld [vmem:[%s4 + $0x1e8] sm:$0xff]
    %v6973 = vld [vmem:[%s4 + $0x1f0] sm:$0xff]
    %v6974 = vld [vmem:[%s4 + $0x1f8] sm:$0xff]
    %6976 = vset.pattern.permute.xlu0 0
    %6977 = vperm.xlu0 %6976, %v6911
    %v6978 = vpop.permute.xlu0 %6977
    %6981 = vset.pattern.permute.xlu0 0
    %6982 = vperm.xlu0 %6981, %v6912
    %v6983 = vpop.permute.xlu0 %6982
    %6986 = vset.pattern.permute.xlu0 0
    %6987 = vperm.xlu0 %6986, %v6913
    %v6988 = vpop.permute.xlu0 %6987
    %6991 = vset.pattern.permute.xlu0 0
    %6992 = vperm.xlu0 %6991, %v6914
    %v6993 = vpop.permute.xlu0 %6992
    %6996 = vset.pattern.permute.xlu0 0
    %6997 = vperm.xlu0 %6996, %v6915
    %v6998 = vpop.permute.xlu0 %6997
    %7001 = vset.pattern.permute.xlu0 0
    %7002 = vperm.xlu0 %7001, %v6916
    %v7003 = vpop.permute.xlu0 %7002
    %7006 = vset.pattern.permute.xlu0 0
    %7007 = vperm.xlu0 %7006, %v6917
    %v7008 = vpop.permute.xlu0 %7007
    %7011 = vset.pattern.permute.xlu0 0
    %7012 = vperm.xlu0 %7011, %v6918
    %v7013 = vpop.permute.xlu0 %7012
    %7016 = vset.pattern.permute.xlu0 0
    %7017 = vperm.xlu0 %7016, %v6919
    %v7018 = vpop.permute.xlu0 %7017
    %7021 = vset.pattern.permute.xlu0 0
    %7022 = vperm.xlu0 %7021, %v6920
    %v7023 = vpop.permute.xlu0 %7022
    %7026 = vset.pattern.permute.xlu0 0
    %7027 = vperm.xlu0 %7026, %v6921
    %v7028 = vpop.permute.xlu0 %7027
    %7031 = vset.pattern.permute.xlu0 0
    %7032 = vperm.xlu0 %7031, %v6922
    %v7033 = vpop.permute.xlu0 %7032
    %7036 = vset.pattern.permute.xlu0 0
    %7037 = vperm.xlu0 %7036, %v6923
    %v7038 = vpop.permute.xlu0 %7037
    %7041 = vset.pattern.permute.xlu0 0
    %7042 = vperm.xlu0 %7041, %v6924
    %v7043 = vpop.permute.xlu0 %7042
    %7046 = vset.pattern.permute.xlu0 0
    %7047 = vperm.xlu0 %7046, %v6925
    %v7048 = vpop.permute.xlu0 %7047
    %7051 = vset.pattern.permute.xlu0 0
    %7052 = vperm.xlu0 %7051, %v6926
    %v7053 = vpop.permute.xlu0 %7052
    %7056 = vset.pattern.permute.xlu0 0
    %7057 = vperm.xlu0 %7056, %v6927
    %v7058 = vpop.permute.xlu0 %7057
    %7061 = vset.pattern.permute.xlu0 0
    %7062 = vperm.xlu0 %7061, %v6928
    %v7063 = vpop.permute.xlu0 %7062
    %7066 = vset.pattern.permute.xlu0 0
    %7067 = vperm.xlu0 %7066, %v6929
    %v7068 = vpop.permute.xlu0 %7067
    %7071 = vset.pattern.permute.xlu0 0
    %7072 = vperm.xlu0 %7071, %v6930
    %v7073 = vpop.permute.xlu0 %7072
    %7076 = vset.pattern.permute.xlu0 0
    %7077 = vperm.xlu0 %7076, %v6931
    %v7078 = vpop.permute.xlu0 %7077
    %7081 = vset.pattern.permute.xlu0 0
    %7082 = vperm.xlu0 %7081, %v6932
    %v7083 = vpop.permute.xlu0 %7082
    %7086 = vset.pattern.permute.xlu0 0
    %7087 = vperm.xlu0 %7086, %v6933
    %v7088 = vpop.permute.xlu0 %7087
    %7091 = vset.pattern.permute.xlu0 0
    %7092 = vperm.xlu0 %7091, %v6934
    %v7093 = vpop.permute.xlu0 %7092
    %7096 = vset.pattern.permute.xlu0 0
    %7097 = vperm.xlu0 %7096, %v6935
    %v7098 = vpop.permute.xlu0 %7097
    %7101 = vset.pattern.permute.xlu0 0
    %7102 = vperm.xlu0 %7101, %v6936
    %v7103 = vpop.permute.xlu0 %7102
    %7106 = vset.pattern.permute.xlu0 0
    %7107 = vperm.xlu0 %7106, %v6937
    %v7108 = vpop.permute.xlu0 %7107
    %7111 = vset.pattern.permute.xlu0 0
    %7112 = vperm.xlu0 %7111, %v6938
    %v7113 = vpop.permute.xlu0 %7112
    %7116 = vset.pattern.permute.xlu0 0
    %7117 = vperm.xlu0 %7116, %v6939
    %v7118 = vpop.permute.xlu0 %7117
    %7121 = vset.pattern.permute.xlu0 0
    %7122 = vperm.xlu0 %7121, %v6940
    %v7123 = vpop.permute.xlu0 %7122
    %7126 = vset.pattern.permute.xlu0 0
    %7127 = vperm.xlu0 %7126, %v6941
    %v7128 = vpop.permute.xlu0 %7127
    %7131 = vset.pattern.permute.xlu0 0
    %7132 = vperm.xlu0 %7131, %v6942
    %v7133 = vpop.permute.xlu0 %7132
    %7136 = vset.pattern.permute.xlu0 0
    %7137 = vperm.xlu0 %7136, %v6943
    %v7138 = vpop.permute.xlu0 %7137
    %7141 = vset.pattern.permute.xlu0 0
    %7142 = vperm.xlu0 %7141, %v6944
    %v7143 = vpop.permute.xlu0 %7142
    %7146 = vset.pattern.permute.xlu0 0
    %7147 = vperm.xlu0 %7146, %v6945
    %v7148 = vpop.permute.xlu0 %7147
    %7151 = vset.pattern.permute.xlu0 0
    %7152 = vperm.xlu0 %7151, %v6946
    %v7153 = vpop.permute.xlu0 %7152
    %7156 = vset.pattern.permute.xlu0 0
    %7157 = vperm.xlu0 %7156, %v6947
    %v7158 = vpop.permute.xlu0 %7157
    %7161 = vset.pattern.permute.xlu0 0
    %7162 = vperm.xlu0 %7161, %v6948
    %v7163 = vpop.permute.xlu0 %7162
    %7166 = vset.pattern.permute.xlu0 0
    %7167 = vperm.xlu0 %7166, %v6949
    %v7168 = vpop.permute.xlu0 %7167
    %7171 = vset.pattern.permute.xlu0 0
    %7172 = vperm.xlu0 %7171, %v6950
    %v7173 = vpop.permute.xlu0 %7172
    %7176 = vset.pattern.permute.xlu0 0
    %7177 = vperm.xlu0 %7176, %v6951
    %v7178 = vpop.permute.xlu0 %7177
    %7181 = vset.pattern.permute.xlu0 0
    %7182 = vperm.xlu0 %7181, %v6952
    %v7183 = vpop.permute.xlu0 %7182
    %7186 = vset.pattern.permute.xlu0 0
    %7187 = vperm.xlu0 %7186, %v6953
    %v7188 = vpop.permute.xlu0 %7187
    %7191 = vset.pattern.permute.xlu0 0
    %7192 = vperm.xlu0 %7191, %v6954
    %v7193 = vpop.permute.xlu0 %7192
    %7196 = vset.pattern.permute.xlu0 0
    %7197 = vperm.xlu0 %7196, %v6955
    %v7198 = vpop.permute.xlu0 %7197
    %7201 = vset.pattern.permute.xlu0 0
    %7202 = vperm.xlu0 %7201, %v6956
    %v7203 = vpop.permute.xlu0 %7202
    %7206 = vset.pattern.permute.xlu0 0
    %7207 = vperm.xlu0 %7206, %v6957
    %v7208 = vpop.permute.xlu0 %7207
    %7211 = vset.pattern.permute.xlu0 0
    %7212 = vperm.xlu0 %7211, %v6958
    %v7213 = vpop.permute.xlu0 %7212
    %7216 = vset.pattern.permute.xlu0 0
    %7217 = vperm.xlu0 %7216, %v6959
    %v7218 = vpop.permute.xlu0 %7217
    %7221 = vset.pattern.permute.xlu0 0
    %7222 = vperm.xlu0 %7221, %v6960
    %v7223 = vpop.permute.xlu0 %7222
    %7226 = vset.pattern.permute.xlu0 0
    %7227 = vperm.xlu0 %7226, %v6961
    %v7228 = vpop.permute.xlu0 %7227
    %7231 = vset.pattern.permute.xlu0 0
    %7232 = vperm.xlu0 %7231, %v6962
    %v7233 = vpop.permute.xlu0 %7232
    %7236 = vset.pattern.permute.xlu0 0
    %7237 = vperm.xlu0 %7236, %v6963
    %v7238 = vpop.permute.xlu0 %7237
    %7241 = vset.pattern.permute.xlu0 0
    %7242 = vperm.xlu0 %7241, %v6964
    %v7243 = vpop.permute.xlu0 %7242
    %7246 = vset.pattern.permute.xlu0 0
    %7247 = vperm.xlu0 %7246, %v6965
    %v7248 = vpop.permute.xlu0 %7247
    %7251 = vset.pattern.permute.xlu0 0
    %7252 = vperm.xlu0 %7251, %v6966
    %v7253 = vpop.permute.xlu0 %7252
    %7256 = vset.pattern.permute.xlu0 0
    %7257 = vperm.xlu0 %7256, %v6967
    %v7258 = vpop.permute.xlu0 %7257
    %7261 = vset.pattern.permute.xlu0 0
    %7262 = vperm.xlu0 %7261, %v6968
    %v7263 = vpop.permute.xlu0 %7262
    %7266 = vset.pattern.permute.xlu0 0
    %7267 = vperm.xlu0 %7266, %v6969
    %v7268 = vpop.permute.xlu0 %7267
    %7271 = vset.pattern.permute.xlu0 0
    %7272 = vperm.xlu0 %7271, %v6970
    %v7273 = vpop.permute.xlu0 %7272
    %7276 = vset.pattern.permute.xlu0 0
    %7277 = vperm.xlu0 %7276, %v6971
    %v7278 = vpop.permute.xlu0 %7277
    %7281 = vset.pattern.permute.xlu0 0
    %7282 = vperm.xlu0 %7281, %v6972
    %v7283 = vpop.permute.xlu0 %7282
    %7286 = vset.pattern.permute.xlu0 0
    %7287 = vperm.xlu0 %7286, %v6973
    %v7288 = vpop.permute.xlu0 %7287
    %7291 = vset.pattern.permute.xlu0 0
    %7292 = vperm.xlu0 %7291, %v6974
    %v7293 = vpop.permute.xlu0 %7292
    %v7551 = vunpack.c.l.b16 %v6591
    %v7552 = vunpack.c.h.b16 %v6591
    %v7553 = vunpack.c.l.b16 %v6592
    %v7554 = vunpack.c.h.b16 %v6592
    %v7555 = vunpack.c.l.b16 %v6593
    %v7556 = vunpack.c.h.b16 %v6593
    %v7557 = vunpack.c.l.b16 %v6594
    %v7558 = vunpack.c.h.b16 %v6594
    %v7559 = vunpack.c.l.b16 %v6595
    %v7560 = vunpack.c.h.b16 %v6595
    %v7561 = vunpack.c.l.b16 %v6596
    %v7562 = vunpack.c.h.b16 %v6596
    %v7563 = vunpack.c.l.b16 %v6597
    %v7564 = vunpack.c.h.b16 %v6597
    %v7565 = vunpack.c.l.b16 %v6598
    %v7566 = vunpack.c.h.b16 %v6598
    %v7567 = vunpack.c.l.b16 %v6599
    %v7568 = vunpack.c.h.b16 %v6599
    %v7569 = vunpack.c.l.b16 %v6600
    %v7570 = vunpack.c.h.b16 %v6600
    %v7571 = vunpack.c.l.b16 %v6601
    %v7572 = vunpack.c.h.b16 %v6601
    %v7573 = vunpack.c.l.b16 %v6602
    %v7574 = vunpack.c.h.b16 %v6602
    %v7575 = vunpack.c.l.b16 %v6603
    %v7576 = vunpack.c.h.b16 %v6603
    %v7577 = vunpack.c.l.b16 %v6604
    %v7578 = vunpack.c.h.b16 %v6604
    %v7579 = vunpack.c.l.b16 %v6605
    %v7580 = vunpack.c.h.b16 %v6605
    %v7581 = vunpack.c.l.b16 %v6606
    %v7582 = vunpack.c.h.b16 %v6606
    %v7583 = vunpack.c.l.b16 %v6607
    %v7584 = vunpack.c.h.b16 %v6607
    %v7585 = vunpack.c.l.b16 %v6608
    %v7586 = vunpack.c.h.b16 %v6608
    %v7587 = vunpack.c.l.b16 %v6609
    %v7588 = vunpack.c.h.b16 %v6609
    %v7589 = vunpack.c.l.b16 %v6610
    %v7590 = vunpack.c.h.b16 %v6610
    %v7591 = vunpack.c.l.b16 %v6611
    %v7592 = vunpack.c.h.b16 %v6611
    %v7593 = vunpack.c.l.b16 %v6612
    %v7594 = vunpack.c.h.b16 %v6612
    %v7595 = vunpack.c.l.b16 %v6613
    %v7596 = vunpack.c.h.b16 %v6613
    %v7597 = vunpack.c.l.b16 %v6614
    %v7598 = vunpack.c.h.b16 %v6614
    %v7599 = vunpack.c.l.b16 %v6615
    %v7600 = vunpack.c.h.b16 %v6615
    %v7601 = vunpack.c.l.b16 %v6616
    %v7602 = vunpack.c.h.b16 %v6616
    %v7603 = vunpack.c.l.b16 %v6617
    %v7604 = vunpack.c.h.b16 %v6617
    %v7605 = vunpack.c.l.b16 %v6618
    %v7606 = vunpack.c.h.b16 %v6618
    %v7607 = vunpack.c.l.b16 %v6619
    %v7608 = vunpack.c.h.b16 %v6619
    %v7609 = vunpack.c.l.b16 %v6620
    %v7610 = vunpack.c.h.b16 %v6620
    %v7611 = vunpack.c.l.b16 %v6621
    %v7612 = vunpack.c.h.b16 %v6621
    %v7613 = vunpack.c.l.b16 %v6622
    %v7614 = vunpack.c.h.b16 %v6622
    %v7615 = vunpack.c.l.b16 %v6623
    %v7616 = vunpack.c.h.b16 %v6623
    %v7617 = vunpack.c.l.b16 %v6624
    %v7618 = vunpack.c.h.b16 %v6624
    %v7619 = vunpack.c.l.b16 %v6625
    %v7620 = vunpack.c.h.b16 %v6625
    %v7621 = vunpack.c.l.b16 %v6626
    %v7622 = vunpack.c.h.b16 %v6626
    %v7623 = vunpack.c.l.b16 %v6627
    %v7624 = vunpack.c.h.b16 %v6627
    %v7625 = vunpack.c.l.b16 %v6628
    %v7626 = vunpack.c.h.b16 %v6628
    %v7627 = vunpack.c.l.b16 %v6629
    %v7628 = vunpack.c.h.b16 %v6629
    %v7629 = vunpack.c.l.b16 %v6630
    %v7630 = vunpack.c.h.b16 %v6630
    %v7631 = vunpack.c.l.b16 %v6631
    %v7632 = vunpack.c.h.b16 %v6631
    %v7633 = vunpack.c.l.b16 %v6632
    %v7634 = vunpack.c.h.b16 %v6632
    %v7635 = vunpack.c.l.b16 %v6633
    %v7636 = vunpack.c.h.b16 %v6633
    %v7637 = vunpack.c.l.b16 %v6634
    %v7638 = vunpack.c.h.b16 %v6634
    %v7639 = vunpack.c.l.b16 %v6635
    %v7640 = vunpack.c.h.b16 %v6635
    %v7641 = vunpack.c.l.b16 %v6636
    %v7642 = vunpack.c.h.b16 %v6636
    %v7643 = vunpack.c.l.b16 %v6637
    %v7644 = vunpack.c.h.b16 %v6637
    %v7645 = vunpack.c.l.b16 %v6638
    %v7646 = vunpack.c.h.b16 %v6638
    %v7647 = vunpack.c.l.b16 %v6639
    %v7648 = vunpack.c.h.b16 %v6639
    %v7649 = vunpack.c.l.b16 %v6640
    %v7650 = vunpack.c.h.b16 %v6640
    %v7651 = vunpack.c.l.b16 %v6641
    %v7652 = vunpack.c.h.b16 %v6641
    %v7653 = vunpack.c.l.b16 %v6642
    %v7654 = vunpack.c.h.b16 %v6642
    %v7655 = vunpack.c.l.b16 %v6643
    %v7656 = vunpack.c.h.b16 %v6643
    %v7657 = vunpack.c.l.b16 %v6644
    %v7658 = vunpack.c.h.b16 %v6644
    %v7659 = vunpack.c.l.b16 %v6645
    %v7660 = vunpack.c.h.b16 %v6645
    %v7661 = vunpack.c.l.b16 %v6646
    %v7662 = vunpack.c.h.b16 %v6646
    %v7663 = vunpack.c.l.b16 %v6647
    %v7664 = vunpack.c.h.b16 %v6647
    %v7665 = vunpack.c.l.b16 %v6648
    %v7666 = vunpack.c.h.b16 %v6648
    %v7667 = vunpack.c.l.b16 %v6649
    %v7668 = vunpack.c.h.b16 %v6649
    %v7669 = vunpack.c.l.b16 %v6650
    %v7670 = vunpack.c.h.b16 %v6650
    %v7671 = vunpack.c.l.b16 %v6651
    %v7672 = vunpack.c.h.b16 %v6651
    %v7673 = vunpack.c.l.b16 %v6652
    %v7674 = vunpack.c.h.b16 %v6652
    %v7675 = vunpack.c.l.b16 %v6653
    %v7676 = vunpack.c.h.b16 %v6653
    %v7677 = vunpack.c.l.b16 %v6654
    %v7678 = vunpack.c.h.b16 %v6654
    %v7679 = vunpack.c.l.b16 %v6655
    %v7680 = vunpack.c.h.b16 %v6655
    %v7681 = vunpack.c.l.b16 %v6656
    %v7682 = vunpack.c.h.b16 %v6656
    %v7683 = vunpack.c.l.b16 %v6657
    %v7684 = vunpack.c.h.b16 %v6657
    %v7685 = vunpack.c.l.b16 %v6658
    %v7686 = vunpack.c.h.b16 %v6658
    %v7687 = vunpack.c.l.b16 %v6659
    %v7688 = vunpack.c.h.b16 %v6659
    %v7689 = vunpack.c.l.b16 %v6660
    %v7690 = vunpack.c.h.b16 %v6660
    %v7691 = vunpack.c.l.b16 %v6661
    %v7692 = vunpack.c.h.b16 %v6661
    %v7693 = vunpack.c.l.b16 %v6662
    %v7694 = vunpack.c.h.b16 %v6662
    %v7695 = vunpack.c.l.b16 %v6663
    %v7696 = vunpack.c.h.b16 %v6663
    %v7697 = vunpack.c.l.b16 %v6664
    %v7698 = vunpack.c.h.b16 %v6664
    %v7699 = vunpack.c.l.b16 %v6665
    %v7700 = vunpack.c.h.b16 %v6665
    %v7701 = vunpack.c.l.b16 %v6666
    %v7702 = vunpack.c.h.b16 %v6666
    %v7703 = vunpack.c.l.b16 %v6667
    %v7704 = vunpack.c.h.b16 %v6667
    %v7705 = vunpack.c.l.b16 %v6668
    %v7706 = vunpack.c.h.b16 %v6668
    %v7707 = vunpack.c.l.b16 %v6669
    %v7708 = vunpack.c.h.b16 %v6669
    %v7709 = vunpack.c.l.b16 %v6670
    %v7710 = vunpack.c.h.b16 %v6670
    %v7711 = vunpack.c.l.b16 %v6671
    %v7712 = vunpack.c.h.b16 %v6671
    %v7713 = vunpack.c.l.b16 %v6672
    %v7714 = vunpack.c.h.b16 %v6672
    %v7715 = vunpack.c.l.b16 %v6673
    %v7716 = vunpack.c.h.b16 %v6673
    %v7717 = vunpack.c.l.b16 %v6674
    %v7718 = vunpack.c.h.b16 %v6674
    %v7719 = vunpack.c.l.b16 %v6675
    %v7720 = vunpack.c.h.b16 %v6675
    %v7721 = vunpack.c.l.b16 %v6676
    %v7722 = vunpack.c.h.b16 %v6676
    %v7723 = vunpack.c.l.b16 %v6677
    %v7724 = vunpack.c.h.b16 %v6677
    %v7725 = vunpack.c.l.b16 %v6678
    %v7726 = vunpack.c.h.b16 %v6678
    %v7727 = vunpack.c.l.b16 %v6679
    %v7728 = vunpack.c.h.b16 %v6679
    %v7729 = vunpack.c.l.b16 %v6680
    %v7730 = vunpack.c.h.b16 %v6680
    %v7731 = vunpack.c.l.b16 %v6681
    %v7732 = vunpack.c.h.b16 %v6681
    %v7733 = vunpack.c.l.b16 %v6682
    %v7734 = vunpack.c.h.b16 %v6682
    %v7735 = vunpack.c.l.b16 %v6683
    %v7736 = vunpack.c.h.b16 %v6683
    %v7737 = vunpack.c.l.b16 %v6684
    %v7738 = vunpack.c.h.b16 %v6684
    %v7739 = vunpack.c.l.b16 %v6685
    %v7740 = vunpack.c.h.b16 %v6685
    %v7741 = vunpack.c.l.b16 %v6686
    %v7742 = vunpack.c.h.b16 %v6686
    %v7743 = vunpack.c.l.b16 %v6687
    %v7744 = vunpack.c.h.b16 %v6687
    %v7745 = vunpack.c.l.b16 %v6688
    %v7746 = vunpack.c.h.b16 %v6688
    %v7747 = vunpack.c.l.b16 %v6689
    %v7748 = vunpack.c.h.b16 %v6689
    %v7749 = vunpack.c.l.b16 %v6690
    %v7750 = vunpack.c.h.b16 %v6690
    %v7751 = vunpack.c.l.b16 %v6691
    %v7752 = vunpack.c.h.b16 %v6691
    %v7753 = vunpack.c.l.b16 %v6692
    %v7754 = vunpack.c.h.b16 %v6692
    %v7755 = vunpack.c.l.b16 %v6693
    %v7756 = vunpack.c.h.b16 %v6693
    %v7757 = vunpack.c.l.b16 %v6694
    %v7758 = vunpack.c.h.b16 %v6694
    %v7759 = vunpack.c.l.b16 %v6695
    %v7760 = vunpack.c.h.b16 %v6695
    %v7761 = vunpack.c.l.b16 %v6696
    %v7762 = vunpack.c.h.b16 %v6696
    %v7763 = vunpack.c.l.b16 %v6697
    %v7764 = vunpack.c.h.b16 %v6697
    %v7765 = vunpack.c.l.b16 %v6698
    %v7766 = vunpack.c.h.b16 %v6698
    %v7767 = vunpack.c.l.b16 %v6699
    %v7768 = vunpack.c.h.b16 %v6699
    %v7769 = vunpack.c.l.b16 %v6700
    %v7770 = vunpack.c.h.b16 %v6700
    %v7771 = vunpack.c.l.b16 %v6701
    %v7772 = vunpack.c.h.b16 %v6701
    %v7773 = vunpack.c.l.b16 %v6702
    %v7774 = vunpack.c.h.b16 %v6702
    %v7775 = vunpack.c.l.b16 %v6703
    %v7776 = vunpack.c.h.b16 %v6703
    %v7777 = vunpack.c.l.b16 %v6704
    %v7778 = vunpack.c.h.b16 %v6704
    %v7779 = vunpack.c.l.b16 %v6705
    %v7780 = vunpack.c.h.b16 %v6705
    %v7781 = vunpack.c.l.b16 %v6706
    %v7782 = vunpack.c.h.b16 %v6706
    %v7783 = vunpack.c.l.b16 %v6707
    %v7784 = vunpack.c.h.b16 %v6707
    %v7785 = vunpack.c.l.b16 %v6708
    %v7786 = vunpack.c.h.b16 %v6708
    %v7787 = vunpack.c.l.b16 %v6709
    %v7788 = vunpack.c.h.b16 %v6709
    %v7789 = vunpack.c.l.b16 %v6710
    %v7790 = vunpack.c.h.b16 %v6710
    %v7791 = vunpack.c.l.b16 %v6711
    %v7792 = vunpack.c.h.b16 %v6711
    %v7793 = vunpack.c.l.b16 %v6712
    %v7794 = vunpack.c.h.b16 %v6712
    %v7795 = vunpack.c.l.b16 %v6713
    %v7796 = vunpack.c.h.b16 %v6713
    %v7797 = vunpack.c.l.b16 %v6714
    %v7798 = vunpack.c.h.b16 %v6714
    %v7799 = vunpack.c.l.b16 %v6715
    %v7800 = vunpack.c.h.b16 %v6715
    %v7801 = vunpack.c.l.b16 %v6716
    %v7802 = vunpack.c.h.b16 %v6716
    %v7803 = vunpack.c.l.b16 %v6717
    %v7804 = vunpack.c.h.b16 %v6717
    %v7805 = vunpack.c.l.b16 %v6718
    %v7806 = vunpack.c.h.b16 %v6718
    %v7807 = vunpack.c.l.b16 %v6719
    %v7808 = vunpack.c.h.b16 %v6719
    %v7809 = vunpack.c.l.b16 %v6720
    %v7810 = vunpack.c.h.b16 %v6720
    %v7811 = vunpack.c.l.b16 %v6721
    %v7812 = vunpack.c.h.b16 %v6721
    %v7813 = vunpack.c.l.b16 %v6722
    %v7814 = vunpack.c.h.b16 %v6722
    %v7815 = vunpack.c.l.b16 %v6723
    %v7816 = vunpack.c.h.b16 %v6723
    %v7817 = vunpack.c.l.b16 %v6724
    %v7818 = vunpack.c.h.b16 %v6724
    %v7819 = vunpack.c.l.b16 %v6725
    %v7820 = vunpack.c.h.b16 %v6725
    %v7821 = vunpack.c.l.b16 %v6726
    %v7822 = vunpack.c.h.b16 %v6726
    %v7823 = vunpack.c.l.b16 %v6727
    %v7824 = vunpack.c.h.b16 %v6727
    %v7825 = vunpack.c.l.b16 %v6728
    %v7826 = vunpack.c.h.b16 %v6728
    %v7827 = vunpack.c.l.b16 %v6729
    %v7828 = vunpack.c.h.b16 %v6729
    %v7829 = vunpack.c.l.b16 %v6730
    %v7830 = vunpack.c.h.b16 %v6730
    %v7831 = vunpack.c.l.b16 %v6731
    %v7832 = vunpack.c.h.b16 %v6731
    %v7833 = vunpack.c.l.b16 %v6732
    %v7834 = vunpack.c.h.b16 %v6732
    %v7835 = vunpack.c.l.b16 %v6733
    %v7836 = vunpack.c.h.b16 %v6733
    %v7837 = vunpack.c.l.b16 %v6734
    %v7838 = vunpack.c.h.b16 %v6734
    %v7839 = vunpack.c.l.b16 %v6735
    %v7840 = vunpack.c.h.b16 %v6735
    %v7841 = vunpack.c.l.b16 %v6736
    %v7842 = vunpack.c.h.b16 %v6736
    %v7843 = vunpack.c.l.b16 %v6737
    %v7844 = vunpack.c.h.b16 %v6737
    %v7845 = vunpack.c.l.b16 %v6738
    %v7846 = vunpack.c.h.b16 %v6738
    %v7847 = vunpack.c.l.b16 %v6739
    %v7848 = vunpack.c.h.b16 %v6739
    %v7849 = vunpack.c.l.b16 %v6740
    %v7850 = vunpack.c.h.b16 %v6740
    %v7851 = vunpack.c.l.b16 %v6741
    %v7852 = vunpack.c.h.b16 %v6741
    %v7853 = vunpack.c.l.b16 %v6742
    %v7854 = vunpack.c.h.b16 %v6742
    %v7855 = vunpack.c.l.b16 %v6743
    %v7856 = vunpack.c.h.b16 %v6743
    %v7857 = vunpack.c.l.b16 %v6744
    %v7858 = vunpack.c.h.b16 %v6744
    %v7859 = vunpack.c.l.b16 %v6745
    %v7860 = vunpack.c.h.b16 %v6745
    %v7861 = vunpack.c.l.b16 %v6746
    %v7862 = vunpack.c.h.b16 %v6746
    %v7863 = vunpack.c.l.b16 %v6747
    %v7864 = vunpack.c.h.b16 %v6747
    %v7865 = vunpack.c.l.b16 %v6748
    %v7866 = vunpack.c.h.b16 %v6748
    %v7867 = vunpack.c.l.b16 %v6749
    %v7868 = vunpack.c.h.b16 %v6749
    %v7869 = vunpack.c.l.b16 %v6750
    %v7870 = vunpack.c.h.b16 %v6750
    %v7871 = vunpack.c.l.b16 %v6751
    %v7872 = vunpack.c.h.b16 %v6751
    %v7873 = vunpack.c.l.b16 %v6752
    %v7874 = vunpack.c.h.b16 %v6752
    %v7875 = vunpack.c.l.b16 %v6753
    %v7876 = vunpack.c.h.b16 %v6753
    %v7877 = vunpack.c.l.b16 %v6754
    %v7878 = vunpack.c.h.b16 %v6754
    %v7879 = vunpack.c.l.b16 %v6755
    %v7880 = vunpack.c.h.b16 %v6755
    %v7881 = vunpack.c.l.b16 %v6756
    %v7882 = vunpack.c.h.b16 %v6756
    %v7883 = vunpack.c.l.b16 %v6757
    %v7884 = vunpack.c.h.b16 %v6757
    %v7885 = vunpack.c.l.b16 %v6758
    %v7886 = vunpack.c.h.b16 %v6758
    %v7887 = vunpack.c.l.b16 %v6759
    %v7888 = vunpack.c.h.b16 %v6759
    %v7889 = vunpack.c.l.b16 %v6760
    %v7890 = vunpack.c.h.b16 %v6760
    %v7891 = vunpack.c.l.b16 %v6761
    %v7892 = vunpack.c.h.b16 %v6761
    %v7893 = vunpack.c.l.b16 %v6762
    %v7894 = vunpack.c.h.b16 %v6762
    %v7895 = vunpack.c.l.b16 %v6763
    %v7896 = vunpack.c.h.b16 %v6763
    %v7897 = vunpack.c.l.b16 %v6764
    %v7898 = vunpack.c.h.b16 %v6764
    %v7899 = vunpack.c.l.b16 %v6765
    %v7900 = vunpack.c.h.b16 %v6765
    %v7901 = vunpack.c.l.b16 %v6766
    %v7902 = vunpack.c.h.b16 %v6766
    %v7903 = vunpack.c.l.b16 %v6767
    %v7904 = vunpack.c.h.b16 %v6767
    %v7905 = vunpack.c.l.b16 %v6768
    %v7906 = vunpack.c.h.b16 %v6768
    %v7907 = vunpack.c.l.b16 %v6769
    %v7908 = vunpack.c.h.b16 %v6769
    %v7909 = vunpack.c.l.b16 %v6770
    %v7910 = vunpack.c.h.b16 %v6770
    %v7911 = vunpack.c.l.b16 %v6771
    %v7912 = vunpack.c.h.b16 %v6771
    %v7913 = vunpack.c.l.b16 %v6772
    %v7914 = vunpack.c.h.b16 %v6772
    %v7915 = vunpack.c.l.b16 %v6773
    %v7916 = vunpack.c.h.b16 %v6773
    %v7917 = vunpack.c.l.b16 %v6774
    %v7918 = vunpack.c.h.b16 %v6774
    %v7919 = vunpack.c.l.b16 %v6775
    %v7920 = vunpack.c.h.b16 %v6775
    %v7921 = vunpack.c.l.b16 %v6776
    %v7922 = vunpack.c.h.b16 %v6776
    %v7923 = vunpack.c.l.b16 %v6777
    %v7924 = vunpack.c.h.b16 %v6777
    %v7925 = vunpack.c.l.b16 %v6778
    %v7926 = vunpack.c.h.b16 %v6778
    %v7927 = vunpack.c.l.b16 %v6779
    %v7928 = vunpack.c.h.b16 %v6779
    %v7929 = vunpack.c.l.b16 %v6780
    %v7930 = vunpack.c.h.b16 %v6780
    %v7931 = vunpack.c.l.b16 %v6781
    %v7932 = vunpack.c.h.b16 %v6781
    %v7933 = vunpack.c.l.b16 %v6782
    %v7934 = vunpack.c.h.b16 %v6782
    %v7935 = vunpack.c.l.b16 %v6783
    %v7936 = vunpack.c.h.b16 %v6783
    %v7937 = vunpack.c.l.b16 %v6784
    %v7938 = vunpack.c.h.b16 %v6784
    %v7939 = vunpack.c.l.b16 %v6785
    %v7940 = vunpack.c.h.b16 %v6785
    %v7941 = vunpack.c.l.b16 %v6786
    %v7942 = vunpack.c.h.b16 %v6786
    %v7943 = vunpack.c.l.b16 %v6787
    %v7944 = vunpack.c.h.b16 %v6787
    %v7945 = vunpack.c.l.b16 %v6788
    %v7946 = vunpack.c.h.b16 %v6788
    %v7947 = vunpack.c.l.b16 %v6789
    %v7948 = vunpack.c.h.b16 %v6789
    %v7949 = vunpack.c.l.b16 %v6790
    %v7950 = vunpack.c.h.b16 %v6790
    %v7951 = vunpack.c.l.b16 %v6791
    %v7952 = vunpack.c.h.b16 %v6791
    %v7953 = vunpack.c.l.b16 %v6792
    %v7954 = vunpack.c.h.b16 %v6792
    %v7955 = vunpack.c.l.b16 %v6793
    %v7956 = vunpack.c.h.b16 %v6793
    %v7957 = vunpack.c.l.b16 %v6794
    %v7958 = vunpack.c.h.b16 %v6794
    %v7959 = vunpack.c.l.b16 %v6795
    %v7960 = vunpack.c.h.b16 %v6795
    %v7961 = vunpack.c.l.b16 %v6796
    %v7962 = vunpack.c.h.b16 %v6796
    %v7963 = vunpack.c.l.b16 %v6797
    %v7964 = vunpack.c.h.b16 %v6797
    %v7965 = vunpack.c.l.b16 %v6798
    %v7966 = vunpack.c.h.b16 %v6798
    %v7967 = vunpack.c.l.b16 %v6799
    %v7968 = vunpack.c.h.b16 %v6799
    %v7969 = vunpack.c.l.b16 %v6800
    %v7970 = vunpack.c.h.b16 %v6800
    %v7971 = vunpack.c.l.b16 %v6801
    %v7972 = vunpack.c.h.b16 %v6801
    %v7973 = vunpack.c.l.b16 %v6802
    %v7974 = vunpack.c.h.b16 %v6802
    %v7975 = vunpack.c.l.b16 %v6803
    %v7976 = vunpack.c.h.b16 %v6803
    %v7977 = vunpack.c.l.b16 %v6804
    %v7978 = vunpack.c.h.b16 %v6804
    %v7979 = vunpack.c.l.b16 %v6805
    %v7980 = vunpack.c.h.b16 %v6805
    %v7981 = vunpack.c.l.b16 %v6806
    %v7982 = vunpack.c.h.b16 %v6806
    %v7983 = vunpack.c.l.b16 %v6807
    %v7984 = vunpack.c.h.b16 %v6807
    %v7985 = vunpack.c.l.b16 %v6808
    %v7986 = vunpack.c.h.b16 %v6808
    %v7987 = vunpack.c.l.b16 %v6809
    %v7988 = vunpack.c.h.b16 %v6809
    %v7989 = vunpack.c.l.b16 %v6810
    %v7990 = vunpack.c.h.b16 %v6810
    %v7991 = vunpack.c.l.b16 %v6811
    %v7992 = vunpack.c.h.b16 %v6811
    %v7993 = vunpack.c.l.b16 %v6812
    %v7994 = vunpack.c.h.b16 %v6812
    %v7995 = vunpack.c.l.b16 %v6813
    %v7996 = vunpack.c.h.b16 %v6813
    %v7997 = vunpack.c.l.b16 %v6814
    %v7998 = vunpack.c.h.b16 %v6814
    %v7999 = vunpack.c.l.b16 %v6815
    %v8000 = vunpack.c.h.b16 %v6815
    %v8001 = vunpack.c.l.b16 %v6816
    %v8002 = vunpack.c.h.b16 %v6816
    %v8003 = vunpack.c.l.b16 %v6817
    %v8004 = vunpack.c.h.b16 %v6817
    %v8005 = vunpack.c.l.b16 %v6818
    %v8006 = vunpack.c.h.b16 %v6818
    %v8007 = vunpack.c.l.b16 %v6819
    %v8008 = vunpack.c.h.b16 %v6819
    %v8009 = vunpack.c.l.b16 %v6820
    %v8010 = vunpack.c.h.b16 %v6820
    %v8011 = vunpack.c.l.b16 %v6821
    %v8012 = vunpack.c.h.b16 %v6821
    %v8013 = vunpack.c.l.b16 %v6822
    %v8014 = vunpack.c.h.b16 %v6822
    %v8015 = vunpack.c.l.b16 %v6823
    %v8016 = vunpack.c.h.b16 %v6823
    %v8017 = vunpack.c.l.b16 %v6824
    %v8018 = vunpack.c.h.b16 %v6824
    %v8019 = vunpack.c.l.b16 %v6825
    %v8020 = vunpack.c.h.b16 %v6825
    %v8021 = vunpack.c.l.b16 %v6826
    %v8022 = vunpack.c.h.b16 %v6826
    %v8023 = vunpack.c.l.b16 %v6827
    %v8024 = vunpack.c.h.b16 %v6827
    %v8025 = vunpack.c.l.b16 %v6828
    %v8026 = vunpack.c.h.b16 %v6828
    %v8027 = vunpack.c.l.b16 %v6829
    %v8028 = vunpack.c.h.b16 %v6829
    %v8029 = vunpack.c.l.b16 %v6830
    %v8030 = vunpack.c.h.b16 %v6830
    %v8031 = vunpack.c.l.b16 %v6831
    %v8032 = vunpack.c.h.b16 %v6831
    %v8033 = vunpack.c.l.b16 %v6832
    %v8034 = vunpack.c.h.b16 %v6832
    %v8035 = vunpack.c.l.b16 %v6833
    %v8036 = vunpack.c.h.b16 %v6833
    %v8037 = vunpack.c.l.b16 %v6834
    %v8038 = vunpack.c.h.b16 %v6834
    %v8039 = vunpack.c.l.b16 %v6835
    %v8040 = vunpack.c.h.b16 %v6835
    %v8041 = vunpack.c.l.b16 %v6836
    %v8042 = vunpack.c.h.b16 %v6836
    %v8043 = vunpack.c.l.b16 %v6837
    %v8044 = vunpack.c.h.b16 %v6837
    %v8045 = vunpack.c.l.b16 %v6838
    %v8046 = vunpack.c.h.b16 %v6838
    %v8047 = vunpack.c.l.b16 %v6839
    %v8048 = vunpack.c.h.b16 %v6839
    %v8049 = vunpack.c.l.b16 %v6840
    %v8050 = vunpack.c.h.b16 %v6840
    %v8051 = vunpack.c.l.b16 %v6841
    %v8052 = vunpack.c.h.b16 %v6841
    %v8053 = vunpack.c.l.b16 %v6842
    %v8054 = vunpack.c.h.b16 %v6842
    %v8055 = vunpack.c.l.b16 %v6843
    %v8056 = vunpack.c.h.b16 %v6843
    %v8057 = vunpack.c.l.b16 %v6844
    %v8058 = vunpack.c.h.b16 %v6844
    %v8059 = vunpack.c.l.b16 %v6845
    %v8060 = vunpack.c.h.b16 %v6845
    %v8061 = vunpack.c.l.b16 %v6846
    %v8062 = vunpack.c.h.b16 %v6846
    %v8063 = vpack.c.b16 %v7559, %v7551
    %v8064 = vpack.c.b16 %v7560, %v7552
    %v8065 = vpack.c.b16 %v7561, %v7553
    %v8066 = vpack.c.b16 %v7562, %v7554
    %v8067 = vpack.c.b16 %v7563, %v7555
    %v8068 = vpack.c.b16 %v7564, %v7556
    %v8069 = vpack.c.b16 %v7565, %v7557
    %v8070 = vpack.c.b16 %v7566, %v7558
    %v8071 = vpack.c.b16 %v7575, %v7567
    %v8072 = vpack.c.b16 %v7576, %v7568
    %v8073 = vpack.c.b16 %v7577, %v7569
    %v8074 = vpack.c.b16 %v7578, %v7570
    %v8075 = vpack.c.b16 %v7579, %v7571
    %v8076 = vpack.c.b16 %v7580, %v7572
    %v8077 = vpack.c.b16 %v7581, %v7573
    %v8078 = vpack.c.b16 %v7582, %v7574
    %v8079 = vpack.c.b16 %v7591, %v7583
    %v8080 = vpack.c.b16 %v7592, %v7584
    %v8081 = vpack.c.b16 %v7593, %v7585
    %v8082 = vpack.c.b16 %v7594, %v7586
    %v8083 = vpack.c.b16 %v7595, %v7587
    %v8084 = vpack.c.b16 %v7596, %v7588
    %v8085 = vpack.c.b16 %v7597, %v7589
    %v8086 = vpack.c.b16 %v7598, %v7590
    %v8087 = vpack.c.b16 %v7607, %v7599
    %v8088 = vpack.c.b16 %v7608, %v7600
    %v8089 = vpack.c.b16 %v7609, %v7601
    %v8090 = vpack.c.b16 %v7610, %v7602
    %v8091 = vpack.c.b16 %v7611, %v7603
    %v8092 = vpack.c.b16 %v7612, %v7604
    %v8093 = vpack.c.b16 %v7613, %v7605
    %v8094 = vpack.c.b16 %v7614, %v7606
    %v8095 = vpack.c.b16 %v7623, %v7615
    %v8096 = vpack.c.b16 %v7624, %v7616
    %v8097 = vpack.c.b16 %v7625, %v7617
    %v8098 = vpack.c.b16 %v7626, %v7618
    %v8099 = vpack.c.b16 %v7627, %v7619
    %v8100 = vpack.c.b16 %v7628, %v7620
    %v8101 = vpack.c.b16 %v7629, %v7621
    %v8102 = vpack.c.b16 %v7630, %v7622
    %v8103 = vpack.c.b16 %v7639, %v7631
    %v8104 = vpack.c.b16 %v7640, %v7632
    %v8105 = vpack.c.b16 %v7641, %v7633
    %v8106 = vpack.c.b16 %v7642, %v7634
    %v8107 = vpack.c.b16 %v7643, %v7635
    %v8108 = vpack.c.b16 %v7644, %v7636
    %v8109 = vpack.c.b16 %v7645, %v7637
    %v8110 = vpack.c.b16 %v7646, %v7638
    %v8111 = vpack.c.b16 %v7655, %v7647
    %v8112 = vpack.c.b16 %v7656, %v7648
    %v8113 = vpack.c.b16 %v7657, %v7649
    %v8114 = vpack.c.b16 %v7658, %v7650
    %v8115 = vpack.c.b16 %v7659, %v7651
    %v8116 = vpack.c.b16 %v7660, %v7652
    %v8117 = vpack.c.b16 %v7661, %v7653
    %v8118 = vpack.c.b16 %v7662, %v7654
    %v8119 = vpack.c.b16 %v7671, %v7663
    %v8120 = vpack.c.b16 %v7672, %v7664
    %v8121 = vpack.c.b16 %v7673, %v7665
    %v8122 = vpack.c.b16 %v7674, %v7666
    %v8123 = vpack.c.b16 %v7675, %v7667
    %v8124 = vpack.c.b16 %v7676, %v7668
    %v8125 = vpack.c.b16 %v7677, %v7669
    %v8126 = vpack.c.b16 %v7678, %v7670
    %v8127 = vpack.c.b16 %v7687, %v7679
    %v8128 = vpack.c.b16 %v7688, %v7680
    %v8129 = vpack.c.b16 %v7689, %v7681
    %v8130 = vpack.c.b16 %v7690, %v7682
    %v8131 = vpack.c.b16 %v7691, %v7683
    %v8132 = vpack.c.b16 %v7692, %v7684
    %v8133 = vpack.c.b16 %v7693, %v7685
    %v8134 = vpack.c.b16 %v7694, %v7686
    %v8135 = vpack.c.b16 %v7703, %v7695
    %v8136 = vpack.c.b16 %v7704, %v7696
    %v8137 = vpack.c.b16 %v7705, %v7697
    %v8138 = vpack.c.b16 %v7706, %v7698
    %v8139 = vpack.c.b16 %v7707, %v7699
    %v8140 = vpack.c.b16 %v7708, %v7700
    %v8141 = vpack.c.b16 %v7709, %v7701
    %v8142 = vpack.c.b16 %v7710, %v7702
    %v8143 = vpack.c.b16 %v7719, %v7711
    %v8144 = vpack.c.b16 %v7720, %v7712
    %v8145 = vpack.c.b16 %v7721, %v7713
    %v8146 = vpack.c.b16 %v7722, %v7714
    %v8147 = vpack.c.b16 %v7723, %v7715
    %v8148 = vpack.c.b16 %v7724, %v7716
    %v8149 = vpack.c.b16 %v7725, %v7717
    %v8150 = vpack.c.b16 %v7726, %v7718
    %v8151 = vpack.c.b16 %v7735, %v7727
    %v8152 = vpack.c.b16 %v7736, %v7728
    %v8153 = vpack.c.b16 %v7737, %v7729
    %v8154 = vpack.c.b16 %v7738, %v7730
    %v8155 = vpack.c.b16 %v7739, %v7731
    %v8156 = vpack.c.b16 %v7740, %v7732
    %v8157 = vpack.c.b16 %v7741, %v7733
    %v8158 = vpack.c.b16 %v7742, %v7734
    %v8159 = vpack.c.b16 %v7751, %v7743
    %v8160 = vpack.c.b16 %v7752, %v7744
    %v8161 = vpack.c.b16 %v7753, %v7745
    %v8162 = vpack.c.b16 %v7754, %v7746
    %v8163 = vpack.c.b16 %v7755, %v7747
    %v8164 = vpack.c.b16 %v7756, %v7748
    %v8165 = vpack.c.b16 %v7757, %v7749
    %v8166 = vpack.c.b16 %v7758, %v7750
    %v8167 = vpack.c.b16 %v7767, %v7759
    %v8168 = vpack.c.b16 %v7768, %v7760
    %v8169 = vpack.c.b16 %v7769, %v7761
    %v8170 = vpack.c.b16 %v7770, %v7762
    %v8171 = vpack.c.b16 %v7771, %v7763
    %v8172 = vpack.c.b16 %v7772, %v7764
    %v8173 = vpack.c.b16 %v7773, %v7765
    %v8174 = vpack.c.b16 %v7774, %v7766
    %v8175 = vpack.c.b16 %v7783, %v7775
    %v8176 = vpack.c.b16 %v7784, %v7776
    %v8177 = vpack.c.b16 %v7785, %v7777
    %v8178 = vpack.c.b16 %v7786, %v7778
    %v8179 = vpack.c.b16 %v7787, %v7779
    %v8180 = vpack.c.b16 %v7788, %v7780
    %v8181 = vpack.c.b16 %v7789, %v7781
    %v8182 = vpack.c.b16 %v7790, %v7782
    %v8183 = vpack.c.b16 %v7799, %v7791
    %v8184 = vpack.c.b16 %v7800, %v7792
    %v8185 = vpack.c.b16 %v7801, %v7793
    %v8186 = vpack.c.b16 %v7802, %v7794
    %v8187 = vpack.c.b16 %v7803, %v7795
    %v8188 = vpack.c.b16 %v7804, %v7796
    %v8189 = vpack.c.b16 %v7805, %v7797
    %v8190 = vpack.c.b16 %v7806, %v7798
    %v8191 = vpack.c.b16 %v7815, %v7807
    %v8192 = vpack.c.b16 %v7816, %v7808
    %v8193 = vpack.c.b16 %v7817, %v7809
    %v8194 = vpack.c.b16 %v7818, %v7810
    %v8195 = vpack.c.b16 %v7819, %v7811
    %v8196 = vpack.c.b16 %v7820, %v7812
    %v8197 = vpack.c.b16 %v7821, %v7813
    %v8198 = vpack.c.b16 %v7822, %v7814
    %v8199 = vpack.c.b16 %v7831, %v7823
    %v8200 = vpack.c.b16 %v7832, %v7824
    %v8201 = vpack.c.b16 %v7833, %v7825
    %v8202 = vpack.c.b16 %v7834, %v7826
    %v8203 = vpack.c.b16 %v7835, %v7827
    %v8204 = vpack.c.b16 %v7836, %v7828
    %v8205 = vpack.c.b16 %v7837, %v7829
    %v8206 = vpack.c.b16 %v7838, %v7830
    %v8207 = vpack.c.b16 %v7847, %v7839
    %v8208 = vpack.c.b16 %v7848, %v7840
    %v8209 = vpack.c.b16 %v7849, %v7841
    %v8210 = vpack.c.b16 %v7850, %v7842
    %v8211 = vpack.c.b16 %v7851, %v7843
    %v8212 = vpack.c.b16 %v7852, %v7844
    %v8213 = vpack.c.b16 %v7853, %v7845
    %v8214 = vpack.c.b16 %v7854, %v7846
    %v8215 = vpack.c.b16 %v7863, %v7855
    %v8216 = vpack.c.b16 %v7864, %v7856
    %v8217 = vpack.c.b16 %v7865, %v7857
    %v8218 = vpack.c.b16 %v7866, %v7858
    %v8219 = vpack.c.b16 %v7867, %v7859
    %v8220 = vpack.c.b16 %v7868, %v7860
    %v8221 = vpack.c.b16 %v7869, %v7861
    %v8222 = vpack.c.b16 %v7870, %v7862
    %v8223 = vpack.c.b16 %v7879, %v7871
    %v8224 = vpack.c.b16 %v7880, %v7872
    %v8225 = vpack.c.b16 %v7881, %v7873
    %v8226 = vpack.c.b16 %v7882, %v7874
    %v8227 = vpack.c.b16 %v7883, %v7875
    %v8228 = vpack.c.b16 %v7884, %v7876
    %v8229 = vpack.c.b16 %v7885, %v7877
    %v8230 = vpack.c.b16 %v7886, %v7878
    %v8231 = vpack.c.b16 %v7895, %v7887
    %v8232 = vpack.c.b16 %v7896, %v7888
    %v8233 = vpack.c.b16 %v7897, %v7889
    %v8234 = vpack.c.b16 %v7898, %v7890
    %v8235 = vpack.c.b16 %v7899, %v7891
    %v8236 = vpack.c.b16 %v7900, %v7892
    %v8237 = vpack.c.b16 %v7901, %v7893
    %v8238 = vpack.c.b16 %v7902, %v7894
    %v8239 = vpack.c.b16 %v7911, %v7903
    %v8240 = vpack.c.b16 %v7912, %v7904
    %v8241 = vpack.c.b16 %v7913, %v7905
    %v8242 = vpack.c.b16 %v7914, %v7906
    %v8243 = vpack.c.b16 %v7915, %v7907
    %v8244 = vpack.c.b16 %v7916, %v7908
    %v8245 = vpack.c.b16 %v7917, %v7909
    %v8246 = vpack.c.b16 %v7918, %v7910
    %v8247 = vpack.c.b16 %v7927, %v7919
    %v8248 = vpack.c.b16 %v7928, %v7920
    %v8249 = vpack.c.b16 %v7929, %v7921
    %v8250 = vpack.c.b16 %v7930, %v7922
    %v8251 = vpack.c.b16 %v7931, %v7923
    %v8252 = vpack.c.b16 %v7932, %v7924
    %v8253 = vpack.c.b16 %v7933, %v7925
    %v8254 = vpack.c.b16 %v7934, %v7926
    %v8255 = vpack.c.b16 %v7943, %v7935
    %v8256 = vpack.c.b16 %v7944, %v7936
    %v8257 = vpack.c.b16 %v7945, %v7937
    %v8258 = vpack.c.b16 %v7946, %v7938
    %v8259 = vpack.c.b16 %v7947, %v7939
    %v8260 = vpack.c.b16 %v7948, %v7940
    %v8261 = vpack.c.b16 %v7949, %v7941
    %v8262 = vpack.c.b16 %v7950, %v7942
    %v8263 = vpack.c.b16 %v7959, %v7951
    %v8264 = vpack.c.b16 %v7960, %v7952
    %v8265 = vpack.c.b16 %v7961, %v7953
    %v8266 = vpack.c.b16 %v7962, %v7954
    %v8267 = vpack.c.b16 %v7963, %v7955
    %v8268 = vpack.c.b16 %v7964, %v7956
    %v8269 = vpack.c.b16 %v7965, %v7957
    %v8270 = vpack.c.b16 %v7966, %v7958
    %v8271 = vpack.c.b16 %v7975, %v7967
    %v8272 = vpack.c.b16 %v7976, %v7968
    %v8273 = vpack.c.b16 %v7977, %v7969
    %v8274 = vpack.c.b16 %v7978, %v7970
    %v8275 = vpack.c.b16 %v7979, %v7971
    %v8276 = vpack.c.b16 %v7980, %v7972
    %v8277 = vpack.c.b16 %v7981, %v7973
    %v8278 = vpack.c.b16 %v7982, %v7974
    %v8279 = vpack.c.b16 %v7991, %v7983
    %v8280 = vpack.c.b16 %v7992, %v7984
    %v8281 = vpack.c.b16 %v7993, %v7985
    %v8282 = vpack.c.b16 %v7994, %v7986
    %v8283 = vpack.c.b16 %v7995, %v7987
    %v8284 = vpack.c.b16 %v7996, %v7988
    %v8285 = vpack.c.b16 %v7997, %v7989
    %v8286 = vpack.c.b16 %v7998, %v7990
    %v8287 = vpack.c.b16 %v8007, %v7999
    %v8288 = vpack.c.b16 %v8008, %v8000
    %v8289 = vpack.c.b16 %v8009, %v8001
    %v8290 = vpack.c.b16 %v8010, %v8002
    %v8291 = vpack.c.b16 %v8011, %v8003
    %v8292 = vpack.c.b16 %v8012, %v8004
    %v8293 = vpack.c.b16 %v8013, %v8005
    %v8294 = vpack.c.b16 %v8014, %v8006
    %v8295 = vpack.c.b16 %v8023, %v8015
    %v8296 = vpack.c.b16 %v8024, %v8016
    %v8297 = vpack.c.b16 %v8025, %v8017
    %v8298 = vpack.c.b16 %v8026, %v8018
    %v8299 = vpack.c.b16 %v8027, %v8019
    %v8300 = vpack.c.b16 %v8028, %v8020
    %v8301 = vpack.c.b16 %v8029, %v8021
    %v8302 = vpack.c.b16 %v8030, %v8022
    %v8303 = vpack.c.b16 %v8039, %v8031
    %v8304 = vpack.c.b16 %v8040, %v8032
    %v8305 = vpack.c.b16 %v8041, %v8033
    %v8306 = vpack.c.b16 %v8042, %v8034
    %v8307 = vpack.c.b16 %v8043, %v8035
    %v8308 = vpack.c.b16 %v8044, %v8036
    %v8309 = vpack.c.b16 %v8045, %v8037
    %v8310 = vpack.c.b16 %v8046, %v8038
    %v8311 = vpack.c.b16 %v8055, %v8047
    %v8312 = vpack.c.b16 %v8056, %v8048
    %v8313 = vpack.c.b16 %v8057, %v8049
    %v8314 = vpack.c.b16 %v8058, %v8050
    %v8315 = vpack.c.b16 %v8059, %v8051
    %v8316 = vpack.c.b16 %v8060, %v8052
    %v8317 = vpack.c.b16 %v8061, %v8053
    %v8318 = vpack.c.b16 %v8062, %v8054
    %8575 = vmatprep.subr.bf16.mxu0 0
    %8576 = vmatpush1.bf16.msra.mxu0 %v6847
    %8577 = vmatprep.subr.bf16.mxu0 0
    %8578 = vmatpush1.bf16.msra.mxu0 %v6848
    %8579 = vmatprep.subr.bf16.mxu0 0
    %8580 = vmatpush1.bf16.msra.mxu0 %v6849
    %8581 = vmatprep.subr.bf16.mxu0 0
    %8582 = vmatpush1.bf16.msra.mxu0 %v6850
    %8583 = vmatprep.subr.bf16.mxu0 0
    %8584 = vmatpush1.bf16.msra.mxu0 %v6851
    %8585 = vmatprep.subr.bf16.mxu0 0
    %8586 = vmatpush1.bf16.msra.mxu0 %v6852
    %8587 = vmatprep.subr.bf16.mxu0 0
    %8588 = vmatpush1.bf16.msra.mxu0 %v6853
    %8589 = vmatprep.subr.bf16.mxu0 0
    %8590 = vmatpush1.bf16.msra.mxu0 %v6854
    %8591 = vmatprep.subr.bf16.mxu0 0
    %8592 = vmatpush1.bf16.msra.mxu0 %v6855
    %8593 = vmatprep.subr.bf16.mxu0 0
    %8594 = vmatpush1.bf16.msra.mxu0 %v6856
    %8595 = vmatprep.subr.bf16.mxu0 0
    %8596 = vmatpush1.bf16.msra.mxu0 %v6857
    %8597 = vmatprep.subr.bf16.mxu0 0
    %8598 = vmatpush1.bf16.msra.mxu0 %v6858
    %8599 = vmatprep.subr.bf16.mxu0 0
    %8600 = vmatpush1.bf16.msra.mxu0 %v6859
    %8601 = vmatprep.subr.bf16.mxu0 0
    %8602 = vmatpush1.bf16.msra.mxu0 %v6860
    %8603 = vmatprep.subr.bf16.mxu0 0
    %8604 = vmatpush1.bf16.msra.mxu0 %v6861
    %8605 = vmatprep.subr.bf16.mxu0 0
    %8606 = vmatpush1.bf16.msra.mxu0 %v6862
    %8607 = vmatprep.mubr.bf16.mxu0 %v8064
    %8608 = vmatmul.mubr.bf16.gmra.mrb[0].mxu0 %v8063
    %v8609 = vpop.f32.mrb[0].mxu0
    %v8610 = vadd.f32 %v6978, %v8609
    %v8611 = vpop.f32.mrb[0].mxu0
    %v8612 = vpop.f32.mrb[0].mxu0
    %v8613 = vadd.f32 %v6983, %v8612
    %v8614 = vpop.f32.mrb[0].mxu0
    %8615 = vmatprep.mubr.bf16.mxu0 %v8072
    %8616 = vmatmul.mubr.bf16.gmra.mrb[0].mxu0 %v8071
    %v8617 = vpop.f32.mrb[0].mxu0
    %v8618 = vadd.f32 %v6988, %v8617
    %v8619 = vpop.f32.mrb[0].mxu0
    %v8620 = vpop.f32.mrb[0].mxu0
    %v8621 = vadd.f32 %v6993, %v8620
    %v8622 = vpop.f32.mrb[0].mxu0
    %8623 = vmatprep.mubr.bf16.mxu0 %v8080
    %8624 = vmatmul.mubr.bf16.gmra.mrb[0].mxu0 %v8079
    %v8625 = vpop.f32.mrb[0].mxu0
    %v8626 = vadd.f32 %v6998, %v8625
    %v8627 = vpop.f32.mrb[0].mxu0
    %v8628 = vpop.f32.mrb[0].mxu0
    %v8629 = vadd.f32 %v7003, %v8628
    %v8630 = vpop.f32.mrb[0].mxu0
    %8631 = vmatprep.mubr.bf16.mxu0 %v8088
    %8632 = vmatmul.mubr.bf16.gmra.mrb[0].mxu0 %v8087
    %v8633 = vpop.f32.mrb[0].mxu0
    %v8634 = vadd.f32 %v7008, %v8633
    %v8635 = vpop.f32.mrb[0].mxu0
    %v8636 = vpop.f32.mrb[0].mxu0
    %v8637 = vadd.f32 %v7013, %v8636
    %v8638 = vpop.f32.mrb[0].mxu0
    %8639 = vmatprep.mubr.bf16.mxu0 %v8096
    %8640 = vmatmul.mubr.bf16.gmra.mrb[0].mxu0 %v8095
    %v8641 = vpop.f32.mrb[0].mxu0
    %v8642 = vadd.f32 %v7018, %v8641
    %v8643 = vpop.f32.mrb[0].mxu0
    %v8644 = vpop.f32.mrb[0].mxu0
    %v8645 = vadd.f32 %v7023, %v8644
    %v8646 = vpop.f32.mrb[0].mxu0
    %8647 = vmatprep.mubr.bf16.mxu0 %v8104
    %8648 = vmatmul.mubr.bf16.gmra.mrb[0].mxu0 %v8103
    %v8649 = vpop.f32.mrb[0].mxu0
    %v8650 = vadd.f32 %v7028, %v8649
    %v8651 = vpop.f32.mrb[0].mxu0
    %v8652 = vpop.f32.mrb[0].mxu0
    %v8653 = vadd.f32 %v7033, %v8652
    %v8654 = vpop.f32.mrb[0].mxu0
    %8655 = vmatprep.mubr.bf16.mxu0 %v8112
    %8656 = vmatmul.mubr.bf16.gmra.mrb[0].mxu0 %v8111
    %v8657 = vpop.f32.mrb[0].mxu0
    %v8658 = vadd.f32 %v7038, %v8657
    %v8659 = vpop.f32.mrb[0].mxu0
    %v8660 = vpop.f32.mrb[0].mxu0
    %v8661 = vadd.f32 %v7043, %v8660
    %v8662 = vpop.f32.mrb[0].mxu0
    %8663 = vmatprep.mubr.bf16.mxu0 %v8120
    %8664 = vmatmul.mubr.bf16.gmra.mrb[0].mxu0 %v8119
    %v8665 = vpop.f32.mrb[0].mxu0
    %v8666 = vadd.f32 %v7048, %v8665
    %v8667 = vpop.f32.mrb[0].mxu0
    %v8668 = vpop.f32.mrb[0].mxu0
    %v8669 = vadd.f32 %v7053, %v8668
    %v8670 = vpop.f32.mrb[0].mxu0
    %8671 = vmatprep.mubr.bf16.mxu0 %v8128
    %8672 = vmatmul.mubr.bf16.gmra.mrb[0].mxu0 %v8127
    %v8673 = vpop.f32.mrb[0].mxu0
    %v8674 = vadd.f32 %v7058, %v8673
    %v8675 = vpop.f32.mrb[0].mxu0
    %v8676 = vpop.f32.mrb[0].mxu0
    %v8677 = vadd.f32 %v7063, %v8676
    %v8678 = vpop.f32.mrb[0].mxu0
    %8679 = vmatprep.mubr.bf16.mxu0 %v8136
    %8680 = vmatmul.mubr.bf16.gmra.mrb[0].mxu0 %v8135
    %v8681 = vpop.f32.mrb[0].mxu0
    %v8682 = vadd.f32 %v7068, %v8681
    %v8683 = vpop.f32.mrb[0].mxu0
    %v8684 = vpop.f32.mrb[0].mxu0
    %v8685 = vadd.f32 %v7073, %v8684
    %v8686 = vpop.f32.mrb[0].mxu0
    %8687 = vmatprep.mubr.bf16.mxu0 %v8144
    %8688 = vmatmul.mubr.bf16.gmra.mrb[0].mxu0 %v8143
    %v8689 = vpop.f32.mrb[0].mxu0
    %v8690 = vadd.f32 %v7078, %v8689
    %v8691 = vpop.f32.mrb[0].mxu0
    %v8692 = vpop.f32.mrb[0].mxu0
    %v8693 = vadd.f32 %v7083, %v8692
    %v8694 = vpop.f32.mrb[0].mxu0
    %8695 = vmatprep.mubr.bf16.mxu0 %v8152
    %8696 = vmatmul.mubr.bf16.gmra.mrb[0].mxu0 %v8151
    %v8697 = vpop.f32.mrb[0].mxu0
    %v8698 = vadd.f32 %v7088, %v8697
    %v8699 = vpop.f32.mrb[0].mxu0
    %v8700 = vpop.f32.mrb[0].mxu0
    %v8701 = vadd.f32 %v7093, %v8700
    %v8702 = vpop.f32.mrb[0].mxu0
    %8703 = vmatprep.mubr.bf16.mxu0 %v8160
    %8704 = vmatmul.mubr.bf16.gmra.mrb[0].mxu0 %v8159
    %v8705 = vpop.f32.mrb[0].mxu0
    %v8706 = vadd.f32 %v7098, %v8705
    %v8707 = vpop.f32.mrb[0].mxu0
    %v8708 = vpop.f32.mrb[0].mxu0
    %v8709 = vadd.f32 %v7103, %v8708
    %v8710 = vpop.f32.mrb[0].mxu0
    %8711 = vmatprep.mubr.bf16.mxu0 %v8168
    %8712 = vmatmul.mubr.bf16.gmra.mrb[0].mxu0 %v8167
    %v8713 = vpop.f32.mrb[0].mxu0
    %v8714 = vadd.f32 %v7108, %v8713
    %v8715 = vpop.f32.mrb[0].mxu0
    %v8716 = vpop.f32.mrb[0].mxu0
    %v8717 = vadd.f32 %v7113, %v8716
    %v8718 = vpop.f32.mrb[0].mxu0
    %8719 = vmatprep.mubr.bf16.mxu0 %v8176
    %8720 = vmatmul.mubr.bf16.gmra.mrb[0].mxu0 %v8175
    %v8721 = vpop.f32.mrb[0].mxu0
    %v8722 = vadd.f32 %v7118, %v8721
    %v8723 = vpop.f32.mrb[0].mxu0
    %v8724 = vpop.f32.mrb[0].mxu0
    %v8725 = vadd.f32 %v7123, %v8724
    %v8726 = vpop.f32.mrb[0].mxu0
    %8727 = vmatprep.mubr.bf16.mxu0 %v8184
    %8728 = vmatmul.mubr.bf16.gmra.mrb[0].mxu0 %v8183
    %v8729 = vpop.f32.mrb[0].mxu0
    %v8730 = vadd.f32 %v7128, %v8729
    %v8731 = vpop.f32.mrb[0].mxu0
    %v8732 = vpop.f32.mrb[0].mxu0
    %v8733 = vadd.f32 %v7133, %v8732
    %v8734 = vpop.f32.mrb[0].mxu0
    %8735 = vmatprep.mubr.bf16.mxu0 %v8192
    %8736 = vmatmul.mubr.bf16.gmra.mrb[0].mxu0 %v8191
    %v8737 = vpop.f32.mrb[0].mxu0
    %v8738 = vadd.f32 %v7138, %v8737
    %v8739 = vpop.f32.mrb[0].mxu0
    %v8740 = vpop.f32.mrb[0].mxu0
    %v8741 = vadd.f32 %v7143, %v8740
    %v8742 = vpop.f32.mrb[0].mxu0
    %8743 = vmatprep.mubr.bf16.mxu0 %v8200
    %8744 = vmatmul.mubr.bf16.gmra.mrb[0].mxu0 %v8199
    %v8745 = vpop.f32.mrb[0].mxu0
    %v8746 = vadd.f32 %v7148, %v8745
    %v8747 = vpop.f32.mrb[0].mxu0
    %v8748 = vpop.f32.mrb[0].mxu0
    %v8749 = vadd.f32 %v7153, %v8748
    %v8750 = vpop.f32.mrb[0].mxu0
    %8751 = vmatprep.mubr.bf16.mxu0 %v8208
    %8752 = vmatmul.mubr.bf16.gmra.mrb[0].mxu0 %v8207
    %v8753 = vpop.f32.mrb[0].mxu0
    %v8754 = vadd.f32 %v7158, %v8753
    %v8755 = vpop.f32.mrb[0].mxu0
    %v8756 = vpop.f32.mrb[0].mxu0
    %v8757 = vadd.f32 %v7163, %v8756
    %v8758 = vpop.f32.mrb[0].mxu0
    %8759 = vmatprep.mubr.bf16.mxu0 %v8216
    %8760 = vmatmul.mubr.bf16.gmra.mrb[0].mxu0 %v8215
    %v8761 = vpop.f32.mrb[0].mxu0
    %v8762 = vadd.f32 %v7168, %v8761
    %v8763 = vpop.f32.mrb[0].mxu0
    %v8764 = vpop.f32.mrb[0].mxu0
    %v8765 = vadd.f32 %v7173, %v8764
    %v8766 = vpop.f32.mrb[0].mxu0
    %8767 = vmatprep.mubr.bf16.mxu0 %v8224
    %8768 = vmatmul.mubr.bf16.gmra.mrb[0].mxu0 %v8223
    %v8769 = vpop.f32.mrb[0].mxu0
    %v8770 = vadd.f32 %v7178, %v8769
    %v8771 = vpop.f32.mrb[0].mxu0
    %v8772 = vpop.f32.mrb[0].mxu0
    %v8773 = vadd.f32 %v7183, %v8772
    %v8774 = vpop.f32.mrb[0].mxu0
    %8775 = vmatprep.mubr.bf16.mxu0 %v8232
    %8776 = vmatmul.mubr.bf16.gmra.mrb[0].mxu0 %v8231
    %v8777 = vpop.f32.mrb[0].mxu0
    %v8778 = vadd.f32 %v7188, %v8777
    %v8779 = vpop.f32.mrb[0].mxu0
    %v8780 = vpop.f32.mrb[0].mxu0
    %v8781 = vadd.f32 %v7193, %v8780
    %v8782 = vpop.f32.mrb[0].mxu0
    %8783 = vmatprep.mubr.bf16.mxu0 %v8240
    %8784 = vmatmul.mubr.bf16.gmra.mrb[0].mxu0 %v8239
    %v8785 = vpop.f32.mrb[0].mxu0
    %v8786 = vadd.f32 %v7198, %v8785
    %v8787 = vpop.f32.mrb[0].mxu0
    %v8788 = vpop.f32.mrb[0].mxu0
    %v8789 = vadd.f32 %v7203, %v8788
    %v8790 = vpop.f32.mrb[0].mxu0
    %8791 = vmatprep.mubr.bf16.mxu0 %v8248
    %8792 = vmatmul.mubr.bf16.gmra.mrb[0].mxu0 %v8247
    %v8793 = vpop.f32.mrb[0].mxu0
    %v8794 = vadd.f32 %v7208, %v8793
    %v8795 = vpop.f32.mrb[0].mxu0
    %v8796 = vpop.f32.mrb[0].mxu0
    %v8797 = vadd.f32 %v7213, %v8796
    %v8798 = vpop.f32.mrb[0].mxu0
    %8799 = vmatprep.mubr.bf16.mxu0 %v8256
    %8800 = vmatmul.mubr.bf16.gmra.mrb[0].mxu0 %v8255
    %v8801 = vpop.f32.mrb[0].mxu0
    %v8802 = vadd.f32 %v7218, %v8801
    %v8803 = vpop.f32.mrb[0].mxu0
    %v8804 = vpop.f32.mrb[0].mxu0
    %v8805 = vadd.f32 %v7223, %v8804
    %v8806 = vpop.f32.mrb[0].mxu0
    %8807 = vmatprep.mubr.bf16.mxu0 %v8264
    %8808 = vmatmul.mubr.bf16.gmra.mrb[0].mxu0 %v8263
    %v8809 = vpop.f32.mrb[0].mxu0
    %v8810 = vadd.f32 %v7228, %v8809
    %v8811 = vpop.f32.mrb[0].mxu0
    %v8812 = vpop.f32.mrb[0].mxu0
    %v8813 = vadd.f32 %v7233, %v8812
    %v8814 = vpop.f32.mrb[0].mxu0
    %8815 = vmatprep.mubr.bf16.mxu0 %v8272
    %8816 = vmatmul.mubr.bf16.gmra.mrb[0].mxu0 %v8271
    %v8817 = vpop.f32.mrb[0].mxu0
    %v8818 = vadd.f32 %v7238, %v8817
    %v8819 = vpop.f32.mrb[0].mxu0
    %v8820 = vpop.f32.mrb[0].mxu0
    %v8821 = vadd.f32 %v7243, %v8820
    %v8822 = vpop.f32.mrb[0].mxu0
    %8823 = vmatprep.mubr.bf16.mxu0 %v8280
    %8824 = vmatmul.mubr.bf16.gmra.mrb[0].mxu0 %v8279
    %v8825 = vpop.f32.mrb[0].mxu0
    %v8826 = vadd.f32 %v7248, %v8825
    %v8827 = vpop.f32.mrb[0].mxu0
    %v8828 = vpop.f32.mrb[0].mxu0
    %v8829 = vadd.f32 %v7253, %v8828
    %v8830 = vpop.f32.mrb[0].mxu0
    %8831 = vmatprep.mubr.bf16.mxu0 %v8288
    %8832 = vmatmul.mubr.bf16.gmra.mrb[0].mxu0 %v8287
    %v8833 = vpop.f32.mrb[0].mxu0
    %v8834 = vadd.f32 %v7258, %v8833
    %v8835 = vpop.f32.mrb[0].mxu0
    %v8836 = vpop.f32.mrb[0].mxu0
    %v8837 = vadd.f32 %v7263, %v8836
    %v8838 = vpop.f32.mrb[0].mxu0
    %8839 = vmatprep.mubr.bf16.mxu0 %v8296
    %8840 = vmatmul.mubr.bf16.gmra.mrb[0].mxu0 %v8295
    %v8841 = vpop.f32.mrb[0].mxu0
    %v8842 = vadd.f32 %v7268, %v8841
    %v8843 = vpop.f32.mrb[0].mxu0
    %v8844 = vpop.f32.mrb[0].mxu0
    %v8845 = vadd.f32 %v7273, %v8844
    %v8846 = vpop.f32.mrb[0].mxu0
    %8847 = vmatprep.mubr.bf16.mxu0 %v8304
    %8848 = vmatmul.mubr.bf16.gmra.mrb[0].mxu0 %v8303
    %v8849 = vpop.f32.mrb[0].mxu0
    %v8850 = vadd.f32 %v7278, %v8849
    %v8851 = vpop.f32.mrb[0].mxu0
    %v8852 = vpop.f32.mrb[0].mxu0
    %v8853 = vadd.f32 %v7283, %v8852
    %v8854 = vpop.f32.mrb[0].mxu0
    %8855 = vmatprep.mubr.bf16.mxu0 %v8312
    %8856 = vmatmul.mubr.bf16.gmra.mrb[0].mxu0 %v8311
    %v8857 = vpop.f32.mrb[0].mxu0
    %v8858 = vadd.f32 %v7288, %v8857
    %v8859 = vpop.f32.mrb[0].mxu0
    %v8860 = vpop.f32.mrb[0].mxu0
    %v8861 = vadd.f32 %v7293, %v8860
    %v8862 = vpop.f32.mrb[0].mxu0
    %8863 = vdwg.mxu0
    %8864 = vmatprep.subr.bf16.mxu0 0
    %8865 = vmatpush1.bf16.msra.mxu0 %v6863
    %8866 = vmatprep.subr.bf16.mxu0 0
    %8867 = vmatpush1.bf16.msra.mxu0 %v6864
    %8868 = vmatprep.subr.bf16.mxu0 0
    %8869 = vmatpush1.bf16.msra.mxu0 %v6865
    %8870 = vmatprep.subr.bf16.mxu0 0
    %8871 = vmatpush1.bf16.msra.mxu0 %v6866
    %8872 = vmatprep.subr.bf16.mxu0 0
    %8873 = vmatpush1.bf16.msra.mxu0 %v6867
    %8874 = vmatprep.subr.bf16.mxu0 0
    %8875 = vmatpush1.bf16.msra.mxu0 %v6868
    %8876 = vmatprep.subr.bf16.mxu0 0
    %8877 = vmatpush1.bf16.msra.mxu0 %v6869
    %8878 = vmatprep.subr.bf16.mxu0 0
    %8879 = vmatpush1.bf16.msra.mxu0 %v6870
    %8880 = vmatprep.subr.bf16.mxu0 0
    %8881 = vmatpush1.bf16.msra.mxu0 %v6871
    %8882 = vmatprep.subr.bf16.mxu0 0
    %8883 = vmatpush1.bf16.msra.mxu0 %v6872
    %8884 = vmatprep.subr.bf16.mxu0 0
    %8885 = vmatpush1.bf16.msra.mxu0 %v6873
    %8886 = vmatprep.subr.bf16.mxu0 0
    %8887 = vmatpush1.bf16.msra.mxu0 %v6874
    %8888 = vmatprep.subr.bf16.mxu0 0
    %8889 = vmatpush1.bf16.msra.mxu0 %v6875
    %8890 = vmatprep.subr.bf16.mxu0 0
    %8891 = vmatpush1.bf16.msra.mxu0 %v6876
    %8892 = vmatprep.subr.bf16.mxu0 0
    %8893 = vmatpush1.bf16.msra.mxu0 %v6877
    %8894 = vmatprep.subr.bf16.mxu0 0
    %8895 = vmatpush1.bf16.msra.mxu0 %v6878
    %8896 = vmatprep.mubr.bf16.mxu0 %v8066
    %8897 = vmatmul.mubr.bf16.gmra.mrb[0].mxu0 %v8065
    %v8898 = vpop.f32.mrb[0].mxu0
    %v8899 = vadd.f32 %v8610, %v8898
    %v8900 = vpop.f32.mrb[0].mxu0
    %v8901 = vpop.f32.mrb[0].mxu0
    %v8902 = vadd.f32 %v8613, %v8901
    %v8903 = vpop.f32.mrb[0].mxu0
    %8904 = vmatprep.mubr.bf16.mxu0 %v8074
    %8905 = vmatmul.mubr.bf16.gmra.mrb[0].mxu0 %v8073
    %v8906 = vpop.f32.mrb[0].mxu0
    %v8907 = vadd.f32 %v8618, %v8906
    %v8908 = vpop.f32.mrb[0].mxu0
    %v8909 = vpop.f32.mrb[0].mxu0
    %v8910 = vadd.f32 %v8621, %v8909
    %v8911 = vpop.f32.mrb[0].mxu0
    %8912 = vmatprep.mubr.bf16.mxu0 %v8082
    %8913 = vmatmul.mubr.bf16.gmra.mrb[0].mxu0 %v8081
    %v8914 = vpop.f32.mrb[0].mxu0
    %v8915 = vadd.f32 %v8626, %v8914
    %v8916 = vpop.f32.mrb[0].mxu0
    %v8917 = vpop.f32.mrb[0].mxu0
    %v8918 = vadd.f32 %v8629, %v8917
    %v8919 = vpop.f32.mrb[0].mxu0
    %8920 = vmatprep.mubr.bf16.mxu0 %v8090
    %8921 = vmatmul.mubr.bf16.gmra.mrb[0].mxu0 %v8089
    %v8922 = vpop.f32.mrb[0].mxu0
    %v8923 = vadd.f32 %v8634, %v8922
    %v8924 = vpop.f32.mrb[0].mxu0
    %v8925 = vpop.f32.mrb[0].mxu0
    %v8926 = vadd.f32 %v8637, %v8925
    %v8927 = vpop.f32.mrb[0].mxu0
    %8928 = vmatprep.mubr.bf16.mxu0 %v8098
    %8929 = vmatmul.mubr.bf16.gmra.mrb[0].mxu0 %v8097
    %v8930 = vpop.f32.mrb[0].mxu0
    %v8931 = vadd.f32 %v8642, %v8930
    %v8932 = vpop.f32.mrb[0].mxu0
    %v8933 = vpop.f32.mrb[0].mxu0
    %v8934 = vadd.f32 %v8645, %v8933
    %v8935 = vpop.f32.mrb[0].mxu0
    %8936 = vmatprep.mubr.bf16.mxu0 %v8106
    %8937 = vmatmul.mubr.bf16.gmra.mrb[0].mxu0 %v8105
    %v8938 = vpop.f32.mrb[0].mxu0
    %v8939 = vadd.f32 %v8650, %v8938
    %v8940 = vpop.f32.mrb[0].mxu0
    %v8941 = vpop.f32.mrb[0].mxu0
    %v8942 = vadd.f32 %v8653, %v8941
    %v8943 = vpop.f32.mrb[0].mxu0
    %8944 = vmatprep.mubr.bf16.mxu0 %v8114
    %8945 = vmatmul.mubr.bf16.gmra.mrb[0].mxu0 %v8113
    %v8946 = vpop.f32.mrb[0].mxu0
    %v8947 = vadd.f32 %v8658, %v8946
    %v8948 = vpop.f32.mrb[0].mxu0
    %v8949 = vpop.f32.mrb[0].mxu0
    %v8950 = vadd.f32 %v8661, %v8949
    %v8951 = vpop.f32.mrb[0].mxu0
    %8952 = vmatprep.mubr.bf16.mxu0 %v8122
    %8953 = vmatmul.mubr.bf16.gmra.mrb[0].mxu0 %v8121
    %v8954 = vpop.f32.mrb[0].mxu0
    %v8955 = vadd.f32 %v8666, %v8954
    %v8956 = vpop.f32.mrb[0].mxu0
    %v8957 = vpop.f32.mrb[0].mxu0
    %v8958 = vadd.f32 %v8669, %v8957
    %v8959 = vpop.f32.mrb[0].mxu0
    %8960 = vmatprep.mubr.bf16.mxu0 %v8130
    %8961 = vmatmul.mubr.bf16.gmra.mrb[0].mxu0 %v8129
    %v8962 = vpop.f32.mrb[0].mxu0
    %v8963 = vadd.f32 %v8674, %v8962
    %v8964 = vpop.f32.mrb[0].mxu0
    %v8965 = vpop.f32.mrb[0].mxu0
    %v8966 = vadd.f32 %v8677, %v8965
    %v8967 = vpop.f32.mrb[0].mxu0
    %8968 = vmatprep.mubr.bf16.mxu0 %v8138
    %8969 = vmatmul.mubr.bf16.gmra.mrb[0].mxu0 %v8137
    %v8970 = vpop.f32.mrb[0].mxu0
    %v8971 = vadd.f32 %v8682, %v8970
    %v8972 = vpop.f32.mrb[0].mxu0
    %v8973 = vpop.f32.mrb[0].mxu0
    %v8974 = vadd.f32 %v8685, %v8973
    %v8975 = vpop.f32.mrb[0].mxu0
    %8976 = vmatprep.mubr.bf16.mxu0 %v8146
    %8977 = vmatmul.mubr.bf16.gmra.mrb[0].mxu0 %v8145
    %v8978 = vpop.f32.mrb[0].mxu0
    %v8979 = vadd.f32 %v8690, %v8978
    %v8980 = vpop.f32.mrb[0].mxu0
    %v8981 = vpop.f32.mrb[0].mxu0
    %v8982 = vadd.f32 %v8693, %v8981
    %v8983 = vpop.f32.mrb[0].mxu0
    %8984 = vmatprep.mubr.bf16.mxu0 %v8154
    %8985 = vmatmul.mubr.bf16.gmra.mrb[0].mxu0 %v8153
    %v8986 = vpop.f32.mrb[0].mxu0
    %v8987 = vadd.f32 %v8698, %v8986
    %v8988 = vpop.f32.mrb[0].mxu0
    %v8989 = vpop.f32.mrb[0].mxu0
    %v8990 = vadd.f32 %v8701, %v8989
    %v8991 = vpop.f32.mrb[0].mxu0
    %8992 = vmatprep.mubr.bf16.mxu0 %v8162
    %8993 = vmatmul.mubr.bf16.gmra.mrb[0].mxu0 %v8161
    %v8994 = vpop.f32.mrb[0].mxu0
    %v8995 = vadd.f32 %v8706, %v8994
    %v8996 = vpop.f32.mrb[0].mxu0
    %v8997 = vpop.f32.mrb[0].mxu0
    %v8998 = vadd.f32 %v8709, %v8997
    %v8999 = vpop.f32.mrb[0].mxu0
    %9000 = vmatprep.mubr.bf16.mxu0 %v8170
    %9001 = vmatmul.mubr.bf16.gmra.mrb[0].mxu0 %v8169
    %v9002 = vpop.f32.mrb[0].mxu0
    %v9003 = vadd.f32 %v8714, %v9002
    %v9004 = vpop.f32.mrb[0].mxu0
    %v9005 = vpop.f32.mrb[0].mxu0
    %v9006 = vadd.f32 %v8717, %v9005
    %v9007 = vpop.f32.mrb[0].mxu0
    %9008 = vmatprep.mubr.bf16.mxu0 %v8178
    %9009 = vmatmul.mubr.bf16.gmra.mrb[0].mxu0 %v8177
    %v9010 = vpop.f32.mrb[0].mxu0
    %v9011 = vadd.f32 %v8722, %v9010
    %v9012 = vpop.f32.mrb[0].mxu0
    %v9013 = vpop.f32.mrb[0].mxu0
    %v9014 = vadd.f32 %v8725, %v9013
    %v9015 = vpop.f32.mrb[0].mxu0
    %9016 = vmatprep.mubr.bf16.mxu0 %v8186
    %9017 = vmatmul.mubr.bf16.gmra.mrb[0].mxu0 %v8185
    %v9018 = vpop.f32.mrb[0].mxu0
    %v9019 = vadd.f32 %v8730, %v9018
    %v9020 = vpop.f32.mrb[0].mxu0
    %v9021 = vpop.f32.mrb[0].mxu0
    %v9022 = vadd.f32 %v8733, %v9021
    %v9023 = vpop.f32.mrb[0].mxu0
    %9024 = vmatprep.mubr.bf16.mxu0 %v8194
    %9025 = vmatmul.mubr.bf16.gmra.mrb[0].mxu0 %v8193
    %v9026 = vpop.f32.mrb[0].mxu0
    %v9027 = vadd.f32 %v8738, %v9026
    %v9028 = vpop.f32.mrb[0].mxu0
    %v9029 = vpop.f32.mrb[0].mxu0
    %v9030 = vadd.f32 %v8741, %v9029
    %v9031 = vpop.f32.mrb[0].mxu0
    %9032 = vmatprep.mubr.bf16.mxu0 %v8202
    %9033 = vmatmul.mubr.bf16.gmra.mrb[0].mxu0 %v8201
    %v9034 = vpop.f32.mrb[0].mxu0
    %v9035 = vadd.f32 %v8746, %v9034
    %v9036 = vpop.f32.mrb[0].mxu0
    %v9037 = vpop.f32.mrb[0].mxu0
    %v9038 = vadd.f32 %v8749, %v9037
    %v9039 = vpop.f32.mrb[0].mxu0
    %9040 = vmatprep.mubr.bf16.mxu0 %v8210
    %9041 = vmatmul.mubr.bf16.gmra.mrb[0].mxu0 %v8209
    %v9042 = vpop.f32.mrb[0].mxu0
    %v9043 = vadd.f32 %v8754, %v9042
    %v9044 = vpop.f32.mrb[0].mxu0
    %v9045 = vpop.f32.mrb[0].mxu0
    %v9046 = vadd.f32 %v8757, %v9045
    %v9047 = vpop.f32.mrb[0].mxu0
    %9048 = vmatprep.mubr.bf16.mxu0 %v8218
    %9049 = vmatmul.mubr.bf16.gmra.mrb[0].mxu0 %v8217
    %v9050 = vpop.f32.mrb[0].mxu0
    %v9051 = vadd.f32 %v8762, %v9050
    %v9052 = vpop.f32.mrb[0].mxu0
    %v9053 = vpop.f32.mrb[0].mxu0
    %v9054 = vadd.f32 %v8765, %v9053
    %v9055 = vpop.f32.mrb[0].mxu0
    %9056 = vmatprep.mubr.bf16.mxu0 %v8226
    %9057 = vmatmul.mubr.bf16.gmra.mrb[0].mxu0 %v8225
    %v9058 = vpop.f32.mrb[0].mxu0
    %v9059 = vadd.f32 %v8770, %v9058
    %v9060 = vpop.f32.mrb[0].mxu0
    %v9061 = vpop.f32.mrb[0].mxu0
    %v9062 = vadd.f32 %v8773, %v9061
    %v9063 = vpop.f32.mrb[0].mxu0
    %9064 = vmatprep.mubr.bf16.mxu0 %v8234
    %9065 = vmatmul.mubr.bf16.gmra.mrb[0].mxu0 %v8233
    %v9066 = vpop.f32.mrb[0].mxu0
    %v9067 = vadd.f32 %v8778, %v9066
    %v9068 = vpop.f32.mrb[0].mxu0
    %v9069 = vpop.f32.mrb[0].mxu0
    %v9070 = vadd.f32 %v8781, %v9069
    %v9071 = vpop.f32.mrb[0].mxu0
    %9072 = vmatprep.mubr.bf16.mxu0 %v8242
    %9073 = vmatmul.mubr.bf16.gmra.mrb[0].mxu0 %v8241
    %v9074 = vpop.f32.mrb[0].mxu0
    %v9075 = vadd.f32 %v8786, %v9074
    %v9076 = vpop.f32.mrb[0].mxu0
    %v9077 = vpop.f32.mrb[0].mxu0
    %v9078 = vadd.f32 %v8789, %v9077
    %v9079 = vpop.f32.mrb[0].mxu0
    %9080 = vmatprep.mubr.bf16.mxu0 %v8250
    %9081 = vmatmul.mubr.bf16.gmra.mrb[0].mxu0 %v8249
    %v9082 = vpop.f32.mrb[0].mxu0
    %v9083 = vadd.f32 %v8794, %v9082
    %v9084 = vpop.f32.mrb[0].mxu0
    %v9085 = vpop.f32.mrb[0].mxu0
    %v9086 = vadd.f32 %v8797, %v9085
    %v9087 = vpop.f32.mrb[0].mxu0
    %9088 = vmatprep.mubr.bf16.mxu0 %v8258
    %9089 = vmatmul.mubr.bf16.gmra.mrb[0].mxu0 %v8257
    %v9090 = vpop.f32.mrb[0].mxu0
    %v9091 = vadd.f32 %v8802, %v9090
    %v9092 = vpop.f32.mrb[0].mxu0
    %v9093 = vpop.f32.mrb[0].mxu0
    %v9094 = vadd.f32 %v8805, %v9093
    %v9095 = vpop.f32.mrb[0].mxu0
    %9096 = vmatprep.mubr.bf16.mxu0 %v8266
    %9097 = vmatmul.mubr.bf16.gmra.mrb[0].mxu0 %v8265
    %v9098 = vpop.f32.mrb[0].mxu0
    %v9099 = vadd.f32 %v8810, %v9098
    %v9100 = vpop.f32.mrb[0].mxu0
    %v9101 = vpop.f32.mrb[0].mxu0
    %v9102 = vadd.f32 %v8813, %v9101
    %v9103 = vpop.f32.mrb[0].mxu0
    %9104 = vmatprep.mubr.bf16.mxu0 %v8274
    %9105 = vmatmul.mubr.bf16.gmra.mrb[0].mxu0 %v8273
    %v9106 = vpop.f32.mrb[0].mxu0
    %v9107 = vadd.f32 %v8818, %v9106
    %v9108 = vpop.f32.mrb[0].mxu0
    %v9109 = vpop.f32.mrb[0].mxu0
    %v9110 = vadd.f32 %v8821, %v9109
    %v9111 = vpop.f32.mrb[0].mxu0
    %9112 = vmatprep.mubr.bf16.mxu0 %v8282
    %9113 = vmatmul.mubr.bf16.gmra.mrb[0].mxu0 %v8281
    %v9114 = vpop.f32.mrb[0].mxu0
    %v9115 = vadd.f32 %v8826, %v9114
    %v9116 = vpop.f32.mrb[0].mxu0
    %v9117 = vpop.f32.mrb[0].mxu0
    %v9118 = vadd.f32 %v8829, %v9117
    %v9119 = vpop.f32.mrb[0].mxu0
    %9120 = vmatprep.mubr.bf16.mxu0 %v8290
    %9121 = vmatmul.mubr.bf16.gmra.mrb[0].mxu0 %v8289
    %v9122 = vpop.f32.mrb[0].mxu0
    %v9123 = vadd.f32 %v8834, %v9122
    %v9124 = vpop.f32.mrb[0].mxu0
    %v9125 = vpop.f32.mrb[0].mxu0
    %v9126 = vadd.f32 %v8837, %v9125
    %v9127 = vpop.f32.mrb[0].mxu0
    %9128 = vmatprep.mubr.bf16.mxu0 %v8298
    %9129 = vmatmul.mubr.bf16.gmra.mrb[0].mxu0 %v8297
    %v9130 = vpop.f32.mrb[0].mxu0
    %v9131 = vadd.f32 %v8842, %v9130
    %v9132 = vpop.f32.mrb[0].mxu0
    %v9133 = vpop.f32.mrb[0].mxu0
    %v9134 = vadd.f32 %v8845, %v9133
    %v9135 = vpop.f32.mrb[0].mxu0
    %9136 = vmatprep.mubr.bf16.mxu0 %v8306
    %9137 = vmatmul.mubr.bf16.gmra.mrb[0].mxu0 %v8305
    %v9138 = vpop.f32.mrb[0].mxu0
    %v9139 = vadd.f32 %v8850, %v9138
    %v9140 = vpop.f32.mrb[0].mxu0
    %v9141 = vpop.f32.mrb[0].mxu0
    %v9142 = vadd.f32 %v8853, %v9141
    %v9143 = vpop.f32.mrb[0].mxu0
    %9144 = vmatprep.mubr.bf16.mxu0 %v8314
    %9145 = vmatmul.mubr.bf16.gmra.mrb[0].mxu0 %v8313
    %v9146 = vpop.f32.mrb[0].mxu0
    %v9147 = vadd.f32 %v8858, %v9146
    %v9148 = vpop.f32.mrb[0].mxu0
    %v9149 = vpop.f32.mrb[0].mxu0
    %v9150 = vadd.f32 %v8861, %v9149
    %v9151 = vpop.f32.mrb[0].mxu0
    %9152 = vdwg.mxu0
    %9153 = vmatprep.subr.bf16.mxu0 0
    %9154 = vmatpush1.bf16.msra.mxu0 %v6879
    %9155 = vmatprep.subr.bf16.mxu0 0
    %9156 = vmatpush1.bf16.msra.mxu0 %v6880
    %9157 = vmatprep.subr.bf16.mxu0 0
    %9158 = vmatpush1.bf16.msra.mxu0 %v6881
    %9159 = vmatprep.subr.bf16.mxu0 0
    %9160 = vmatpush1.bf16.msra.mxu0 %v6882
    %9161 = vmatprep.subr.bf16.mxu0 0
    %9162 = vmatpush1.bf16.msra.mxu0 %v6883
    %9163 = vmatprep.subr.bf16.mxu0 0
    %9164 = vmatpush1.bf16.msra.mxu0 %v6884
    %9165 = vmatprep.subr.bf16.mxu0 0
    %9166 = vmatpush1.bf16.msra.mxu0 %v6885
    %9167 = vmatprep.subr.bf16.mxu0 0
    %9168 = vmatpush1.bf16.msra.mxu0 %v6886
    %9169 = vmatprep.subr.bf16.mxu0 0
    %9170 = vmatpush1.bf16.msra.mxu0 %v6887
    %9171 = vmatprep.subr.bf16.mxu0 0
    %9172 = vmatpush1.bf16.msra.mxu0 %v6888
    %9173 = vmatprep.subr.bf16.mxu0 0
    %9174 = vmatpush1.bf16.msra.mxu0 %v6889
    %9175 = vmatprep.subr.bf16.mxu0 0
    %9176 = vmatpush1.bf16.msra.mxu0 %v6890
    %9177 = vmatprep.subr.bf16.mxu0 0
    %9178 = vmatpush1.bf16.msra.mxu0 %v6891
    %9179 = vmatprep.subr.bf16.mxu0 0
    %9180 = vmatpush1.bf16.msra.mxu0 %v6892
    %9181 = vmatprep.subr.bf16.mxu0 0
    %9182 = vmatpush1.bf16.msra.mxu0 %v6893
    %9183 = vmatprep.subr.bf16.mxu0 0
    %9184 = vmatpush1.bf16.msra.mxu0 %v6894
    %9185 = vmatprep.mubr.bf16.mxu0 %v8068
    %9186 = vmatmul.mubr.bf16.gmra.mrb[0].mxu0 %v8067
    %v9187 = vpop.f32.mrb[0].mxu0
    %v9188 = vadd.f32 %v8899, %v9187
    %v9189 = vpop.f32.mrb[0].mxu0
    %v9190 = vpop.f32.mrb[0].mxu0
    %v9191 = vadd.f32 %v8902, %v9190
    %v9192 = vpop.f32.mrb[0].mxu0
    %9193 = vmatprep.mubr.bf16.mxu0 %v8076
    %9194 = vmatmul.mubr.bf16.gmra.mrb[0].mxu0 %v8075
    %v9195 = vpop.f32.mrb[0].mxu0
    %v9196 = vadd.f32 %v8907, %v9195
    %v9197 = vpop.f32.mrb[0].mxu0
    %v9198 = vpop.f32.mrb[0].mxu0
    %v9199 = vadd.f32 %v8910, %v9198
    %v9200 = vpop.f32.mrb[0].mxu0
    %9201 = vmatprep.mubr.bf16.mxu0 %v8084
    %9202 = vmatmul.mubr.bf16.gmra.mrb[0].mxu0 %v8083
    %v9203 = vpop.f32.mrb[0].mxu0
    %v9204 = vadd.f32 %v8915, %v9203
    %v9205 = vpop.f32.mrb[0].mxu0
    %v9206 = vpop.f32.mrb[0].mxu0
    %v9207 = vadd.f32 %v8918, %v9206
    %v9208 = vpop.f32.mrb[0].mxu0
    %9209 = vmatprep.mubr.bf16.mxu0 %v8092
    %9210 = vmatmul.mubr.bf16.gmra.mrb[0].mxu0 %v8091
    %v9211 = vpop.f32.mrb[0].mxu0
    %v9212 = vadd.f32 %v8923, %v9211
    %v9213 = vpop.f32.mrb[0].mxu0
    %v9214 = vpop.f32.mrb[0].mxu0
    %v9215 = vadd.f32 %v8926, %v9214
    %v9216 = vpop.f32.mrb[0].mxu0
    %9217 = vmatprep.mubr.bf16.mxu0 %v8100
    %9218 = vmatmul.mubr.bf16.gmra.mrb[0].mxu0 %v8099
    %v9219 = vpop.f32.mrb[0].mxu0
    %v9220 = vadd.f32 %v8931, %v9219
    %v9221 = vpop.f32.mrb[0].mxu0
    %v9222 = vpop.f32.mrb[0].mxu0
    %v9223 = vadd.f32 %v8934, %v9222
    %v9224 = vpop.f32.mrb[0].mxu0
    %9225 = vmatprep.mubr.bf16.mxu0 %v8108
    %9226 = vmatmul.mubr.bf16.gmra.mrb[0].mxu0 %v8107
    %v9227 = vpop.f32.mrb[0].mxu0
    %v9228 = vadd.f32 %v8939, %v9227
    %v9229 = vpop.f32.mrb[0].mxu0
    %v9230 = vpop.f32.mrb[0].mxu0
    %v9231 = vadd.f32 %v8942, %v9230
    %v9232 = vpop.f32.mrb[0].mxu0
    %9233 = vmatprep.mubr.bf16.mxu0 %v8116
    %9234 = vmatmul.mubr.bf16.gmra.mrb[0].mxu0 %v8115
    %v9235 = vpop.f32.mrb[0].mxu0
    %v9236 = vadd.f32 %v8947, %v9235
    %v9237 = vpop.f32.mrb[0].mxu0
    %v9238 = vpop.f32.mrb[0].mxu0
    %v9239 = vadd.f32 %v8950, %v9238
    %v9240 = vpop.f32.mrb[0].mxu0
    %9241 = vmatprep.mubr.bf16.mxu0 %v8124
    %9242 = vmatmul.mubr.bf16.gmra.mrb[0].mxu0 %v8123
    %v9243 = vpop.f32.mrb[0].mxu0
    %v9244 = vadd.f32 %v8955, %v9243
    %v9245 = vpop.f32.mrb[0].mxu0
    %v9246 = vpop.f32.mrb[0].mxu0
    %v9247 = vadd.f32 %v8958, %v9246
    %v9248 = vpop.f32.mrb[0].mxu0
    %9249 = vmatprep.mubr.bf16.mxu0 %v8132
    %9250 = vmatmul.mubr.bf16.gmra.mrb[0].mxu0 %v8131
    %v9251 = vpop.f32.mrb[0].mxu0
    %v9252 = vadd.f32 %v8963, %v9251
    %v9253 = vpop.f32.mrb[0].mxu0
    %v9254 = vpop.f32.mrb[0].mxu0
    %v9255 = vadd.f32 %v8966, %v9254
    %v9256 = vpop.f32.mrb[0].mxu0
    %9257 = vmatprep.mubr.bf16.mxu0 %v8140
    %9258 = vmatmul.mubr.bf16.gmra.mrb[0].mxu0 %v8139
    %v9259 = vpop.f32.mrb[0].mxu0
    %v9260 = vadd.f32 %v8971, %v9259
    %v9261 = vpop.f32.mrb[0].mxu0
    %v9262 = vpop.f32.mrb[0].mxu0
    %v9263 = vadd.f32 %v8974, %v9262
    %v9264 = vpop.f32.mrb[0].mxu0
    %9265 = vmatprep.mubr.bf16.mxu0 %v8148
    %9266 = vmatmul.mubr.bf16.gmra.mrb[0].mxu0 %v8147
    %v9267 = vpop.f32.mrb[0].mxu0
    %v9268 = vadd.f32 %v8979, %v9267
    %v9269 = vpop.f32.mrb[0].mxu0
    %v9270 = vpop.f32.mrb[0].mxu0
    %v9271 = vadd.f32 %v8982, %v9270
    %v9272 = vpop.f32.mrb[0].mxu0
    %9273 = vmatprep.mubr.bf16.mxu0 %v8156
    %9274 = vmatmul.mubr.bf16.gmra.mrb[0].mxu0 %v8155
    %v9275 = vpop.f32.mrb[0].mxu0
    %v9276 = vadd.f32 %v8987, %v9275
    %v9277 = vpop.f32.mrb[0].mxu0
    %v9278 = vpop.f32.mrb[0].mxu0
    %v9279 = vadd.f32 %v8990, %v9278
    %v9280 = vpop.f32.mrb[0].mxu0
    %9281 = vmatprep.mubr.bf16.mxu0 %v8164
    %9282 = vmatmul.mubr.bf16.gmra.mrb[0].mxu0 %v8163
    %v9283 = vpop.f32.mrb[0].mxu0
    %v9284 = vadd.f32 %v8995, %v9283
    %v9285 = vpop.f32.mrb[0].mxu0
    %v9286 = vpop.f32.mrb[0].mxu0
    %v9287 = vadd.f32 %v8998, %v9286
    %v9288 = vpop.f32.mrb[0].mxu0
    %9289 = vmatprep.mubr.bf16.mxu0 %v8172
    %9290 = vmatmul.mubr.bf16.gmra.mrb[0].mxu0 %v8171
    %v9291 = vpop.f32.mrb[0].mxu0
    %v9292 = vadd.f32 %v9003, %v9291
    %v9293 = vpop.f32.mrb[0].mxu0
    %v9294 = vpop.f32.mrb[0].mxu0
    %v9295 = vadd.f32 %v9006, %v9294
    %v9296 = vpop.f32.mrb[0].mxu0
    %9297 = vmatprep.mubr.bf16.mxu0 %v8180
    %9298 = vmatmul.mubr.bf16.gmra.mrb[0].mxu0 %v8179
    %v9299 = vpop.f32.mrb[0].mxu0
    %v9300 = vadd.f32 %v9011, %v9299
    %v9301 = vpop.f32.mrb[0].mxu0
    %v9302 = vpop.f32.mrb[0].mxu0
    %v9303 = vadd.f32 %v9014, %v9302
    %v9304 = vpop.f32.mrb[0].mxu0
    %9305 = vmatprep.mubr.bf16.mxu0 %v8188
    %9306 = vmatmul.mubr.bf16.gmra.mrb[0].mxu0 %v8187
    %v9307 = vpop.f32.mrb[0].mxu0
    %v9308 = vadd.f32 %v9019, %v9307
    %v9309 = vpop.f32.mrb[0].mxu0
    %v9310 = vpop.f32.mrb[0].mxu0
    %v9311 = vadd.f32 %v9022, %v9310
    %v9312 = vpop.f32.mrb[0].mxu0
    %9313 = vmatprep.mubr.bf16.mxu0 %v8196
    %9314 = vmatmul.mubr.bf16.gmra.mrb[0].mxu0 %v8195
    %v9315 = vpop.f32.mrb[0].mxu0
    %v9316 = vadd.f32 %v9027, %v9315
    %v9317 = vpop.f32.mrb[0].mxu0
    %v9318 = vpop.f32.mrb[0].mxu0
    %v9319 = vadd.f32 %v9030, %v9318
    %v9320 = vpop.f32.mrb[0].mxu0
    %9321 = vmatprep.mubr.bf16.mxu0 %v8204
    %9322 = vmatmul.mubr.bf16.gmra.mrb[0].mxu0 %v8203
    %v9323 = vpop.f32.mrb[0].mxu0
    %v9324 = vadd.f32 %v9035, %v9323
    %v9325 = vpop.f32.mrb[0].mxu0
    %v9326 = vpop.f32.mrb[0].mxu0
    %v9327 = vadd.f32 %v9038, %v9326
    %v9328 = vpop.f32.mrb[0].mxu0
    %9329 = vmatprep.mubr.bf16.mxu0 %v8212
    %9330 = vmatmul.mubr.bf16.gmra.mrb[0].mxu0 %v8211
    %v9331 = vpop.f32.mrb[0].mxu0
    %v9332 = vadd.f32 %v9043, %v9331
    %v9333 = vpop.f32.mrb[0].mxu0
    %v9334 = vpop.f32.mrb[0].mxu0
    %v9335 = vadd.f32 %v9046, %v9334
    %v9336 = vpop.f32.mrb[0].mxu0
    %9337 = vmatprep.mubr.bf16.mxu0 %v8220
    %9338 = vmatmul.mubr.bf16.gmra.mrb[0].mxu0 %v8219
    %v9339 = vpop.f32.mrb[0].mxu0
    %v9340 = vadd.f32 %v9051, %v9339
    %v9341 = vpop.f32.mrb[0].mxu0
    %v9342 = vpop.f32.mrb[0].mxu0
    %v9343 = vadd.f32 %v9054, %v9342
    %v9344 = vpop.f32.mrb[0].mxu0
    %9345 = vmatprep.mubr.bf16.mxu0 %v8228
    %9346 = vmatmul.mubr.bf16.gmra.mrb[0].mxu0 %v8227
    %v9347 = vpop.f32.mrb[0].mxu0
    %v9348 = vadd.f32 %v9059, %v9347
    %v9349 = vpop.f32.mrb[0].mxu0
    %v9350 = vpop.f32.mrb[0].mxu0
    %v9351 = vadd.f32 %v9062, %v9350
    %v9352 = vpop.f32.mrb[0].mxu0
    %9353 = vmatprep.mubr.bf16.mxu0 %v8236
    %9354 = vmatmul.mubr.bf16.gmra.mrb[0].mxu0 %v8235
    %v9355 = vpop.f32.mrb[0].mxu0
    %v9356 = vadd.f32 %v9067, %v9355
    %v9357 = vpop.f32.mrb[0].mxu0
    %v9358 = vpop.f32.mrb[0].mxu0
    %v9359 = vadd.f32 %v9070, %v9358
    %v9360 = vpop.f32.mrb[0].mxu0
    %9361 = vmatprep.mubr.bf16.mxu0 %v8244
    %9362 = vmatmul.mubr.bf16.gmra.mrb[0].mxu0 %v8243
    %v9363 = vpop.f32.mrb[0].mxu0
    %v9364 = vadd.f32 %v9075, %v9363
    %v9365 = vpop.f32.mrb[0].mxu0
    %v9366 = vpop.f32.mrb[0].mxu0
    %v9367 = vadd.f32 %v9078, %v9366
    %v9368 = vpop.f32.mrb[0].mxu0
    %9369 = vmatprep.mubr.bf16.mxu0 %v8252
    %9370 = vmatmul.mubr.bf16.gmra.mrb[0].mxu0 %v8251
    %v9371 = vpop.f32.mrb[0].mxu0
    %v9372 = vadd.f32 %v9083, %v9371
    %v9373 = vpop.f32.mrb[0].mxu0
    %v9374 = vpop.f32.mrb[0].mxu0
    %v9375 = vadd.f32 %v9086, %v9374
    %v9376 = vpop.f32.mrb[0].mxu0
    %9377 = vmatprep.mubr.bf16.mxu0 %v8260
    %9378 = vmatmul.mubr.bf16.gmra.mrb[0].mxu0 %v8259
    %v9379 = vpop.f32.mrb[0].mxu0
    %v9380 = vadd.f32 %v9091, %v9379
    %v9381 = vpop.f32.mrb[0].mxu0
    %v9382 = vpop.f32.mrb[0].mxu0
    %v9383 = vadd.f32 %v9094, %v9382
    %v9384 = vpop.f32.mrb[0].mxu0
    %9385 = vmatprep.mubr.bf16.mxu0 %v8268
    %9386 = vmatmul.mubr.bf16.gmra.mrb[0].mxu0 %v8267
    %v9387 = vpop.f32.mrb[0].mxu0
    %v9388 = vadd.f32 %v9099, %v9387
    %v9389 = vpop.f32.mrb[0].mxu0
    %v9390 = vpop.f32.mrb[0].mxu0
    %v9391 = vadd.f32 %v9102, %v9390
    %v9392 = vpop.f32.mrb[0].mxu0
    %9393 = vmatprep.mubr.bf16.mxu0 %v8276
    %9394 = vmatmul.mubr.bf16.gmra.mrb[0].mxu0 %v8275
    %v9395 = vpop.f32.mrb[0].mxu0
    %v9396 = vadd.f32 %v9107, %v9395
    %v9397 = vpop.f32.mrb[0].mxu0
    %v9398 = vpop.f32.mrb[0].mxu0
    %v9399 = vadd.f32 %v9110, %v9398
    %v9400 = vpop.f32.mrb[0].mxu0
    %9401 = vmatprep.mubr.bf16.mxu0 %v8284
    %9402 = vmatmul.mubr.bf16.gmra.mrb[0].mxu0 %v8283
    %v9403 = vpop.f32.mrb[0].mxu0
    %v9404 = vadd.f32 %v9115, %v9403
    %v9405 = vpop.f32.mrb[0].mxu0
    %v9406 = vpop.f32.mrb[0].mxu0
    %v9407 = vadd.f32 %v9118, %v9406
    %v9408 = vpop.f32.mrb[0].mxu0
    %9409 = vmatprep.mubr.bf16.mxu0 %v8292
    %9410 = vmatmul.mubr.bf16.gmra.mrb[0].mxu0 %v8291
    %v9411 = vpop.f32.mrb[0].mxu0
    %v9412 = vadd.f32 %v9123, %v9411
    %v9413 = vpop.f32.mrb[0].mxu0
    %v9414 = vpop.f32.mrb[0].mxu0
    %v9415 = vadd.f32 %v9126, %v9414
    %v9416 = vpop.f32.mrb[0].mxu0
    %9417 = vmatprep.mubr.bf16.mxu0 %v8300
    %9418 = vmatmul.mubr.bf16.gmra.mrb[0].mxu0 %v8299
    %v9419 = vpop.f32.mrb[0].mxu0
    %v9420 = vadd.f32 %v9131, %v9419
    %v9421 = vpop.f32.mrb[0].mxu0
    %v9422 = vpop.f32.mrb[0].mxu0
    %v9423 = vadd.f32 %v9134, %v9422
    %v9424 = vpop.f32.mrb[0].mxu0
    %9425 = vmatprep.mubr.bf16.mxu0 %v8308
    %9426 = vmatmul.mubr.bf16.gmra.mrb[0].mxu0 %v8307
    %v9427 = vpop.f32.mrb[0].mxu0
    %v9428 = vadd.f32 %v9139, %v9427
    %v9429 = vpop.f32.mrb[0].mxu0
    %v9430 = vpop.f32.mrb[0].mxu0
    %v9431 = vadd.f32 %v9142, %v9430
    %v9432 = vpop.f32.mrb[0].mxu0
    %9433 = vmatprep.mubr.bf16.mxu0 %v8316
    %9434 = vmatmul.mubr.bf16.gmra.mrb[0].mxu0 %v8315
    %v9435 = vpop.f32.mrb[0].mxu0
    %v9436 = vadd.f32 %v9147, %v9435
    %v9437 = vpop.f32.mrb[0].mxu0
    %v9438 = vpop.f32.mrb[0].mxu0
    %v9439 = vadd.f32 %v9150, %v9438
    %v9440 = vpop.f32.mrb[0].mxu0
    %9441 = vdwg.mxu0
    %9442 = vmatprep.subr.bf16.mxu0 0
    %9443 = vmatpush1.bf16.msra.mxu0 %v6895
    %9444 = vmatprep.subr.bf16.mxu0 0
    %9445 = vmatpush1.bf16.msra.mxu0 %v6896
    %9446 = vmatprep.subr.bf16.mxu0 0
    %9447 = vmatpush1.bf16.msra.mxu0 %v6897
    %9448 = vmatprep.subr.bf16.mxu0 0
    %9449 = vmatpush1.bf16.msra.mxu0 %v6898
    %9450 = vmatprep.subr.bf16.mxu0 0
    %9451 = vmatpush1.bf16.msra.mxu0 %v6899
    %9452 = vmatprep.subr.bf16.mxu0 0
    %9453 = vmatpush1.bf16.msra.mxu0 %v6900
    %9454 = vmatprep.subr.bf16.mxu0 0
    %9455 = vmatpush1.bf16.msra.mxu0 %v6901
    %9456 = vmatprep.subr.bf16.mxu0 0
    %9457 = vmatpush1.bf16.msra.mxu0 %v6902
    %9458 = vmatprep.subr.bf16.mxu0 0
    %9459 = vmatpush1.bf16.msra.mxu0 %v6903
    %9460 = vmatprep.subr.bf16.mxu0 0
    %9461 = vmatpush1.bf16.msra.mxu0 %v6904
    %9462 = vmatprep.subr.bf16.mxu0 0
    %9463 = vmatpush1.bf16.msra.mxu0 %v6905
    %9464 = vmatprep.subr.bf16.mxu0 0
    %9465 = vmatpush1.bf16.msra.mxu0 %v6906
    %9466 = vmatprep.subr.bf16.mxu0 0
    %9467 = vmatpush1.bf16.msra.mxu0 %v6907
    %9468 = vmatprep.subr.bf16.mxu0 0
    %9469 = vmatpush1.bf16.msra.mxu0 %v6908
    %9470 = vmatprep.subr.bf16.mxu0 0
    %9471 = vmatpush1.bf16.msra.mxu0 %v6909
    %9472 = vmatprep.subr.bf16.mxu0 0
    %9473 = vmatpush1.bf16.msra.mxu0 %v6910
    %9474 = vmatprep.mubr.bf16.mxu0 %v8070
    %9475 = vmatmul.mubr.bf16.gmra.mrb[0].mxu0 %v8069
    %v9476 = vpop.f32.mrb[0].mxu0
    %v9477 = vadd.f32 %v9188, %v9476
    %v9478 = vpop.f32.mrb[0].mxu0
    %v9479 = vpop.f32.mrb[0].mxu0
    %v9480 = vadd.f32 %v9191, %v9479
    %v9481 = vpop.f32.mrb[0].mxu0
    %9482 = vmatprep.mubr.bf16.mxu0 %v8078
    %9483 = vmatmul.mubr.bf16.gmra.mrb[0].mxu0 %v8077
    %v9484 = vpop.f32.mrb[0].mxu0
    %v9485 = vadd.f32 %v9196, %v9484
    %v9486 = vpop.f32.mrb[0].mxu0
    %v9487 = vpop.f32.mrb[0].mxu0
    %v9488 = vadd.f32 %v9199, %v9487
    %v9489 = vpop.f32.mrb[0].mxu0
    %9490 = vmatprep.mubr.bf16.mxu0 %v8086
    %9491 = vmatmul.mubr.bf16.gmra.mrb[0].mxu0 %v8085
    %v9492 = vpop.f32.mrb[0].mxu0
    %v9493 = vadd.f32 %v9204, %v9492
    %v9494 = vpop.f32.mrb[0].mxu0
    %v9495 = vpop.f32.mrb[0].mxu0
    %v9496 = vadd.f32 %v9207, %v9495
    %v9497 = vpop.f32.mrb[0].mxu0
    %9498 = vmatprep.mubr.bf16.mxu0 %v8094
    %9499 = vmatmul.mubr.bf16.gmra.mrb[0].mxu0 %v8093
    %v9500 = vpop.f32.mrb[0].mxu0
    %v9501 = vadd.f32 %v9212, %v9500
    %v9502 = vpop.f32.mrb[0].mxu0
    %v9503 = vpop.f32.mrb[0].mxu0
    %v9504 = vadd.f32 %v9215, %v9503
    %v9505 = vpop.f32.mrb[0].mxu0
    %9506 = vmatprep.mubr.bf16.mxu0 %v8102
    %9507 = vmatmul.mubr.bf16.gmra.mrb[0].mxu0 %v8101
    %v9508 = vpop.f32.mrb[0].mxu0
    %v9509 = vadd.f32 %v9220, %v9508
    %v9510 = vpop.f32.mrb[0].mxu0
    %v9511 = vpop.f32.mrb[0].mxu0
    %v9512 = vadd.f32 %v9223, %v9511
    %v9513 = vpop.f32.mrb[0].mxu0
    %9514 = vmatprep.mubr.bf16.mxu0 %v8110
    %9515 = vmatmul.mubr.bf16.gmra.mrb[0].mxu0 %v8109
    %v9516 = vpop.f32.mrb[0].mxu0
    %v9517 = vadd.f32 %v9228, %v9516
    %v9518 = vpop.f32.mrb[0].mxu0
    %v9519 = vpop.f32.mrb[0].mxu0
    %v9520 = vadd.f32 %v9231, %v9519
    %v9521 = vpop.f32.mrb[0].mxu0
    %9522 = vmatprep.mubr.bf16.mxu0 %v8118
    %9523 = vmatmul.mubr.bf16.gmra.mrb[0].mxu0 %v8117
    %v9524 = vpop.f32.mrb[0].mxu0
    %v9525 = vadd.f32 %v9236, %v9524
    %v9526 = vpop.f32.mrb[0].mxu0
    %v9527 = vpop.f32.mrb[0].mxu0
    %v9528 = vadd.f32 %v9239, %v9527
    %v9529 = vpop.f32.mrb[0].mxu0
    %9530 = vmatprep.mubr.bf16.mxu0 %v8126
    %9531 = vmatmul.mubr.bf16.gmra.mrb[0].mxu0 %v8125
    %v9532 = vpop.f32.mrb[0].mxu0
    %v9533 = vadd.f32 %v9244, %v9532
    %v9534 = vpop.f32.mrb[0].mxu0
    %v9535 = vpop.f32.mrb[0].mxu0
    %v9536 = vadd.f32 %v9247, %v9535
    %v9537 = vpop.f32.mrb[0].mxu0
    %9538 = vmatprep.mubr.bf16.mxu0 %v8134
    %9539 = vmatmul.mubr.bf16.gmra.mrb[0].mxu0 %v8133
    %v9540 = vpop.f32.mrb[0].mxu0
    %v9541 = vadd.f32 %v9252, %v9540
    %v9542 = vpop.f32.mrb[0].mxu0
    %v9543 = vpop.f32.mrb[0].mxu0
    %v9544 = vadd.f32 %v9255, %v9543
    %v9545 = vpop.f32.mrb[0].mxu0
    %9546 = vmatprep.mubr.bf16.mxu0 %v8142
    %9547 = vmatmul.mubr.bf16.gmra.mrb[0].mxu0 %v8141
    %v9548 = vpop.f32.mrb[0].mxu0
    %v9549 = vadd.f32 %v9260, %v9548
    %v9550 = vpop.f32.mrb[0].mxu0
    %v9551 = vpop.f32.mrb[0].mxu0
    %v9552 = vadd.f32 %v9263, %v9551
    %v9553 = vpop.f32.mrb[0].mxu0
    %9554 = vmatprep.mubr.bf16.mxu0 %v8150
    %9555 = vmatmul.mubr.bf16.gmra.mrb[0].mxu0 %v8149
    %v9556 = vpop.f32.mrb[0].mxu0
    %v9557 = vadd.f32 %v9268, %v9556
    %v9558 = vpop.f32.mrb[0].mxu0
    %v9559 = vpop.f32.mrb[0].mxu0
    %v9560 = vadd.f32 %v9271, %v9559
    %v9561 = vpop.f32.mrb[0].mxu0
    %9562 = vmatprep.mubr.bf16.mxu0 %v8158
    %9563 = vmatmul.mubr.bf16.gmra.mrb[0].mxu0 %v8157
    %v9564 = vpop.f32.mrb[0].mxu0
    %v9565 = vadd.f32 %v9276, %v9564
    %v9566 = vpop.f32.mrb[0].mxu0
    %v9567 = vpop.f32.mrb[0].mxu0
    %v9568 = vadd.f32 %v9279, %v9567
    %v9569 = vpop.f32.mrb[0].mxu0
    %9570 = vmatprep.mubr.bf16.mxu0 %v8166
    %9571 = vmatmul.mubr.bf16.gmra.mrb[0].mxu0 %v8165
    %v9572 = vpop.f32.mrb[0].mxu0
    %v9573 = vadd.f32 %v9284, %v9572
    %v9574 = vpop.f32.mrb[0].mxu0
    %v9575 = vpop.f32.mrb[0].mxu0
    %v9576 = vadd.f32 %v9287, %v9575
    %v9577 = vpop.f32.mrb[0].mxu0
    %9578 = vmatprep.mubr.bf16.mxu0 %v8174
    %9579 = vmatmul.mubr.bf16.gmra.mrb[0].mxu0 %v8173
    %v9580 = vpop.f32.mrb[0].mxu0
    %v9581 = vadd.f32 %v9292, %v9580
    %v9582 = vpop.f32.mrb[0].mxu0
    %v9583 = vpop.f32.mrb[0].mxu0
    %v9584 = vadd.f32 %v9295, %v9583
    %v9585 = vpop.f32.mrb[0].mxu0
    %9586 = vmatprep.mubr.bf16.mxu0 %v8182
    %9587 = vmatmul.mubr.bf16.gmra.mrb[0].mxu0 %v8181
    %v9588 = vpop.f32.mrb[0].mxu0
    %v9589 = vadd.f32 %v9300, %v9588
    %v9590 = vpop.f32.mrb[0].mxu0
    %v9591 = vpop.f32.mrb[0].mxu0
    %v9592 = vadd.f32 %v9303, %v9591
    %v9593 = vpop.f32.mrb[0].mxu0
    %9594 = vmatprep.mubr.bf16.mxu0 %v8190
    %9595 = vmatmul.mubr.bf16.gmra.mrb[0].mxu0 %v8189
    %v9596 = vpop.f32.mrb[0].mxu0
    %v9597 = vadd.f32 %v9308, %v9596
    %v9598 = vpop.f32.mrb[0].mxu0
    %v9599 = vpop.f32.mrb[0].mxu0
    %v9600 = vadd.f32 %v9311, %v9599
    %v9601 = vpop.f32.mrb[0].mxu0
    %9602 = vmatprep.mubr.bf16.mxu0 %v8198
    %9603 = vmatmul.mubr.bf16.gmra.mrb[0].mxu0 %v8197
    %v9604 = vpop.f32.mrb[0].mxu0
    %v9605 = vadd.f32 %v9316, %v9604
    %v9606 = vpop.f32.mrb[0].mxu0
    %v9607 = vpop.f32.mrb[0].mxu0
    %v9608 = vadd.f32 %v9319, %v9607
    %v9609 = vpop.f32.mrb[0].mxu0
    %9610 = vmatprep.mubr.bf16.mxu0 %v8206
    %9611 = vmatmul.mubr.bf16.gmra.mrb[0].mxu0 %v8205
    %v9612 = vpop.f32.mrb[0].mxu0
    %v9613 = vadd.f32 %v9324, %v9612
    %v9614 = vpop.f32.mrb[0].mxu0
    %v9615 = vpop.f32.mrb[0].mxu0
    %v9616 = vadd.f32 %v9327, %v9615
    %v9617 = vpop.f32.mrb[0].mxu0
    %9618 = vmatprep.mubr.bf16.mxu0 %v8214
    %9619 = vmatmul.mubr.bf16.gmra.mrb[0].mxu0 %v8213
    %v9620 = vpop.f32.mrb[0].mxu0
    %v9621 = vadd.f32 %v9332, %v9620
    %v9622 = vpop.f32.mrb[0].mxu0
    %v9623 = vpop.f32.mrb[0].mxu0
    %v9624 = vadd.f32 %v9335, %v9623
    %v9625 = vpop.f32.mrb[0].mxu0
    %9626 = vmatprep.mubr.bf16.mxu0 %v8222
    %9627 = vmatmul.mubr.bf16.gmra.mrb[0].mxu0 %v8221
    %v9628 = vpop.f32.mrb[0].mxu0
    %v9629 = vadd.f32 %v9340, %v9628
    %v9630 = vpop.f32.mrb[0].mxu0
    %v9631 = vpop.f32.mrb[0].mxu0
    %v9632 = vadd.f32 %v9343, %v9631
    %v9633 = vpop.f32.mrb[0].mxu0
    %9634 = vmatprep.mubr.bf16.mxu0 %v8230
    %9635 = vmatmul.mubr.bf16.gmra.mrb[0].mxu0 %v8229
    %v9636 = vpop.f32.mrb[0].mxu0
    %v9637 = vadd.f32 %v9348, %v9636
    %v9638 = vpop.f32.mrb[0].mxu0
    %v9639 = vpop.f32.mrb[0].mxu0
    %v9640 = vadd.f32 %v9351, %v9639
    %v9641 = vpop.f32.mrb[0].mxu0
    %9642 = vmatprep.mubr.bf16.mxu0 %v8238
    %9643 = vmatmul.mubr.bf16.gmra.mrb[0].mxu0 %v8237
    %v9644 = vpop.f32.mrb[0].mxu0
    %v9645 = vadd.f32 %v9356, %v9644
    %v9646 = vpop.f32.mrb[0].mxu0
    %v9647 = vpop.f32.mrb[0].mxu0
    %v9648 = vadd.f32 %v9359, %v9647
    %v9649 = vpop.f32.mrb[0].mxu0
    %9650 = vmatprep.mubr.bf16.mxu0 %v8246
    %9651 = vmatmul.mubr.bf16.gmra.mrb[0].mxu0 %v8245
    %v9652 = vpop.f32.mrb[0].mxu0
    %v9653 = vadd.f32 %v9364, %v9652
    %v9654 = vpop.f32.mrb[0].mxu0
    %v9655 = vpop.f32.mrb[0].mxu0
    %v9656 = vadd.f32 %v9367, %v9655
    %v9657 = vpop.f32.mrb[0].mxu0
    %9658 = vmatprep.mubr.bf16.mxu0 %v8254
    %9659 = vmatmul.mubr.bf16.gmra.mrb[0].mxu0 %v8253
    %v9660 = vpop.f32.mrb[0].mxu0
    %v9661 = vadd.f32 %v9372, %v9660
    %v9662 = vpop.f32.mrb[0].mxu0
    %v9663 = vpop.f32.mrb[0].mxu0
    %v9664 = vadd.f32 %v9375, %v9663
    %v9665 = vpop.f32.mrb[0].mxu0
    %9666 = vmatprep.mubr.bf16.mxu0 %v8262
    %9667 = vmatmul.mubr.bf16.gmra.mrb[0].mxu0 %v8261
    %v9668 = vpop.f32.mrb[0].mxu0
    %v9669 = vadd.f32 %v9380, %v9668
    %v9670 = vpop.f32.mrb[0].mxu0
    %v9671 = vpop.f32.mrb[0].mxu0
    %v9672 = vadd.f32 %v9383, %v9671
    %v9673 = vpop.f32.mrb[0].mxu0
    %9674 = vmatprep.mubr.bf16.mxu0 %v8270
    %9675 = vmatmul.mubr.bf16.gmra.mrb[0].mxu0 %v8269
    %v9676 = vpop.f32.mrb[0].mxu0
    %v9677 = vadd.f32 %v9388, %v9676
    %v9678 = vpop.f32.mrb[0].mxu0
    %v9679 = vpop.f32.mrb[0].mxu0
    %v9680 = vadd.f32 %v9391, %v9679
    %v9681 = vpop.f32.mrb[0].mxu0
    %9682 = vmatprep.mubr.bf16.mxu0 %v8278
    %9683 = vmatmul.mubr.bf16.gmra.mrb[0].mxu0 %v8277
    %v9684 = vpop.f32.mrb[0].mxu0
    %v9685 = vadd.f32 %v9396, %v9684
    %v9686 = vpop.f32.mrb[0].mxu0
    %v9687 = vpop.f32.mrb[0].mxu0
    %v9688 = vadd.f32 %v9399, %v9687
    %v9689 = vpop.f32.mrb[0].mxu0
    %9690 = vmatprep.mubr.bf16.mxu0 %v8286
    %9691 = vmatmul.mubr.bf16.gmra.mrb[0].mxu0 %v8285
    %v9692 = vpop.f32.mrb[0].mxu0
    %v9693 = vadd.f32 %v9404, %v9692
    %v9694 = vpop.f32.mrb[0].mxu0
    %v9695 = vpop.f32.mrb[0].mxu0
    %v9696 = vadd.f32 %v9407, %v9695
    %v9697 = vpop.f32.mrb[0].mxu0
    %9698 = vmatprep.mubr.bf16.mxu0 %v8294
    %9699 = vmatmul.mubr.bf16.gmra.mrb[0].mxu0 %v8293
    %v9700 = vpop.f32.mrb[0].mxu0
    %v9701 = vadd.f32 %v9412, %v9700
    %v9702 = vpop.f32.mrb[0].mxu0
    %v9703 = vpop.f32.mrb[0].mxu0
    %v9704 = vadd.f32 %v9415, %v9703
    %v9705 = vpop.f32.mrb[0].mxu0
    %9706 = vmatprep.mubr.bf16.mxu0 %v8302
    %9707 = vmatmul.mubr.bf16.gmra.mrb[0].mxu0 %v8301
    %v9708 = vpop.f32.mrb[0].mxu0
    %v9709 = vadd.f32 %v9420, %v9708
    %v9710 = vpop.f32.mrb[0].mxu0
    %v9711 = vpop.f32.mrb[0].mxu0
    %v9712 = vadd.f32 %v9423, %v9711
    %v9713 = vpop.f32.mrb[0].mxu0
    %9714 = vmatprep.mubr.bf16.mxu0 %v8310
    %9715 = vmatmul.mubr.bf16.gmra.mrb[0].mxu0 %v8309
    %v9716 = vpop.f32.mrb[0].mxu0
    %v9717 = vadd.f32 %v9428, %v9716
    %v9718 = vpop.f32.mrb[0].mxu0
    %v9719 = vpop.f32.mrb[0].mxu0
    %v9720 = vadd.f32 %v9431, %v9719
    %v9721 = vpop.f32.mrb[0].mxu0
    %9722 = vmatprep.mubr.bf16.mxu0 %v8318
    %9723 = vmatmul.mubr.bf16.gmra.mrb[0].mxu0 %v8317
    %v9724 = vpop.f32.mrb[0].mxu0
    %v9725 = vadd.f32 %v9436, %v9724
    %v9726 = vpop.f32.mrb[0].mxu0
    %v9727 = vpop.f32.mrb[0].mxu0
    %v9728 = vadd.f32 %v9439, %v9727
    %v9729 = vpop.f32.mrb[0].mxu0
    %9730 = vdwg.mxu0
    %vm9731 = vcmp.gt.f32.partialorder %v9477, 0.0
    %vm9732 = vcmp.gt.f32.partialorder %v9480, 0.0
    %vm9733 = vcmp.gt.f32.partialorder %v9485, 0.0
    %vm9734 = vcmp.gt.f32.partialorder %v9488, 0.0
    %vm9735 = vcmp.gt.f32.partialorder %v9493, 0.0
    %vm9736 = vcmp.gt.f32.partialorder %v9496, 0.0
    %vm9737 = vcmp.gt.f32.partialorder %v9501, 0.0
    %vm9738 = vcmp.gt.f32.partialorder %v9504, 0.0
    %vm9739 = vcmp.gt.f32.partialorder %v9509, 0.0
    %vm9740 = vcmp.gt.f32.partialorder %v9512, 0.0
    %vm9741 = vcmp.gt.f32.partialorder %v9517, 0.0
    %vm9742 = vcmp.gt.f32.partialorder %v9520, 0.0
    %vm9743 = vcmp.gt.f32.partialorder %v9525, 0.0
    %vm9744 = vcmp.gt.f32.partialorder %v9528, 0.0
    %vm9745 = vcmp.gt.f32.partialorder %v9533, 0.0
    %vm9746 = vcmp.gt.f32.partialorder %v9536, 0.0
    %vm9747 = vcmp.gt.f32.partialorder %v9541, 0.0
    %vm9748 = vcmp.gt.f32.partialorder %v9544, 0.0
    %vm9749 = vcmp.gt.f32.partialorder %v9549, 0.0
    %vm9750 = vcmp.gt.f32.partialorder %v9552, 0.0
    %vm9751 = vcmp.gt.f32.partialorder %v9557, 0.0
    %vm9752 = vcmp.gt.f32.partialorder %v9560, 0.0
    %vm9753 = vcmp.gt.f32.partialorder %v9565, 0.0
    %vm9754 = vcmp.gt.f32.partialorder %v9568, 0.0
    %vm9755 = vcmp.gt.f32.partialorder %v9573, 0.0
    %vm9756 = vcmp.gt.f32.partialorder %v9576, 0.0
    %vm9757 = vcmp.gt.f32.partialorder %v9581, 0.0
    %vm9758 = vcmp.gt.f32.partialorder %v9584, 0.0
    %vm9759 = vcmp.gt.f32.partialorder %v9589, 0.0
    %vm9760 = vcmp.gt.f32.partialorder %v9592, 0.0
    %vm9761 = vcmp.gt.f32.partialorder %v9597, 0.0
    %vm9762 = vcmp.gt.f32.partialorder %v9600, 0.0
    %vm9763 = vcmp.gt.f32.partialorder %v9605, 0.0
    %vm9764 = vcmp.gt.f32.partialorder %v9608, 0.0
    %vm9765 = vcmp.gt.f32.partialorder %v9613, 0.0
    %vm9766 = vcmp.gt.f32.partialorder %v9616, 0.0
    %vm9767 = vcmp.gt.f32.partialorder %v9621, 0.0
    %vm9768 = vcmp.gt.f32.partialorder %v9624, 0.0
    %vm9769 = vcmp.gt.f32.partialorder %v9629, 0.0
    %vm9770 = vcmp.gt.f32.partialorder %v9632, 0.0
    %vm9771 = vcmp.gt.f32.partialorder %v9637, 0.0
    %vm9772 = vcmp.gt.f32.partialorder %v9640, 0.0
    %vm9773 = vcmp.gt.f32.partialorder %v9645, 0.0
    %vm9774 = vcmp.gt.f32.partialorder %v9648, 0.0
    %vm9775 = vcmp.gt.f32.partialorder %v9653, 0.0
    %vm9776 = vcmp.gt.f32.partialorder %v9656, 0.0
    %vm9777 = vcmp.gt.f32.partialorder %v9661, 0.0
    %vm9778 = vcmp.gt.f32.partialorder %v9664, 0.0
    %vm9779 = vcmp.gt.f32.partialorder %v9669, 0.0
    %vm9780 = vcmp.gt.f32.partialorder %v9672, 0.0
    %vm9781 = vcmp.gt.f32.partialorder %v9677, 0.0
    %vm9782 = vcmp.gt.f32.partialorder %v9680, 0.0
    %vm9783 = vcmp.gt.f32.partialorder %v9685, 0.0
    %vm9784 = vcmp.gt.f32.partialorder %v9688, 0.0
    %vm9785 = vcmp.gt.f32.partialorder %v9693, 0.0
    %vm9786 = vcmp.gt.f32.partialorder %v9696, 0.0
    %vm9787 = vcmp.gt.f32.partialorder %v9701, 0.0
    %vm9788 = vcmp.gt.f32.partialorder %v9704, 0.0
    %vm9789 = vcmp.gt.f32.partialorder %v9709, 0.0
    %vm9790 = vcmp.gt.f32.partialorder %v9712, 0.0
    %vm9791 = vcmp.gt.f32.partialorder %v9717, 0.0
    %vm9792 = vcmp.gt.f32.partialorder %v9720, 0.0
    %vm9793 = vcmp.gt.f32.partialorder %v9725, 0.0
    %vm9794 = vcmp.gt.f32.partialorder %v9728, 0.0
    %v9795 = vmul.f32 %v9477, 0.2
    %v9796 = vmul.f32 %v9480, 0.2
    %v9797 = vmul.f32 %v9485, 0.2
    %v9798 = vmul.f32 %v9488, 0.2
    %v9799 = vmul.f32 %v9493, 0.2
    %v9800 = vmul.f32 %v9496, 0.2
    %v9801 = vmul.f32 %v9501, 0.2
    %v9802 = vmul.f32 %v9504, 0.2
    %v9803 = vmul.f32 %v9509, 0.2
    %v9804 = vmul.f32 %v9512, 0.2
    %v9805 = vmul.f32 %v9517, 0.2
    %v9806 = vmul.f32 %v9520, 0.2
    %v9807 = vmul.f32 %v9525, 0.2
    %v9808 = vmul.f32 %v9528, 0.2
    %v9809 = vmul.f32 %v9533, 0.2
    %v9810 = vmul.f32 %v9536, 0.2
    %v9811 = vmul.f32 %v9541, 0.2
    %v9812 = vmul.f32 %v9544, 0.2
    %v9813 = vmul.f32 %v9549, 0.2
    %v9814 = vmul.f32 %v9552, 0.2
    %v9815 = vmul.f32 %v9557, 0.2
    %v9816 = vmul.f32 %v9560, 0.2
    %v9817 = vmul.f32 %v9565, 0.2
    %v9818 = vmul.f32 %v9568, 0.2
    %v9819 = vmul.f32 %v9573, 0.2
    %v9820 = vmul.f32 %v9576, 0.2
    %v9821 = vmul.f32 %v9581, 0.2
    %v9822 = vmul.f32 %v9584, 0.2
    %v9823 = vmul.f32 %v9589, 0.2
    %v9824 = vmul.f32 %v9592, 0.2
    %v9825 = vmul.f32 %v9597, 0.2
    %v9826 = vmul.f32 %v9600, 0.2
    %v9827 = vmul.f32 %v9605, 0.2
    %v9828 = vmul.f32 %v9608, 0.2
    %v9829 = vmul.f32 %v9613, 0.2
    %v9830 = vmul.f32 %v9616, 0.2
    %v9831 = vmul.f32 %v9621, 0.2
    %v9832 = vmul.f32 %v9624, 0.2
    %v9833 = vmul.f32 %v9629, 0.2
    %v9834 = vmul.f32 %v9632, 0.2
    %v9835 = vmul.f32 %v9637, 0.2
    %v9836 = vmul.f32 %v9640, 0.2
    %v9837 = vmul.f32 %v9645, 0.2
    %v9838 = vmul.f32 %v9648, 0.2
    %v9839 = vmul.f32 %v9653, 0.2
    %v9840 = vmul.f32 %v9656, 0.2
    %v9841 = vmul.f32 %v9661, 0.2
    %v9842 = vmul.f32 %v9664, 0.2
    %v9843 = vmul.f32 %v9669, 0.2
    %v9844 = vmul.f32 %v9672, 0.2
    %v9845 = vmul.f32 %v9677, 0.2
    %v9846 = vmul.f32 %v9680, 0.2
    %v9847 = vmul.f32 %v9685, 0.2
    %v9848 = vmul.f32 %v9688, 0.2
    %v9849 = vmul.f32 %v9693, 0.2
    %v9850 = vmul.f32 %v9696, 0.2
    %v9851 = vmul.f32 %v9701, 0.2
    %v9852 = vmul.f32 %v9704, 0.2
    %v9853 = vmul.f32 %v9709, 0.2
    %v9854 = vmul.f32 %v9712, 0.2
    %v9855 = vmul.f32 %v9717, 0.2
    %v9856 = vmul.f32 %v9720, 0.2
    %v9857 = vmul.f32 %v9725, 0.2
    %v9858 = vmul.f32 %v9728, 0.2
    %v9859 = vsel %vm9731, %v9477, %v9795
    %v9860 = vsel %vm9732, %v9480, %v9796
    %v9861 = vsel %vm9733, %v9485, %v9797
    %v9862 = vsel %vm9734, %v9488, %v9798
    %v9863 = vsel %vm9735, %v9493, %v9799
    %v9864 = vsel %vm9736, %v9496, %v9800
    %v9865 = vsel %vm9737, %v9501, %v9801
    %v9866 = vsel %vm9738, %v9504, %v9802
    %v9867 = vsel %vm9739, %v9509, %v9803
    %v9868 = vsel %vm9740, %v9512, %v9804
    %v9869 = vsel %vm9741, %v9517, %v9805
    %v9870 = vsel %vm9742, %v9520, %v9806
    %v9871 = vsel %vm9743, %v9525, %v9807
    %v9872 = vsel %vm9744, %v9528, %v9808
    %v9873 = vsel %vm9745, %v9533, %v9809
    %v9874 = vsel %vm9746, %v9536, %v9810
    %v9875 = vsel %vm9747, %v9541, %v9811
    %v9876 = vsel %vm9748, %v9544, %v9812
    %v9877 = vsel %vm9749, %v9549, %v9813
    %v9878 = vsel %vm9750, %v9552, %v9814
    %v9879 = vsel %vm9751, %v9557, %v9815
    %v9880 = vsel %vm9752, %v9560, %v9816
    %v9881 = vsel %vm9753, %v9565, %v9817
    %v9882 = vsel %vm9754, %v9568, %v9818
    %v9883 = vsel %vm9755, %v9573, %v9819
    %v9884 = vsel %vm9756, %v9576, %v9820
    %v9885 = vsel %vm9757, %v9581, %v9821
    %v9886 = vsel %vm9758, %v9584, %v9822
    %v9887 = vsel %vm9759, %v9589, %v9823
    %v9888 = vsel %vm9760, %v9592, %v9824
    %v9889 = vsel %vm9761, %v9597, %v9825
    %v9890 = vsel %vm9762, %v9600, %v9826
    %v9891 = vsel %vm9763, %v9605, %v9827
    %v9892 = vsel %vm9764, %v9608, %v9828
    %v9893 = vsel %vm9765, %v9613, %v9829
    %v9894 = vsel %vm9766, %v9616, %v9830
    %v9895 = vsel %vm9767, %v9621, %v9831
    %v9896 = vsel %vm9768, %v9624, %v9832
    %v9897 = vsel %vm9769, %v9629, %v9833
    %v9898 = vsel %vm9770, %v9632, %v9834
    %v9899 = vsel %vm9771, %v9637, %v9835
    %v9900 = vsel %vm9772, %v9640, %v9836
    %v9901 = vsel %vm9773, %v9645, %v9837
    %v9902 = vsel %vm9774, %v9648, %v9838
    %v9903 = vsel %vm9775, %v9653, %v9839
    %v9904 = vsel %vm9776, %v9656, %v9840
    %v9905 = vsel %vm9777, %v9661, %v9841
    %v9906 = vsel %vm9778, %v9664, %v9842
    %v9907 = vsel %vm9779, %v9669, %v9843
    %v9908 = vsel %vm9780, %v9672, %v9844
    %v9909 = vsel %vm9781, %v9677, %v9845
    %v9910 = vsel %vm9782, %v9680, %v9846
    %v9911 = vsel %vm9783, %v9685, %v9847
    %v9912 = vsel %vm9784, %v9688, %v9848
    %v9913 = vsel %vm9785, %v9693, %v9849
    %v9914 = vsel %vm9786, %v9696, %v9850
    %v9915 = vsel %vm9787, %v9701, %v9851
    %v9916 = vsel %vm9788, %v9704, %v9852
    %v9917 = vsel %vm9789, %v9709, %v9853
    %v9918 = vsel %vm9790, %v9712, %v9854
    %v9919 = vsel %vm9791, %v9717, %v9855
    %v9920 = vsel %vm9792, %v9720, %v9856
    %v9921 = vsel %vm9793, %v9725, %v9857
    %v9922 = vsel %vm9794, %v9728, %v9858
    %v9923 = vld [vmem:[#allocation9] sm:$0xff]
    %v9924 = vld [vmem:[#allocation9 + $0x8] sm:$0xff]
    %v9925 = vld [vmem:[#allocation9 + $0x10] sm:$0xff]
    %v9926 = vld [vmem:[#allocation9 + $0x18] sm:$0xff]
    %v9927 = vld [vmem:[#allocation9 + $0x20] sm:$0xff]
    %v9928 = vld [vmem:[#allocation9 + $0x28] sm:$0xff]
    %v9929 = vld [vmem:[#allocation9 + $0x30] sm:$0xff]
    %v9930 = vld [vmem:[#allocation9 + $0x38] sm:$0xff]
    %v9931 = vld [vmem:[#allocation9 + $0x40] sm:$0xff]
    %v9932 = vld [vmem:[#allocation9 + $0x48] sm:$0xff]
    %v9933 = vld [vmem:[#allocation9 + $0x50] sm:$0xff]
    %v9934 = vld [vmem:[#allocation9 + $0x58] sm:$0xff]
    %v9935 = vld [vmem:[#allocation9 + $0x60] sm:$0xff]
    %v9936 = vld [vmem:[#allocation9 + $0x68] sm:$0xff]
    %v9937 = vld [vmem:[#allocation9 + $0x70] sm:$0xff]
    %v9938 = vld [vmem:[#allocation9 + $0x78] sm:$0xff]
    %v9939 = vld [vmem:[#allocation9 + $0x80] sm:$0xff]
    %v9940 = vld [vmem:[#allocation9 + $0x88] sm:$0xff]
    %v9941 = vld [vmem:[#allocation9 + $0x90] sm:$0xff]
    %v9942 = vld [vmem:[#allocation9 + $0x98] sm:$0xff]
    %v9943 = vld [vmem:[#allocation9 + $0xa0] sm:$0xff]
    %v9944 = vld [vmem:[#allocation9 + $0xa8] sm:$0xff]
    %v9945 = vld [vmem:[#allocation9 + $0xb0] sm:$0xff]
    %v9946 = vld [vmem:[#allocation9 + $0xb8] sm:$0xff]
    %v9947 = vld [vmem:[#allocation9 + $0xc0] sm:$0xff]
    %v9948 = vld [vmem:[#allocation9 + $0xc8] sm:$0xff]
    %v9949 = vld [vmem:[#allocation9 + $0xd0] sm:$0xff]
    %v9950 = vld [vmem:[#allocation9 + $0xd8] sm:$0xff]
    %v9951 = vld [vmem:[#allocation9 + $0xe0] sm:$0xff]
    %v9952 = vld [vmem:[#allocation9 + $0xe8] sm:$0xff]
    %v9953 = vld [vmem:[#allocation9 + $0xf0] sm:$0xff]
    %v9954 = vld [vmem:[#allocation9 + $0xf8] sm:$0xff]
    %v9955 = vld [vmem:[#allocation9 + $0x100] sm:$0xff]
    %v9956 = vld [vmem:[#allocation9 + $0x108] sm:$0xff]
    %v9957 = vld [vmem:[#allocation9 + $0x110] sm:$0xff]
    %v9958 = vld [vmem:[#allocation9 + $0x118] sm:$0xff]
    %v9959 = vld [vmem:[#allocation9 + $0x120] sm:$0xff]
    %v9960 = vld [vmem:[#allocation9 + $0x128] sm:$0xff]
    %v9961 = vld [vmem:[#allocation9 + $0x130] sm:$0xff]
    %v9962 = vld [vmem:[#allocation9 + $0x138] sm:$0xff]
    %v9963 = vld [vmem:[#allocation9 + $0x140] sm:$0xff]
    %v9964 = vld [vmem:[#allocation9 + $0x148] sm:$0xff]
    %v9965 = vld [vmem:[#allocation9 + $0x150] sm:$0xff]
    %v9966 = vld [vmem:[#allocation9 + $0x158] sm:$0xff]
    %v9967 = vld [vmem:[#allocation9 + $0x160] sm:$0xff]
    %v9968 = vld [vmem:[#allocation9 + $0x168] sm:$0xff]
    %v9969 = vld [vmem:[#allocation9 + $0x170] sm:$0xff]
    %v9970 = vld [vmem:[#allocation9 + $0x178] sm:$0xff]
    %v9971 = vld [vmem:[#allocation9 + $0x180] sm:$0xff]
    %v9972 = vld [vmem:[#allocation9 + $0x188] sm:$0xff]
    %v9973 = vld [vmem:[#allocation9 + $0x190] sm:$0xff]
    %v9974 = vld [vmem:[#allocation9 + $0x198] sm:$0xff]
    %v9975 = vld [vmem:[#allocation9 + $0x1a0] sm:$0xff]
    %v9976 = vld [vmem:[#allocation9 + $0x1a8] sm:$0xff]
    %v9977 = vld [vmem:[#allocation9 + $0x1b0] sm:$0xff]
    %v9978 = vld [vmem:[#allocation9 + $0x1b8] sm:$0xff]
    %v9979 = vld [vmem:[#allocation9 + $0x1c0] sm:$0xff]
    %v9980 = vld [vmem:[#allocation9 + $0x1c8] sm:$0xff]
    %v9981 = vld [vmem:[#allocation9 + $0x1d0] sm:$0xff]
    %v9982 = vld [vmem:[#allocation9 + $0x1d8] sm:$0xff]
    %v9983 = vld [vmem:[#allocation9 + $0x1e0] sm:$0xff]
    %v9984 = vld [vmem:[#allocation9 + $0x1e8] sm:$0xff]
    %v9985 = vld [vmem:[#allocation9 + $0x1f0] sm:$0xff]
    %v9986 = vld [vmem:[#allocation9 + $0x1f8] sm:$0xff]
    %v9987 = vpack.c.bf16 %v9860, %v9859
    %v9988 = vpack.c.bf16 %v9862, %v9861
    %v9989 = vpack.c.bf16 %v9864, %v9863
    %v9990 = vpack.c.bf16 %v9866, %v9865
    %v9991 = vpack.c.bf16 %v9868, %v9867
    %v9992 = vpack.c.bf16 %v9870, %v9869
    %v9993 = vpack.c.bf16 %v9872, %v9871
    %v9994 = vpack.c.bf16 %v9874, %v9873
    %v9995 = vpack.c.bf16 %v9876, %v9875
    %v9996 = vpack.c.bf16 %v9878, %v9877
    %v9997 = vpack.c.bf16 %v9880, %v9879
    %v9998 = vpack.c.bf16 %v9882, %v9881
    %v9999 = vpack.c.bf16 %v9884, %v9883
    %v10000 = vpack.c.bf16 %v9886, %v9885
    %v10001 = vpack.c.bf16 %v9888, %v9887
    %v10002 = vpack.c.bf16 %v9890, %v9889
    %v10003 = vpack.c.bf16 %v9892, %v9891
    %v10004 = vpack.c.bf16 %v9894, %v9893
    %v10005 = vpack.c.bf16 %v9896, %v9895
    %v10006 = vpack.c.bf16 %v9898, %v9897
    %v10007 = vpack.c.bf16 %v9900, %v9899
    %v10008 = vpack.c.bf16 %v9902, %v9901
    %v10009 = vpack.c.bf16 %v9904, %v9903
    %v10010 = vpack.c.bf16 %v9906, %v9905
    %v10011 = vpack.c.bf16 %v9908, %v9907
    %v10012 = vpack.c.bf16 %v9910, %v9909
    %v10013 = vpack.c.bf16 %v9912, %v9911
    %v10014 = vpack.c.bf16 %v9914, %v9913
    %v10015 = vpack.c.bf16 %v9916, %v9915
    %v10016 = vpack.c.bf16 %v9918, %v9917
    %v10017 = vpack.c.bf16 %v9920, %v9919
    %v10018 = vpack.c.bf16 %v9922, %v9921
    %v10019 = vld [vmem:[%s6] sm:$0xff]
    %v10020 = vld [vmem:[%s6 + $0x8] sm:$0xff]
    %v10021 = vld [vmem:[%s6 + $0x10] sm:$0xff]
    %v10022 = vld [vmem:[%s6 + $0x18] sm:$0xff]
    %v10023 = vld [vmem:[%s6 + $0x20] sm:$0xff]
    %v10024 = vld [vmem:[%s6 + $0x28] sm:$0xff]
    %v10025 = vld [vmem:[%s6 + $0x30] sm:$0xff]
    %v10026 = vld [vmem:[%s6 + $0x38] sm:$0xff]
    %v10027 = vld [vmem:[%s6 + $0x40] sm:$0xff]
    %v10028 = vld [vmem:[%s6 + $0x48] sm:$0xff]
    %v10029 = vld [vmem:[%s6 + $0x50] sm:$0xff]
    %v10030 = vld [vmem:[%s6 + $0x58] sm:$0xff]
    %v10031 = vld [vmem:[%s6 + $0x60] sm:$0xff]
    %v10032 = vld [vmem:[%s6 + $0x68] sm:$0xff]
    %v10033 = vld [vmem:[%s6 + $0x70] sm:$0xff]
    %v10034 = vld [vmem:[%s6 + $0x78] sm:$0xff]
    %v10035 = vld [vmem:[%s6 + $0x80] sm:$0xff]
    %v10036 = vld [vmem:[%s6 + $0x88] sm:$0xff]
    %v10037 = vld [vmem:[%s6 + $0x90] sm:$0xff]
    %v10038 = vld [vmem:[%s6 + $0x98] sm:$0xff]
    %v10039 = vld [vmem:[%s6 + $0xa0] sm:$0xff]
    %v10040 = vld [vmem:[%s6 + $0xa8] sm:$0xff]
    %v10041 = vld [vmem:[%s6 + $0xb0] sm:$0xff]
    %v10042 = vld [vmem:[%s6 + $0xb8] sm:$0xff]
    %v10043 = vld [vmem:[%s6 + $0xc0] sm:$0xff]
    %v10044 = vld [vmem:[%s6 + $0xc8] sm:$0xff]
    %v10045 = vld [vmem:[%s6 + $0xd0] sm:$0xff]
    %v10046 = vld [vmem:[%s6 + $0xd8] sm:$0xff]
    %v10047 = vld [vmem:[%s6 + $0xe0] sm:$0xff]
    %v10048 = vld [vmem:[%s6 + $0xe8] sm:$0xff]
    %v10049 = vld [vmem:[%s6 + $0xf0] sm:$0xff]
    %v10050 = vld [vmem:[%s6 + $0xf8] sm:$0xff]
    %10052 = vset.pattern.permute.xlu0 0
    %10053 = vperm.xlu0 %10052, %v10019
    %v10054 = vpop.permute.xlu0 %10053
    %10057 = vset.pattern.permute.xlu0 0
    %10058 = vperm.xlu0 %10057, %v10020
    %v10059 = vpop.permute.xlu0 %10058
    %10062 = vset.pattern.permute.xlu0 0
    %10063 = vperm.xlu0 %10062, %v10021
    %v10064 = vpop.permute.xlu0 %10063
    %10067 = vset.pattern.permute.xlu0 0
    %10068 = vperm.xlu0 %10067, %v10022
    %v10069 = vpop.permute.xlu0 %10068
    %10072 = vset.pattern.permute.xlu0 0
    %10073 = vperm.xlu0 %10072, %v10023
    %v10074 = vpop.permute.xlu0 %10073
    %10077 = vset.pattern.permute.xlu0 0
    %10078 = vperm.xlu0 %10077, %v10024
    %v10079 = vpop.permute.xlu0 %10078
    %10082 = vset.pattern.permute.xlu0 0
    %10083 = vperm.xlu0 %10082, %v10025
    %v10084 = vpop.permute.xlu0 %10083
    %10087 = vset.pattern.permute.xlu0 0
    %10088 = vperm.xlu0 %10087, %v10026
    %v10089 = vpop.permute.xlu0 %10088
    %10092 = vset.pattern.permute.xlu0 0
    %10093 = vperm.xlu0 %10092, %v10027
    %v10094 = vpop.permute.xlu0 %10093
    %10097 = vset.pattern.permute.xlu0 0
    %10098 = vperm.xlu0 %10097, %v10028
    %v10099 = vpop.permute.xlu0 %10098
    %10102 = vset.pattern.permute.xlu0 0
    %10103 = vperm.xlu0 %10102, %v10029
    %v10104 = vpop.permute.xlu0 %10103
    %10107 = vset.pattern.permute.xlu0 0
    %10108 = vperm.xlu0 %10107, %v10030
    %v10109 = vpop.permute.xlu0 %10108
    %10112 = vset.pattern.permute.xlu0 0
    %10113 = vperm.xlu0 %10112, %v10031
    %v10114 = vpop.permute.xlu0 %10113
    %10117 = vset.pattern.permute.xlu0 0
    %10118 = vperm.xlu0 %10117, %v10032
    %v10119 = vpop.permute.xlu0 %10118
    %10122 = vset.pattern.permute.xlu0 0
    %10123 = vperm.xlu0 %10122, %v10033
    %v10124 = vpop.permute.xlu0 %10123
    %10127 = vset.pattern.permute.xlu0 0
    %10128 = vperm.xlu0 %10127, %v10034
    %v10129 = vpop.permute.xlu0 %10128
    %10132 = vset.pattern.permute.xlu0 0
    %10133 = vperm.xlu0 %10132, %v10035
    %v10134 = vpop.permute.xlu0 %10133
    %10137 = vset.pattern.permute.xlu0 0
    %10138 = vperm.xlu0 %10137, %v10036
    %v10139 = vpop.permute.xlu0 %10138
    %10142 = vset.pattern.permute.xlu0 0
    %10143 = vperm.xlu0 %10142, %v10037
    %v10144 = vpop.permute.xlu0 %10143
    %10147 = vset.pattern.permute.xlu0 0
    %10148 = vperm.xlu0 %10147, %v10038
    %v10149 = vpop.permute.xlu0 %10148
    %10152 = vset.pattern.permute.xlu0 0
    %10153 = vperm.xlu0 %10152, %v10039
    %v10154 = vpop.permute.xlu0 %10153
    %10157 = vset.pattern.permute.xlu0 0
    %10158 = vperm.xlu0 %10157, %v10040
    %v10159 = vpop.permute.xlu0 %10158
    %10162 = vset.pattern.permute.xlu0 0
    %10163 = vperm.xlu0 %10162, %v10041
    %v10164 = vpop.permute.xlu0 %10163
    %10167 = vset.pattern.permute.xlu0 0
    %10168 = vperm.xlu0 %10167, %v10042
    %v10169 = vpop.permute.xlu0 %10168
    %10172 = vset.pattern.permute.xlu0 0
    %10173 = vperm.xlu0 %10172, %v10043
    %v10174 = vpop.permute.xlu0 %10173
    %10177 = vset.pattern.permute.xlu0 0
    %10178 = vperm.xlu0 %10177, %v10044
    %v10179 = vpop.permute.xlu0 %10178
    %10182 = vset.pattern.permute.xlu0 0
    %10183 = vperm.xlu0 %10182, %v10045
    %v10184 = vpop.permute.xlu0 %10183
    %10187 = vset.pattern.permute.xlu0 0
    %10188 = vperm.xlu0 %10187, %v10046
    %v10189 = vpop.permute.xlu0 %10188
    %10192 = vset.pattern.permute.xlu0 0
    %10193 = vperm.xlu0 %10192, %v10047
    %v10194 = vpop.permute.xlu0 %10193
    %10197 = vset.pattern.permute.xlu0 0
    %10198 = vperm.xlu0 %10197, %v10048
    %v10199 = vpop.permute.xlu0 %10198
    %10202 = vset.pattern.permute.xlu0 0
    %10203 = vperm.xlu0 %10202, %v10049
    %v10204 = vpop.permute.xlu0 %10203
    %10207 = vset.pattern.permute.xlu0 0
    %10208 = vperm.xlu0 %10207, %v10050
    %v10209 = vpop.permute.xlu0 %10208
    %v10275 = vunpack.c.l.b16 %v9923
    %v10276 = vunpack.c.h.b16 %v9923
    %v10277 = vunpack.c.l.b16 %v9924
    %v10278 = vunpack.c.h.b16 %v9924
    %v10279 = vunpack.c.l.b16 %v9925
    %v10280 = vunpack.c.h.b16 %v9925
    %v10281 = vunpack.c.l.b16 %v9926
    %v10282 = vunpack.c.h.b16 %v9926
    %v10283 = vunpack.c.l.b16 %v9927
    %v10284 = vunpack.c.h.b16 %v9927
    %v10285 = vunpack.c.l.b16 %v9928
    %v10286 = vunpack.c.h.b16 %v9928
    %v10287 = vunpack.c.l.b16 %v9929
    %v10288 = vunpack.c.h.b16 %v9929
    %v10289 = vunpack.c.l.b16 %v9930
    %v10290 = vunpack.c.h.b16 %v9930
    %v10291 = vunpack.c.l.b16 %v9931
    %v10292 = vunpack.c.h.b16 %v9931
    %v10293 = vunpack.c.l.b16 %v9932
    %v10294 = vunpack.c.h.b16 %v9932
    %v10295 = vunpack.c.l.b16 %v9933
    %v10296 = vunpack.c.h.b16 %v9933
    %v10297 = vunpack.c.l.b16 %v9934
    %v10298 = vunpack.c.h.b16 %v9934
    %v10299 = vunpack.c.l.b16 %v9935
    %v10300 = vunpack.c.h.b16 %v9935
    %v10301 = vunpack.c.l.b16 %v9936
    %v10302 = vunpack.c.h.b16 %v9936
    %v10303 = vunpack.c.l.b16 %v9937
    %v10304 = vunpack.c.h.b16 %v9937
    %v10305 = vunpack.c.l.b16 %v9938
    %v10306 = vunpack.c.h.b16 %v9938
    %v10307 = vunpack.c.l.b16 %v9939
    %v10308 = vunpack.c.h.b16 %v9939
    %v10309 = vunpack.c.l.b16 %v9940
    %v10310 = vunpack.c.h.b16 %v9940
    %v10311 = vunpack.c.l.b16 %v9941
    %v10312 = vunpack.c.h.b16 %v9941
    %v10313 = vunpack.c.l.b16 %v9942
    %v10314 = vunpack.c.h.b16 %v9942
    %v10315 = vunpack.c.l.b16 %v9943
    %v10316 = vunpack.c.h.b16 %v9943
    %v10317 = vunpack.c.l.b16 %v9944
    %v10318 = vunpack.c.h.b16 %v9944
    %v10319 = vunpack.c.l.b16 %v9945
    %v10320 = vunpack.c.h.b16 %v9945
    %v10321 = vunpack.c.l.b16 %v9946
    %v10322 = vunpack.c.h.b16 %v9946
    %v10323 = vunpack.c.l.b16 %v9947
    %v10324 = vunpack.c.h.b16 %v9947
    %v10325 = vunpack.c.l.b16 %v9948
    %v10326 = vunpack.c.h.b16 %v9948
    %v10327 = vunpack.c.l.b16 %v9949
    %v10328 = vunpack.c.h.b16 %v9949
    %v10329 = vunpack.c.l.b16 %v9950
    %v10330 = vunpack.c.h.b16 %v9950
    %v10331 = vunpack.c.l.b16 %v9951
    %v10332 = vunpack.c.h.b16 %v9951
    %v10333 = vunpack.c.l.b16 %v9952
    %v10334 = vunpack.c.h.b16 %v9952
    %v10335 = vunpack.c.l.b16 %v9953
    %v10336 = vunpack.c.h.b16 %v9953
    %v10337 = vunpack.c.l.b16 %v9954
    %v10338 = vunpack.c.h.b16 %v9954
    %v10339 = vunpack.c.l.b16 %v9955
    %v10340 = vunpack.c.h.b16 %v9955
    %v10341 = vunpack.c.l.b16 %v9956
    %v10342 = vunpack.c.h.b16 %v9956
    %v10343 = vunpack.c.l.b16 %v9957
    %v10344 = vunpack.c.h.b16 %v9957
    %v10345 = vunpack.c.l.b16 %v9958
    %v10346 = vunpack.c.h.b16 %v9958
    %v10347 = vunpack.c.l.b16 %v9959
    %v10348 = vunpack.c.h.b16 %v9959
    %v10349 = vunpack.c.l.b16 %v9960
    %v10350 = vunpack.c.h.b16 %v9960
    %v10351 = vunpack.c.l.b16 %v9961
    %v10352 = vunpack.c.h.b16 %v9961
    %v10353 = vunpack.c.l.b16 %v9962
    %v10354 = vunpack.c.h.b16 %v9962
    %v10355 = vunpack.c.l.b16 %v9963
    %v10356 = vunpack.c.h.b16 %v9963
    %v10357 = vunpack.c.l.b16 %v9964
    %v10358 = vunpack.c.h.b16 %v9964
    %v10359 = vunpack.c.l.b16 %v9965
    %v10360 = vunpack.c.h.b16 %v9965
    %v10361 = vunpack.c.l.b16 %v9966
    %v10362 = vunpack.c.h.b16 %v9966
    %v10363 = vunpack.c.l.b16 %v9967
    %v10364 = vunpack.c.h.b16 %v9967
    %v10365 = vunpack.c.l.b16 %v9968
    %v10366 = vunpack.c.h.b16 %v9968
    %v10367 = vunpack.c.l.b16 %v9969
    %v10368 = vunpack.c.h.b16 %v9969
    %v10369 = vunpack.c.l.b16 %v9970
    %v10370 = vunpack.c.h.b16 %v9970
    %v10371 = vunpack.c.l.b16 %v9971
    %v10372 = vunpack.c.h.b16 %v9971
    %v10373 = vunpack.c.l.b16 %v9972
    %v10374 = vunpack.c.h.b16 %v9972
    %v10375 = vunpack.c.l.b16 %v9973
    %v10376 = vunpack.c.h.b16 %v9973
    %v10377 = vunpack.c.l.b16 %v9974
    %v10378 = vunpack.c.h.b16 %v9974
    %v10379 = vunpack.c.l.b16 %v9975
    %v10380 = vunpack.c.h.b16 %v9975
    %v10381 = vunpack.c.l.b16 %v9976
    %v10382 = vunpack.c.h.b16 %v9976
    %v10383 = vunpack.c.l.b16 %v9977
    %v10384 = vunpack.c.h.b16 %v9977
    %v10385 = vunpack.c.l.b16 %v9978
    %v10386 = vunpack.c.h.b16 %v9978
    %v10387 = vunpack.c.l.b16 %v9979
    %v10388 = vunpack.c.h.b16 %v9979
    %v10389 = vunpack.c.l.b16 %v9980
    %v10390 = vunpack.c.h.b16 %v9980
    %v10391 = vunpack.c.l.b16 %v9981
    %v10392 = vunpack.c.h.b16 %v9981
    %v10393 = vunpack.c.l.b16 %v9982
    %v10394 = vunpack.c.h.b16 %v9982
    %v10395 = vunpack.c.l.b16 %v9983
    %v10396 = vunpack.c.h.b16 %v9983
    %v10397 = vunpack.c.l.b16 %v9984
    %v10398 = vunpack.c.h.b16 %v9984
    %v10399 = vunpack.c.l.b16 %v9985
    %v10400 = vunpack.c.h.b16 %v9985
    %v10401 = vunpack.c.l.b16 %v9986
    %v10402 = vunpack.c.h.b16 %v9986
    %v10403 = vpack.c.b16 %v10279, %v10275
    %v10404 = vpack.c.b16 %v10280, %v10276
    %v10405 = vpack.c.b16 %v10281, %v10277
    %v10406 = vpack.c.b16 %v10282, %v10278
    %v10407 = vpack.c.b16 %v10287, %v10283
    %v10408 = vpack.c.b16 %v10288, %v10284
    %v10409 = vpack.c.b16 %v10289, %v10285
    %v10410 = vpack.c.b16 %v10290, %v10286
    %v10411 = vpack.c.b16 %v10295, %v10291
    %v10412 = vpack.c.b16 %v10296, %v10292
    %v10413 = vpack.c.b16 %v10297, %v10293
    %v10414 = vpack.c.b16 %v10298, %v10294
    %v10415 = vpack.c.b16 %v10303, %v10299
    %v10416 = vpack.c.b16 %v10304, %v10300
    %v10417 = vpack.c.b16 %v10305, %v10301
    %v10418 = vpack.c.b16 %v10306, %v10302
    %v10419 = vpack.c.b16 %v10311, %v10307
    %v10420 = vpack.c.b16 %v10312, %v10308
    %v10421 = vpack.c.b16 %v10313, %v10309
    %v10422 = vpack.c.b16 %v10314, %v10310
    %v10423 = vpack.c.b16 %v10319, %v10315
    %v10424 = vpack.c.b16 %v10320, %v10316
    %v10425 = vpack.c.b16 %v10321, %v10317
    %v10426 = vpack.c.b16 %v10322, %v10318
    %v10427 = vpack.c.b16 %v10327, %v10323
    %v10428 = vpack.c.b16 %v10328, %v10324
    %v10429 = vpack.c.b16 %v10329, %v10325
    %v10430 = vpack.c.b16 %v10330, %v10326
    %v10431 = vpack.c.b16 %v10335, %v10331
    %v10432 = vpack.c.b16 %v10336, %v10332
    %v10433 = vpack.c.b16 %v10337, %v10333
    %v10434 = vpack.c.b16 %v10338, %v10334
    %v10435 = vpack.c.b16 %v10343, %v10339
    %v10436 = vpack.c.b16 %v10344, %v10340
    %v10437 = vpack.c.b16 %v10345, %v10341
    %v10438 = vpack.c.b16 %v10346, %v10342
    %v10439 = vpack.c.b16 %v10351, %v10347
    %v10440 = vpack.c.b16 %v10352, %v10348
    %v10441 = vpack.c.b16 %v10353, %v10349
    %v10442 = vpack.c.b16 %v10354, %v10350
    %v10443 = vpack.c.b16 %v10359, %v10355
    %v10444 = vpack.c.b16 %v10360, %v10356
    %v10445 = vpack.c.b16 %v10361, %v10357
    %v10446 = vpack.c.b16 %v10362, %v10358
    %v10447 = vpack.c.b16 %v10367, %v10363
    %v10448 = vpack.c.b16 %v10368, %v10364
    %v10449 = vpack.c.b16 %v10369, %v10365
    %v10450 = vpack.c.b16 %v10370, %v10366
    %v10451 = vpack.c.b16 %v10375, %v10371
    %v10452 = vpack.c.b16 %v10376, %v10372
    %v10453 = vpack.c.b16 %v10377, %v10373
    %v10454 = vpack.c.b16 %v10378, %v10374
    %v10455 = vpack.c.b16 %v10383, %v10379
    %v10456 = vpack.c.b16 %v10384, %v10380
    %v10457 = vpack.c.b16 %v10385, %v10381
    %v10458 = vpack.c.b16 %v10386, %v10382
    %v10459 = vpack.c.b16 %v10391, %v10387
    %v10460 = vpack.c.b16 %v10392, %v10388
    %v10461 = vpack.c.b16 %v10393, %v10389
    %v10462 = vpack.c.b16 %v10394, %v10390
    %v10463 = vpack.c.b16 %v10399, %v10395
    %v10464 = vpack.c.b16 %v10400, %v10396
    %v10465 = vpack.c.b16 %v10401, %v10397
    %v10466 = vpack.c.b16 %v10402, %v10398
    %10531 = vmatprep.subr.bf16.mxu0 0
    %10532 = vmatpush1.bf16.msra.mxu0 %v9987
    %10533 = vmatprep.subr.bf16.mxu0 0
    %10534 = vmatpush1.bf16.msra.mxu0 %v9988
    %10535 = vmatprep.subr.bf16.mxu0 0
    %10536 = vmatpush1.bf16.msra.mxu0 %v9989
    %10537 = vmatprep.subr.bf16.mxu0 0
    %10538 = vmatpush1.bf16.msra.mxu0 %v9990
    %10539 = vmatprep.subr.bf16.mxu0 0
    %10540 = vmatpush1.bf16.msra.mxu0 %v9991
    %10541 = vmatprep.subr.bf16.mxu0 0
    %10542 = vmatpush1.bf16.msra.mxu0 %v9992
    %10543 = vmatprep.subr.bf16.mxu0 0
    %10544 = vmatpush1.bf16.msra.mxu0 %v9993
    %10545 = vmatprep.subr.bf16.mxu0 0
    %10546 = vmatpush1.bf16.msra.mxu0 %v9994
    %10547 = vmatprep.subr.bf16.mxu0 0
    %10548 = vmatpush1.bf16.msra.mxu0 %v9995
    %10549 = vmatprep.subr.bf16.mxu0 0
    %10550 = vmatpush1.bf16.msra.mxu0 %v9996
    %10551 = vmatprep.subr.bf16.mxu0 0
    %10552 = vmatpush1.bf16.msra.mxu0 %v9997
    %10553 = vmatprep.subr.bf16.mxu0 0
    %10554 = vmatpush1.bf16.msra.mxu0 %v9998
    %10555 = vmatprep.subr.bf16.mxu0 0
    %10556 = vmatpush1.bf16.msra.mxu0 %v9999
    %10557 = vmatprep.subr.bf16.mxu0 0
    %10558 = vmatpush1.bf16.msra.mxu0 %v10000
    %10559 = vmatprep.subr.bf16.mxu0 0
    %10560 = vmatpush1.bf16.msra.mxu0 %v10001
    %10561 = vmatprep.subr.bf16.mxu0 0
    %10562 = vmatpush1.bf16.msra.mxu0 %v10002
    %10563 = vmatprep.mubr.bf16.mxu0 %v10404
    %10564 = vmatmul.mubr.bf16.gmra.mrb[0].mxu0 %v10403
    %v10565 = vpop.f32.mrb[0].mxu0
    %v10566 = vadd.f32 %v10054, %v10565
    %v10567 = vpop.f32.mrb[0].mxu0
    %v10568 = vpop.f32.mrb[0].mxu0
    %v10569 = vadd.f32 %v10059, %v10568
    %v10570 = vpop.f32.mrb[0].mxu0
    %10571 = vmatprep.mubr.bf16.mxu0 %v10408
    %10572 = vmatmul.mubr.bf16.gmra.mrb[0].mxu0 %v10407
    %v10573 = vpop.f32.mrb[0].mxu0
    %v10574 = vadd.f32 %v10064, %v10573
    %v10575 = vpop.f32.mrb[0].mxu0
    %v10576 = vpop.f32.mrb[0].mxu0
    %v10577 = vadd.f32 %v10069, %v10576
    %v10578 = vpop.f32.mrb[0].mxu0
    %10579 = vmatprep.mubr.bf16.mxu0 %v10412
    %10580 = vmatmul.mubr.bf16.gmra.mrb[0].mxu0 %v10411
    %v10581 = vpop.f32.mrb[0].mxu0
    %v10582 = vadd.f32 %v10074, %v10581
    %v10583 = vpop.f32.mrb[0].mxu0
    %v10584 = vpop.f32.mrb[0].mxu0
    %v10585 = vadd.f32 %v10079, %v10584
    %v10586 = vpop.f32.mrb[0].mxu0
    %10587 = vmatprep.mubr.bf16.mxu0 %v10416
    %10588 = vmatmul.mubr.bf16.gmra.mrb[0].mxu0 %v10415
    %v10589 = vpop.f32.mrb[0].mxu0
    %v10590 = vadd.f32 %v10084, %v10589
    %v10591 = vpop.f32.mrb[0].mxu0
    %v10592 = vpop.f32.mrb[0].mxu0
    %v10593 = vadd.f32 %v10089, %v10592
    %v10594 = vpop.f32.mrb[0].mxu0
    %10595 = vmatprep.mubr.bf16.mxu0 %v10420
    %10596 = vmatmul.mubr.bf16.gmra.mrb[0].mxu0 %v10419
    %v10597 = vpop.f32.mrb[0].mxu0
    %v10598 = vadd.f32 %v10094, %v10597
    %v10599 = vpop.f32.mrb[0].mxu0
    %v10600 = vpop.f32.mrb[0].mxu0
    %v10601 = vadd.f32 %v10099, %v10600
    %v10602 = vpop.f32.mrb[0].mxu0
    %10603 = vmatprep.mubr.bf16.mxu0 %v10424
    %10604 = vmatmul.mubr.bf16.gmra.mrb[0].mxu0 %v10423
    %v10605 = vpop.f32.mrb[0].mxu0
    %v10606 = vadd.f32 %v10104, %v10605
    %v10607 = vpop.f32.mrb[0].mxu0
    %v10608 = vpop.f32.mrb[0].mxu0
    %v10609 = vadd.f32 %v10109, %v10608
    %v10610 = vpop.f32.mrb[0].mxu0
    %10611 = vmatprep.mubr.bf16.mxu0 %v10428
    %10612 = vmatmul.mubr.bf16.gmra.mrb[0].mxu0 %v10427
    %v10613 = vpop.f32.mrb[0].mxu0
    %v10614 = vadd.f32 %v10114, %v10613
    %v10615 = vpop.f32.mrb[0].mxu0
    %v10616 = vpop.f32.mrb[0].mxu0
    %v10617 = vadd.f32 %v10119, %v10616
    %v10618 = vpop.f32.mrb[0].mxu0
    %10619 = vmatprep.mubr.bf16.mxu0 %v10432
    %10620 = vmatmul.mubr.bf16.gmra.mrb[0].mxu0 %v10431
    %v10621 = vpop.f32.mrb[0].mxu0
    %v10622 = vadd.f32 %v10124, %v10621
    %v10623 = vpop.f32.mrb[0].mxu0
    %v10624 = vpop.f32.mrb[0].mxu0
    %v10625 = vadd.f32 %v10129, %v10624
    %v10626 = vpop.f32.mrb[0].mxu0
    %10627 = vmatprep.mubr.bf16.mxu0 %v10436
    %10628 = vmatmul.mubr.bf16.gmra.mrb[0].mxu0 %v10435
    %v10629 = vpop.f32.mrb[0].mxu0
    %v10630 = vadd.f32 %v10134, %v10629
    %v10631 = vpop.f32.mrb[0].mxu0
    %v10632 = vpop.f32.mrb[0].mxu0
    %v10633 = vadd.f32 %v10139, %v10632
    %v10634 = vpop.f32.mrb[0].mxu0
    %10635 = vmatprep.mubr.bf16.mxu0 %v10440
    %10636 = vmatmul.mubr.bf16.gmra.mrb[0].mxu0 %v10439
    %v10637 = vpop.f32.mrb[0].mxu0
    %v10638 = vadd.f32 %v10144, %v10637
    %v10639 = vpop.f32.mrb[0].mxu0
    %v10640 = vpop.f32.mrb[0].mxu0
    %v10641 = vadd.f32 %v10149, %v10640
    %v10642 = vpop.f32.mrb[0].mxu0
    %10643 = vmatprep.mubr.bf16.mxu0 %v10444
    %10644 = vmatmul.mubr.bf16.gmra.mrb[0].mxu0 %v10443
    %v10645 = vpop.f32.mrb[0].mxu0
    %v10646 = vadd.f32 %v10154, %v10645
    %v10647 = vpop.f32.mrb[0].mxu0
    %v10648 = vpop.f32.mrb[0].mxu0
    %v10649 = vadd.f32 %v10159, %v10648
    %v10650 = vpop.f32.mrb[0].mxu0
    %10651 = vmatprep.mubr.bf16.mxu0 %v10448
    %10652 = vmatmul.mubr.bf16.gmra.mrb[0].mxu0 %v10447
    %v10653 = vpop.f32.mrb[0].mxu0
    %v10654 = vadd.f32 %v10164, %v10653
    %v10655 = vpop.f32.mrb[0].mxu0
    %v10656 = vpop.f32.mrb[0].mxu0
    %v10657 = vadd.f32 %v10169, %v10656
    %v10658 = vpop.f32.mrb[0].mxu0
    %10659 = vmatprep.mubr.bf16.mxu0 %v10452
    %10660 = vmatmul.mubr.bf16.gmra.mrb[0].mxu0 %v10451
    %v10661 = vpop.f32.mrb[0].mxu0
    %v10662 = vadd.f32 %v10174, %v10661
    %v10663 = vpop.f32.mrb[0].mxu0
    %v10664 = vpop.f32.mrb[0].mxu0
    %v10665 = vadd.f32 %v10179, %v10664
    %v10666 = vpop.f32.mrb[0].mxu0
    %10667 = vmatprep.mubr.bf16.mxu0 %v10456
    %10668 = vmatmul.mubr.bf16.gmra.mrb[0].mxu0 %v10455
    %v10669 = vpop.f32.mrb[0].mxu0
    %v10670 = vadd.f32 %v10184, %v10669
    %v10671 = vpop.f32.mrb[0].mxu0
    %v10672 = vpop.f32.mrb[0].mxu0
    %v10673 = vadd.f32 %v10189, %v10672
    %v10674 = vpop.f32.mrb[0].mxu0
    %10675 = vmatprep.mubr.bf16.mxu0 %v10460
    %10676 = vmatmul.mubr.bf16.gmra.mrb[0].mxu0 %v10459
    %v10677 = vpop.f32.mrb[0].mxu0
    %v10678 = vadd.f32 %v10194, %v10677
    %v10679 = vpop.f32.mrb[0].mxu0
    %v10680 = vpop.f32.mrb[0].mxu0
    %v10681 = vadd.f32 %v10199, %v10680
    %v10682 = vpop.f32.mrb[0].mxu0
    %10683 = vmatprep.mubr.bf16.mxu0 %v10464
    %10684 = vmatmul.mubr.bf16.gmra.mrb[0].mxu0 %v10463
    %v10685 = vpop.f32.mrb[0].mxu0
    %v10686 = vadd.f32 %v10204, %v10685
    %v10687 = vpop.f32.mrb[0].mxu0
    %v10688 = vpop.f32.mrb[0].mxu0
    %v10689 = vadd.f32 %v10209, %v10688
    %v10690 = vpop.f32.mrb[0].mxu0
    %10691 = vdwg.mxu0
    %10692 = vmatprep.subr.bf16.mxu0 0
    %10693 = vmatpush1.bf16.msra.mxu0 %v10003
    %10694 = vmatprep.subr.bf16.mxu0 0
    %10695 = vmatpush1.bf16.msra.mxu0 %v10004
    %10696 = vmatprep.subr.bf16.mxu0 0
    %10697 = vmatpush1.bf16.msra.mxu0 %v10005
    %10698 = vmatprep.subr.bf16.mxu0 0
    %10699 = vmatpush1.bf16.msra.mxu0 %v10006
    %10700 = vmatprep.subr.bf16.mxu0 0
    %10701 = vmatpush1.bf16.msra.mxu0 %v10007
    %10702 = vmatprep.subr.bf16.mxu0 0
    %10703 = vmatpush1.bf16.msra.mxu0 %v10008
    %10704 = vmatprep.subr.bf16.mxu0 0
    %10705 = vmatpush1.bf16.msra.mxu0 %v10009
    %10706 = vmatprep.subr.bf16.mxu0 0
    %10707 = vmatpush1.bf16.msra.mxu0 %v10010
    %10708 = vmatprep.subr.bf16.mxu0 0
    %10709 = vmatpush1.bf16.msra.mxu0 %v10011
    %10710 = vmatprep.subr.bf16.mxu0 0
    %10711 = vmatpush1.bf16.msra.mxu0 %v10012
    %10712 = vmatprep.subr.bf16.mxu0 0
    %10713 = vmatpush1.bf16.msra.mxu0 %v10013
    %10714 = vmatprep.subr.bf16.mxu0 0
    %10715 = vmatpush1.bf16.msra.mxu0 %v10014
    %10716 = vmatprep.subr.bf16.mxu0 0
    %10717 = vmatpush1.bf16.msra.mxu0 %v10015
    %10718 = vmatprep.subr.bf16.mxu0 0
    %10719 = vmatpush1.bf16.msra.mxu0 %v10016
    %10720 = vmatprep.subr.bf16.mxu0 0
    %10721 = vmatpush1.bf16.msra.mxu0 %v10017
    %10722 = vmatprep.subr.bf16.mxu0 0
    %10723 = vmatpush1.bf16.msra.mxu0 %v10018
    %10724 = vmatprep.mubr.bf16.mxu0 %v10406
    %10725 = vmatmul.mubr.bf16.gmra.mrb[0].mxu0 %v10405
    %v10726 = vpop.f32.mrb[0].mxu0
    %v10727 = vadd.f32 %v10566, %v10726
    %v10728 = vpop.f32.mrb[0].mxu0
    %v10729 = vpop.f32.mrb[0].mxu0
    %v10730 = vadd.f32 %v10569, %v10729
    %v10731 = vpop.f32.mrb[0].mxu0
    %10732 = vmatprep.mubr.bf16.mxu0 %v10410
    %10733 = vmatmul.mubr.bf16.gmra.mrb[0].mxu0 %v10409
    %v10734 = vpop.f32.mrb[0].mxu0
    %v10735 = vadd.f32 %v10574, %v10734
    %v10736 = vpop.f32.mrb[0].mxu0
    %v10737 = vpop.f32.mrb[0].mxu0
    %v10738 = vadd.f32 %v10577, %v10737
    %v10739 = vpop.f32.mrb[0].mxu0
    %10740 = vmatprep.mubr.bf16.mxu0 %v10414
    %10741 = vmatmul.mubr.bf16.gmra.mrb[0].mxu0 %v10413
    %v10742 = vpop.f32.mrb[0].mxu0
    %v10743 = vadd.f32 %v10582, %v10742
    %v10744 = vpop.f32.mrb[0].mxu0
    %v10745 = vpop.f32.mrb[0].mxu0
    %v10746 = vadd.f32 %v10585, %v10745
    %v10747 = vpop.f32.mrb[0].mxu0
    %10748 = vmatprep.mubr.bf16.mxu0 %v10418
    %10749 = vmatmul.mubr.bf16.gmra.mrb[0].mxu0 %v10417
    %v10750 = vpop.f32.mrb[0].mxu0
    %v10751 = vadd.f32 %v10590, %v10750
    %v10752 = vpop.f32.mrb[0].mxu0
    %v10753 = vpop.f32.mrb[0].mxu0
    %v10754 = vadd.f32 %v10593, %v10753
    %v10755 = vpop.f32.mrb[0].mxu0
    %10756 = vmatprep.mubr.bf16.mxu0 %v10422
    %10757 = vmatmul.mubr.bf16.gmra.mrb[0].mxu0 %v10421
    %v10758 = vpop.f32.mrb[0].mxu0
    %v10759 = vadd.f32 %v10598, %v10758
    %v10760 = vpop.f32.mrb[0].mxu0
    %v10761 = vpop.f32.mrb[0].mxu0
    %v10762 = vadd.f32 %v10601, %v10761
    %v10763 = vpop.f32.mrb[0].mxu0
    %10764 = vmatprep.mubr.bf16.mxu0 %v10426
    %10765 = vmatmul.mubr.bf16.gmra.mrb[0].mxu0 %v10425
    %v10766 = vpop.f32.mrb[0].mxu0
    %v10767 = vadd.f32 %v10606, %v10766
    %v10768 = vpop.f32.mrb[0].mxu0
    %v10769 = vpop.f32.mrb[0].mxu0
    %v10770 = vadd.f32 %v10609, %v10769
    %v10771 = vpop.f32.mrb[0].mxu0
    %10772 = vmatprep.mubr.bf16.mxu0 %v10430
    %10773 = vmatmul.mubr.bf16.gmra.mrb[0].mxu0 %v10429
    %v10774 = vpop.f32.mrb[0].mxu0
    %v10775 = vadd.f32 %v10614, %v10774
    %v10776 = vpop.f32.mrb[0].mxu0
    %v10777 = vpop.f32.mrb[0].mxu0
    %v10778 = vadd.f32 %v10617, %v10777
    %v10779 = vpop.f32.mrb[0].mxu0
    %10780 = vmatprep.mubr.bf16.mxu0 %v10434
    %10781 = vmatmul.mubr.bf16.gmra.mrb[0].mxu0 %v10433
    %v10782 = vpop.f32.mrb[0].mxu0
    %v10783 = vadd.f32 %v10622, %v10782
    %v10784 = vpop.f32.mrb[0].mxu0
    %v10785 = vpop.f32.mrb[0].mxu0
    %v10786 = vadd.f32 %v10625, %v10785
    %v10787 = vpop.f32.mrb[0].mxu0
    %10788 = vmatprep.mubr.bf16.mxu0 %v10438
    %10789 = vmatmul.mubr.bf16.gmra.mrb[0].mxu0 %v10437
    %v10790 = vpop.f32.mrb[0].mxu0
    %v10791 = vadd.f32 %v10630, %v10790
    %v10792 = vpop.f32.mrb[0].mxu0
    %v10793 = vpop.f32.mrb[0].mxu0
    %v10794 = vadd.f32 %v10633, %v10793
    %v10795 = vpop.f32.mrb[0].mxu0
    %10796 = vmatprep.mubr.bf16.mxu0 %v10442
    %10797 = vmatmul.mubr.bf16.gmra.mrb[0].mxu0 %v10441
    %v10798 = vpop.f32.mrb[0].mxu0
    %v10799 = vadd.f32 %v10638, %v10798
    %v10800 = vpop.f32.mrb[0].mxu0
    %v10801 = vpop.f32.mrb[0].mxu0
    %v10802 = vadd.f32 %v10641, %v10801
    %v10803 = vpop.f32.mrb[0].mxu0
    %10804 = vmatprep.mubr.bf16.mxu0 %v10446
    %10805 = vmatmul.mubr.bf16.gmra.mrb[0].mxu0 %v10445
    %v10806 = vpop.f32.mrb[0].mxu0
    %v10807 = vadd.f32 %v10646, %v10806
    %v10808 = vpop.f32.mrb[0].mxu0
    %v10809 = vpop.f32.mrb[0].mxu0
    %v10810 = vadd.f32 %v10649, %v10809
    %v10811 = vpop.f32.mrb[0].mxu0
    %10812 = vmatprep.mubr.bf16.mxu0 %v10450
    %10813 = vmatmul.mubr.bf16.gmra.mrb[0].mxu0 %v10449
    %v10814 = vpop.f32.mrb[0].mxu0
    %v10815 = vadd.f32 %v10654, %v10814
    %v10816 = vpop.f32.mrb[0].mxu0
    %v10817 = vpop.f32.mrb[0].mxu0
    %v10818 = vadd.f32 %v10657, %v10817
    %v10819 = vpop.f32.mrb[0].mxu0
    %10820 = vmatprep.mubr.bf16.mxu0 %v10454
    %10821 = vmatmul.mubr.bf16.gmra.mrb[0].mxu0 %v10453
    %v10822 = vpop.f32.mrb[0].mxu0
    %v10823 = vadd.f32 %v10662, %v10822
    %v10824 = vpop.f32.mrb[0].mxu0
    %v10825 = vpop.f32.mrb[0].mxu0
    %v10826 = vadd.f32 %v10665, %v10825
    %v10827 = vpop.f32.mrb[0].mxu0
    %10828 = vmatprep.mubr.bf16.mxu0 %v10458
    %10829 = vmatmul.mubr.bf16.gmra.mrb[0].mxu0 %v10457
    %v10830 = vpop.f32.mrb[0].mxu0
    %v10831 = vadd.f32 %v10670, %v10830
    %v10832 = vpop.f32.mrb[0].mxu0
    %v10833 = vpop.f32.mrb[0].mxu0
    %v10834 = vadd.f32 %v10673, %v10833
    %v10835 = vpop.f32.mrb[0].mxu0
    %10836 = vmatprep.mubr.bf16.mxu0 %v10462
    %10837 = vmatmul.mubr.bf16.gmra.mrb[0].mxu0 %v10461
    %v10838 = vpop.f32.mrb[0].mxu0
    %v10839 = vadd.f32 %v10678, %v10838
    %v10840 = vpop.f32.mrb[0].mxu0
    %v10841 = vpop.f32.mrb[0].mxu0
    %v10842 = vadd.f32 %v10681, %v10841
    %v10843 = vpop.f32.mrb[0].mxu0
    %10844 = vmatprep.mubr.bf16.mxu0 %v10466
    %10845 = vmatmul.mubr.bf16.gmra.mrb[0].mxu0 %v10465
    %v10846 = vpop.f32.mrb[0].mxu0
    %v10847 = vadd.f32 %v10686, %v10846
    %v10848 = vpop.f32.mrb[0].mxu0
    %v10849 = vpop.f32.mrb[0].mxu0
    %v10850 = vadd.f32 %v10689, %v10849
    %v10851 = vpop.f32.mrb[0].mxu0
    %10852 = vdwg.mxu0
    %vm10853 = vcmp.gt.f32.partialorder %v10727, 0.0
    %vm10854 = vcmp.gt.f32.partialorder %v10730, 0.0
    %vm10855 = vcmp.gt.f32.partialorder %v10735, 0.0
    %vm10856 = vcmp.gt.f32.partialorder %v10738, 0.0
    %vm10857 = vcmp.gt.f32.partialorder %v10743, 0.0
    %vm10858 = vcmp.gt.f32.partialorder %v10746, 0.0
    %vm10859 = vcmp.gt.f32.partialorder %v10751, 0.0
    %vm10860 = vcmp.gt.f32.partialorder %v10754, 0.0
    %vm10861 = vcmp.gt.f32.partialorder %v10759, 0.0
    %vm10862 = vcmp.gt.f32.partialorder %v10762, 0.0
    %vm10863 = vcmp.gt.f32.partialorder %v10767, 0.0
    %vm10864 = vcmp.gt.f32.partialorder %v10770, 0.0
    %vm10865 = vcmp.gt.f32.partialorder %v10775, 0.0
    %vm10866 = vcmp.gt.f32.partialorder %v10778, 0.0
    %vm10867 = vcmp.gt.f32.partialorder %v10783, 0.0
    %vm10868 = vcmp.gt.f32.partialorder %v10786, 0.0
    %vm10869 = vcmp.gt.f32.partialorder %v10791, 0.0
    %vm10870 = vcmp.gt.f32.partialorder %v10794, 0.0
    %vm10871 = vcmp.gt.f32.partialorder %v10799, 0.0
    %vm10872 = vcmp.gt.f32.partialorder %v10802, 0.0
    %vm10873 = vcmp.gt.f32.partialorder %v10807, 0.0
    %vm10874 = vcmp.gt.f32.partialorder %v10810, 0.0
    %vm10875 = vcmp.gt.f32.partialorder %v10815, 0.0
    %vm10876 = vcmp.gt.f32.partialorder %v10818, 0.0
    %vm10877 = vcmp.gt.f32.partialorder %v10823, 0.0
    %vm10878 = vcmp.gt.f32.partialorder %v10826, 0.0
    %vm10879 = vcmp.gt.f32.partialorder %v10831, 0.0
    %vm10880 = vcmp.gt.f32.partialorder %v10834, 0.0
    %vm10881 = vcmp.gt.f32.partialorder %v10839, 0.0
    %vm10882 = vcmp.gt.f32.partialorder %v10842, 0.0
    %vm10883 = vcmp.gt.f32.partialorder %v10847, 0.0
    %vm10884 = vcmp.gt.f32.partialorder %v10850, 0.0
    %v10885 = vmul.f32 %v10727, 0.2
    %v10886 = vmul.f32 %v10730, 0.2
    %v10887 = vmul.f32 %v10735, 0.2
    %v10888 = vmul.f32 %v10738, 0.2
    %v10889 = vmul.f32 %v10743, 0.2
    %v10890 = vmul.f32 %v10746, 0.2
    %v10891 = vmul.f32 %v10751, 0.2
    %v10892 = vmul.f32 %v10754, 0.2
    %v10893 = vmul.f32 %v10759, 0.2
    %v10894 = vmul.f32 %v10762, 0.2
    %v10895 = vmul.f32 %v10767, 0.2
    %v10896 = vmul.f32 %v10770, 0.2
    %v10897 = vmul.f32 %v10775, 0.2
    %v10898 = vmul.f32 %v10778, 0.2
    %v10899 = vmul.f32 %v10783, 0.2
    %v10900 = vmul.f32 %v10786, 0.2
    %v10901 = vmul.f32 %v10791, 0.2
    %v10902 = vmul.f32 %v10794, 0.2
    %v10903 = vmul.f32 %v10799, 0.2
    %v10904 = vmul.f32 %v10802, 0.2
    %v10905 = vmul.f32 %v10807, 0.2
    %v10906 = vmul.f32 %v10810, 0.2
    %v10907 = vmul.f32 %v10815, 0.2
    %v10908 = vmul.f32 %v10818, 0.2
    %v10909 = vmul.f32 %v10823, 0.2
    %v10910 = vmul.f32 %v10826, 0.2
    %v10911 = vmul.f32 %v10831, 0.2
    %v10912 = vmul.f32 %v10834, 0.2
    %v10913 = vmul.f32 %v10839, 0.2
    %v10914 = vmul.f32 %v10842, 0.2
    %v10915 = vmul.f32 %v10847, 0.2
    %v10916 = vmul.f32 %v10850, 0.2
    %v10917 = vsel %vm10853, %v10727, %v10885
    %v10918 = vsel %vm10854, %v10730, %v10886
    %v10919 = vsel %vm10855, %v10735, %v10887
    %v10920 = vsel %vm10856, %v10738, %v10888
    %v10921 = vsel %vm10857, %v10743, %v10889
    %v10922 = vsel %vm10858, %v10746, %v10890
    %v10923 = vsel %vm10859, %v10751, %v10891
    %v10924 = vsel %vm10860, %v10754, %v10892
    %v10925 = vsel %vm10861, %v10759, %v10893
    %v10926 = vsel %vm10862, %v10762, %v10894
    %v10927 = vsel %vm10863, %v10767, %v10895
    %v10928 = vsel %vm10864, %v10770, %v10896
    %v10929 = vsel %vm10865, %v10775, %v10897
    %v10930 = vsel %vm10866, %v10778, %v10898
    %v10931 = vsel %vm10867, %v10783, %v10899
    %v10932 = vsel %vm10868, %v10786, %v10900
    %v10933 = vsel %vm10869, %v10791, %v10901
    %v10934 = vsel %vm10870, %v10794, %v10902
    %v10935 = vsel %vm10871, %v10799, %v10903
    %v10936 = vsel %vm10872, %v10802, %v10904
    %v10937 = vsel %vm10873, %v10807, %v10905
    %v10938 = vsel %vm10874, %v10810, %v10906
    %v10939 = vsel %vm10875, %v10815, %v10907
    %v10940 = vsel %vm10876, %v10818, %v10908
    %v10941 = vsel %vm10877, %v10823, %v10909
    %v10942 = vsel %vm10878, %v10826, %v10910
    %v10943 = vsel %vm10879, %v10831, %v10911
    %v10944 = vsel %vm10880, %v10834, %v10912
    %v10945 = vsel %vm10881, %v10839, %v10913
    %v10946 = vsel %vm10882, %v10842, %v10914
    %v10947 = vsel %vm10883, %v10847, %v10915
    %v10948 = vsel %vm10884, %v10850, %v10916
    %v10949 = vld [vmem:[%s7] sm:$0xff]
    %v10950 = vld [vmem:[%s7 + $0x8] sm:$0xff]
    %v10951 = vld [vmem:[%s7 + $0x10] sm:$0xff]
    %v10952 = vld [vmem:[%s7 + $0x18] sm:$0xff]
    %v10953 = vld [vmem:[%s7 + $0x20] sm:$0xff]
    %v10954 = vld [vmem:[%s7 + $0x28] sm:$0xff]
    %v10955 = vld [vmem:[%s7 + $0x30] sm:$0xff]
    %v10956 = vld [vmem:[%s7 + $0x38] sm:$0xff]
    %v10957 = vld [vmem:[%s7 + $0x40] sm:$0xff]
    %v10958 = vld [vmem:[%s7 + $0x48] sm:$0xff]
    %v10959 = vld [vmem:[%s7 + $0x50] sm:$0xff]
    %v10960 = vld [vmem:[%s7 + $0x58] sm:$0xff]
    %v10961 = vld [vmem:[%s7 + $0x60] sm:$0xff]
    %v10962 = vld [vmem:[%s7 + $0x68] sm:$0xff]
    %v10963 = vld [vmem:[%s7 + $0x70] sm:$0xff]
    %v10964 = vld [vmem:[%s7 + $0x78] sm:$0xff]
    %v10965 = vld [vmem:[%s7 + $0x80] sm:$0xff]
    %v10966 = vld [vmem:[%s7 + $0x88] sm:$0xff]
    %v10967 = vld [vmem:[%s7 + $0x90] sm:$0xff]
    %v10968 = vld [vmem:[%s7 + $0x98] sm:$0xff]
    %v10969 = vld [vmem:[%s7 + $0xa0] sm:$0xff]
    %v10970 = vld [vmem:[%s7 + $0xa8] sm:$0xff]
    %v10971 = vld [vmem:[%s7 + $0xb0] sm:$0xff]
    %v10972 = vld [vmem:[%s7 + $0xb8] sm:$0xff]
    %v10973 = vld [vmem:[%s7 + $0xc0] sm:$0xff]
    %v10974 = vld [vmem:[%s7 + $0xc8] sm:$0xff]
    %v10975 = vld [vmem:[%s7 + $0xd0] sm:$0xff]
    %v10976 = vld [vmem:[%s7 + $0xd8] sm:$0xff]
    %v10977 = vld [vmem:[%s7 + $0xe0] sm:$0xff]
    %v10978 = vld [vmem:[%s7 + $0xe8] sm:$0xff]
    %v10979 = vld [vmem:[%s7 + $0xf0] sm:$0xff]
    %v10980 = vld [vmem:[%s7 + $0xf8] sm:$0xff]
    %10982 = vset.pattern.permute.xlu0 0
    %10983 = vperm.xlu0 %10982, %v10949
    %v10984 = vpop.permute.xlu0 %10983
    %10987 = vset.pattern.permute.xlu0 0
    %10988 = vperm.xlu0 %10987, %v10950
    %v10989 = vpop.permute.xlu0 %10988
    %10992 = vset.pattern.permute.xlu0 0
    %10993 = vperm.xlu0 %10992, %v10951
    %v10994 = vpop.permute.xlu0 %10993
    %10997 = vset.pattern.permute.xlu0 0
    %10998 = vperm.xlu0 %10997, %v10952
    %v10999 = vpop.permute.xlu0 %10998
    %11002 = vset.pattern.permute.xlu0 0
    %11003 = vperm.xlu0 %11002, %v10953
    %v11004 = vpop.permute.xlu0 %11003
    %11007 = vset.pattern.permute.xlu0 0
    %11008 = vperm.xlu0 %11007, %v10954
    %v11009 = vpop.permute.xlu0 %11008
    %11012 = vset.pattern.permute.xlu0 0
    %11013 = vperm.xlu0 %11012, %v10955
    %v11014 = vpop.permute.xlu0 %11013
    %11017 = vset.pattern.permute.xlu0 0
    %11018 = vperm.xlu0 %11017, %v10956
    %v11019 = vpop.permute.xlu0 %11018
    %11022 = vset.pattern.permute.xlu0 0
    %11023 = vperm.xlu0 %11022, %v10957
    %v11024 = vpop.permute.xlu0 %11023
    %11027 = vset.pattern.permute.xlu0 0
    %11028 = vperm.xlu0 %11027, %v10958
    %v11029 = vpop.permute.xlu0 %11028
    %11032 = vset.pattern.permute.xlu0 0
    %11033 = vperm.xlu0 %11032, %v10959
    %v11034 = vpop.permute.xlu0 %11033
    %11037 = vset.pattern.permute.xlu0 0
    %11038 = vperm.xlu0 %11037, %v10960
    %v11039 = vpop.permute.xlu0 %11038
    %11042 = vset.pattern.permute.xlu0 0
    %11043 = vperm.xlu0 %11042, %v10961
    %v11044 = vpop.permute.xlu0 %11043
    %11047 = vset.pattern.permute.xlu0 0
    %11048 = vperm.xlu0 %11047, %v10962
    %v11049 = vpop.permute.xlu0 %11048
    %11052 = vset.pattern.permute.xlu0 0
    %11053 = vperm.xlu0 %11052, %v10963
    %v11054 = vpop.permute.xlu0 %11053
    %11057 = vset.pattern.permute.xlu0 0
    %11058 = vperm.xlu0 %11057, %v10964
    %v11059 = vpop.permute.xlu0 %11058
    %11062 = vset.pattern.permute.xlu0 0
    %11063 = vperm.xlu0 %11062, %v10965
    %v11064 = vpop.permute.xlu0 %11063
    %11067 = vset.pattern.permute.xlu0 0
    %11068 = vperm.xlu0 %11067, %v10966
    %v11069 = vpop.permute.xlu0 %11068
    %11072 = vset.pattern.permute.xlu0 0
    %11073 = vperm.xlu0 %11072, %v10967
    %v11074 = vpop.permute.xlu0 %11073
    %11077 = vset.pattern.permute.xlu0 0
    %11078 = vperm.xlu0 %11077, %v10968
    %v11079 = vpop.permute.xlu0 %11078
    %11082 = vset.pattern.permute.xlu0 0
    %11083 = vperm.xlu0 %11082, %v10969
    %v11084 = vpop.permute.xlu0 %11083
    %11087 = vset.pattern.permute.xlu0 0
    %11088 = vperm.xlu0 %11087, %v10970
    %v11089 = vpop.permute.xlu0 %11088
    %11092 = vset.pattern.permute.xlu0 0
    %11093 = vperm.xlu0 %11092, %v10971
    %v11094 = vpop.permute.xlu0 %11093
    %11097 = vset.pattern.permute.xlu0 0
    %11098 = vperm.xlu0 %11097, %v10972
    %v11099 = vpop.permute.xlu0 %11098
    %11102 = vset.pattern.permute.xlu0 0
    %11103 = vperm.xlu0 %11102, %v10973
    %v11104 = vpop.permute.xlu0 %11103
    %11107 = vset.pattern.permute.xlu0 0
    %11108 = vperm.xlu0 %11107, %v10974
    %v11109 = vpop.permute.xlu0 %11108
    %11112 = vset.pattern.permute.xlu0 0
    %11113 = vperm.xlu0 %11112, %v10975
    %v11114 = vpop.permute.xlu0 %11113
    %11117 = vset.pattern.permute.xlu0 0
    %11118 = vperm.xlu0 %11117, %v10976
    %v11119 = vpop.permute.xlu0 %11118
    %11122 = vset.pattern.permute.xlu0 0
    %11123 = vperm.xlu0 %11122, %v10977
    %v11124 = vpop.permute.xlu0 %11123
    %11127 = vset.pattern.permute.xlu0 0
    %11128 = vperm.xlu0 %11127, %v10978
    %v11129 = vpop.permute.xlu0 %11128
    %11132 = vset.pattern.permute.xlu0 0
    %11133 = vperm.xlu0 %11132, %v10979
    %v11134 = vpop.permute.xlu0 %11133
    %11137 = vset.pattern.permute.xlu0 0
    %11138 = vperm.xlu0 %11137, %v10980
    %v11139 = vpop.permute.xlu0 %11138
    %v11141 = vmul.f32 %v10917, %v10984
    %v11142 = vmul.f32 %v10918, %v10989
    %v11143 = vmul.f32 %v10919, %v10994
    %v11144 = vmul.f32 %v10920, %v10999
    %v11145 = vmul.f32 %v10921, %v11004
    %v11146 = vmul.f32 %v10922, %v11009
    %v11147 = vmul.f32 %v10923, %v11014
    %v11148 = vmul.f32 %v10924, %v11019
    %v11149 = vmul.f32 %v10925, %v11024
    %v11150 = vmul.f32 %v10926, %v11029
    %v11151 = vmul.f32 %v10927, %v11034
    %v11152 = vmul.f32 %v10928, %v11039
    %v11153 = vmul.f32 %v10929, %v11044
    %v11154 = vmul.f32 %v10930, %v11049
    %v11155 = vmul.f32 %v10931, %v11054
    %v11156 = vmul.f32 %v10932, %v11059
    %v11157 = vmul.f32 %v10933, %v11064
    %v11158 = vmul.f32 %v10934, %v11069
    %v11159 = vmul.f32 %v10935, %v11074
    %v11160 = vmul.f32 %v10936, %v11079
    %v11161 = vmul.f32 %v10937, %v11084
    %v11162 = vmul.f32 %v10938, %v11089
    %v11163 = vmul.f32 %v10939, %v11094
    %v11164 = vmul.f32 %v10940, %v11099
    %v11165 = vmul.f32 %v10941, %v11104
    %v11166 = vmul.f32 %v10942, %v11109
    %v11167 = vmul.f32 %v10943, %v11114
    %v11168 = vmul.f32 %v10944, %v11119
    %v11169 = vmul.f32 %v10945, %v11124
    %v11170 = vmul.f32 %v10946, %v11129
    %v11171 = vmul.f32 %v10947, %v11134
    %v11172 = vmul.f32 %v10948, %v11139
    %v11173 = vadd.f32 %v11141, %v11142
    %v11174 = vadd.f32 %v11173, %v11143
    %v11175 = vadd.f32 %v11174, %v11144
    %v11176 = vadd.f32 %v11175, %v11145
    %v11177 = vadd.f32 %v11176, %v11146
    %v11178 = vadd.f32 %v11177, %v11147
    %v11179 = vadd.f32 %v11178, %v11148
    %v11180 = vadd.f32 %v11179, %v11149
    %v11181 = vadd.f32 %v11180, %v11150
    %v11182 = vadd.f32 %v11181, %v11151
    %v11183 = vadd.f32 %v11182, %v11152
    %v11184 = vadd.f32 %v11183, %v11153
    %v11185 = vadd.f32 %v11184, %v11154
    %v11186 = vadd.f32 %v11185, %v11155
    %v11187 = vadd.f32 %v11186, %v11156
    %v11188 = vadd.f32 %v11187, %v11157
    %v11189 = vadd.f32 %v11188, %v11158
    %v11190 = vadd.f32 %v11189, %v11159
    %v11191 = vadd.f32 %v11190, %v11160
    %v11192 = vadd.f32 %v11191, %v11161
    %v11193 = vadd.f32 %v11192, %v11162
    %v11194 = vadd.f32 %v11193, %v11163
    %v11195 = vadd.f32 %v11194, %v11164
    %v11196 = vadd.f32 %v11195, %v11165
    %v11197 = vadd.f32 %v11196, %v11166
    %v11198 = vadd.f32 %v11197, %v11167
    %v11199 = vadd.f32 %v11198, %v11168
    %v11200 = vadd.f32 %v11199, %v11169
    %v11201 = vadd.f32 %v11200, %v11170
    %v11202 = vadd.f32 %v11201, %v11171
    %v11203 = vadd.f32 %v11202, %v11172
    %v11204 = vrot.slane %v11203, 4
    %v11205 = vadd.f32 %v11203, %v11204
    %v11206 = vrot.slane %v11205, 2
    %v11207 = vadd.f32 %v11205, %v11206
    %v11208 = vrot.slane %v11207, 1
    %v11209 = vadd.f32 %v11207, %v11208
    %v11210 = vld [vmem:[#allocation2] sm:$0x1]
    %11212 = vset.pattern.permute.xlu0 0
    %11213 = vperm.xlu0 %11212, %v11210
    %v11214 = vpop.permute.xlu0 %11213
    %v11216 = vlaneseq
    %v11217 = vshrl.u32 %v11216, 7
    %v11218 = vsub.s32 0, %v11217
    %v11219 = vrot.slane %v11214, %v11218
    %v11220 = vadd.f32 %v11209, %v11219
    %v11221 = vxor.u32 %v11220, 2147483648
    %v11222 = vmul.f32 %v11221, 1.442695
    %v11223 = vpow.pop %v11222
    %v11224 = vadd.f32 %v11223, 1.0
    %v11225 = vrcp.pop %v11224
    %v11226 = vmul.f32 1.0, %v11225
    %11227 = vst [vmem:[#allocation11] sm:$0x1] %v11226
    // Predicated region
    $region54: #{tpu_custom_call.1} parent=1 // pred_check
      _
    $region55: #{tpu_custom_call.1} parent=1 // pred_check_branch
      %11229 = sbr.rel (0) target = $region57
    $region56: #{tpu_custom_call.1} parent=1 // pred_region
      %s11231 = ssub.s32 16, 16
      %11232 = vsyncadd [#allocation5], %s11231
      %s11234 = sshll.u32 [#allocation11], 4
      %s11235 = int_to_ptr.vmem [resolvable:$true] %s11234
      %11237 = dma.vmem_to_hbm [thread:$0]  %s11235, 16, %s9, [#allocation5]
    $region57: #{tpu_custom_call.1} parent=1 // pred_fallthru
      _
    // Predicated region
    $region58: #{tpu_custom_call.1} parent=1 // pred_check
      _
    $region59: #{tpu_custom_call.1} parent=1 // pred_check_branch
      %11239 = sbr.rel (0) target = $region61
    $region60: #{tpu_custom_call.1} parent=1 // pred_region
      %11240 = dma.done [#allocation5], 16
    $region61: #{tpu_custom_call.1} parent=1 // pred_fallthru
      _
    %11241 = vsyncpa [#allocation4], 1
    %11242 = vsyncpa [#allocation7], 1
    %11243 = vsyncpa [#allocation10], 1
    %11244 = vsyncpa [#allocation5], 1

</llo_original>
